<compile_context>
chip_gen: v7x
topology: tpu7x:2x2x1
jax: 0.10.0
libtpu: 0.0.40
codegen_flags: <defaults>
</compile_context>

<pallas_src>
import functools

import jax
import jax.numpy as jnp
from jax.experimental import pallas as pl
from jax.experimental.pallas import tpu as pltpu

# ------------------------- model hyper-parameters --------------------------
D_MODEL = 300      # encoder_in == encoder_out == att_d_model
D_PAD = 384        # 3 x 128 lanes (activations / weight rows zero-padded)
N_LAYERS = 6       # att_n_layer
N_HEADS = 8        # att_n_header
D_K = 64
D_V = 64
D_INNER = 64
FF_PAD = 128       # FFN inner dim padded 64 -> 128 (lane-dense)
H_GATE1 = 128      # encoder_gate: 300 -> 128 -> 64 -> 1
H_GATE2 = 64
GATE2_PAD = 128    # gate hidden padded 64 -> 128
H_OUT = 64         # out_fc1: 300 -> 64
HOUT_PAD = 128     # out hidden padded 64 -> 128
OUT_DIM = 5        # out_fc2: 64 -> 5
OUT_PAD = 128      # lane-padded output slab
LN_EPS = 1e-6
NEG_INF = -1.0e9

QKV_W = 3 * N_HEADS * D_K            # 1536 fused QKV output width
OFF_K = N_HEADS * D_K                # 512
OFF_V = 2 * N_HEADS * D_K            # 1024

_STREAMED = ('wqkv', 'wo', 'ln1_g', 'ln1_b',
             'w1', 'b1', 'w2', 'b2', 'ln2_g', 'ln2_b')
_HEAD_KEYS = ('g1', 'gb1', 'g2', 'gb2', 'g3', 'gb3',
              'f1', 'fb1', 'f2', 'fb2')
_WEIGHT_ORDER = _STREAMED + _HEAD_KEYS


# ------------------------------ kernel utils -------------------------------
def _layer_norm(x, gamma, beta, lanemask):
    # x: (R, D_PAD) with zero pad columns; stats over the true D_MODEL features.
    mu = jnp.sum(x, axis=-1, keepdims=True) * (1.0 / D_MODEL)
    d = (x - mu) * lanemask
    var = jnp.sum(d * d, axis=-1, keepdims=True) * (1.0 / D_MODEL)
    # gamma/beta pad columns are zero => output pad columns stay exactly zero.
    return d * jax.lax.rsqrt(var + LN_EPS) * gamma + beta


# ------------------------- fused forward kernel ----------------------------
def _fused_forward_kernel(batch, seq,
                          x_ref, keymask_ref, seqmask_ref,
                          wqkv_ref, wo_ref,
                          ln1_g_ref, ln1_b_ref, w1_ref, b1_ref,
                          w2_ref, b2_ref, ln2_g_ref, ln2_b_ref,
                          g1_ref, gb1_ref, g2_ref, gb2_ref, g3_ref, gb3_ref,
                          f1_ref, fb1_ref, f2_ref, fb2_ref,
                          o_ref, acc_ref):
    layer = pl.program_id(0)
    rows = batch * seq

    # lane mask selecting the true (unpadded) feature columns
    lane_ids = jax.lax.broadcasted_iota(jnp.int32, (1, D_PAD), 1)
    lanemask = (lane_ids < D_MODEL).astype(jnp.float32)

    @pl.when(layer == 0)
    def _():
        acc_ref[...] = x_ref[...]                 # (B*S, D_PAD) f32

    x2 = acc_ref[...]                             # activation carried across layers
    xb = x2.astype(jnp.bfloat16)
    kmask = keymask_ref[...]                      # (B, 1, S) key-side validity mask

    # ---- fused QKV projection: one wide lane-dense matmul (rows, 1536) ----
    qkv = jnp.dot(xb, wqkv_ref[0], preferred_element_type=jnp.float32)

    scale = 1.0 / jnp.sqrt(jnp.float32(D_K))
    ctx_heads = []
    for h in range(N_HEADS):                      # static unroll; static 64-lane slices
        qh = qkv[:, h * D_K:(h + 1) * D_K]
        kh = qkv[:, OFF_K + h * D_K: OFF_K + (h + 1) * D_K]
        vh = qkv[:, OFF_V + h * D_V: OFF_V + (h + 1) * D_V]
        q3 = qh.reshape(batch, seq, D_K)
        k3 = kh.reshape(batch, seq, D_K)
        v3 = vh.reshape(batch, seq, D_V)
        s = jnp.einsum('bqd,bkd->bqk', q3, k3,
                       preferred_element_type=jnp.float32) * scale   # (B,S,S)
        s = jnp.where(kmask > 0.0, s, NEG_INF)
        m = jnp.max(s, axis=-1, keepdims=True)
        p = jnp.exp(s - m)
        p = p * pl.reciprocal(jnp.sum(p, axis=-1, keepdims=True), approx=True)
        ctx = jnp.einsum('bqk,bkd->bqd', p, v3,
                         preferred_element_type=jnp.float32)          # (B,S,Dv)
        ctx_heads.append(ctx.reshape(rows, D_V).astype(jnp.bfloat16))

    # single K=512 output projection; heads assembled in bf16
    ctx_full = jnp.concatenate(ctx_heads, axis=-1)                    # (B*S, 512) bf16
    attn_out = jnp.dot(ctx_full, wo_ref[0],
                       preferred_element_type=jnp.float32)            # (B*S, D_PAD)

    y = _layer_norm(x2 + attn_out, ln1_g_ref[0], ln1_b_ref[0], lanemask)

    # ---- FFN with inner dim padded to 128 (lane-dense) ----
    h1 = jnp.maximum(
        jnp.dot(y.astype(jnp.bfloat16), w1_ref[0],
                preferred_element_type=jnp.float32) + b1_ref[0], 0.0)
    h2 = jnp.dot(h1.astype(jnp.bfloat16), w2_ref[0],
                 preferred_element_type=jnp.float32) + b2_ref[0]
    z = _layer_norm(y + h2, ln2_g_ref[0], ln2_b_ref[0], lanemask)
    acc_ref[...] = z

    # ---- fused head at the last layer: gate MLP + masked pooling + out MLP ----
    @pl.when(layer == pl.num_programs(0) - 1)
    def _():
        zb = z.astype(jnp.bfloat16)
        g = jnp.maximum(
            jnp.dot(zb, g1_ref[...],
                    preferred_element_type=jnp.float32) + gb1_ref[...], 0.0)
        g = jnp.maximum(
            jnp.dot(g.astype(jnp.bfloat16), g2_ref[...],
                    preferred_element_type=jnp.float32) + gb2_ref[...], 0.0)
        # gate logits as VPU broadcast-multiply + lane reduction (no N=1 matmul)
        logits = jnp.sum(g * g3_ref[...], axis=-1, keepdims=True) + gb3_ref[...]
        logits3 = logits.reshape(batch, seq, 1)
        logits3 = jnp.where(seqmask_ref[...] > 0.0, logits3, NEG_INF)
        mx = jnp.max(logits3, axis=1, keepdims=True)
        p = jnp.exp(logits3 - mx)
        p = p * pl.reciprocal(jnp.sum(p, axis=1, keepdims=True), approx=True)
        hs = jnp.sum(p * z.reshape(batch, seq, D_PAD), axis=1)       # (B, D_PAD)
        o1 = jnp.maximum(
            jnp.dot(hs.astype(jnp.bfloat16), f1_ref[...],
                    preferred_element_type=jnp.float32) + fb1_ref[...], 0.0)
        out = jnp.dot(o1, f2_ref[...],
                      preferred_element_type=jnp.float32) + fb2_ref[...]     # (B, 128)
        o_ref[...] = jax.nn.sigmoid(out)


# ------------------------------ pallas wrapper ------------------------------
def _stream_spec(shape):
    nd = len(shape) - 1
    return pl.BlockSpec((1,) + tuple(shape[1:]),
                        lambda l, _nd=nd: (l,) + (0,) * _nd)


def _invariant_spec(shape):
    nd = len(shape)
    return pl.BlockSpec(tuple(shape), lambda l, _nd=nd: (0,) * _nd)


@jax.jit
def transformer_linear_attn(packed, inputs, mask):
    """Forward. inputs: (B,S,300) f32, mask: (B,S) f32 {0,1} -> (B,5) sigmoid."""
    B, S, D = inputs.shape
    xpad = jnp.zeros((B, S, D_PAD), jnp.float32).at[:, :, :D].set(inputs)
    x2 = xpad.reshape(B * S, D_PAD)
    keymask = mask[:, None, :].astype(jnp.float32)     # (B,1,S) key-side mask
    seqmask = mask[:, :, None].astype(jnp.float32)     # (B,S,1) pooling mask

    in_specs = [_invariant_spec(x2.shape),
                _invariant_spec(keymask.shape),
                _invariant_spec(seqmask.shape)]
    for k in _WEIGHT_ORDER:
        spec_fn = _stream_spec if k in _STREAMED else _invariant_spec
        in_specs.append(spec_fn(packed[k].shape))

    kernel = functools.partial(_fused_forward_kernel, B, S)
    out = pl.pallas_call(
        kernel,
        out_shape=jax.ShapeDtypeStruct((B, OUT_PAD), jnp.float32),
        grid=(N_LAYERS,),
        in_specs=in_specs,
        out_specs=pl.BlockSpec((B, OUT_PAD), lambda l: (0, 0)),
        scratch_shapes=[pltpu.VMEM((B * S, D_PAD), jnp.float32)],
        compiler_params=pltpu.CompilerParams(
            dimension_semantics=("arbitrary",),
            vmem_limit_bytes=32 * 1024 * 1024),
    )(x2, keymask, seqmask, *[packed[k] for k in _WEIGHT_ORDER])
    return out[:, :OUT_DIM]


# ------------------ parameter packing (pad + fuse + stack + bf16) ------------------
def pack_params(params):
    f32, bf16 = jnp.float32, jnp.bfloat16

    def pad2d(w, rows, cols):
        return jnp.zeros((rows, cols), f32).at[:w.shape[0], :w.shape[1]].set(w)

    layers = params['layers']

    def stack(fn):
        return jnp.stack([fn(lw) for lw in layers], axis=0)

    packed = dict(
        # fused QKV slab: (L, D_PAD, 1536), columns ordered [Q heads | K heads | V heads]
        wqkv=stack(lambda lw: pad2d(
            jnp.concatenate([lw['wq'], lw['wk'], lw['wv']], axis=1),
            D_PAD, QKV_W)).astype(bf16),
        wo=stack(lambda lw: pad2d(lw['wo'], N_HEADS * D_V, D_PAD)).astype(bf16),
        ln1_g=stack(lambda lw: pad2d(lw['ln1_g'], 1, D_PAD)),
        ln1_b=stack(lambda lw: pad2d(lw['ln1_b'], 1, D_PAD)),
        w1=stack(lambda lw: pad2d(lw['w1'], D_PAD, FF_PAD)).astype(bf16),
        b1=stack(lambda lw: pad2d(lw['b1'], 1, FF_PAD)),
        w2=stack(lambda lw: pad2d(lw['w2'], FF_PAD, D_PAD)).astype(bf16),
        b2=stack(lambda lw: pad2d(lw['b2'], 1, D_PAD)),
        ln2_g=stack(lambda lw: pad2d(lw['ln2_g'], 1, D_PAD)),
        ln2_b=stack(lambda lw: pad2d(lw['ln2_b'], 1, D_PAD)),
    )
    head = params['head']
    packed.update(
        g1=pad2d(head['g1'], D_PAD, H_GATE1).astype(bf16),
        gb1=pad2d(head['gb1'], 1, H_GATE1),
        g2=pad2d(head['g2'], H_GATE1, GATE2_PAD).astype(bf16),
        gb2=pad2d(head['gb2'], 1, GATE2_PAD),
        g3=pad2d(head['g3'].T, 1, GATE2_PAD),          # (1, 128) gate vector (VPU path)
        gb3=head['gb3'],
        f1=pad2d(head['f1'], D_PAD, HOUT_PAD).astype(bf16),
        fb1=pad2d(head['fb1'], 1, HOUT_PAD),
        f2=pad2d(head['f2'], HOUT_PAD, OUT_PAD),
        fb2=pad2d(head['fb2'], 1, OUT_PAD),
    )
    return packed


# --------------------------- deterministic params ---------------------------
def init_params(key):
    def dense(k, shape, scale=0.05):
        return (scale * jax.random.normal(k, shape)).astype(jnp.float32)

    keys = iter(jax.random.split(key, 64))
    layers = []
    for _ in range(N_LAYERS):
        layers.append(dict(
            wq=dense(next(keys), (D_MODEL, N_HEADS * D_K)),
            wk=dense(next(keys), (D_MODEL, N_HEADS * D_K)),
            wv=dense(next(keys), (D_MODEL, N_HEADS * D_V)),
            wo=dense(next(keys), (N_HEADS * D_V, D_MODEL)),
            ln1_g=jnp.ones((1, D_MODEL), jnp.float32),
            ln1_b=jnp.zeros((1, D_MODEL), jnp.float32),
            w1=dense(next(keys), (D_MODEL, D_INNER)),
            b1=jnp.zeros((1, D_INNER), jnp.float32),
            w2=dense(next(keys), (D_INNER, D_MODEL)),
            b2=jnp.zeros((1, D_MODEL), jnp.float32),
            ln2_g=jnp.ones((1, D_MODEL), jnp.float32),
            ln2_b=jnp.zeros((1, D_MODEL), jnp.float32),
        ))
    head = dict(
        g1=dense(next(keys), (D_MODEL, H_GATE1)),
        gb1=jnp.zeros((1, H_GATE1), jnp.float32),
        g2=dense(next(keys), (H_GATE1, H_GATE2)),
        gb2=jnp.zeros((1, H_GATE2), jnp.float32),
        g3=dense(next(keys), (H_GATE2, 1)),
        gb3=jnp.zeros((1, 1), jnp.float32),
        f1=dense(next(keys), (D_MODEL, H_OUT)),
        fb1=jnp.zeros((1, H_OUT), jnp.float32),
        f2=dense(next(keys), (H_OUT, OUT_DIM)),
        fb2=jnp.zeros((1, OUT_DIM), jnp.float32),
    )
    return {'layers': layers, 'head': head}


# ---------------------------------- main ------------------------------------
if __name__ == "__main__":
    B, S = 2, 8
    key = jax.random.PRNGKey(0)
    pkey, xkey = jax.random.split(key)

    params = init_params(pkey)
    packed = pack_params(params)

    inputs = jax.random.normal(xkey, (B, S, D_MODEL), dtype=jnp.float32)
    lengths = jnp.array([S, 5], dtype=jnp.int32)
    mask = (jnp.arange(S)[None, :] < lengths[:, None]).astype(jnp.float32)  # (B, S)

    out = transformer_linear_attn(packed, inputs, mask)
    out = jax.block_until_ready(out)

    assert out.shape == (B, OUT_DIM)
    assert bool(jnp.all(jnp.isfinite(out)))
    assert bool(jnp.all((out >= 0.0) & (out <= 1.0)))   # sigmoid output range
    print("KERNEL_OK")
</pallas_src>

<mosaic_0001>
module attributes {stable_mosaic.version = 11 : i64} {
  func.func @_fused_forward_kernel(%arg0: i32, %arg1: memref<16x384xf32, #tpu.memory_space<vmem>>, %arg2: memref<2x1x8xf32, #tpu.memory_space<vmem>>, %arg3: memref<2x8x1xf32, #tpu.memory_space<vmem>>, %arg4: memref<1x384x1536xbf16, #tpu.memory_space<vmem>>, %arg5: memref<1x512x384xbf16, #tpu.memory_space<vmem>>, %arg6: memref<1x1x384xf32, #tpu.memory_space<vmem>>, %arg7: memref<1x1x384xf32, #tpu.memory_space<vmem>>, %arg8: memref<1x384x128xbf16, #tpu.memory_space<vmem>>, %arg9: memref<1x1x128xf32, #tpu.memory_space<vmem>>, %arg10: memref<1x128x384xbf16, #tpu.memory_space<vmem>>, %arg11: memref<1x1x384xf32, #tpu.memory_space<vmem>>, %arg12: memref<1x1x384xf32, #tpu.memory_space<vmem>>, %arg13: memref<1x1x384xf32, #tpu.memory_space<vmem>>, %arg14: memref<384x128xbf16, #tpu.memory_space<vmem>>, %arg15: memref<1x128xf32, #tpu.memory_space<vmem>>, %arg16: memref<128x128xbf16, #tpu.memory_space<vmem>>, %arg17: memref<1x128xf32, #tpu.memory_space<vmem>>, %arg18: memref<1x128xf32, #tpu.memory_space<vmem>>, %arg19: memref<1x1xf32, #tpu.memory_space<vmem>>, %arg20: memref<384x128xbf16, #tpu.memory_space<vmem>>, %arg21: memref<1x128xf32, #tpu.memory_space<vmem>>, %arg22: memref<128x128xf32, #tpu.memory_space<vmem>>, %arg23: memref<1x128xf32, #tpu.memory_space<vmem>>, %arg24: memref<2x128xf32, #tpu.memory_space<vmem>>, %arg25: memref<16x384xf32, #tpu.memory_space<vmem>>) attributes {dimension_semantics = [#tpu.dimension_semantics<arbitrary>], iteration_bounds = array<i64: 6>, scalar_prefetch = 0 : i64, scratch_operands = 1 : i64, tpu.core_type = #tpu.core_type<tc>, window_params = [{pipeline_mode = #tpu.pipeline_mode<synchronous>, transform_indices = @transform_0, window_bounds = array<i64: 16, 384>}, {pipeline_mode = #tpu.pipeline_mode<synchronous>, transform_indices = @transform_1, window_bounds = array<i64: 2, 1, 8>}, {pipeline_mode = #tpu.pipeline_mode<synchronous>, transform_indices = @transform_2, window_bounds = array<i64: 2, 8, 1>}, {transform_indices = @transform_3, window_bounds = array<i64: 1, 384, 1536>}, {transform_indices = @transform_4, window_bounds = array<i64: 1, 512, 384>}, {transform_indices = @transform_5, window_bounds = array<i64: 1, 1, 384>}, {transform_indices = @transform_6, window_bounds = array<i64: 1, 1, 384>}, {transform_indices = @transform_7, window_bounds = array<i64: 1, 384, 128>}, {transform_indices = @transform_8, window_bounds = array<i64: 1, 1, 128>}, {transform_indices = @transform_9, window_bounds = array<i64: 1, 128, 384>}, {transform_indices = @transform_10, window_bounds = array<i64: 1, 1, 384>}, {transform_indices = @transform_11, window_bounds = array<i64: 1, 1, 384>}, {transform_indices = @transform_12, window_bounds = array<i64: 1, 1, 384>}, {pipeline_mode = #tpu.pipeline_mode<synchronous>, transform_indices = @transform_13, window_bounds = array<i64: 384, 128>}, {pipeline_mode = #tpu.pipeline_mode<synchronous>, transform_indices = @transform_14, window_bounds = array<i64: 1, 128>}, {pipeline_mode = #tpu.pipeline_mode<synchronous>, transform_indices = @transform_15, window_bounds = array<i64: 128, 128>}, {pipeline_mode = #tpu.pipeline_mode<synchronous>, transform_indices = @transform_16, window_bounds = array<i64: 1, 128>}, {pipeline_mode = #tpu.pipeline_mode<synchronous>, transform_indices = @transform_17, window_bounds = array<i64: 1, 128>}, {pipeline_mode = #tpu.pipeline_mode<synchronous>, transform_indices = @transform_18, window_bounds = array<i64: 1, 1>}, {pipeline_mode = #tpu.pipeline_mode<synchronous>, transform_indices = @transform_19, window_bounds = array<i64: 384, 128>}, {pipeline_mode = #tpu.pipeline_mode<synchronous>, transform_indices = @transform_20, window_bounds = array<i64: 1, 128>}, {pipeline_mode = #tpu.pipeline_mode<synchronous>, transform_indices = @transform_21, window_bounds = array<i64: 128, 128>}, {pipeline_mode = #tpu.pipeline_mode<synchronous>, transform_indices = @transform_22, window_bounds = array<i64: 1, 128>}, {pipeline_mode = #tpu.pipeline_mode<synchronous>, transform_indices = @transform_23, window_bounds = array<i64: 2, 128>}]} {
    %0 = tpu.iota {dimensions = array<i32: 1>} : vector<1x384xi32>
    %c300_i32 = arith.constant 300 : i32
    %1 = vector.broadcast %c300_i32 : i32 to vector<1x384xi32>
    %2 = arith.cmpi slt, %0, %1 : vector<1x384xi32>
    %3 = arith.extui %2 : vector<1x384xi1> to vector<1x384xi32>
    %4 = arith.sitofp %3 : vector<1x384xi32> to vector<1x384xf32>
    %c0_i32 = arith.constant 0 : i32
    %5 = arith.cmpi eq, %arg0, %c0_i32 : i32
    %6 = arith.extui %5 : i1 to i32
    %c0_i32_0 = arith.constant 0 : i32
    %7 = arith.cmpi ne, %6, %c0_i32_0 : i32
    scf.if %7 {
      %c0_102 = arith.constant 0 : index
      %c0_103 = arith.constant 0 : index
      %320 = vector.load %arg1[%c0_102, %c0_103] : memref<16x384xf32, #tpu.memory_space<vmem>>, vector<16x384xf32>
      %c0_104 = arith.constant 0 : index
      %c0_105 = arith.constant 0 : index
      %321 = vector.load %arg25[%c0_104, %c0_105] : memref<16x384xf32, #tpu.memory_space<vmem>>, vector<16x384xf32>
      tpu.vector_store %arg25[%c0_104, %c0_105], %320 {strides = array<i32>} : memref<16x384xf32, #tpu.memory_space<vmem>>, vector<16x384xf32>,
    } else {
    }
    %c0 = arith.constant 0 : index
    %c0_1 = arith.constant 0 : index
    %8 = vector.load %arg25[%c0, %c0_1] : memref<16x384xf32, #tpu.memory_space<vmem>>, vector<16x384xf32>
    %9 = arith.truncf %8 : vector<16x384xf32> to vector<16x384xbf16>
    %c0_2 = arith.constant 0 : index
    %c0_3 = arith.constant 0 : index
    %c0_4 = arith.constant 0 : index
    %10 = vector.load %arg2[%c0_2, %c0_3, %c0_4] : memref<2x1x8xf32, #tpu.memory_space<vmem>>, vector<2x1x8xf32>
    %c0_5 = arith.constant 0 : index
    %c0_6 = arith.constant 0 : index
    %c0_7 = arith.constant 0 : index
    %11 = vector.load %arg4[%c0_5, %c0_6, %c0_7] : memref<1x384x1536xbf16, #tpu.memory_space<vmem>>, vector<1x384x1536xbf16>
    %12 = vector.shape_cast %11 : vector<1x384x1536xbf16> to vector<384x1536xbf16>
    %cst = arith.constant dense<0.000000e+00> : vector<16x1536xf32>
    %13 = tpu.matmul %9, %12, %cst {dimension_numbers = #tpu.dot_dimension_numbers<[1], [0], [0], [1], [0, 0, 1, 1], [], []>} : vector<16x384xbf16>, vector<384x1536xbf16>, vector<16x1536xf32> -> vector<16x1536xf32>
    %cst_8 = arith.constant 6.400000e+01 : f32
    %14 = math.sqrt %cst_8 : f32
    %cst_9 = arith.constant 1.000000e+00 : f32
    %15 = arith.divf %cst_9, %14 : f32
    %16 = vector.extract_strided_slice %13 {offsets = [0, 0], sizes = [16, 64], strides = [1, 1]} : vector<16x1536xf32> to vector<16x64xf32>
    %17 = vector.extract_strided_slice %13 {offsets = [0, 512], sizes = [16, 64], strides = [1, 1]} : vector<16x1536xf32> to vector<16x64xf32>
    %18 = vector.extract_strided_slice %13 {offsets = [0, 1024], sizes = [16, 64], strides = [1, 1]} : vector<16x1536xf32> to vector<16x64xf32>
    %19 = vector.shape_cast %16 : vector<16x64xf32> to vector<2x8x64xf32>
    %20 = vector.shape_cast %17 : vector<16x64xf32> to vector<2x8x64xf32>
    %21 = vector.shape_cast %18 : vector<16x64xf32> to vector<2x8x64xf32>
    "tpu.trace_start"() <{level = 10 : i32, message = "bqd,bkd->bqk"}> : () -> ()
    %cst_10 = arith.constant dense<0.000000e+00> : vector<2x8x8xf32>
    %22 = tpu.matmul %19, %20, %cst_10 {dimension_numbers = #tpu.dot_dimension_numbers<[2], [2], [1], [1], [0, 0, 0, 1, 1, 1], [0], [0]>} : vector<2x8x64xf32>, vector<2x8x64xf32>, vector<2x8x8xf32> -> vector<2x8x8xf32>
    "tpu.trace_stop"() : () -> ()
    %23 = vector.broadcast %15 : f32 to vector<2x8x8xf32>
    %24 = arith.mulf %22, %23 : vector<2x8x8xf32>
    %cst_11 = arith.constant 0.000000e+00 : f32
    %25 = vector.broadcast %cst_11 : f32 to vector<2x1x8xf32>
    %26 = arith.cmpf ogt, %10, %25 : vector<2x1x8xf32>
    %cst_12 = arith.constant -1.000000e+09 : f32
    %27 = vector.shape_cast %26 : vector<2x1x8xi1> to vector<2x1x8xi1>
    %28 = vector.broadcast %27 : vector<2x1x8xi1> to vector<2x8x8xi1>
    %29 = vector.broadcast %cst_12 : f32 to vector<2x8x8xf32>
    %30 = arith.select %28, %24, %29 : vector<2x8x8xi1>, vector<2x8x8xf32>
    %cst_13 = arith.constant dense<0xFF800000> : vector<2x8xf32>
    %31 = vector.multi_reduction <maximumf>, %30, %cst_13 [2] : vector<2x8x8xf32> to vector<2x8xf32>
    %32 = vector.shape_cast %31 : vector<2x8xf32> to vector<2x8x1xf32>
    %33 = vector.broadcast %32 : vector<2x8x1xf32> to vector<2x8x8xf32>
    %34 = arith.subf %30, %33 : vector<2x8x8xf32>
    %35 = math.exp %34 : vector<2x8x8xf32>
    %cst_14 = arith.constant dense<0.000000e+00> : vector<2x8xf32>
    %36 = vector.multi_reduction <add>, %35, %cst_14 [2] : vector<2x8x8xf32> to vector<2x8xf32>
    %37 = vector.shape_cast %36 : vector<2x8xf32> to vector<2x8x1xf32>
    %38 = tpu.reciprocal %37 {approx = true} : vector<2x8x1xf32> -> vector<2x8x1xf32>
    %39 = vector.broadcast %38 : vector<2x8x1xf32> to vector<2x8x8xf32>
    %40 = arith.mulf %35, %39 : vector<2x8x8xf32>
    "tpu.trace_start"() <{level = 10 : i32, message = "bqk,bkd->bqd"}> : () -> ()
    %cst_15 = arith.constant dense<0.000000e+00> : vector<2x8x64xf32>
    %41 = tpu.matmul %40, %21, %cst_15 {dimension_numbers = #tpu.dot_dimension_numbers<[2], [1], [1], [2], [0, 0, 0, 1, 1, 2], [0], [0]>} : vector<2x8x8xf32>, vector<2x8x64xf32>, vector<2x8x64xf32> -> vector<2x8x64xf32>
    "tpu.trace_stop"() : () -> ()
    %42 = vector.shape_cast %41 : vector<2x8x64xf32> to vector<16x64xf32>
    %43 = arith.truncf %42 : vector<16x64xf32> to vector<16x64xbf16>
    %44 = vector.extract_strided_slice %13 {offsets = [0, 64], sizes = [16, 64], strides = [1, 1]} : vector<16x1536xf32> to vector<16x64xf32>
    %45 = vector.extract_strided_slice %13 {offsets = [0, 576], sizes = [16, 64], strides = [1, 1]} : vector<16x1536xf32> to vector<16x64xf32>
    %46 = vector.extract_strided_slice %13 {offsets = [0, 1088], sizes = [16, 64], strides = [1, 1]} : vector<16x1536xf32> to vector<16x64xf32>
    %47 = vector.shape_cast %44 : vector<16x64xf32> to vector<2x8x64xf32>
    %48 = vector.shape_cast %45 : vector<16x64xf32> to vector<2x8x64xf32>
    %49 = vector.shape_cast %46 : vector<16x64xf32> to vector<2x8x64xf32>
    "tpu.trace_start"() <{level = 10 : i32, message = "bqd,bkd->bqk"}> : () -> ()
    %cst_16 = arith.constant dense<0.000000e+00> : vector<2x8x8xf32>
    %50 = tpu.matmul %47, %48, %cst_16 {dimension_numbers = #tpu.dot_dimension_numbers<[2], [2], [1], [1], [0, 0, 0, 1, 1, 1], [0], [0]>} : vector<2x8x64xf32>, vector<2x8x64xf32>, vector<2x8x8xf32> -> vector<2x8x8xf32>
    "tpu.trace_stop"() : () -> ()
    %51 = vector.broadcast %15 : f32 to vector<2x8x8xf32>
    %52 = arith.mulf %50, %51 : vector<2x8x8xf32>
    %cst_17 = arith.constant 0.000000e+00 : f32
    %53 = vector.broadcast %cst_17 : f32 to vector<2x1x8xf32>
    %54 = arith.cmpf ogt, %10, %53 : vector<2x1x8xf32>
    %cst_18 = arith.constant -1.000000e+09 : f32
    %55 = vector.shape_cast %54 : vector<2x1x8xi1> to vector<2x1x8xi1>
    %56 = vector.broadcast %55 : vector<2x1x8xi1> to vector<2x8x8xi1>
    %57 = vector.broadcast %cst_18 : f32 to vector<2x8x8xf32>
    %58 = arith.select %56, %52, %57 : vector<2x8x8xi1>, vector<2x8x8xf32>
    %cst_19 = arith.constant dense<0xFF800000> : vector<2x8xf32>
    %59 = vector.multi_reduction <maximumf>, %58, %cst_19 [2] : vector<2x8x8xf32> to vector<2x8xf32>
    %60 = vector.shape_cast %59 : vector<2x8xf32> to vector<2x8x1xf32>
    %61 = vector.broadcast %60 : vector<2x8x1xf32> to vector<2x8x8xf32>
    %62 = arith.subf %58, %61 : vector<2x8x8xf32>
    %63 = math.exp %62 : vector<2x8x8xf32>
    %cst_20 = arith.constant dense<0.000000e+00> : vector<2x8xf32>
    %64 = vector.multi_reduction <add>, %63, %cst_20 [2] : vector<2x8x8xf32> to vector<2x8xf32>
    %65 = vector.shape_cast %64 : vector<2x8xf32> to vector<2x8x1xf32>
    %66 = tpu.reciprocal %65 {approx = true} : vector<2x8x1xf32> -> vector<2x8x1xf32>
    %67 = vector.broadcast %66 : vector<2x8x1xf32> to vector<2x8x8xf32>
    %68 = arith.mulf %63, %67 : vector<2x8x8xf32>
    "tpu.trace_start"() <{level = 10 : i32, message = "bqk,bkd->bqd"}> : () -> ()
    %cst_21 = arith.constant dense<0.000000e+00> : vector<2x8x64xf32>
    %69 = tpu.matmul %68, %49, %cst_21 {dimension_numbers = #tpu.dot_dimension_numbers<[2], [1], [1], [2], [0, 0, 0, 1, 1, 2], [0], [0]>} : vector<2x8x8xf32>, vector<2x8x64xf32>, vector<2x8x64xf32> -> vector<2x8x64xf32>
    "tpu.trace_stop"() : () -> ()
    %70 = vector.shape_cast %69 : vector<2x8x64xf32> to vector<16x64xf32>
    %71 = arith.truncf %70 : vector<16x64xf32> to vector<16x64xbf16>
    %72 = vector.extract_strided_slice %13 {offsets = [0, 128], sizes = [16, 64], strides = [1, 1]} : vector<16x1536xf32> to vector<16x64xf32>
    %73 = vector.extract_strided_slice %13 {offsets = [0, 640], sizes = [16, 64], strides = [1, 1]} : vector<16x1536xf32> to vector<16x64xf32>
    %74 = vector.extract_strided_slice %13 {offsets = [0, 1152], sizes = [16, 64], strides = [1, 1]} : vector<16x1536xf32> to vector<16x64xf32>
    %75 = vector.shape_cast %72 : vector<16x64xf32> to vector<2x8x64xf32>
    %76 = vector.shape_cast %73 : vector<16x64xf32> to vector<2x8x64xf32>
    %77 = vector.shape_cast %74 : vector<16x64xf32> to vector<2x8x64xf32>
    "tpu.trace_start"() <{level = 10 : i32, message = "bqd,bkd->bqk"}> : () -> ()
    %cst_22 = arith.constant dense<0.000000e+00> : vector<2x8x8xf32>
    %78 = tpu.matmul %75, %76, %cst_22 {dimension_numbers = #tpu.dot_dimension_numbers<[2], [2], [1], [1], [0, 0, 0, 1, 1, 1], [0], [0]>} : vector<2x8x64xf32>, vector<2x8x64xf32>, vector<2x8x8xf32> -> vector<2x8x8xf32>
    "tpu.trace_stop"() : () -> ()
    %79 = vector.broadcast %15 : f32 to vector<2x8x8xf32>
    %80 = arith.mulf %78, %79 : vector<2x8x8xf32>
    %cst_23 = arith.constant 0.000000e+00 : f32
    %81 = vector.broadcast %cst_23 : f32 to vector<2x1x8xf32>
    %82 = arith.cmpf ogt, %10, %81 : vector<2x1x8xf32>
    %cst_24 = arith.constant -1.000000e+09 : f32
    %83 = vector.shape_cast %82 : vector<2x1x8xi1> to vector<2x1x8xi1>
    %84 = vector.broadcast %83 : vector<2x1x8xi1> to vector<2x8x8xi1>
    %85 = vector.broadcast %cst_24 : f32 to vector<2x8x8xf32>
    %86 = arith.select %84, %80, %85 : vector<2x8x8xi1>, vector<2x8x8xf32>
    %cst_25 = arith.constant dense<0xFF800000> : vector<2x8xf32>
    %87 = vector.multi_reduction <maximumf>, %86, %cst_25 [2] : vector<2x8x8xf32> to vector<2x8xf32>
    %88 = vector.shape_cast %87 : vector<2x8xf32> to vector<2x8x1xf32>
    %89 = vector.broadcast %88 : vector<2x8x1xf32> to vector<2x8x8xf32>
    %90 = arith.subf %86, %89 : vector<2x8x8xf32>
    %91 = math.exp %90 : vector<2x8x8xf32>
    %cst_26 = arith.constant dense<0.000000e+00> : vector<2x8xf32>
    %92 = vector.multi_reduction <add>, %91, %cst_26 [2] : vector<2x8x8xf32> to vector<2x8xf32>
    %93 = vector.shape_cast %92 : vector<2x8xf32> to vector<2x8x1xf32>
    %94 = tpu.reciprocal %93 {approx = true} : vector<2x8x1xf32> -> vector<2x8x1xf32>
    %95 = vector.broadcast %94 : vector<2x8x1xf32> to vector<2x8x8xf32>
    %96 = arith.mulf %91, %95 : vector<2x8x8xf32>
    "tpu.trace_start"() <{level = 10 : i32, message = "bqk,bkd->bqd"}> : () -> ()
    %cst_27 = arith.constant dense<0.000000e+00> : vector<2x8x64xf32>
    %97 = tpu.matmul %96, %77, %cst_27 {dimension_numbers = #tpu.dot_dimension_numbers<[2], [1], [1], [2], [0, 0, 0, 1, 1, 2], [0], [0]>} : vector<2x8x8xf32>, vector<2x8x64xf32>, vector<2x8x64xf32> -> vector<2x8x64xf32>
    "tpu.trace_stop"() : () -> ()
    %98 = vector.shape_cast %97 : vector<2x8x64xf32> to vector<16x64xf32>
    %99 = arith.truncf %98 : vector<16x64xf32> to vector<16x64xbf16>
    %100 = vector.extract_strided_slice %13 {offsets = [0, 192], sizes = [16, 64], strides = [1, 1]} : vector<16x1536xf32> to vector<16x64xf32>
    %101 = vector.extract_strided_slice %13 {offsets = [0, 704], sizes = [16, 64], strides = [1, 1]} : vector<16x1536xf32> to vector<16x64xf32>
    %102 = vector.extract_strided_slice %13 {offsets = [0, 1216], sizes = [16, 64], strides = [1, 1]} : vector<16x1536xf32> to vector<16x64xf32>
    %103 = vector.shape_cast %100 : vector<16x64xf32> to vector<2x8x64xf32>
    %104 = vector.shape_cast %101 : vector<16x64xf32> to vector<2x8x64xf32>
    %105 = vector.shape_cast %102 : vector<16x64xf32> to vector<2x8x64xf32>
    "tpu.trace_start"() <{level = 10 : i32, message = "bqd,bkd->bqk"}> : () -> ()
    %cst_28 = arith.constant dense<0.000000e+00> : vector<2x8x8xf32>
    %106 = tpu.matmul %103, %104, %cst_28 {dimension_numbers = #tpu.dot_dimension_numbers<[2], [2], [1], [1], [0, 0, 0, 1, 1, 1], [0], [0]>} : vector<2x8x64xf32>, vector<2x8x64xf32>, vector<2x8x8xf32> -> vector<2x8x8xf32>
    "tpu.trace_stop"() : () -> ()
    %107 = vector.broadcast %15 : f32 to vector<2x8x8xf32>
    %108 = arith.mulf %106, %107 : vector<2x8x8xf32>
    %cst_29 = arith.constant 0.000000e+00 : f32
    %109 = vector.broadcast %cst_29 : f32 to vector<2x1x8xf32>
    %110 = arith.cmpf ogt, %10, %109 : vector<2x1x8xf32>
    %cst_30 = arith.constant -1.000000e+09 : f32
    %111 = vector.shape_cast %110 : vector<2x1x8xi1> to vector<2x1x8xi1>
    %112 = vector.broadcast %111 : vector<2x1x8xi1> to vector<2x8x8xi1>
    %113 = vector.broadcast %cst_30 : f32 to vector<2x8x8xf32>
    %114 = arith.select %112, %108, %113 : vector<2x8x8xi1>, vector<2x8x8xf32>
    %cst_31 = arith.constant dense<0xFF800000> : vector<2x8xf32>
    %115 = vector.multi_reduction <maximumf>, %114, %cst_31 [2] : vector<2x8x8xf32> to vector<2x8xf32>
    %116 = vector.shape_cast %115 : vector<2x8xf32> to vector<2x8x1xf32>
    %117 = vector.broadcast %116 : vector<2x8x1xf32> to vector<2x8x8xf32>
    %118 = arith.subf %114, %117 : vector<2x8x8xf32>
    %119 = math.exp %118 : vector<2x8x8xf32>
    %cst_32 = arith.constant dense<0.000000e+00> : vector<2x8xf32>
    %120 = vector.multi_reduction <add>, %119, %cst_32 [2] : vector<2x8x8xf32> to vector<2x8xf32>
    %121 = vector.shape_cast %120 : vector<2x8xf32> to vector<2x8x1xf32>
    %122 = tpu.reciprocal %121 {approx = true} : vector<2x8x1xf32> -> vector<2x8x1xf32>
    %123 = vector.broadcast %122 : vector<2x8x1xf32> to vector<2x8x8xf32>
    %124 = arith.mulf %119, %123 : vector<2x8x8xf32>
    "tpu.trace_start"() <{level = 10 : i32, message = "bqk,bkd->bqd"}> : () -> ()
    %cst_33 = arith.constant dense<0.000000e+00> : vector<2x8x64xf32>
    %125 = tpu.matmul %124, %105, %cst_33 {dimension_numbers = #tpu.dot_dimension_numbers<[2], [1], [1], [2], [0, 0, 0, 1, 1, 2], [0], [0]>} : vector<2x8x8xf32>, vector<2x8x64xf32>, vector<2x8x64xf32> -> vector<2x8x64xf32>
    "tpu.trace_stop"() : () -> ()
    %126 = vector.shape_cast %125 : vector<2x8x64xf32> to vector<16x64xf32>
    %127 = arith.truncf %126 : vector<16x64xf32> to vector<16x64xbf16>
    %128 = vector.extract_strided_slice %13 {offsets = [0, 256], sizes = [16, 64], strides = [1, 1]} : vector<16x1536xf32> to vector<16x64xf32>
    %129 = vector.extract_strided_slice %13 {offsets = [0, 768], sizes = [16, 64], strides = [1, 1]} : vector<16x1536xf32> to vector<16x64xf32>
    %130 = vector.extract_strided_slice %13 {offsets = [0, 1280], sizes = [16, 64], strides = [1, 1]} : vector<16x1536xf32> to vector<16x64xf32>
    %131 = vector.shape_cast %128 : vector<16x64xf32> to vector<2x8x64xf32>
    %132 = vector.shape_cast %129 : vector<16x64xf32> to vector<2x8x64xf32>
    %133 = vector.shape_cast %130 : vector<16x64xf32> to vector<2x8x64xf32>
    "tpu.trace_start"() <{level = 10 : i32, message = "bqd,bkd->bqk"}> : () -> ()
    %cst_34 = arith.constant dense<0.000000e+00> : vector<2x8x8xf32>
    %134 = tpu.matmul %131, %132, %cst_34 {dimension_numbers = #tpu.dot_dimension_numbers<[2], [2], [1], [1], [0, 0, 0, 1, 1, 1], [0], [0]>} : vector<2x8x64xf32>, vector<2x8x64xf32>, vector<2x8x8xf32> -> vector<2x8x8xf32>
    "tpu.trace_stop"() : () -> ()
    %135 = vector.broadcast %15 : f32 to vector<2x8x8xf32>
    %136 = arith.mulf %134, %135 : vector<2x8x8xf32>
    %cst_35 = arith.constant 0.000000e+00 : f32
    %137 = vector.broadcast %cst_35 : f32 to vector<2x1x8xf32>
    %138 = arith.cmpf ogt, %10, %137 : vector<2x1x8xf32>
    %cst_36 = arith.constant -1.000000e+09 : f32
    %139 = vector.shape_cast %138 : vector<2x1x8xi1> to vector<2x1x8xi1>
    %140 = vector.broadcast %139 : vector<2x1x8xi1> to vector<2x8x8xi1>
    %141 = vector.broadcast %cst_36 : f32 to vector<2x8x8xf32>
    %142 = arith.select %140, %136, %141 : vector<2x8x8xi1>, vector<2x8x8xf32>
    %cst_37 = arith.constant dense<0xFF800000> : vector<2x8xf32>
    %143 = vector.multi_reduction <maximumf>, %142, %cst_37 [2] : vector<2x8x8xf32> to vector<2x8xf32>
    %144 = vector.shape_cast %143 : vector<2x8xf32> to vector<2x8x1xf32>
    %145 = vector.broadcast %144 : vector<2x8x1xf32> to vector<2x8x8xf32>
    %146 = arith.subf %142, %145 : vector<2x8x8xf32>
    %147 = math.exp %146 : vector<2x8x8xf32>
    %cst_38 = arith.constant dense<0.000000e+00> : vector<2x8xf32>
    %148 = vector.multi_reduction <add>, %147, %cst_38 [2] : vector<2x8x8xf32> to vector<2x8xf32>
    %149 = vector.shape_cast %148 : vector<2x8xf32> to vector<2x8x1xf32>
    %150 = tpu.reciprocal %149 {approx = true} : vector<2x8x1xf32> -> vector<2x8x1xf32>
    %151 = vector.broadcast %150 : vector<2x8x1xf32> to vector<2x8x8xf32>
    %152 = arith.mulf %147, %151 : vector<2x8x8xf32>
    "tpu.trace_start"() <{level = 10 : i32, message = "bqk,bkd->bqd"}> : () -> ()
    %cst_39 = arith.constant dense<0.000000e+00> : vector<2x8x64xf32>
    %153 = tpu.matmul %152, %133, %cst_39 {dimension_numbers = #tpu.dot_dimension_numbers<[2], [1], [1], [2], [0, 0, 0, 1, 1, 2], [0], [0]>} : vector<2x8x8xf32>, vector<2x8x64xf32>, vector<2x8x64xf32> -> vector<2x8x64xf32>
    "tpu.trace_stop"() : () -> ()
    %154 = vector.shape_cast %153 : vector<2x8x64xf32> to vector<16x64xf32>
    %155 = arith.truncf %154 : vector<16x64xf32> to vector<16x64xbf16>
    %156 = vector.extract_strided_slice %13 {offsets = [0, 320], sizes = [16, 64], strides = [1, 1]} : vector<16x1536xf32> to vector<16x64xf32>
    %157 = vector.extract_strided_slice %13 {offsets = [0, 832], sizes = [16, 64], strides = [1, 1]} : vector<16x1536xf32> to vector<16x64xf32>
    %158 = vector.extract_strided_slice %13 {offsets = [0, 1344], sizes = [16, 64], strides = [1, 1]} : vector<16x1536xf32> to vector<16x64xf32>
    %159 = vector.shape_cast %156 : vector<16x64xf32> to vector<2x8x64xf32>
    %160 = vector.shape_cast %157 : vector<16x64xf32> to vector<2x8x64xf32>
    %161 = vector.shape_cast %158 : vector<16x64xf32> to vector<2x8x64xf32>
    "tpu.trace_start"() <{level = 10 : i32, message = "bqd,bkd->bqk"}> : () -> ()
    %cst_40 = arith.constant dense<0.000000e+00> : vector<2x8x8xf32>
    %162 = tpu.matmul %159, %160, %cst_40 {dimension_numbers = #tpu.dot_dimension_numbers<[2], [2], [1], [1], [0, 0, 0, 1, 1, 1], [0], [0]>} : vector<2x8x64xf32>, vector<2x8x64xf32>, vector<2x8x8xf32> -> vector<2x8x8xf32>
    "tpu.trace_stop"() : () -> ()
    %163 = vector.broadcast %15 : f32 to vector<2x8x8xf32>
    %164 = arith.mulf %162, %163 : vector<2x8x8xf32>
    %cst_41 = arith.constant 0.000000e+00 : f32
    %165 = vector.broadcast %cst_41 : f32 to vector<2x1x8xf32>
    %166 = arith.cmpf ogt, %10, %165 : vector<2x1x8xf32>
    %cst_42 = arith.constant -1.000000e+09 : f32
    %167 = vector.shape_cast %166 : vector<2x1x8xi1> to vector<2x1x8xi1>
    %168 = vector.broadcast %167 : vector<2x1x8xi1> to vector<2x8x8xi1>
    %169 = vector.broadcast %cst_42 : f32 to vector<2x8x8xf32>
    %170 = arith.select %168, %164, %169 : vector<2x8x8xi1>, vector<2x8x8xf32>
    %cst_43 = arith.constant dense<0xFF800000> : vector<2x8xf32>
    %171 = vector.multi_reduction <maximumf>, %170, %cst_43 [2] : vector<2x8x8xf32> to vector<2x8xf32>
    %172 = vector.shape_cast %171 : vector<2x8xf32> to vector<2x8x1xf32>
    %173 = vector.broadcast %172 : vector<2x8x1xf32> to vector<2x8x8xf32>
    %174 = arith.subf %170, %173 : vector<2x8x8xf32>
    %175 = math.exp %174 : vector<2x8x8xf32>
    %cst_44 = arith.constant dense<0.000000e+00> : vector<2x8xf32>
    %176 = vector.multi_reduction <add>, %175, %cst_44 [2] : vector<2x8x8xf32> to vector<2x8xf32>
    %177 = vector.shape_cast %176 : vector<2x8xf32> to vector<2x8x1xf32>
    %178 = tpu.reciprocal %177 {approx = true} : vector<2x8x1xf32> -> vector<2x8x1xf32>
    %179 = vector.broadcast %178 : vector<2x8x1xf32> to vector<2x8x8xf32>
    %180 = arith.mulf %175, %179 : vector<2x8x8xf32>
    "tpu.trace_start"() <{level = 10 : i32, message = "bqk,bkd->bqd"}> : () -> ()
    %cst_45 = arith.constant dense<0.000000e+00> : vector<2x8x64xf32>
    %181 = tpu.matmul %180, %161, %cst_45 {dimension_numbers = #tpu.dot_dimension_numbers<[2], [1], [1], [2], [0, 0, 0, 1, 1, 2], [0], [0]>} : vector<2x8x8xf32>, vector<2x8x64xf32>, vector<2x8x64xf32> -> vector<2x8x64xf32>
    "tpu.trace_stop"() : () -> ()
    %182 = vector.shape_cast %181 : vector<2x8x64xf32> to vector<16x64xf32>
    %183 = arith.truncf %182 : vector<16x64xf32> to vector<16x64xbf16>
    %184 = vector.extract_strided_slice %13 {offsets = [0, 384], sizes = [16, 64], strides = [1, 1]} : vector<16x1536xf32> to vector<16x64xf32>
    %185 = vector.extract_strided_slice %13 {offsets = [0, 896], sizes = [16, 64], strides = [1, 1]} : vector<16x1536xf32> to vector<16x64xf32>
    %186 = vector.extract_strided_slice %13 {offsets = [0, 1408], sizes = [16, 64], strides = [1, 1]} : vector<16x1536xf32> to vector<16x64xf32>
    %187 = vector.shape_cast %184 : vector<16x64xf32> to vector<2x8x64xf32>
    %188 = vector.shape_cast %185 : vector<16x64xf32> to vector<2x8x64xf32>
    %189 = vector.shape_cast %186 : vector<16x64xf32> to vector<2x8x64xf32>
    "tpu.trace_start"() <{level = 10 : i32, message = "bqd,bkd->bqk"}> : () -> ()
    %cst_46 = arith.constant dense<0.000000e+00> : vector<2x8x8xf32>
    %190 = tpu.matmul %187, %188, %cst_46 {dimension_numbers = #tpu.dot_dimension_numbers<[2], [2], [1], [1], [0, 0, 0, 1, 1, 1], [0], [0]>} : vector<2x8x64xf32>, vector<2x8x64xf32>, vector<2x8x8xf32> -> vector<2x8x8xf32>
    "tpu.trace_stop"() : () -> ()
    %191 = vector.broadcast %15 : f32 to vector<2x8x8xf32>
    %192 = arith.mulf %190, %191 : vector<2x8x8xf32>
    %cst_47 = arith.constant 0.000000e+00 : f32
    %193 = vector.broadcast %cst_47 : f32 to vector<2x1x8xf32>
    %194 = arith.cmpf ogt, %10, %193 : vector<2x1x8xf32>
    %cst_48 = arith.constant -1.000000e+09 : f32
    %195 = vector.shape_cast %194 : vector<2x1x8xi1> to vector<2x1x8xi1>
    %196 = vector.broadcast %195 : vector<2x1x8xi1> to vector<2x8x8xi1>
    %197 = vector.broadcast %cst_48 : f32 to vector<2x8x8xf32>
    %198 = arith.select %196, %192, %197 : vector<2x8x8xi1>, vector<2x8x8xf32>
    %cst_49 = arith.constant dense<0xFF800000> : vector<2x8xf32>
    %199 = vector.multi_reduction <maximumf>, %198, %cst_49 [2] : vector<2x8x8xf32> to vector<2x8xf32>
    %200 = vector.shape_cast %199 : vector<2x8xf32> to vector<2x8x1xf32>
    %201 = vector.broadcast %200 : vector<2x8x1xf32> to vector<2x8x8xf32>
    %202 = arith.subf %198, %201 : vector<2x8x8xf32>
    %203 = math.exp %202 : vector<2x8x8xf32>
    %cst_50 = arith.constant dense<0.000000e+00> : vector<2x8xf32>
    %204 = vector.multi_reduction <add>, %203, %cst_50 [2] : vector<2x8x8xf32> to vector<2x8xf32>
    %205 = vector.shape_cast %204 : vector<2x8xf32> to vector<2x8x1xf32>
    %206 = tpu.reciprocal %205 {approx = true} : vector<2x8x1xf32> -> vector<2x8x1xf32>
    %207 = vector.broadcast %206 : vector<2x8x1xf32> to vector<2x8x8xf32>
    %208 = arith.mulf %203, %207 : vector<2x8x8xf32>
    "tpu.trace_start"() <{level = 10 : i32, message = "bqk,bkd->bqd"}> : () -> ()
    %cst_51 = arith.constant dense<0.000000e+00> : vector<2x8x64xf32>
    %209 = tpu.matmul %208, %189, %cst_51 {dimension_numbers = #tpu.dot_dimension_numbers<[2], [1], [1], [2], [0, 0, 0, 1, 1, 2], [0], [0]>} : vector<2x8x8xf32>, vector<2x8x64xf32>, vector<2x8x64xf32> -> vector<2x8x64xf32>
    "tpu.trace_stop"() : () -> ()
    %210 = vector.shape_cast %209 : vector<2x8x64xf32> to vector<16x64xf32>
    %211 = arith.truncf %210 : vector<16x64xf32> to vector<16x64xbf16>
    %212 = vector.extract_strided_slice %13 {offsets = [0, 448], sizes = [16, 64], strides = [1, 1]} : vector<16x1536xf32> to vector<16x64xf32>
    %213 = vector.extract_strided_slice %13 {offsets = [0, 960], sizes = [16, 64], strides = [1, 1]} : vector<16x1536xf32> to vector<16x64xf32>
    %214 = vector.extract_strided_slice %13 {offsets = [0, 1472], sizes = [16, 64], strides = [1, 1]} : vector<16x1536xf32> to vector<16x64xf32>
    %215 = vector.shape_cast %212 : vector<16x64xf32> to vector<2x8x64xf32>
    %216 = vector.shape_cast %213 : vector<16x64xf32> to vector<2x8x64xf32>
    %217 = vector.shape_cast %214 : vector<16x64xf32> to vector<2x8x64xf32>
    "tpu.trace_start"() <{level = 10 : i32, message = "bqd,bkd->bqk"}> : () -> ()
    %cst_52 = arith.constant dense<0.000000e+00> : vector<2x8x8xf32>
    %218 = tpu.matmul %215, %216, %cst_52 {dimension_numbers = #tpu.dot_dimension_numbers<[2], [2], [1], [1], [0, 0, 0, 1, 1, 1], [0], [0]>} : vector<2x8x64xf32>, vector<2x8x64xf32>, vector<2x8x8xf32> -> vector<2x8x8xf32>
    "tpu.trace_stop"() : () -> ()
    %219 = vector.broadcast %15 : f32 to vector<2x8x8xf32>
    %220 = arith.mulf %218, %219 : vector<2x8x8xf32>
    %cst_53 = arith.constant 0.000000e+00 : f32
    %221 = vector.broadcast %cst_53 : f32 to vector<2x1x8xf32>
    %222 = arith.cmpf ogt, %10, %221 : vector<2x1x8xf32>
    %cst_54 = arith.constant -1.000000e+09 : f32
    %223 = vector.shape_cast %222 : vector<2x1x8xi1> to vector<2x1x8xi1>
    %224 = vector.broadcast %223 : vector<2x1x8xi1> to vector<2x8x8xi1>
    %225 = vector.broadcast %cst_54 : f32 to vector<2x8x8xf32>
    %226 = arith.select %224, %220, %225 : vector<2x8x8xi1>, vector<2x8x8xf32>
    %cst_55 = arith.constant dense<0xFF800000> : vector<2x8xf32>
    %227 = vector.multi_reduction <maximumf>, %226, %cst_55 [2] : vector<2x8x8xf32> to vector<2x8xf32>
    %228 = vector.shape_cast %227 : vector<2x8xf32> to vector<2x8x1xf32>
    %229 = vector.broadcast %228 : vector<2x8x1xf32> to vector<2x8x8xf32>
    %230 = arith.subf %226, %229 : vector<2x8x8xf32>
    %231 = math.exp %230 : vector<2x8x8xf32>
    %cst_56 = arith.constant dense<0.000000e+00> : vector<2x8xf32>
    %232 = vector.multi_reduction <add>, %231, %cst_56 [2] : vector<2x8x8xf32> to vector<2x8xf32>
    %233 = vector.shape_cast %232 : vector<2x8xf32> to vector<2x8x1xf32>
    %234 = tpu.reciprocal %233 {approx = true} : vector<2x8x1xf32> -> vector<2x8x1xf32>
    %235 = vector.broadcast %234 : vector<2x8x1xf32> to vector<2x8x8xf32>
    %236 = arith.mulf %231, %235 : vector<2x8x8xf32>
    "tpu.trace_start"() <{level = 10 : i32, message = "bqk,bkd->bqd"}> : () -> ()
    %cst_57 = arith.constant dense<0.000000e+00> : vector<2x8x64xf32>
    %237 = tpu.matmul %236, %217, %cst_57 {dimension_numbers = #tpu.dot_dimension_numbers<[2], [1], [1], [2], [0, 0, 0, 1, 1, 2], [0], [0]>} : vector<2x8x8xf32>, vector<2x8x64xf32>, vector<2x8x64xf32> -> vector<2x8x64xf32>
    "tpu.trace_stop"() : () -> ()
    %238 = vector.shape_cast %237 : vector<2x8x64xf32> to vector<16x64xf32>
    %239 = arith.truncf %238 : vector<16x64xf32> to vector<16x64xbf16>
    %240 = tpu.concatenate %43, %71, %99, %127, %155, %183, %211, %239 in 1 : vector<16x64xbf16>, vector<16x64xbf16>, vector<16x64xbf16>, vector<16x64xbf16>, vector<16x64xbf16>, vector<16x64xbf16>, vector<16x64xbf16>, vector<16x64xbf16> -> vector<16x512xbf16>
    %c0_58 = arith.constant 0 : index
    %c0_59 = arith.constant 0 : index
    %c0_60 = arith.constant 0 : index
    %241 = vector.load %arg5[%c0_58, %c0_59, %c0_60] : memref<1x512x384xbf16, #tpu.memory_space<vmem>>, vector<1x512x384xbf16>
    %242 = vector.shape_cast %241 : vector<1x512x384xbf16> to vector<512x384xbf16>
    %cst_61 = arith.constant dense<0.000000e+00> : vector<16x384xf32>
    %243 = tpu.matmul %240, %242, %cst_61 {dimension_numbers = #tpu.dot_dimension_numbers<[1], [0], [0], [1], [0, 0, 1, 1], [], []>} : vector<16x512xbf16>, vector<512x384xbf16>, vector<16x384xf32> -> vector<16x384xf32>
    %244 = arith.addf %8, %243 : vector<16x384xf32>
    %c0_62 = arith.constant 0 : index
    %c0_63 = arith.constant 0 : index
    %c0_64 = arith.constant 0 : index
    %245 = vector.load %arg6[%c0_62, %c0_63, %c0_64] : memref<1x1x384xf32, #tpu.memory_space<vmem>>, vector<1x1x384xf32>
    %246 = vector.shape_cast %245 : vector<1x1x384xf32> to vector<1x384xf32>
    %c0_65 = arith.constant 0 : index
    %c0_66 = arith.constant 0 : index
    %c0_67 = arith.constant 0 : index
    %247 = vector.load %arg7[%c0_65, %c0_66, %c0_67] : memref<1x1x384xf32, #tpu.memory_space<vmem>>, vector<1x1x384xf32>
    %248 = vector.shape_cast %247 : vector<1x1x384xf32> to vector<1x384xf32>
    %cst_68 = arith.constant dense<0.000000e+00> : vector<16xf32>
    %249 = vector.multi_reduction <add>, %244, %cst_68 [1] : vector<16x384xf32> to vector<16xf32>
    %250 = vector.shape_cast %249 : vector<16xf32> to vector<16x1xf32>
    %cst_69 = arith.constant 0.00333333341 : f32
    %251 = vector.broadcast %cst_69 : f32 to vector<16x1xf32>
    %252 = arith.mulf %250, %251 : vector<16x1xf32>
    %253 = vector.broadcast %252 : vector<16x1xf32> to vector<16x384xf32>
    %254 = arith.subf %244, %253 : vector<16x384xf32>
    %255 = vector.broadcast %4 : vector<1x384xf32> to vector<16x384xf32>
    %256 = arith.mulf %254, %255 : vector<16x384xf32>
    %257 = arith.mulf %256, %256 : vector<16x384xf32>
    %cst_70 = arith.constant dense<0.000000e+00> : vector<16xf32>
    %258 = vector.multi_reduction <add>, %257, %cst_70 [1] : vector<16x384xf32> to vector<16xf32>
    %259 = vector.shape_cast %258 : vector<16xf32> to vector<16x1xf32>
    %cst_71 = arith.constant 0.00333333341 : f32
    %260 = vector.broadcast %cst_71 : f32 to vector<16x1xf32>
    %261 = arith.mulf %259, %260 : vector<16x1xf32>
    %cst_72 = arith.constant 9.99999997E-7 : f32
    %262 = vector.broadcast %cst_72 : f32 to vector<16x1xf32>
    %263 = arith.addf %261, %262 : vector<16x1xf32>
    %264 = math.rsqrt %263 : vector<16x1xf32>
    %265 = vector.broadcast %264 : vector<16x1xf32> to vector<16x384xf32>
    %266 = arith.mulf %256, %265 : vector<16x384xf32>
    %267 = vector.broadcast %246 : vector<1x384xf32> to vector<16x384xf32>
    %268 = arith.mulf %266, %267 : vector<16x384xf32>
    %269 = vector.broadcast %248 : vector<1x384xf32> to vector<16x384xf32>
    %270 = arith.addf %268, %269 : vector<16x384xf32>
    %271 = arith.truncf %270 : vector<16x384xf32> to vector<16x384xbf16>
    %c0_73 = arith.constant 0 : index
    %c0_74 = arith.constant 0 : index
    %c0_75 = arith.constant 0 : index
    %272 = vector.load %arg8[%c0_73, %c0_74, %c0_75] : memref<1x384x128xbf16, #tpu.memory_space<vmem>>, vector<1x384x128xbf16>
    %273 = vector.shape_cast %272 : vector<1x384x128xbf16> to vector<384x128xbf16>
    %cst_76 = arith.constant dense<0.000000e+00> : vector<16x128xf32>
    %274 = tpu.matmul %271, %273, %cst_76 {dimension_numbers = #tpu.dot_dimension_numbers<[1], [0], [0], [1], [0, 0, 1, 1], [], []>} : vector<16x384xbf16>, vector<384x128xbf16>, vector<16x128xf32> -> vector<16x128xf32>
    %c0_77 = arith.constant 0 : index
    %c0_78 = arith.constant 0 : index
    %c0_79 = arith.constant 0 : index
    %275 = vector.load %arg9[%c0_77, %c0_78, %c0_79] : memref<1x1x128xf32, #tpu.memory_space<vmem>>, vector<1x1x128xf32>
    %276 = vector.shape_cast %275 : vector<1x1x128xf32> to vector<1x128xf32>
    %277 = vector.broadcast %276 : vector<1x128xf32> to vector<16x128xf32>
    %278 = arith.addf %274, %277 : vector<16x128xf32>
    %cst_80 = arith.constant 0.000000e+00 : f32
    %279 = vector.broadcast %cst_80 : f32 to vector<16x128xf32>
    %280 = arith.maximumf %278, %279 : vector<16x128xf32>
    %281 = arith.truncf %280 : vector<16x128xf32> to vector<16x128xbf16>
    %c0_81 = arith.constant 0 : index
    %c0_82 = arith.constant 0 : index
    %c0_83 = arith.constant 0 : index
    %282 = vector.load %arg10[%c0_81, %c0_82, %c0_83] : memref<1x128x384xbf16, #tpu.memory_space<vmem>>, vector<1x128x384xbf16>
    %283 = vector.shape_cast %282 : vector<1x128x384xbf16> to vector<128x384xbf16>
    %cst_84 = arith.constant dense<0.000000e+00> : vector<16x384xf32>
    %284 = tpu.matmul %281, %283, %cst_84 {dimension_numbers = #tpu.dot_dimension_numbers<[1], [0], [0], [1], [0, 0, 1, 1], [], []>} : vector<16x128xbf16>, vector<128x384xbf16>, vector<16x384xf32> -> vector<16x384xf32>
    %c0_85 = arith.constant 0 : index
    %c0_86 = arith.constant 0 : index
    %c0_87 = arith.constant 0 : index
    %285 = vector.load %arg11[%c0_85, %c0_86, %c0_87] : memref<1x1x384xf32, #tpu.memory_space<vmem>>, vector<1x1x384xf32>
    %286 = vector.shape_cast %285 : vector<1x1x384xf32> to vector<1x384xf32>
    %287 = vector.broadcast %286 : vector<1x384xf32> to vector<16x384xf32>
    %288 = arith.addf %284, %287 : vector<16x384xf32>
    %289 = arith.addf %270, %288 : vector<16x384xf32>
    %c0_88 = arith.constant 0 : index
    %c0_89 = arith.constant 0 : index
    %c0_90 = arith.constant 0 : index
    %290 = vector.load %arg12[%c0_88, %c0_89, %c0_90] : memref<1x1x384xf32, #tpu.memory_space<vmem>>, vector<1x1x384xf32>
    %291 = vector.shape_cast %290 : vector<1x1x384xf32> to vector<1x384xf32>
    %c0_91 = arith.constant 0 : index
    %c0_92 = arith.constant 0 : index
    %c0_93 = arith.constant 0 : index
    %292 = vector.load %arg13[%c0_91, %c0_92, %c0_93] : memref<1x1x384xf32, #tpu.memory_space<vmem>>, vector<1x1x384xf32>
    %293 = vector.shape_cast %292 : vector<1x1x384xf32> to vector<1x384xf32>
    %cst_94 = arith.constant dense<0.000000e+00> : vector<16xf32>
    %294 = vector.multi_reduction <add>, %289, %cst_94 [1] : vector<16x384xf32> to vector<16xf32>
    %295 = vector.shape_cast %294 : vector<16xf32> to vector<16x1xf32>
    %cst_95 = arith.constant 0.00333333341 : f32
    %296 = vector.broadcast %cst_95 : f32 to vector<16x1xf32>
    %297 = arith.mulf %295, %296 : vector<16x1xf32>
    %298 = vector.broadcast %297 : vector<16x1xf32> to vector<16x384xf32>
    %299 = arith.subf %289, %298 : vector<16x384xf32>
    %300 = vector.broadcast %4 : vector<1x384xf32> to vector<16x384xf32>
    %301 = arith.mulf %299, %300 : vector<16x384xf32>
    %302 = arith.mulf %301, %301 : vector<16x384xf32>
    %cst_96 = arith.constant dense<0.000000e+00> : vector<16xf32>
    %303 = vector.multi_reduction <add>, %302, %cst_96 [1] : vector<16x384xf32> to vector<16xf32>
    %304 = vector.shape_cast %303 : vector<16xf32> to vector<16x1xf32>
    %cst_97 = arith.constant 0.00333333341 : f32
    %305 = vector.broadcast %cst_97 : f32 to vector<16x1xf32>
    %306 = arith.mulf %304, %305 : vector<16x1xf32>
    %cst_98 = arith.constant 9.99999997E-7 : f32
    %307 = vector.broadcast %cst_98 : f32 to vector<16x1xf32>
    %308 = arith.addf %306, %307 : vector<16x1xf32>
    %309 = math.rsqrt %308 : vector<16x1xf32>
    %310 = vector.broadcast %309 : vector<16x1xf32> to vector<16x384xf32>
    %311 = arith.mulf %301, %310 : vector<16x384xf32>
    %312 = vector.broadcast %291 : vector<1x384xf32> to vector<16x384xf32>
    %313 = arith.mulf %311, %312 : vector<16x384xf32>
    %314 = vector.broadcast %293 : vector<1x384xf32> to vector<16x384xf32>
    %315 = arith.addf %313, %314 : vector<16x384xf32>
    %c0_99 = arith.constant 0 : index
    %c0_100 = arith.constant 0 : index
    %316 = vector.load %arg25[%c0_99, %c0_100] : memref<16x384xf32, #tpu.memory_space<vmem>>, vector<16x384xf32>
    tpu.vector_store %arg25[%c0_99, %c0_100], %315 {strides = array<i32>} : memref<16x384xf32, #tpu.memory_space<vmem>>, vector<16x384xf32>,
    %c5_i32 = arith.constant 5 : i32
    %317 = arith.cmpi eq, %arg0, %c5_i32 : i32
    %318 = arith.extui %317 : i1 to i32
    %c0_i32_101 = arith.constant 0 : i32
    %319 = arith.cmpi ne, %318, %c0_i32_101 : i32
    scf.if %319 {
      %320 = arith.truncf %315 : vector<16x384xf32> to vector<16x384xbf16>
      %c0_102 = arith.constant 0 : index
      %c0_103 = arith.constant 0 : index
      %321 = vector.load %arg14[%c0_102, %c0_103] : memref<384x128xbf16, #tpu.memory_space<vmem>>, vector<384x128xbf16>
      %cst_104 = arith.constant dense<0.000000e+00> : vector<16x128xf32>
      %322 = tpu.matmul %320, %321, %cst_104 {dimension_numbers = #tpu.dot_dimension_numbers<[1], [0], [0], [1], [0, 0, 1, 1], [], []>} : vector<16x384xbf16>, vector<384x128xbf16>, vector<16x128xf32> -> vector<16x128xf32>
      %c0_105 = arith.constant 0 : index
      %c0_106 = arith.constant 0 : index
      %323 = vector.load %arg15[%c0_105, %c0_106] : memref<1x128xf32, #tpu.memory_space<vmem>>, vector<1x128xf32>
      %324 = vector.broadcast %323 : vector<1x128xf32> to vector<16x128xf32>
      %325 = arith.addf %322, %324 : vector<16x128xf32>
      %cst_107 = arith.constant 0.000000e+00 : f32
      %326 = vector.broadcast %cst_107 : f32 to vector<16x128xf32>
      %327 = arith.maximumf %325, %326 : vector<16x128xf32>
      %328 = arith.truncf %327 : vector<16x128xf32> to vector<16x128xbf16>
      %c0_108 = arith.constant 0 : index
      %c0_109 = arith.constant 0 : index
      %329 = vector.load %arg16[%c0_108, %c0_109] : memref<128x128xbf16, #tpu.memory_space<vmem>>, vector<128x128xbf16>
      %cst_110 = arith.constant dense<0.000000e+00> : vector<16x128xf32>
      %330 = tpu.matmul %328, %329, %cst_110 {dimension_numbers = #tpu.dot_dimension_numbers<[1], [0], [0], [1], [0, 0, 1, 1], [], []>} : vector<16x128xbf16>, vector<128x128xbf16>, vector<16x128xf32> -> vector<16x128xf32>
      %c0_111 = arith.constant 0 : index
      %c0_112 = arith.constant 0 : index
      %331 = vector.load %arg17[%c0_111, %c0_112] : memref<1x128xf32, #tpu.memory_space<vmem>>, vector<1x128xf32>
      %332 = vector.broadcast %331 : vector<1x128xf32> to vector<16x128xf32>
      %333 = arith.addf %330, %332 : vector<16x128xf32>
      %cst_113 = arith.constant 0.000000e+00 : f32
      %334 = vector.broadcast %cst_113 : f32 to vector<16x128xf32>
      %335 = arith.maximumf %333, %334 : vector<16x128xf32>
      %c0_114 = arith.constant 0 : index
      %c0_115 = arith.constant 0 : index
      %336 = vector.load %arg18[%c0_114, %c0_115] : memref<1x128xf32, #tpu.memory_space<vmem>>, vector<1x128xf32>
      %337 = vector.broadcast %336 : vector<1x128xf32> to vector<16x128xf32>
      %338 = arith.mulf %335, %337 : vector<16x128xf32>
      %cst_116 = arith.constant dense<0.000000e+00> : vector<16xf32>
      %339 = vector.multi_reduction <add>, %338, %cst_116 [1] : vector<16x128xf32> to vector<16xf32>
      %340 = vector.shape_cast %339 : vector<16xf32> to vector<16x1xf32>
      %c0_117 = arith.constant 0 : index
      %c0_118 = arith.constant 0 : index
      %341 = vector.load %arg19[%c0_117, %c0_118] : memref<1x1xf32, #tpu.memory_space<vmem>>, vector<1x1xf32>
      %342 = vector.broadcast %341 : vector<1x1xf32> to vector<16x1xf32>
      %343 = arith.addf %340, %342 : vector<16x1xf32>
      %344 = vector.shape_cast %343 : vector<16x1xf32> to vector<2x8x1xf32>
      %c0_119 = arith.constant 0 : index
      %c0_120 = arith.constant 0 : index
      %c0_121 = arith.constant 0 : index
      %345 = vector.load %arg3[%c0_119, %c0_120, %c0_121] : memref<2x8x1xf32, #tpu.memory_space<vmem>>, vector<2x8x1xf32>
      %cst_122 = arith.constant 0.000000e+00 : f32
      %346 = vector.broadcast %cst_122 : f32 to vector<2x8x1xf32>
      %347 = arith.cmpf ogt, %345, %346 : vector<2x8x1xf32>
      %cst_123 = arith.constant -1.000000e+09 : f32
      %348 = vector.broadcast %cst_123 : f32 to vector<2x8x1xf32>
      %349 = arith.select %347, %344, %348 : vector<2x8x1xi1>, vector<2x8x1xf32>
      %cst_124 = arith.constant dense<0xFF800000> : vector<2x1xf32>
      %350 = vector.multi_reduction <maximumf>, %349, %cst_124 [1] : vector<2x8x1xf32> to vector<2x1xf32>
      %351 = vector.shape_cast %350 : vector<2x1xf32> to vector<2x1x1xf32>
      %352 = vector.broadcast %351 : vector<2x1x1xf32> to vector<2x8x1xf32>
      %353 = arith.subf %349, %352 : vector<2x8x1xf32>
      %354 = math.exp %353 : vector<2x8x1xf32>
      %cst_125 = arith.constant dense<0.000000e+00> : vector<2x1xf32>
      %355 = vector.multi_reduction <add>, %354, %cst_125 [1] : vector<2x8x1xf32> to vector<2x1xf32>
      %356 = vector.shape_cast %355 : vector<2x1xf32> to vector<2x1x1xf32>
      %357 = tpu.reciprocal %356 {approx = true} : vector<2x1x1xf32> -> vector<2x1x1xf32>
      %358 = vector.broadcast %357 : vector<2x1x1xf32> to vector<2x8x1xf32>
      %359 = arith.mulf %354, %358 : vector<2x8x1xf32>
      %360 = vector.shape_cast %315 : vector<16x384xf32> to vector<2x8x384xf32>
      %361 = vector.broadcast %359 : vector<2x8x1xf32> to vector<2x8x384xf32>
      %362 = arith.mulf %361, %360 : vector<2x8x384xf32>
      %cst_126 = arith.constant dense<0.000000e+00> : vector<2x384xf32>
      %363 = vector.multi_reduction <add>, %362, %cst_126 [1] : vector<2x8x384xf32> to vector<2x384xf32>
      %364 = arith.truncf %363 : vector<2x384xf32> to vector<2x384xbf16>
      %c0_127 = arith.constant 0 : index
      %c0_128 = arith.constant 0 : index
      %365 = vector.load %arg20[%c0_127, %c0_128] : memref<384x128xbf16, #tpu.memory_space<vmem>>, vector<384x128xbf16>
      %cst_129 = arith.constant dense<0.000000e+00> : vector<2x128xf32>
      %366 = tpu.matmul %364, %365, %cst_129 {dimension_numbers = #tpu.dot_dimension_numbers<[1], [0], [0], [1], [0, 0, 1, 1], [], []>} : vector<2x384xbf16>, vector<384x128xbf16>, vector<2x128xf32> -> vector<2x128xf32>
      %c0_130 = arith.constant 0 : index
      %c0_131 = arith.constant 0 : index
      %367 = vector.load %arg21[%c0_130, %c0_131] : memref<1x128xf32, #tpu.memory_space<vmem>>, vector<1x128xf32>
      %368 = vector.broadcast %367 : vector<1x128xf32> to vector<2x128xf32>
      %369 = arith.addf %366, %368 : vector<2x128xf32>
      %cst_132 = arith.constant 0.000000e+00 : f32
      %370 = vector.broadcast %cst_132 : f32 to vector<2x128xf32>
      %371 = arith.maximumf %369, %370 : vector<2x128xf32>
      %c0_133 = arith.constant 0 : index
      %c0_134 = arith.constant 0 : index
      %372 = vector.load %arg22[%c0_133, %c0_134] : memref<128x128xf32, #tpu.memory_space<vmem>>, vector<128x128xf32>
      %cst_135 = arith.constant dense<0.000000e+00> : vector<2x128xf32>
      %373 = tpu.matmul %371, %372, %cst_135 {dimension_numbers = #tpu.dot_dimension_numbers<[1], [0], [0], [1], [0, 0, 1, 1], [], []>} : vector<2x128xf32>, vector<128x128xf32>, vector<2x128xf32> -> vector<2x128xf32>
      %c0_136 = arith.constant 0 : index
      %c0_137 = arith.constant 0 : index
      %374 = vector.load %arg23[%c0_136, %c0_137] : memref<1x128xf32, #tpu.memory_space<vmem>>, vector<1x128xf32>
      %375 = vector.broadcast %374 : vector<1x128xf32> to vector<2x128xf32>
      %376 = arith.addf %373, %375 : vector<2x128xf32>
      %377 = arith.negf %376 : vector<2x128xf32>
      %378 = math.exp %377 : vector<2x128xf32>
      %cst_138 = arith.constant 1.000000e+00 : f32
      %379 = vector.broadcast %cst_138 : f32 to vector<2x128xf32>
      %380 = arith.addf %379, %378 : vector<2x128xf32>
      %381 = arith.divf %379, %380 : vector<2x128xf32>
      %c0_139 = arith.constant 0 : index
      %c0_140 = arith.constant 0 : index
      %382 = vector.load %arg24[%c0_139, %c0_140] : memref<2x128xf32, #tpu.memory_space<vmem>>, vector<2x128xf32>
      tpu.vector_store %arg24[%c0_139, %c0_140], %381 {strides = array<i32>} : memref<2x128xf32, #tpu.memory_space<vmem>>, vector<2x128xf32>,
    } else {
    }
    return
  }
  func.func @transform_0(%arg0: i32) -> (i32, i32) {
    %c0_i32 = arith.constant 0 : i32
    %c0_i32_0 = arith.constant 0 : i32
    %c0_i32_1 = arith.constant 0 : i32
    return %c0_i32, %c0_i32_0 : i32, i32
  }
  func.func @transform_1(%arg0: i32) -> (i32, i32, i32) {
    %c0_i32 = arith.constant 0 : i32
    %c0_i32_0 = arith.constant 0 : i32
    %c0_i32_1 = arith.constant 0 : i32
    %c0_i32_2 = arith.constant 0 : i32
    return %c0_i32, %c0_i32_0, %c0_i32_1 : i32, i32, i32
  }
  func.func @transform_2(%arg0: i32) -> (i32, i32, i32) {
    %c0_i32 = arith.constant 0 : i32
    %c0_i32_0 = arith.constant 0 : i32
    %c0_i32_1 = arith.constant 0 : i32
    %c0_i32_2 = arith.constant 0 : i32
    return %c0_i32, %c0_i32_0, %c0_i32_1 : i32, i32, i32
  }
  func.func @transform_3(%arg0: i32) -> (i32, i32, i32) {
    %c0_i32 = arith.constant 0 : i32
    %c0_i32_0 = arith.constant 0 : i32
    %c0_i32_1 = arith.constant 0 : i32
    return %arg0, %c0_i32, %c0_i32_0 : i32, i32, i32
  }
  func.func @transform_4(%arg0: i32) -> (i32, i32, i32) {
    %c0_i32 = arith.constant 0 : i32
    %c0_i32_0 = arith.constant 0 : i32
    %c0_i32_1 = arith.constant 0 : i32
    return %arg0, %c0_i32, %c0_i32_0 : i32, i32, i32
  }
  func.func @transform_5(%arg0: i32) -> (i32, i32, i32) {
    %c0_i32 = arith.constant 0 : i32
    %c0_i32_0 = arith.constant 0 : i32
    %c0_i32_1 = arith.constant 0 : i32
    return %arg0, %c0_i32, %c0_i32_0 : i32, i32, i32
  }
  func.func @transform_6(%arg0: i32) -> (i32, i32, i32) {
    %c0_i32 = arith.constant 0 : i32
    %c0_i32_0 = arith.constant 0 : i32
    %c0_i32_1 = arith.constant 0 : i32
    return %arg0, %c0_i32, %c0_i32_0 : i32, i32, i32
  }
  func.func @transform_7(%arg0: i32) -> (i32, i32, i32) {
    %c0_i32 = arith.constant 0 : i32
    %c0_i32_0 = arith.constant 0 : i32
    %c0_i32_1 = arith.constant 0 : i32
    return %arg0, %c0_i32, %c0_i32_0 : i32, i32, i32
  }
  func.func @transform_8(%arg0: i32) -> (i32, i32, i32) {
    %c0_i32 = arith.constant 0 : i32
    %c0_i32_0 = arith.constant 0 : i32
    %c0_i32_1 = arith.constant 0 : i32
    return %arg0, %c0_i32, %c0_i32_0 : i32, i32, i32
  }
  func.func @transform_9(%arg0: i32) -> (i32, i32, i32) {
    %c0_i32 = arith.constant 0 : i32
    %c0_i32_0 = arith.constant 0 : i32
    %c0_i32_1 = arith.constant 0 : i32
    return %arg0, %c0_i32, %c0_i32_0 : i32, i32, i32
  }
  func.func @transform_10(%arg0: i32) -> (i32, i32, i32) {
    %c0_i32 = arith.constant 0 : i32
    %c0_i32_0 = arith.constant 0 : i32
    %c0_i32_1 = arith.constant 0 : i32
    return %arg0, %c0_i32, %c0_i32_0 : i32, i32, i32
  }
  func.func @transform_11(%arg0: i32) -> (i32, i32, i32) {
    %c0_i32 = arith.constant 0 : i32
    %c0_i32_0 = arith.constant 0 : i32
    %c0_i32_1 = arith.constant 0 : i32
    return %arg0, %c0_i32, %c0_i32_0 : i32, i32, i32
  }
  func.func @transform_12(%arg0: i32) -> (i32, i32, i32) {
    %c0_i32 = arith.constant 0 : i32
    %c0_i32_0 = arith.constant 0 : i32
    %c0_i32_1 = arith.constant 0 : i32
    return %arg0, %c0_i32, %c0_i32_0 : i32, i32, i32
  }
  func.func @transform_13(%arg0: i32) -> (i32, i32) {
    %c0_i32 = arith.constant 0 : i32
    %c0_i32_0 = arith.constant 0 : i32
    %c0_i32_1 = arith.constant 0 : i32
    return %c0_i32, %c0_i32_0 : i32, i32
  }
  func.func @transform_14(%arg0: i32) -> (i32, i32) {
    %c0_i32 = arith.constant 0 : i32
    %c0_i32_0 = arith.constant 0 : i32
    %c0_i32_1 = arith.constant 0 : i32
    return %c0_i32, %c0_i32_0 : i32, i32
  }
  func.func @transform_15(%arg0: i32) -> (i32, i32) {
    %c0_i32 = arith.constant 0 : i32
    %c0_i32_0 = arith.constant 0 : i32
    %c0_i32_1 = arith.constant 0 : i32
    return %c0_i32, %c0_i32_0 : i32, i32
  }
  func.func @transform_16(%arg0: i32) -> (i32, i32) {
    %c0_i32 = arith.constant 0 : i32
    %c0_i32_0 = arith.constant 0 : i32
    %c0_i32_1 = arith.constant 0 : i32
    return %c0_i32, %c0_i32_0 : i32, i32
  }
  func.func @transform_17(%arg0: i32) -> (i32, i32) {
    %c0_i32 = arith.constant 0 : i32
    %c0_i32_0 = arith.constant 0 : i32
    %c0_i32_1 = arith.constant 0 : i32
    return %c0_i32, %c0_i32_0 : i32, i32
  }
  func.func @transform_18(%arg0: i32) -> (i32, i32) {
    %c0_i32 = arith.constant 0 : i32
    %c0_i32_0 = arith.constant 0 : i32
    %c0_i32_1 = arith.constant 0 : i32
    return %c0_i32, %c0_i32_0 : i32, i32
  }
  func.func @transform_19(%arg0: i32) -> (i32, i32) {
    %c0_i32 = arith.constant 0 : i32
    %c0_i32_0 = arith.constant 0 : i32
    %c0_i32_1 = arith.constant 0 : i32
    return %c0_i32, %c0_i32_0 : i32, i32
  }
  func.func @transform_20(%arg0: i32) -> (i32, i32) {
    %c0_i32 = arith.constant 0 : i32
    %c0_i32_0 = arith.constant 0 : i32
    %c0_i32_1 = arith.constant 0 : i32
    return %c0_i32, %c0_i32_0 : i32, i32
  }
  func.func @transform_21(%arg0: i32) -> (i32, i32) {
    %c0_i32 = arith.constant 0 : i32
    %c0_i32_0 = arith.constant 0 : i32
    %c0_i32_1 = arith.constant 0 : i32
    return %c0_i32, %c0_i32_0 : i32, i32
  }
  func.func @transform_22(%arg0: i32) -> (i32, i32) {
    %c0_i32 = arith.constant 0 : i32
    %c0_i32_0 = arith.constant 0 : i32
    %c0_i32_1 = arith.constant 0 : i32
    return %c0_i32, %c0_i32_0 : i32, i32
  }
  func.func @transform_23(%arg0: i32) -> (i32, i32) {
    %c0_i32 = arith.constant 0 : i32
    %c0_i32_0 = arith.constant 0 : i32
    %c0_i32_1 = arith.constant 0 : i32
    return %c0_i32, %c0_i32_0 : i32, i32
  }
}

</mosaic_0001>

<llo_original>
// kernel: transformer_linear_attn.1
$region0: #{transformer_linear_attn.1}
  #allocation0 [shape = 'u32[]', space=smem, size = 0x4, offset = 0x4, fixed_abs, tag = 'smem constant byte address 0x4 - core index']
  #allocation1 [shape = 'u32[144,128]{1,0:T(1,128)}', space=vmem, size = 0x12000, scoped, tag = 'internal scratch']
  #allocation2 [shape = 'f32[16,384]{1,0:T(8,128)}', space=vmem, size = 0x6000, scoped, tag = 'scratch operand']
  #allocation3 [shape = 'f32[1,1]{1,0:T(1,128)S(1)}', space=vmem, size = 0x200, scoped, tag = 'scoped memory for transformer_linear_attn.1']
  %s0 = inlined_call_operand.vmem [shape: f32[16,384], index: 0, kind: input, shape index: {}]
  %s1 = inlined_call_operand.hbm [shape: f32[2,1,8], index: 1, kind: input, shape index: {}]
  %s2 = inlined_call_operand.vmem [shape: f32[2,8,1], index: 2, kind: input, shape index: {}]
  %s3 = inlined_call_operand.hbm [shape: bf16[6,384,1536], index: 3, kind: input, shape index: {}]
  %s4 = inlined_call_operand.hbm [shape: bf16[6,512,384], index: 4, kind: input, shape index: {}]
  %s5 = inlined_call_operand.hbm [shape: f32[6,1,384], index: 5, kind: input, shape index: {}]
  %s6 = inlined_call_operand.hbm [shape: f32[6,1,384], index: 6, kind: input, shape index: {}]
  %s7 = inlined_call_operand.hbm [shape: bf16[6,384,128], index: 7, kind: input, shape index: {}]
  %s8 = inlined_call_operand.hbm [shape: f32[6,1,128], index: 8, kind: input, shape index: {}]
  %s9 = inlined_call_operand.hbm [shape: bf16[6,128,384], index: 9, kind: input, shape index: {}]
  %s10 = inlined_call_operand.hbm [shape: f32[6,1,384], index: 10, kind: input, shape index: {}]
  %s11 = inlined_call_operand.hbm [shape: f32[6,1,384], index: 11, kind: input, shape index: {}]
  %s12 = inlined_call_operand.hbm [shape: f32[6,1,384], index: 12, kind: input, shape index: {}]
  %s13 = inlined_call_operand.hbm [shape: bf16[384,128], index: 13, kind: input, shape index: {}]
  %s14 = inlined_call_operand.hbm [shape: f32[1,128], index: 14, kind: input, shape index: {}]
  %s15 = inlined_call_operand.hbm [shape: bf16[128,128], index: 15, kind: input, shape index: {}]
  %s16 = inlined_call_operand.hbm [shape: f32[1,128], index: 16, kind: input, shape index: {}]
  %s17 = inlined_call_operand.hbm [shape: f32[1,128], index: 17, kind: input, shape index: {}]
  %s18 = inlined_call_operand.<no memory space> [shape: f32[1,1], index: 18, kind: input, shape index: {}]
  %s19 = inlined_call_operand.hbm [shape: bf16[384,128], index: 19, kind: input, shape index: {}]
  %s20 = inlined_call_operand.hbm [shape: f32[1,128], index: 20, kind: input, shape index: {}]
  %s21 = inlined_call_operand.hbm [shape: f32[128,128], index: 21, kind: input, shape index: {}]
  %s22 = inlined_call_operand.hbm [shape: f32[1,128], index: 22, kind: input, shape index: {}]
  %s23 = inlined_call_operand.hbm [shape: f32[2,128], index: 23, kind: output, shape index: {}]
  %s24 = sld [smem:[#allocation0]]
  $region213: #{transformer_linear_attn.1} parent=0
    _
  %s26 = ssub.s32 1, %s24
  %s27 = scalar_select 0, %s26, %s24
  %v28 = vstv %s18
  %29 = vst [vmem:[#allocation3] sm:$0x1] %v28
  $region1: #{transformer_linear_attn.1} parent=0
    #allocation4 [shape = 'u8[1024]{0}', space=vmem, size = 0x400, scoped, tag = 'input window, operand 1, single buffered']
    #allocation5 [shape = 's32[2]{0}', space=sflag, size = 0x8, scoped, tag = 'scoped memory for transformer_linear_attn.1']
    #allocation6 [shape = 's32[2]{0}', space=sflag, size = 0x8, scoped, tag = 'scoped memory for transformer_linear_attn.1']
    #allocation7 [shape = 'u8[2359296]{0}', space=vmem, size = 0x240000, scoped, tag = 'input window, operand 3']
    #allocation8 [shape = 's32[2]{0}', space=sflag, size = 0x8, scoped, tag = 'scoped memory for transformer_linear_attn.1']
    #allocation9 [shape = 'u8[786432]{0}', space=vmem, size = 0xc0000, scoped, tag = 'input window, operand 4']
    #allocation10 [shape = 'u8[3072]{0}', space=vmem, size = 0xc00, scoped, tag = 'input window, operand 5']
    #allocation11 [shape = 's32[2]{0}', space=sflag, size = 0x8, scoped, tag = 'scoped memory for transformer_linear_attn.1']
    #allocation12 [shape = 'u8[3072]{0}', space=vmem, size = 0xc00, scoped, tag = 'input window, operand 6']
    #allocation13 [shape = 'u8[196608]{0}', space=vmem, size = 0x30000, scoped, tag = 'input window, operand 7']
    #allocation14 [shape = 's32[2]{0}', space=sflag, size = 0x8, scoped, tag = 'scoped memory for transformer_linear_attn.1']
    #allocation15 [shape = 'u8[1024]{0}', space=vmem, size = 0x400, scoped, tag = 'input window, operand 8']
    #allocation16 [shape = 'u8[196608]{0}', space=vmem, size = 0x30000, scoped, tag = 'input window, operand 9']
    #allocation17 [shape = 's32[2]{0}', space=sflag, size = 0x8, scoped, tag = 'scoped memory for transformer_linear_attn.1']
    #allocation18 [shape = 'u8[3072]{0}', space=vmem, size = 0xc00, scoped, tag = 'input window, operand 10']
    #allocation19 [shape = 'u8[3072]{0}', space=vmem, size = 0xc00, scoped, tag = 'input window, operand 11']
    #allocation20 [shape = 's32[2]{0}', space=sflag, size = 0x8, scoped, tag = 'scoped memory for transformer_linear_attn.1']
    #allocation21 [shape = 'u8[3072]{0}', space=vmem, size = 0xc00, scoped, tag = 'input window, operand 12']
    #allocation22 [shape = 'u8[98304]{0}', space=vmem, size = 0x18000, scoped, tag = 'input window, operand 13, single buffered']
    #allocation23 [shape = 's32[1]{0}', space=sflag, size = 0x4, scoped, tag = 'scoped memory for transformer_linear_attn.1']
    #allocation24 [shape = 'u8[512]{0}', space=vmem, size = 0x400, scoped, tag = 'input window, operand 14, single buffered']
    #allocation25 [shape = 'u8[32768]{0}', space=vmem, size = 0x8000, scoped, tag = 'input window, operand 15, single buffered']
    #allocation26 [shape = 's32[1]{0}', space=sflag, size = 0x4, scoped, tag = 'scoped memory for transformer_linear_attn.1']
    #allocation27 [shape = 'u8[512]{0}', space=vmem, size = 0x400, scoped, tag = 'input window, operand 16, single buffered']
    #allocation28 [shape = 'u8[512]{0}', space=vmem, size = 0x400, scoped, tag = 'input window, operand 17, single buffered']
    #allocation29 [shape = 's32[1]{0}', space=sflag, size = 0x4, scoped, tag = 'scoped memory for transformer_linear_attn.1']
    #allocation30 [shape = 'u8[98304]{0}', space=vmem, size = 0x18000, scoped, tag = 'input window, operand 19, single buffered']
    #allocation31 [shape = 'u8[512]{0}', space=vmem, size = 0x400, scoped, tag = 'input window, operand 20, single buffered']
    #allocation32 [shape = 's32[1]{0}', space=sflag, size = 0x4, scoped, tag = 'scoped memory for transformer_linear_attn.1']
    #allocation33 [shape = 'u8[65536]{0}', space=vmem, size = 0x10000, scoped, tag = 'input window, operand 21, single buffered']
    #allocation34 [shape = 'u8[512]{0}', space=vmem, size = 0x400, scoped, tag = 'input window, operand 22, single buffered']
    #allocation35 [shape = 's32[1]{0}', space=sflag, size = 0x4, scoped, tag = 'scoped memory for transformer_linear_attn.1']
    #allocation36 [shape = 'u8[1024]{0}', space=vmem, size = 0x400, scoped, tag = 'output window, operand 0, single buffered']
    %30 = vsyncpa [#allocation5], 0
    %31 = vsyncpa [#allocation8], 0
    %s32 = scalar_lea.sflag [#allocation8], 1
    %33 = vsyncpa %s32, 0
    %34 = vsyncpa [#allocation11], 0
    %s35 = scalar_lea.sflag [#allocation11], 1
    %36 = vsyncpa %s35, 0
    %37 = vsyncpa [#allocation14], 0
    %s38 = scalar_lea.sflag [#allocation14], 1
    %39 = vsyncpa %s38, 0
    %40 = vsyncpa [#allocation17], 0
    %s41 = scalar_lea.sflag [#allocation17], 1
    %42 = vsyncpa %s41, 0
    %43 = vsyncpa [#allocation20], 0
    %s44 = scalar_lea.sflag [#allocation20], 1
    %45 = vsyncpa %s44, 0
    %46 = vsyncpa [#allocation23], 0
    %47 = vsyncpa [#allocation26], 0
    %48 = vsyncpa [#allocation29], 0
    %49 = vsyncpa [#allocation32], 0
    %50 = vsyncpa [#allocation35], 0
    %51 = vsyncpa [#allocation6], 0
    loop: start=0, step=1, limit=8
    $region2: #{transformer_linear_attn.1} parent=1 // loop_pre_header
      _
    $region3: #{transformer_linear_attn.1} parent=1 // loop_header
      %s53 = sphi 0, %s57
      %p54 = scmp.ge.s32.totalorder %s53, 8
      %s61 = sphi 0, %s61
      %s63 = sphi 0, %s61
      %s64 = sphi 0, %s63
      %s78 = sphi 0, %s64
      %s82 = sphi 0, %s82
      %s84 = sphi 0, %s82
      %s85 = sphi 0, %s84
      %s99 = sphi 0, %s85
      %s103 = sphi 0, %s103
      %s105 = sphi 0, %s103
      %s106 = sphi 0, %s105
      %s120 = sphi 0, %s106
      %s126 = sphi 0, %s128
      %s129 = sphi 0, %s126
      %s130 = sphi 0, %s129
      %s146 = sphi 0, %s130
      %s152 = sphi 0, %s154
      %s155 = sphi 0, %s152
      %s156 = sphi 0, %s155
      %s172 = sphi 0, %s156
      %s178 = sphi 0, %s180
      %s181 = sphi 0, %s178
      %s182 = sphi 0, %s181
      %s198 = sphi 0, %s182
      %s204 = sphi 0, %s206
      %s207 = sphi 0, %s204
      %s208 = sphi 0, %s207
      %s224 = sphi 0, %s208
      %s230 = sphi 0, %s232
      %s233 = sphi 0, %s230
      %s234 = sphi 0, %s233
      %s250 = sphi 0, %s234
      %s256 = sphi 0, %s258
      %s259 = sphi 0, %s256
      %s260 = sphi 0, %s259
      %s276 = sphi 0, %s260
      %s282 = sphi 0, %s284
      %s285 = sphi 0, %s282
      %s286 = sphi 0, %s285
      %s302 = sphi 0, %s286
      %s308 = sphi 0, %s310
      %s311 = sphi 0, %s308
      %s312 = sphi 0, %s311
      %s328 = sphi 0, %s312
      %s334 = sphi 0, %s336
      %s337 = sphi 0, %s334
      %s338 = sphi 0, %s337
      %s354 = sphi 0, %s338
      %s360 = sphi 0, %s362
      %s363 = sphi 0, %s360
      %s364 = sphi 0, %s363
      %s380 = sphi 0, %s364
      %s384 = sphi 0, %s384
      %s386 = sphi 0, %s384
      %s387 = sphi 0, %s386
      %s401 = sphi 0, %s387
      %s405 = sphi 0, %s405
      %s407 = sphi 0, %s405
      %s408 = sphi 0, %s407
      %s422 = sphi 0, %s408
      %s426 = sphi 0, %s426
      %s428 = sphi 0, %s426
      %s429 = sphi 0, %s428
      %s443 = sphi 0, %s429
      %s447 = sphi 0, %s447
      %s449 = sphi 0, %s447
      %s450 = sphi 0, %s449
      %s464 = sphi 0, %s450
      %s468 = sphi 0, %s468
      %s470 = sphi 0, %s468
      %s471 = sphi 0, %s470
      %s485 = sphi 0, %s471
      %s489 = sphi 0, %s489
      %s491 = sphi 0, %s489
      %s492 = sphi 0, %s491
      %s506 = sphi 0, %s492
      %s510 = sphi 0, %s510
      %s512 = sphi 0, %s510
      %s513 = sphi 0, %s512
      %s527 = sphi 0, %s513
      %s531 = sphi 0, %s531
      %s533 = sphi 0, %s531
      %s534 = sphi 0, %s533
      %s548 = sphi 0, %s534
      %s552 = sphi 0, %s552
      %s554 = sphi 0, %s552
      %s555 = sphi 0, %s554
      %s569 = sphi 0, %s555
      %s573 = sphi 0, %s573
      %s575 = sphi 0, %s573
      %s576 = sphi 0, %s575
      %s590 = sphi 0, %s576
      %s594 = sphi 0, %s594
      %s596 = sphi 0, %s594
      %s597 = sphi 0, %s596
      %s611 = sphi 0, %s597
    $region4: #{transformer_linear_attn.1} parent=1 // loop_header_branch
      %56 = sbr.rel (%p54) target = $region8
    $region5: #{transformer_linear_attn.1} parent=1 // loop_body
      %s58 = ssub.s32 %s53, 1
      %s59 = ssub.s32 %s53, 2
      %s60 = sadd.s32 %s53, 1
      %s62 = sadd.s32 %s61, 1
      %p65 = scmp.eq.s32.totalorder %s53, 5
      %p66 = scmp.ne.s32.totalorder %s61, %s63
      %p67 = scmp.eq.s32.totalorder %s53, 0
      %p68 = por %p66, %p67
      %p69 = scmp.ne.s32.totalorder %s61, %s63
      %p70 = scmp.eq.s32.totalorder %s58, 5
      %p71 = por %p69, %p70
      %p72 = scmp.ne.s32.totalorder %s63, %s64
      %p73 = scmp.eq.s32.totalorder %s58, 0
      %p74 = por %p72, %p73
      %p75 = scmp.ne.s32.totalorder %s63, %s64
      %p76 = scmp.eq.s32.totalorder %s59, 5
      %p77 = por %p75, %p76
      %p79 = scmp.ne.s32.totalorder %s64, %s78
      %p80 = scmp.eq.s32.totalorder %s59, 0
      %p81 = por %p79, %p80
      %s83 = sadd.s32 %s82, 1
      %p86 = scmp.eq.s32.totalorder %s53, 5
      %p87 = scmp.ne.s32.totalorder %s82, %s84
      %p88 = scmp.eq.s32.totalorder %s53, 0
      %p89 = por %p87, %p88
      %p90 = scmp.ne.s32.totalorder %s82, %s84
      %p91 = scmp.eq.s32.totalorder %s58, 5
      %p92 = por %p90, %p91
      %p93 = scmp.ne.s32.totalorder %s84, %s85
      %p94 = scmp.eq.s32.totalorder %s58, 0
      %p95 = por %p93, %p94
      %p96 = scmp.ne.s32.totalorder %s84, %s85
      %p97 = scmp.eq.s32.totalorder %s59, 5
      %p98 = por %p96, %p97
      %p100 = scmp.ne.s32.totalorder %s85, %s99
      %p101 = scmp.eq.s32.totalorder %s59, 0
      %p102 = por %p100, %p101
      %s104 = sadd.s32 %s103, 1
      %p107 = scmp.eq.s32.totalorder %s53, 5
      %p108 = scmp.ne.s32.totalorder %s103, %s105
      %p109 = scmp.eq.s32.totalorder %s53, 0
      %p110 = por %p108, %p109
      %p111 = scmp.ne.s32.totalorder %s103, %s105
      %p112 = scmp.eq.s32.totalorder %s58, 5
      %p113 = por %p111, %p112
      %p114 = scmp.ne.s32.totalorder %s105, %s106
      %p115 = scmp.eq.s32.totalorder %s58, 0
      %p116 = por %p114, %p115
      %p117 = scmp.ne.s32.totalorder %s105, %s106
      %p118 = scmp.eq.s32.totalorder %s59, 5
      %p119 = por %p117, %p118
      %p121 = scmp.ne.s32.totalorder %s106, %s120
      %p122 = scmp.eq.s32.totalorder %s59, 0
      %p123 = por %p121, %p122
      %s124 = ssub.s32 %s53, %s60
      %p125 = scmp.eq.s32.totalorder %s124, 0
      %s127 = sadd.s32 %s126, 1
      %s128 = scalar_select %p125, %s126, %s127
      %p131 = pneg %p125
      %p132 = scmp.eq.s32.totalorder %s53, 5
      %p133 = por %p131, %p132
      %p134 = scmp.ne.s32.totalorder %s126, %s129
      %p135 = scmp.eq.s32.totalorder %s53, 0
      %p136 = por %p134, %p135
      %p137 = scmp.ne.s32.totalorder %s126, %s129
      %p138 = scmp.eq.s32.totalorder %s58, 5
      %p139 = por %p137, %p138
      %p140 = scmp.ne.s32.totalorder %s129, %s130
      %p141 = scmp.eq.s32.totalorder %s58, 0
      %p142 = por %p140, %p141
      %p143 = scmp.ne.s32.totalorder %s129, %s130
      %p144 = scmp.eq.s32.totalorder %s59, 5
      %p145 = por %p143, %p144
      %p147 = scmp.ne.s32.totalorder %s130, %s146
      %p148 = scmp.eq.s32.totalorder %s59, 0
      %p149 = por %p147, %p148
      %s150 = ssub.s32 %s53, %s60
      %p151 = scmp.eq.s32.totalorder %s150, 0
      %s153 = sadd.s32 %s152, 1
      %s154 = scalar_select %p151, %s152, %s153
      %p157 = pneg %p151
      %p158 = scmp.eq.s32.totalorder %s53, 5
      %p159 = por %p157, %p158
      %p160 = scmp.ne.s32.totalorder %s152, %s155
      %p161 = scmp.eq.s32.totalorder %s53, 0
      %p162 = por %p160, %p161
      %p163 = scmp.ne.s32.totalorder %s152, %s155
      %p164 = scmp.eq.s32.totalorder %s58, 5
      %p165 = por %p163, %p164
      %p166 = scmp.ne.s32.totalorder %s155, %s156
      %p167 = scmp.eq.s32.totalorder %s58, 0
      %p168 = por %p166, %p167
      %p169 = scmp.ne.s32.totalorder %s155, %s156
      %p170 = scmp.eq.s32.totalorder %s59, 5
      %p171 = por %p169, %p170
      %p173 = scmp.ne.s32.totalorder %s156, %s172
      %p174 = scmp.eq.s32.totalorder %s59, 0
      %p175 = por %p173, %p174
      %s176 = ssub.s32 %s53, %s60
      %p177 = scmp.eq.s32.totalorder %s176, 0
      %s179 = sadd.s32 %s178, 1
      %s180 = scalar_select %p177, %s178, %s179
      %p183 = pneg %p177
      %p184 = scmp.eq.s32.totalorder %s53, 5
      %p185 = por %p183, %p184
      %p186 = scmp.ne.s32.totalorder %s178, %s181
      %p187 = scmp.eq.s32.totalorder %s53, 0
      %p188 = por %p186, %p187
      %p189 = scmp.ne.s32.totalorder %s178, %s181
      %p190 = scmp.eq.s32.totalorder %s58, 5
      %p191 = por %p189, %p190
      %p192 = scmp.ne.s32.totalorder %s181, %s182
      %p193 = scmp.eq.s32.totalorder %s58, 0
      %p194 = por %p192, %p193
      %p195 = scmp.ne.s32.totalorder %s181, %s182
      %p196 = scmp.eq.s32.totalorder %s59, 5
      %p197 = por %p195, %p196
      %p199 = scmp.ne.s32.totalorder %s182, %s198
      %p200 = scmp.eq.s32.totalorder %s59, 0
      %p201 = por %p199, %p200
      %s202 = ssub.s32 %s53, %s60
      %p203 = scmp.eq.s32.totalorder %s202, 0
      %s205 = sadd.s32 %s204, 1
      %s206 = scalar_select %p203, %s204, %s205
      %p209 = pneg %p203
      %p210 = scmp.eq.s32.totalorder %s53, 5
      %p211 = por %p209, %p210
      %p212 = scmp.ne.s32.totalorder %s204, %s207
      %p213 = scmp.eq.s32.totalorder %s53, 0
      %p214 = por %p212, %p213
      %p215 = scmp.ne.s32.totalorder %s204, %s207
      %p216 = scmp.eq.s32.totalorder %s58, 5
      %p217 = por %p215, %p216
      %p218 = scmp.ne.s32.totalorder %s207, %s208
      %p219 = scmp.eq.s32.totalorder %s58, 0
      %p220 = por %p218, %p219
      %p221 = scmp.ne.s32.totalorder %s207, %s208
      %p222 = scmp.eq.s32.totalorder %s59, 5
      %p223 = por %p221, %p222
      %p225 = scmp.ne.s32.totalorder %s208, %s224
      %p226 = scmp.eq.s32.totalorder %s59, 0
      %p227 = por %p225, %p226
      %s228 = ssub.s32 %s53, %s60
      %p229 = scmp.eq.s32.totalorder %s228, 0
      %s231 = sadd.s32 %s230, 1
      %s232 = scalar_select %p229, %s230, %s231
      %p235 = pneg %p229
      %p236 = scmp.eq.s32.totalorder %s53, 5
      %p237 = por %p235, %p236
      %p238 = scmp.ne.s32.totalorder %s230, %s233
      %p239 = scmp.eq.s32.totalorder %s53, 0
      %p240 = por %p238, %p239
      %p241 = scmp.ne.s32.totalorder %s230, %s233
      %p242 = scmp.eq.s32.totalorder %s58, 5
      %p243 = por %p241, %p242
      %p244 = scmp.ne.s32.totalorder %s233, %s234
      %p245 = scmp.eq.s32.totalorder %s58, 0
      %p246 = por %p244, %p245
      %p247 = scmp.ne.s32.totalorder %s233, %s234
      %p248 = scmp.eq.s32.totalorder %s59, 5
      %p249 = por %p247, %p248
      %p251 = scmp.ne.s32.totalorder %s234, %s250
      %p252 = scmp.eq.s32.totalorder %s59, 0
      %p253 = por %p251, %p252
      %s254 = ssub.s32 %s53, %s60
      %p255 = scmp.eq.s32.totalorder %s254, 0
      %s257 = sadd.s32 %s256, 1
      %s258 = scalar_select %p255, %s256, %s257
      %p261 = pneg %p255
      %p262 = scmp.eq.s32.totalorder %s53, 5
      %p263 = por %p261, %p262
      %p264 = scmp.ne.s32.totalorder %s256, %s259
      %p265 = scmp.eq.s32.totalorder %s53, 0
      %p266 = por %p264, %p265
      %p267 = scmp.ne.s32.totalorder %s256, %s259
      %p268 = scmp.eq.s32.totalorder %s58, 5
      %p269 = por %p267, %p268
      %p270 = scmp.ne.s32.totalorder %s259, %s260
      %p271 = scmp.eq.s32.totalorder %s58, 0
      %p272 = por %p270, %p271
      %p273 = scmp.ne.s32.totalorder %s259, %s260
      %p274 = scmp.eq.s32.totalorder %s59, 5
      %p275 = por %p273, %p274
      %p277 = scmp.ne.s32.totalorder %s260, %s276
      %p278 = scmp.eq.s32.totalorder %s59, 0
      %p279 = por %p277, %p278
      %s280 = ssub.s32 %s53, %s60
      %p281 = scmp.eq.s32.totalorder %s280, 0
      %s283 = sadd.s32 %s282, 1
      %s284 = scalar_select %p281, %s282, %s283
      %p287 = pneg %p281
      %p288 = scmp.eq.s32.totalorder %s53, 5
      %p289 = por %p287, %p288
      %p290 = scmp.ne.s32.totalorder %s282, %s285
      %p291 = scmp.eq.s32.totalorder %s53, 0
      %p292 = por %p290, %p291
      %p293 = scmp.ne.s32.totalorder %s282, %s285
      %p294 = scmp.eq.s32.totalorder %s58, 5
      %p295 = por %p293, %p294
      %p296 = scmp.ne.s32.totalorder %s285, %s286
      %p297 = scmp.eq.s32.totalorder %s58, 0
      %p298 = por %p296, %p297
      %p299 = scmp.ne.s32.totalorder %s285, %s286
      %p300 = scmp.eq.s32.totalorder %s59, 5
      %p301 = por %p299, %p300
      %p303 = scmp.ne.s32.totalorder %s286, %s302
      %p304 = scmp.eq.s32.totalorder %s59, 0
      %p305 = por %p303, %p304
      %s306 = ssub.s32 %s53, %s60
      %p307 = scmp.eq.s32.totalorder %s306, 0
      %s309 = sadd.s32 %s308, 1
      %s310 = scalar_select %p307, %s308, %s309
      %p313 = pneg %p307
      %p314 = scmp.eq.s32.totalorder %s53, 5
      %p315 = por %p313, %p314
      %p316 = scmp.ne.s32.totalorder %s308, %s311
      %p317 = scmp.eq.s32.totalorder %s53, 0
      %p318 = por %p316, %p317
      %p319 = scmp.ne.s32.totalorder %s308, %s311
      %p320 = scmp.eq.s32.totalorder %s58, 5
      %p321 = por %p319, %p320
      %p322 = scmp.ne.s32.totalorder %s311, %s312
      %p323 = scmp.eq.s32.totalorder %s58, 0
      %p324 = por %p322, %p323
      %p325 = scmp.ne.s32.totalorder %s311, %s312
      %p326 = scmp.eq.s32.totalorder %s59, 5
      %p327 = por %p325, %p326
      %p329 = scmp.ne.s32.totalorder %s312, %s328
      %p330 = scmp.eq.s32.totalorder %s59, 0
      %p331 = por %p329, %p330
      %s332 = ssub.s32 %s53, %s60
      %p333 = scmp.eq.s32.totalorder %s332, 0
      %s335 = sadd.s32 %s334, 1
      %s336 = scalar_select %p333, %s334, %s335
      %p339 = pneg %p333
      %p340 = scmp.eq.s32.totalorder %s53, 5
      %p341 = por %p339, %p340
      %p342 = scmp.ne.s32.totalorder %s334, %s337
      %p343 = scmp.eq.s32.totalorder %s53, 0
      %p344 = por %p342, %p343
      %p345 = scmp.ne.s32.totalorder %s334, %s337
      %p346 = scmp.eq.s32.totalorder %s58, 5
      %p347 = por %p345, %p346
      %p348 = scmp.ne.s32.totalorder %s337, %s338
      %p349 = scmp.eq.s32.totalorder %s58, 0
      %p350 = por %p348, %p349
      %p351 = scmp.ne.s32.totalorder %s337, %s338
      %p352 = scmp.eq.s32.totalorder %s59, 5
      %p353 = por %p351, %p352
      %p355 = scmp.ne.s32.totalorder %s338, %s354
      %p356 = scmp.eq.s32.totalorder %s59, 0
      %p357 = por %p355, %p356
      %s358 = ssub.s32 %s53, %s60
      %p359 = scmp.eq.s32.totalorder %s358, 0
      %s361 = sadd.s32 %s360, 1
      %s362 = scalar_select %p359, %s360, %s361
      %p365 = pneg %p359
      %p366 = scmp.eq.s32.totalorder %s53, 5
      %p367 = por %p365, %p366
      %p368 = scmp.ne.s32.totalorder %s360, %s363
      %p369 = scmp.eq.s32.totalorder %s53, 0
      %p370 = por %p368, %p369
      %p371 = scmp.ne.s32.totalorder %s360, %s363
      %p372 = scmp.eq.s32.totalorder %s58, 5
      %p373 = por %p371, %p372
      %p374 = scmp.ne.s32.totalorder %s363, %s364
      %p375 = scmp.eq.s32.totalorder %s58, 0
      %p376 = por %p374, %p375
      %p377 = scmp.ne.s32.totalorder %s363, %s364
      %p378 = scmp.eq.s32.totalorder %s59, 5
      %p379 = por %p377, %p378
      %p381 = scmp.ne.s32.totalorder %s364, %s380
      %p382 = scmp.eq.s32.totalorder %s59, 0
      %p383 = por %p381, %p382
      %s385 = sadd.s32 %s384, 1
      %p388 = scmp.eq.s32.totalorder %s53, 5
      %p389 = scmp.ne.s32.totalorder %s384, %s386
      %p390 = scmp.eq.s32.totalorder %s53, 0
      %p391 = por %p389, %p390
      %p392 = scmp.ne.s32.totalorder %s384, %s386
      %p393 = scmp.eq.s32.totalorder %s58, 5
      %p394 = por %p392, %p393
      %p395 = scmp.ne.s32.totalorder %s386, %s387
      %p396 = scmp.eq.s32.totalorder %s58, 0
      %p397 = por %p395, %p396
      %p398 = scmp.ne.s32.totalorder %s386, %s387
      %p399 = scmp.eq.s32.totalorder %s59, 5
      %p400 = por %p398, %p399
      %p402 = scmp.ne.s32.totalorder %s387, %s401
      %p403 = scmp.eq.s32.totalorder %s59, 0
      %p404 = por %p402, %p403
      %s406 = sadd.s32 %s405, 1
      %p409 = scmp.eq.s32.totalorder %s53, 5
      %p410 = scmp.ne.s32.totalorder %s405, %s407
      %p411 = scmp.eq.s32.totalorder %s53, 0
      %p412 = por %p410, %p411
      %p413 = scmp.ne.s32.totalorder %s405, %s407
      %p414 = scmp.eq.s32.totalorder %s58, 5
      %p415 = por %p413, %p414
      %p416 = scmp.ne.s32.totalorder %s407, %s408
      %p417 = scmp.eq.s32.totalorder %s58, 0
      %p418 = por %p416, %p417
      %p419 = scmp.ne.s32.totalorder %s407, %s408
      %p420 = scmp.eq.s32.totalorder %s59, 5
      %p421 = por %p419, %p420
      %p423 = scmp.ne.s32.totalorder %s408, %s422
      %p424 = scmp.eq.s32.totalorder %s59, 0
      %p425 = por %p423, %p424
      %s427 = sadd.s32 %s426, 1
      %p430 = scmp.eq.s32.totalorder %s53, 5
      %p431 = scmp.ne.s32.totalorder %s426, %s428
      %p432 = scmp.eq.s32.totalorder %s53, 0
      %p433 = por %p431, %p432
      %p434 = scmp.ne.s32.totalorder %s426, %s428
      %p435 = scmp.eq.s32.totalorder %s58, 5
      %p436 = por %p434, %p435
      %p437 = scmp.ne.s32.totalorder %s428, %s429
      %p438 = scmp.eq.s32.totalorder %s58, 0
      %p439 = por %p437, %p438
      %p440 = scmp.ne.s32.totalorder %s428, %s429
      %p441 = scmp.eq.s32.totalorder %s59, 5
      %p442 = por %p440, %p441
      %p444 = scmp.ne.s32.totalorder %s429, %s443
      %p445 = scmp.eq.s32.totalorder %s59, 0
      %p446 = por %p444, %p445
      %s448 = sadd.s32 %s447, 1
      %p451 = scmp.eq.s32.totalorder %s53, 5
      %p452 = scmp.ne.s32.totalorder %s447, %s449
      %p453 = scmp.eq.s32.totalorder %s53, 0
      %p454 = por %p452, %p453
      %p455 = scmp.ne.s32.totalorder %s447, %s449
      %p456 = scmp.eq.s32.totalorder %s58, 5
      %p457 = por %p455, %p456
      %p458 = scmp.ne.s32.totalorder %s449, %s450
      %p459 = scmp.eq.s32.totalorder %s58, 0
      %p460 = por %p458, %p459
      %p461 = scmp.ne.s32.totalorder %s449, %s450
      %p462 = scmp.eq.s32.totalorder %s59, 5
      %p463 = por %p461, %p462
      %p465 = scmp.ne.s32.totalorder %s450, %s464
      %p466 = scmp.eq.s32.totalorder %s59, 0
      %p467 = por %p465, %p466
      %s469 = sadd.s32 %s468, 1
      %p472 = scmp.eq.s32.totalorder %s53, 5
      %p473 = scmp.ne.s32.totalorder %s468, %s470
      %p474 = scmp.eq.s32.totalorder %s53, 0
      %p475 = por %p473, %p474
      %p476 = scmp.ne.s32.totalorder %s468, %s470
      %p477 = scmp.eq.s32.totalorder %s58, 5
      %p478 = por %p476, %p477
      %p479 = scmp.ne.s32.totalorder %s470, %s471
      %p480 = scmp.eq.s32.totalorder %s58, 0
      %p481 = por %p479, %p480
      %p482 = scmp.ne.s32.totalorder %s470, %s471
      %p483 = scmp.eq.s32.totalorder %s59, 5
      %p484 = por %p482, %p483
      %p486 = scmp.ne.s32.totalorder %s471, %s485
      %p487 = scmp.eq.s32.totalorder %s59, 0
      %p488 = por %p486, %p487
      %s490 = sadd.s32 %s489, 1
      %p493 = scmp.eq.s32.totalorder %s53, 5
      %p494 = scmp.ne.s32.totalorder %s489, %s491
      %p495 = scmp.eq.s32.totalorder %s53, 0
      %p496 = por %p494, %p495
      %p497 = scmp.ne.s32.totalorder %s489, %s491
      %p498 = scmp.eq.s32.totalorder %s58, 5
      %p499 = por %p497, %p498
      %p500 = scmp.ne.s32.totalorder %s491, %s492
      %p501 = scmp.eq.s32.totalorder %s58, 0
      %p502 = por %p500, %p501
      %p503 = scmp.ne.s32.totalorder %s491, %s492
      %p504 = scmp.eq.s32.totalorder %s59, 5
      %p505 = por %p503, %p504
      %p507 = scmp.ne.s32.totalorder %s492, %s506
      %p508 = scmp.eq.s32.totalorder %s59, 0
      %p509 = por %p507, %p508
      %s511 = sadd.s32 %s510, 1
      %p514 = scmp.eq.s32.totalorder %s53, 5
      %p515 = scmp.ne.s32.totalorder %s510, %s512
      %p516 = scmp.eq.s32.totalorder %s53, 0
      %p517 = por %p515, %p516
      %p518 = scmp.ne.s32.totalorder %s510, %s512
      %p519 = scmp.eq.s32.totalorder %s58, 5
      %p520 = por %p518, %p519
      %p521 = scmp.ne.s32.totalorder %s512, %s513
      %p522 = scmp.eq.s32.totalorder %s58, 0
      %p523 = por %p521, %p522
      %p524 = scmp.ne.s32.totalorder %s512, %s513
      %p525 = scmp.eq.s32.totalorder %s59, 5
      %p526 = por %p524, %p525
      %p528 = scmp.ne.s32.totalorder %s513, %s527
      %p529 = scmp.eq.s32.totalorder %s59, 0
      %p530 = por %p528, %p529
      %s532 = sadd.s32 %s531, 1
      %p535 = scmp.eq.s32.totalorder %s53, 5
      %p536 = scmp.ne.s32.totalorder %s531, %s533
      %p537 = scmp.eq.s32.totalorder %s53, 0
      %p538 = por %p536, %p537
      %p539 = scmp.ne.s32.totalorder %s531, %s533
      %p540 = scmp.eq.s32.totalorder %s58, 5
      %p541 = por %p539, %p540
      %p542 = scmp.ne.s32.totalorder %s533, %s534
      %p543 = scmp.eq.s32.totalorder %s58, 0
      %p544 = por %p542, %p543
      %p545 = scmp.ne.s32.totalorder %s533, %s534
      %p546 = scmp.eq.s32.totalorder %s59, 5
      %p547 = por %p545, %p546
      %p549 = scmp.ne.s32.totalorder %s534, %s548
      %p550 = scmp.eq.s32.totalorder %s59, 0
      %p551 = por %p549, %p550
      %s553 = sadd.s32 %s552, 1
      %p556 = scmp.eq.s32.totalorder %s53, 5
      %p557 = scmp.ne.s32.totalorder %s552, %s554
      %p558 = scmp.eq.s32.totalorder %s53, 0
      %p559 = por %p557, %p558
      %p560 = scmp.ne.s32.totalorder %s552, %s554
      %p561 = scmp.eq.s32.totalorder %s58, 5
      %p562 = por %p560, %p561
      %p563 = scmp.ne.s32.totalorder %s554, %s555
      %p564 = scmp.eq.s32.totalorder %s58, 0
      %p565 = por %p563, %p564
      %p566 = scmp.ne.s32.totalorder %s554, %s555
      %p567 = scmp.eq.s32.totalorder %s59, 5
      %p568 = por %p566, %p567
      %p570 = scmp.ne.s32.totalorder %s555, %s569
      %p571 = scmp.eq.s32.totalorder %s59, 0
      %p572 = por %p570, %p571
      %s574 = sadd.s32 %s573, 1
      %p577 = scmp.eq.s32.totalorder %s53, 5
      %p578 = scmp.ne.s32.totalorder %s573, %s575
      %p579 = scmp.eq.s32.totalorder %s53, 0
      %p580 = por %p578, %p579
      %p581 = scmp.ne.s32.totalorder %s573, %s575
      %p582 = scmp.eq.s32.totalorder %s58, 5
      %p583 = por %p581, %p582
      %p584 = scmp.ne.s32.totalorder %s575, %s576
      %p585 = scmp.eq.s32.totalorder %s58, 0
      %p586 = por %p584, %p585
      %p587 = scmp.ne.s32.totalorder %s575, %s576
      %p588 = scmp.eq.s32.totalorder %s59, 5
      %p589 = por %p587, %p588
      %p591 = scmp.ne.s32.totalorder %s576, %s590
      %p592 = scmp.eq.s32.totalorder %s59, 0
      %p593 = por %p591, %p592
      %s595 = sadd.s32 %s594, 1
      %p598 = scmp.eq.s32.totalorder %s53, 5
      %p599 = scmp.ne.s32.totalorder %s594, %s596
      %p600 = scmp.eq.s32.totalorder %s53, 0
      %p601 = por %p599, %p600
      %p602 = scmp.ne.s32.totalorder %s594, %s596
      %p603 = scmp.eq.s32.totalorder %s58, 5
      %p604 = por %p602, %p603
      %p605 = scmp.ne.s32.totalorder %s596, %s597
      %p606 = scmp.eq.s32.totalorder %s58, 0
      %p607 = por %p605, %p606
      %p608 = scmp.ne.s32.totalorder %s596, %s597
      %p609 = scmp.eq.s32.totalorder %s59, 5
      %p610 = por %p608, %p609
      %p612 = scmp.ne.s32.totalorder %s597, %s611
      %p613 = scmp.eq.s32.totalorder %s59, 0
      %p614 = por %p612, %p613
      %p615 = scmp.le.s32.totalorder 1, %s53
      %p616 = scmp.lt.s32.totalorder %s53, 7
      %p617 = pnand %p615, %p616
      %p618 = pneg %p617
      // Predicated region
      $region9: #{transformer_linear_attn.1} parent=5 // pred_check
        _
      $region10: #{transformer_linear_attn.1} parent=5 // pred_check_branch
        %620 = sbr.rel (%p617) target = $region12
      $region11: #{transformer_linear_attn.1} parent=5 // pred_region
        %s621 = ssub.s32 %s53, 1
        // Predicated region
        $region13: #{transformer_linear_attn.1} parent=11 // pred_check
          %p622 = pneg %p74
        $region14: #{transformer_linear_attn.1} parent=11 // pred_check_branch
          %624 = sbr.rel (%p622) target = $region16
        $region15: #{transformer_linear_attn.1} parent=11 // pred_region
          _
        $region16: #{transformer_linear_attn.1} parent=11 // pred_fallthru
          _
        // Predicated region
        $region17: #{transformer_linear_attn.1} parent=11 // pred_check
          %p625 = pneg %p95
        $region18: #{transformer_linear_attn.1} parent=11 // pred_check_branch
          %627 = sbr.rel (%p625) target = $region20
        $region19: #{transformer_linear_attn.1} parent=11 // pred_region
          %s629 = ssub.s32 32, 32
          %630 = vsyncadd [#allocation5], %s629
          %s631 = sshll.u32 [#allocation4], 4
          %s632 = int_to_ptr.vmem [resolvable:$true] %s631
          %637 = dma.hbm_to_vmem [thread:$0]  %s1, 32, %s632, [#allocation5], 16, 16, 1
        $region20: #{transformer_linear_attn.1} parent=11 // pred_fallthru
          _
        // Predicated region
        $region21: #{transformer_linear_attn.1} parent=11 // pred_check
          %p638 = pneg %p116
        $region22: #{transformer_linear_attn.1} parent=11 // pred_check_branch
          %640 = sbr.rel (%p638) target = $region24
        $region23: #{transformer_linear_attn.1} parent=11 // pred_region
          _
        $region24: #{transformer_linear_attn.1} parent=11 // pred_fallthru
          _
        // Predicated region
        $region25: #{transformer_linear_attn.1} parent=11 // pred_check
          %p641 = pneg %p397
        $region26: #{transformer_linear_attn.1} parent=11 // pred_check_branch
          %643 = sbr.rel (%p641) target = $region28
        $region27: #{transformer_linear_attn.1} parent=11 // pred_region
          %s645 = ssub.s32 3072, 3072
          %646 = vsyncadd [#allocation23], %s645
          %s647 = sshll.u32 [#allocation22], 4
          %s648 = int_to_ptr.vmem [resolvable:$true] %s647
          %653 = dma.hbm_to_vmem [thread:$0]  %s13, 3072, %s648, [#allocation23], 64, 64, 4
        $region28: #{transformer_linear_attn.1} parent=11 // pred_fallthru
          _
        // Predicated region
        $region29: #{transformer_linear_attn.1} parent=11 // pred_check
          %p654 = pneg %p418
        $region30: #{transformer_linear_attn.1} parent=11 // pred_check_branch
          %656 = sbr.rel (%p654) target = $region32
        $region31: #{transformer_linear_attn.1} parent=11 // pred_region
          %s658 = ssub.s32 16, 16
          %659 = vsyncadd [#allocation23], %s658
          %s661 = sshll.u32 [#allocation24], 4
          %s662 = int_to_ptr.vmem [resolvable:$true] %s661
          %664 = dma.hbm_to_vmem [thread:$0]  %s14, 16, %s662, [#allocation23]
        $region32: #{transformer_linear_attn.1} parent=11 // pred_fallthru
          _
        // Predicated region
        $region33: #{transformer_linear_attn.1} parent=11 // pred_check
          %p665 = pneg %p439
        $region34: #{transformer_linear_attn.1} parent=11 // pred_check_branch
          %667 = sbr.rel (%p665) target = $region36
        $region35: #{transformer_linear_attn.1} parent=11 // pred_region
          %s669 = ssub.s32 1024, 1024
          %670 = vsyncadd [#allocation26], %s669
          %s671 = sshll.u32 [#allocation25], 4
          %s672 = int_to_ptr.vmem [resolvable:$true] %s671
          %677 = dma.hbm_to_vmem [thread:$0]  %s15, 1024, %s672, [#allocation26], 64, 64, 4
        $region36: #{transformer_linear_attn.1} parent=11 // pred_fallthru
          _
        // Predicated region
        $region37: #{transformer_linear_attn.1} parent=11 // pred_check
          %p678 = pneg %p460
        $region38: #{transformer_linear_attn.1} parent=11 // pred_check_branch
          %680 = sbr.rel (%p678) target = $region40
        $region39: #{transformer_linear_attn.1} parent=11 // pred_region
          %s682 = ssub.s32 16, 16
          %683 = vsyncadd [#allocation26], %s682
          %s685 = sshll.u32 [#allocation27], 4
          %s686 = int_to_ptr.vmem [resolvable:$true] %s685
          %688 = dma.hbm_to_vmem [thread:$0]  %s16, 16, %s686, [#allocation26]
        $region40: #{transformer_linear_attn.1} parent=11 // pred_fallthru
          _
        // Predicated region
        $region41: #{transformer_linear_attn.1} parent=11 // pred_check
          %p689 = pneg %p481
        $region42: #{transformer_linear_attn.1} parent=11 // pred_check_branch
          %691 = sbr.rel (%p689) target = $region44
        $region43: #{transformer_linear_attn.1} parent=11 // pred_region
          %s693 = ssub.s32 16, 16
          %694 = vsyncadd [#allocation29], %s693
          %s696 = sshll.u32 [#allocation28], 4
          %s697 = int_to_ptr.vmem [resolvable:$true] %s696
          %699 = dma.hbm_to_vmem [thread:$0]  %s17, 16, %s697, [#allocation29]
        $region44: #{transformer_linear_attn.1} parent=11 // pred_fallthru
          _
        // Predicated region
        $region45: #{transformer_linear_attn.1} parent=11 // pred_check
          %p700 = pneg %p502
        $region46: #{transformer_linear_attn.1} parent=11 // pred_check_branch
          %702 = sbr.rel (%p700) target = $region48
        $region47: #{transformer_linear_attn.1} parent=11 // pred_region
          _
        $region48: #{transformer_linear_attn.1} parent=11 // pred_fallthru
          _
        // Predicated region
        $region49: #{transformer_linear_attn.1} parent=11 // pred_check
          %p703 = pneg %p523
        $region50: #{transformer_linear_attn.1} parent=11 // pred_check_branch
          %705 = sbr.rel (%p703) target = $region52
        $region51: #{transformer_linear_attn.1} parent=11 // pred_region
          %s707 = ssub.s32 3072, 3072
          %708 = vsyncadd [#allocation29], %s707
          %s709 = sshll.u32 [#allocation30], 4
          %s710 = int_to_ptr.vmem [resolvable:$true] %s709
          %715 = dma.hbm_to_vmem [thread:$0]  %s19, 3072, %s710, [#allocation29], 64, 64, 4
        $region52: #{transformer_linear_attn.1} parent=11 // pred_fallthru
          _
        // Predicated region
        $region53: #{transformer_linear_attn.1} parent=11 // pred_check
          %p716 = pneg %p544
        $region54: #{transformer_linear_attn.1} parent=11 // pred_check_branch
          %718 = sbr.rel (%p716) target = $region56
        $region55: #{transformer_linear_attn.1} parent=11 // pred_region
          %s720 = ssub.s32 16, 16
          %721 = vsyncadd [#allocation32], %s720
          %s723 = sshll.u32 [#allocation31], 4
          %s724 = int_to_ptr.vmem [resolvable:$true] %s723
          %726 = dma.hbm_to_vmem [thread:$0]  %s20, 16, %s724, [#allocation32]
        $region56: #{transformer_linear_attn.1} parent=11 // pred_fallthru
          _
        // Predicated region
        $region57: #{transformer_linear_attn.1} parent=11 // pred_check
          %p727 = pneg %p565
        $region58: #{transformer_linear_attn.1} parent=11 // pred_check_branch
          %729 = sbr.rel (%p727) target = $region60
        $region59: #{transformer_linear_attn.1} parent=11 // pred_region
          %s731 = ssub.s32 2048, 2048
          %732 = vsyncadd [#allocation32], %s731
          %s733 = sshll.u32 [#allocation33], 4
          %s734 = int_to_ptr.vmem [resolvable:$true] %s733
          %739 = dma.hbm_to_vmem [thread:$0]  %s21, 2048, %s734, [#allocation32], 128, 128, 8
        $region60: #{transformer_linear_attn.1} parent=11 // pred_fallthru
          _
        // Predicated region
        $region61: #{transformer_linear_attn.1} parent=11 // pred_check
          %p740 = pneg %p586
        $region62: #{transformer_linear_attn.1} parent=11 // pred_check_branch
          %742 = sbr.rel (%p740) target = $region64
        $region63: #{transformer_linear_attn.1} parent=11 // pred_region
          %s744 = ssub.s32 16, 16
          %745 = vsyncadd [#allocation35], %s744
          %s747 = sshll.u32 [#allocation34], 4
          %s748 = int_to_ptr.vmem [resolvable:$true] %s747
          %750 = dma.hbm_to_vmem [thread:$0]  %s22, 16, %s748, [#allocation35]
        $region64: #{transformer_linear_attn.1} parent=11 // pred_fallthru
          _
      $region12: #{transformer_linear_attn.1} parent=5 // pred_fallthru
        _
      %p751 = scmp.lt.s32.totalorder %s53, 6
      // Predicated region
      $region65: #{transformer_linear_attn.1} parent=5 // pred_check
        %p752 = pneg %p751
      $region66: #{transformer_linear_attn.1} parent=5 // pred_check_branch
        %754 = sbr.rel (%p752) target = $region68
      $region67: #{transformer_linear_attn.1} parent=5 // pred_region
        // Predicated region
        $region69: #{transformer_linear_attn.1} parent=67 // pred_check
          %p755 = pneg %p136
        $region70: #{transformer_linear_attn.1} parent=67 // pred_check_branch
          %757 = sbr.rel (%p755) target = $region72
        $region71: #{transformer_linear_attn.1} parent=67 // pred_region
          %s758 = sand.u32 %s53, 1
          %s759 = scalar_lea.sflag [#allocation8], %s758
          %s760 = sand.u32 %s126, 1
          %s761 = smul.addr %s760, 2304
          %s762 = scalar_lea.vmem [#allocation7], %s761
          %s764 = ssub.s32 36864, 36864
          %765 = vsyncadd %s759, %s764
          %s766 = smul.addr %s53, 576
          %s767 = smul.addr %s766, 64
          %s768 = scalar_lea.hbm %s3, %s767
          %s769 = sshll.u32 %s762, 4
          %s770 = int_to_ptr.vmem [resolvable:$true] %s769
          %775 = dma.hbm_to_vmem [thread:$0]  %s768, 36864, %s770, %s759, 768, 768, 48
        $region72: #{transformer_linear_attn.1} parent=67 // pred_fallthru
          _
        // Predicated region
        $region73: #{transformer_linear_attn.1} parent=67 // pred_check
          %p776 = pneg %p162
        $region74: #{transformer_linear_attn.1} parent=67 // pred_check_branch
          %778 = sbr.rel (%p776) target = $region76
        $region75: #{transformer_linear_attn.1} parent=67 // pred_region
          %s779 = sand.u32 %s53, 1
          %s780 = scalar_lea.sflag [#allocation8], %s779
          %s781 = sand.u32 %s152, 1
          %s782 = smul.addr %s781, 768
          %s783 = scalar_lea.vmem [#allocation9], %s782
          %s785 = ssub.s32 12288, 12288
          %786 = vsyncadd %s780, %s785
          %s787 = smul.addr %s53, 192
          %s788 = smul.addr %s787, 64
          %s789 = scalar_lea.hbm %s4, %s788
          %s790 = sshll.u32 %s783, 4
          %s791 = int_to_ptr.vmem [resolvable:$true] %s790
          %796 = dma.hbm_to_vmem [thread:$0]  %s789, 12288, %s791, %s780, 192, 192, 12
        $region76: #{transformer_linear_attn.1} parent=67 // pred_fallthru
          _
        // Predicated region
        $region77: #{transformer_linear_attn.1} parent=67 // pred_check
          %p797 = pneg %p188
        $region78: #{transformer_linear_attn.1} parent=67 // pred_check_branch
          %799 = sbr.rel (%p797) target = $region80
        $region79: #{transformer_linear_attn.1} parent=67 // pred_region
          %s800 = sand.u32 %s53, 1
          %s801 = scalar_lea.sflag [#allocation11], %s800
          %s802 = sand.u32 %s178, 1
          %s803 = smul.addr %s802, 3
          %s804 = scalar_lea.vmem [#allocation10], %s803
          %s806 = ssub.s32 48, 48
          %807 = vsyncadd %s801, %s806
          %s808 = smul.addr %s53, 3
          %s809 = smul.addr %s808, 16
          %s810 = scalar_lea.hbm %s5, %s809
          %s812 = sshll.u32 %s804, 4
          %s813 = int_to_ptr.vmem [resolvable:$true] %s812
          %815 = dma.hbm_to_vmem [thread:$0]  %s810, 48, %s813, %s801
        $region80: #{transformer_linear_attn.1} parent=67 // pred_fallthru
          _
        // Predicated region
        $region81: #{transformer_linear_attn.1} parent=67 // pred_check
          %p816 = pneg %p214
        $region82: #{transformer_linear_attn.1} parent=67 // pred_check_branch
          %818 = sbr.rel (%p816) target = $region84
        $region83: #{transformer_linear_attn.1} parent=67 // pred_region
          %s819 = sand.u32 %s53, 1
          %s820 = scalar_lea.sflag [#allocation11], %s819
          %s821 = sand.u32 %s204, 1
          %s822 = smul.addr %s821, 3
          %s823 = scalar_lea.vmem [#allocation12], %s822
          %s825 = ssub.s32 48, 48
          %826 = vsyncadd %s820, %s825
          %s827 = smul.addr %s53, 3
          %s828 = smul.addr %s827, 16
          %s829 = scalar_lea.hbm %s6, %s828
          %s831 = sshll.u32 %s823, 4
          %s832 = int_to_ptr.vmem [resolvable:$true] %s831
          %834 = dma.hbm_to_vmem [thread:$0]  %s829, 48, %s832, %s820
        $region84: #{transformer_linear_attn.1} parent=67 // pred_fallthru
          _
        // Predicated region
        $region85: #{transformer_linear_attn.1} parent=67 // pred_check
          %p835 = pneg %p240
        $region86: #{transformer_linear_attn.1} parent=67 // pred_check_branch
          %837 = sbr.rel (%p835) target = $region88
        $region87: #{transformer_linear_attn.1} parent=67 // pred_region
          %s838 = sand.u32 %s53, 1
          %s839 = scalar_lea.sflag [#allocation14], %s838
          %s840 = sand.u32 %s230, 1
          %s841 = smul.addr %s840, 192
          %s842 = scalar_lea.vmem [#allocation13], %s841
          %s844 = ssub.s32 3072, 3072
          %845 = vsyncadd %s839, %s844
          %s846 = smul.addr %s53, 48
          %s847 = smul.addr %s846, 64
          %s848 = scalar_lea.hbm %s7, %s847
          %s849 = sshll.u32 %s842, 4
          %s850 = int_to_ptr.vmem [resolvable:$true] %s849
          %855 = dma.hbm_to_vmem [thread:$0]  %s848, 3072, %s850, %s839, 64, 64, 4
        $region88: #{transformer_linear_attn.1} parent=67 // pred_fallthru
          _
        // Predicated region
        $region89: #{transformer_linear_attn.1} parent=67 // pred_check
          %p856 = pneg %p266
        $region90: #{transformer_linear_attn.1} parent=67 // pred_check_branch
          %858 = sbr.rel (%p856) target = $region92
        $region91: #{transformer_linear_attn.1} parent=67 // pred_region
          %s859 = sand.u32 %s53, 1
          %s860 = scalar_lea.sflag [#allocation14], %s859
          %s861 = sand.u32 %s256, 1
          %s862 = scalar_lea.vmem [#allocation15], %s861
          %s864 = ssub.s32 16, 16
          %865 = vsyncadd %s860, %s864
          %s866 = smul.addr %s53, 16
          %s867 = scalar_lea.hbm %s8, %s866
          %s869 = sshll.u32 %s862, 4
          %s870 = int_to_ptr.vmem [resolvable:$true] %s869
          %872 = dma.hbm_to_vmem [thread:$0]  %s867, 16, %s870, %s860
        $region92: #{transformer_linear_attn.1} parent=67 // pred_fallthru
          _
        // Predicated region
        $region93: #{transformer_linear_attn.1} parent=67 // pred_check
          %p873 = pneg %p292
        $region94: #{transformer_linear_attn.1} parent=67 // pred_check_branch
          %875 = sbr.rel (%p873) target = $region96
        $region95: #{transformer_linear_attn.1} parent=67 // pred_region
          %s876 = sand.u32 %s53, 1
          %s877 = scalar_lea.sflag [#allocation17], %s876
          %s878 = sand.u32 %s282, 1
          %s879 = smul.addr %s878, 192
          %s880 = scalar_lea.vmem [#allocation16], %s879
          %s882 = ssub.s32 3072, 3072
          %883 = vsyncadd %s877, %s882
          %s884 = smul.addr %s53, 48
          %s885 = smul.addr %s884, 64
          %s886 = scalar_lea.hbm %s9, %s885
          %s887 = sshll.u32 %s880, 4
          %s888 = int_to_ptr.vmem [resolvable:$true] %s887
          %893 = dma.hbm_to_vmem [thread:$0]  %s886, 3072, %s888, %s877, 192, 192, 12
        $region96: #{transformer_linear_attn.1} parent=67 // pred_fallthru
          _
        // Predicated region
        $region97: #{transformer_linear_attn.1} parent=67 // pred_check
          %p894 = pneg %p318
        $region98: #{transformer_linear_attn.1} parent=67 // pred_check_branch
          %896 = sbr.rel (%p894) target = $region100
        $region99: #{transformer_linear_attn.1} parent=67 // pred_region
          %s897 = sand.u32 %s53, 1
          %s898 = scalar_lea.sflag [#allocation17], %s897
          %s899 = sand.u32 %s308, 1
          %s900 = smul.addr %s899, 3
          %s901 = scalar_lea.vmem [#allocation18], %s900
          %s903 = ssub.s32 48, 48
          %904 = vsyncadd %s898, %s903
          %s905 = smul.addr %s53, 3
          %s906 = smul.addr %s905, 16
          %s907 = scalar_lea.hbm %s10, %s906
          %s909 = sshll.u32 %s901, 4
          %s910 = int_to_ptr.vmem [resolvable:$true] %s909
          %912 = dma.hbm_to_vmem [thread:$0]  %s907, 48, %s910, %s898
        $region100: #{transformer_linear_attn.1} parent=67 // pred_fallthru
          _
        // Predicated region
        $region101: #{transformer_linear_attn.1} parent=67 // pred_check
          %p913 = pneg %p344
        $region102: #{transformer_linear_attn.1} parent=67 // pred_check_branch
          %915 = sbr.rel (%p913) target = $region104
        $region103: #{transformer_linear_attn.1} parent=67 // pred_region
          %s916 = sand.u32 %s53, 1
          %s917 = scalar_lea.sflag [#allocation20], %s916
          %s918 = sand.u32 %s334, 1
          %s919 = smul.addr %s918, 3
          %s920 = scalar_lea.vmem [#allocation19], %s919
          %s922 = ssub.s32 48, 48
          %923 = vsyncadd %s917, %s922
          %s924 = smul.addr %s53, 3
          %s925 = smul.addr %s924, 16
          %s926 = scalar_lea.hbm %s11, %s925
          %s928 = sshll.u32 %s920, 4
          %s929 = int_to_ptr.vmem [resolvable:$true] %s928
          %931 = dma.hbm_to_vmem [thread:$0]  %s926, 48, %s929, %s917
        $region104: #{transformer_linear_attn.1} parent=67 // pred_fallthru
          _
        // Predicated region
        $region105: #{transformer_linear_attn.1} parent=67 // pred_check
          %p932 = pneg %p370
        $region106: #{transformer_linear_attn.1} parent=67 // pred_check_branch
          %934 = sbr.rel (%p932) target = $region108
        $region107: #{transformer_linear_attn.1} parent=67 // pred_region
          %s935 = sand.u32 %s53, 1
          %s936 = scalar_lea.sflag [#allocation20], %s935
          %s937 = sand.u32 %s360, 1
          %s938 = smul.addr %s937, 3
          %s939 = scalar_lea.vmem [#allocation21], %s938
          %s941 = ssub.s32 48, 48
          %942 = vsyncadd %s936, %s941
          %s943 = smul.addr %s53, 3
          %s944 = smul.addr %s943, 16
          %s945 = scalar_lea.hbm %s12, %s944
          %s947 = sshll.u32 %s939, 4
          %s948 = int_to_ptr.vmem [resolvable:$true] %s947
          %950 = dma.hbm_to_vmem [thread:$0]  %s945, 48, %s948, %s936
        $region108: #{transformer_linear_attn.1} parent=67 // pred_fallthru
          _
      $region68: #{transformer_linear_attn.1} parent=5 // pred_fallthru
        _
      %p951 = scmp.le.s32.totalorder 1, %s53
      %p952 = scmp.lt.s32.totalorder %s53, 7
      %p953 = pnand %p951, %p952
      %p954 = pneg %p953
      // Predicated region
      $region109: #{transformer_linear_attn.1} parent=5 // pred_check
        _
      $region110: #{transformer_linear_attn.1} parent=5 // pred_check_branch
        %956 = sbr.rel (%p953) target = $region112
      $region111: #{transformer_linear_attn.1} parent=5 // pred_region
        %s957 = ssub.s32 %s53, 1
        // Predicated region
        $region113: #{transformer_linear_attn.1} parent=111 // pred_check
          %p958 = pneg %p95
        $region114: #{transformer_linear_attn.1} parent=111 // pred_check_branch
          %960 = sbr.rel (%p958) target = $region116
        $region115: #{transformer_linear_attn.1} parent=111 // pred_region
          %961 = dma.done [#allocation5], 32
        $region116: #{transformer_linear_attn.1} parent=111 // pred_fallthru
          _
        %s962 = sand.u32 %s58, 1
        %s963 = scalar_lea.sflag [#allocation8], %s962
        %s964 = sand.u32 %s129, 1
        %s965 = smul.addr %s964, 2304
        %s966 = scalar_lea.vmem [#allocation7], %s965
        // Predicated region
        $region117: #{transformer_linear_attn.1} parent=111 // pred_check
          %p967 = pneg %p142
        $region118: #{transformer_linear_attn.1} parent=111 // pred_check_branch
          %969 = sbr.rel (%p967) target = $region120
        $region119: #{transformer_linear_attn.1} parent=111 // pred_region
          %970 = dma.done %s963, 36864
        $region120: #{transformer_linear_attn.1} parent=111 // pred_fallthru
          _
        %s971 = sand.u32 %s58, 1
        %s972 = scalar_lea.sflag [#allocation8], %s971
        %s973 = sand.u32 %s155, 1
        %s974 = smul.addr %s973, 768
        %s975 = scalar_lea.vmem [#allocation9], %s974
        // Predicated region
        $region121: #{transformer_linear_attn.1} parent=111 // pred_check
          %p976 = pneg %p168
        $region122: #{transformer_linear_attn.1} parent=111 // pred_check_branch
          %978 = sbr.rel (%p976) target = $region124
        $region123: #{transformer_linear_attn.1} parent=111 // pred_region
          %979 = dma.done %s972, 12288
        $region124: #{transformer_linear_attn.1} parent=111 // pred_fallthru
          _
        %s980 = sand.u32 %s58, 1
        %s981 = scalar_lea.sflag [#allocation11], %s980
        %s982 = sand.u32 %s181, 1
        %s983 = smul.addr %s982, 3
        %s984 = scalar_lea.vmem [#allocation10], %s983
        // Predicated region
        $region125: #{transformer_linear_attn.1} parent=111 // pred_check
          %p985 = pneg %p194
        $region126: #{transformer_linear_attn.1} parent=111 // pred_check_branch
          %987 = sbr.rel (%p985) target = $region128
        $region127: #{transformer_linear_attn.1} parent=111 // pred_region
          %988 = dma.done %s981, 48
        $region128: #{transformer_linear_attn.1} parent=111 // pred_fallthru
          _
        %s989 = sand.u32 %s58, 1
        %s990 = scalar_lea.sflag [#allocation11], %s989
        %s991 = sand.u32 %s207, 1
        %s992 = smul.addr %s991, 3
        %s993 = scalar_lea.vmem [#allocation12], %s992
        // Predicated region
        $region129: #{transformer_linear_attn.1} parent=111 // pred_check
          %p994 = pneg %p220
        $region130: #{transformer_linear_attn.1} parent=111 // pred_check_branch
          %996 = sbr.rel (%p994) target = $region132
        $region131: #{transformer_linear_attn.1} parent=111 // pred_region
          %997 = dma.done %s990, 48
        $region132: #{transformer_linear_attn.1} parent=111 // pred_fallthru
          _
        %s998 = sand.u32 %s58, 1
        %s999 = scalar_lea.sflag [#allocation14], %s998
        %s1000 = sand.u32 %s233, 1
        %s1001 = smul.addr %s1000, 192
        %s1002 = scalar_lea.vmem [#allocation13], %s1001
        // Predicated region
        $region133: #{transformer_linear_attn.1} parent=111 // pred_check
          %p1003 = pneg %p246
        $region134: #{transformer_linear_attn.1} parent=111 // pred_check_branch
          %1005 = sbr.rel (%p1003) target = $region136
        $region135: #{transformer_linear_attn.1} parent=111 // pred_region
          %1006 = dma.done %s999, 3072
        $region136: #{transformer_linear_attn.1} parent=111 // pred_fallthru
          _
        %s1007 = sand.u32 %s58, 1
        %s1008 = scalar_lea.sflag [#allocation14], %s1007
        %s1009 = sand.u32 %s259, 1
        %s1010 = scalar_lea.vmem [#allocation15], %s1009
        // Predicated region
        $region137: #{transformer_linear_attn.1} parent=111 // pred_check
          %p1011 = pneg %p272
        $region138: #{transformer_linear_attn.1} parent=111 // pred_check_branch
          %1013 = sbr.rel (%p1011) target = $region140
        $region139: #{transformer_linear_attn.1} parent=111 // pred_region
          %1014 = dma.done %s1008, 16
        $region140: #{transformer_linear_attn.1} parent=111 // pred_fallthru
          _
        %s1015 = sand.u32 %s58, 1
        %s1016 = scalar_lea.sflag [#allocation17], %s1015
        %s1017 = sand.u32 %s285, 1
        %s1018 = smul.addr %s1017, 192
        %s1019 = scalar_lea.vmem [#allocation16], %s1018
        // Predicated region
        $region141: #{transformer_linear_attn.1} parent=111 // pred_check
          %p1020 = pneg %p298
        $region142: #{transformer_linear_attn.1} parent=111 // pred_check_branch
          %1022 = sbr.rel (%p1020) target = $region144
        $region143: #{transformer_linear_attn.1} parent=111 // pred_region
          %1023 = dma.done %s1016, 3072
        $region144: #{transformer_linear_attn.1} parent=111 // pred_fallthru
          _
        %s1024 = sand.u32 %s58, 1
        %s1025 = scalar_lea.sflag [#allocation17], %s1024
        %s1026 = sand.u32 %s311, 1
        %s1027 = smul.addr %s1026, 3
        %s1028 = scalar_lea.vmem [#allocation18], %s1027
        // Predicated region
        $region145: #{transformer_linear_attn.1} parent=111 // pred_check
          %p1029 = pneg %p324
        $region146: #{transformer_linear_attn.1} parent=111 // pred_check_branch
          %1031 = sbr.rel (%p1029) target = $region148
        $region147: #{transformer_linear_attn.1} parent=111 // pred_region
          %1032 = dma.done %s1025, 48
        $region148: #{transformer_linear_attn.1} parent=111 // pred_fallthru
          _
        %s1033 = sand.u32 %s58, 1
        %s1034 = scalar_lea.sflag [#allocation20], %s1033
        %s1035 = sand.u32 %s337, 1
        %s1036 = smul.addr %s1035, 3
        %s1037 = scalar_lea.vmem [#allocation19], %s1036
        // Predicated region
        $region149: #{transformer_linear_attn.1} parent=111 // pred_check
          %p1038 = pneg %p350
        $region150: #{transformer_linear_attn.1} parent=111 // pred_check_branch
          %1040 = sbr.rel (%p1038) target = $region152
        $region151: #{transformer_linear_attn.1} parent=111 // pred_region
          %1041 = dma.done %s1034, 48
        $region152: #{transformer_linear_attn.1} parent=111 // pred_fallthru
          _
        %s1042 = sand.u32 %s58, 1
        %s1043 = scalar_lea.sflag [#allocation20], %s1042
        %s1044 = sand.u32 %s363, 1
        %s1045 = smul.addr %s1044, 3
        %s1046 = scalar_lea.vmem [#allocation21], %s1045
        // Predicated region
        $region153: #{transformer_linear_attn.1} parent=111 // pred_check
          %p1047 = pneg %p376
        $region154: #{transformer_linear_attn.1} parent=111 // pred_check_branch
          %1049 = sbr.rel (%p1047) target = $region156
        $region155: #{transformer_linear_attn.1} parent=111 // pred_region
          %1050 = dma.done %s1043, 48
        $region156: #{transformer_linear_attn.1} parent=111 // pred_fallthru
          _
        // Predicated region
        $region157: #{transformer_linear_attn.1} parent=111 // pred_check
          %p1051 = pneg %p397
        $region158: #{transformer_linear_attn.1} parent=111 // pred_check_branch
          %1053 = sbr.rel (%p1051) target = $region160
        $region159: #{transformer_linear_attn.1} parent=111 // pred_region
          %1054 = dma.done [#allocation23], 3072
        $region160: #{transformer_linear_attn.1} parent=111 // pred_fallthru
          _
        // Predicated region
        $region161: #{transformer_linear_attn.1} parent=111 // pred_check
          %p1055 = pneg %p418
        $region162: #{transformer_linear_attn.1} parent=111 // pred_check_branch
          %1057 = sbr.rel (%p1055) target = $region164
        $region163: #{transformer_linear_attn.1} parent=111 // pred_region
          %1058 = dma.done [#allocation23], 16
        $region164: #{transformer_linear_attn.1} parent=111 // pred_fallthru
          _
        // Predicated region
        $region165: #{transformer_linear_attn.1} parent=111 // pred_check
          %p1059 = pneg %p439
        $region166: #{transformer_linear_attn.1} parent=111 // pred_check_branch
          %1061 = sbr.rel (%p1059) target = $region168
        $region167: #{transformer_linear_attn.1} parent=111 // pred_region
          %1062 = dma.done [#allocation26], 1024
        $region168: #{transformer_linear_attn.1} parent=111 // pred_fallthru
          _
        // Predicated region
        $region169: #{transformer_linear_attn.1} parent=111 // pred_check
          %p1063 = pneg %p460
        $region170: #{transformer_linear_attn.1} parent=111 // pred_check_branch
          %1065 = sbr.rel (%p1063) target = $region172
        $region171: #{transformer_linear_attn.1} parent=111 // pred_region
          %1066 = dma.done [#allocation26], 16
        $region172: #{transformer_linear_attn.1} parent=111 // pred_fallthru
          _
        // Predicated region
        $region173: #{transformer_linear_attn.1} parent=111 // pred_check
          %p1067 = pneg %p481
        $region174: #{transformer_linear_attn.1} parent=111 // pred_check_branch
          %1069 = sbr.rel (%p1067) target = $region176
        $region175: #{transformer_linear_attn.1} parent=111 // pred_region
          %1070 = dma.done [#allocation29], 16
        $region176: #{transformer_linear_attn.1} parent=111 // pred_fallthru
          _
        // Predicated region
        $region177: #{transformer_linear_attn.1} parent=111 // pred_check
          %p1071 = pneg %p523
        $region178: #{transformer_linear_attn.1} parent=111 // pred_check_branch
          %1073 = sbr.rel (%p1071) target = $region180
        $region179: #{transformer_linear_attn.1} parent=111 // pred_region
          %1074 = dma.done [#allocation29], 3072
        $region180: #{transformer_linear_attn.1} parent=111 // pred_fallthru
          _
        // Predicated region
        $region181: #{transformer_linear_attn.1} parent=111 // pred_check
          %p1075 = pneg %p544
        $region182: #{transformer_linear_attn.1} parent=111 // pred_check_branch
          %1077 = sbr.rel (%p1075) target = $region184
        $region183: #{transformer_linear_attn.1} parent=111 // pred_region
          %1078 = dma.done [#allocation32], 16
        $region184: #{transformer_linear_attn.1} parent=111 // pred_fallthru
          _
        // Predicated region
        $region185: #{transformer_linear_attn.1} parent=111 // pred_check
          %p1079 = pneg %p565
        $region186: #{transformer_linear_attn.1} parent=111 // pred_check_branch
          %1081 = sbr.rel (%p1079) target = $region188
        $region187: #{transformer_linear_attn.1} parent=111 // pred_region
          %1082 = dma.done [#allocation32], 2048
        $region188: #{transformer_linear_attn.1} parent=111 // pred_fallthru
          _
        // Predicated region
        $region189: #{transformer_linear_attn.1} parent=111 // pred_check
          %p1083 = pneg %p586
        $region190: #{transformer_linear_attn.1} parent=111 // pred_check_branch
          %1085 = sbr.rel (%p1083) target = $region192
        $region191: #{transformer_linear_attn.1} parent=111 // pred_region
          %1086 = dma.done [#allocation35], 16
        $region192: #{transformer_linear_attn.1} parent=111 // pred_fallthru
          _
        %p1087 = pneg %p74
        %p1088 = pneg %p71
        %p1089 = pneg %p95
        %p1090 = pneg %p92
        %p1091 = pneg %p116
        %p1092 = pneg %p113
        %s1093 = sand.u32 %s58, 1
        %s1094 = scalar_lea.sflag [#allocation8], %s1093
        %s1095 = sand.u32 %s129, 1
        %s1096 = smul.addr %s1095, 2304
        %s1097 = scalar_lea.vmem [#allocation7], %s1096
        %p1098 = pneg %p142
        %p1099 = pneg %p139
        %s1100 = sand.u32 %s58, 1
        %s1101 = scalar_lea.sflag [#allocation8], %s1100
        %s1102 = sand.u32 %s155, 1
        %s1103 = smul.addr %s1102, 768
        %s1104 = scalar_lea.vmem [#allocation9], %s1103
        %p1105 = pneg %p168
        %p1106 = pneg %p165
        %s1107 = sand.u32 %s58, 1
        %s1108 = scalar_lea.sflag [#allocation11], %s1107
        %s1109 = sand.u32 %s181, 1
        %s1110 = smul.addr %s1109, 3
        %s1111 = scalar_lea.vmem [#allocation10], %s1110
        %p1112 = pneg %p194
        %p1113 = pneg %p191
        %s1114 = sand.u32 %s58, 1
        %s1115 = scalar_lea.sflag [#allocation11], %s1114
        %s1116 = sand.u32 %s207, 1
        %s1117 = smul.addr %s1116, 3
        %s1118 = scalar_lea.vmem [#allocation12], %s1117
        %p1119 = pneg %p220
        %p1120 = pneg %p217
        %s1121 = sand.u32 %s58, 1
        %s1122 = scalar_lea.sflag [#allocation14], %s1121
        %s1123 = sand.u32 %s233, 1
        %s1124 = smul.addr %s1123, 192
        %s1125 = scalar_lea.vmem [#allocation13], %s1124
        %p1126 = pneg %p246
        %p1127 = pneg %p243
        %s1128 = sand.u32 %s58, 1
        %s1129 = scalar_lea.sflag [#allocation14], %s1128
        %s1130 = sand.u32 %s259, 1
        %s1131 = scalar_lea.vmem [#allocation15], %s1130
        %p1132 = pneg %p272
        %p1133 = pneg %p269
        %s1134 = sand.u32 %s58, 1
        %s1135 = scalar_lea.sflag [#allocation17], %s1134
        %s1136 = sand.u32 %s285, 1
        %s1137 = smul.addr %s1136, 192
        %s1138 = scalar_lea.vmem [#allocation16], %s1137
        %p1139 = pneg %p298
        %p1140 = pneg %p295
        %s1141 = sand.u32 %s58, 1
        %s1142 = scalar_lea.sflag [#allocation17], %s1141
        %s1143 = sand.u32 %s311, 1
        %s1144 = smul.addr %s1143, 3
        %s1145 = scalar_lea.vmem [#allocation18], %s1144
        %p1146 = pneg %p324
        %p1147 = pneg %p321
        %s1148 = sand.u32 %s58, 1
        %s1149 = scalar_lea.sflag [#allocation20], %s1148
        %s1150 = sand.u32 %s337, 1
        %s1151 = smul.addr %s1150, 3
        %s1152 = scalar_lea.vmem [#allocation19], %s1151
        %p1153 = pneg %p350
        %p1154 = pneg %p347
        %s1155 = sand.u32 %s58, 1
        %s1156 = scalar_lea.sflag [#allocation20], %s1155
        %s1157 = sand.u32 %s363, 1
        %s1158 = smul.addr %s1157, 3
        %s1159 = scalar_lea.vmem [#allocation21], %s1158
        %p1160 = pneg %p376
        %p1161 = pneg %p373
        %p1162 = pneg %p397
        %p1163 = pneg %p394
        %p1164 = pneg %p418
        %p1165 = pneg %p415
        %p1166 = pneg %p439
        %p1167 = pneg %p436
        %p1168 = pneg %p460
        %p1169 = pneg %p457
        %p1170 = pneg %p481
        %p1171 = pneg %p478
        %p1172 = pneg %p502
        %p1173 = pneg %p499
        %p1174 = pneg %p523
        %p1175 = pneg %p520
        %p1176 = pneg %p544
        %p1177 = pneg %p541
        %p1178 = pneg %p565
        %p1179 = pneg %p562
        %p1180 = pneg %p586
        %p1181 = pneg %p583
        %p1182 = pneg %p607
        %p1183 = pneg %p604
        %v1185 = vlaneseq
        %v1186 = vand.u32 %v1185, 127
        %v1187 = vadd.s32 %v1186, 128
        %v1188 = vadd.s32 %v1186, 256
        %vm1189 = vcmp.lt.s32.totalorder %v1186, 300
        %vm1190 = vcmp.lt.s32.totalorder %v1187, 300
        %vm1191 = vcmp.lt.s32.totalorder %v1188, 300
        %v1192 = vsel %vm1189, 1, 0
        %v1193 = vsel %vm1190, 1, 0
        %v1194 = vsel %vm1191, 1, 0
        %v1195 = vcvt.s32.f32 %v1192
        %v1196 = vcvt.s32.f32 %v1193
        %v1197 = vcvt.s32.f32 %v1194
        %p1198 = scmp.eq.s32.totalorder %s58, 0
        // Predicated region
        $region193: #{transformer_linear_attn.1} parent=111 // pred_check
          %p1199 = pneg %p1198
        $region194: #{transformer_linear_attn.1} parent=111 // pred_check_branch
          %1201 = sbr.rel (%p1199) target = $region196
        $region195: #{transformer_linear_attn.1} parent=111 // pred_region
          %v1202 = vld [vmem:[%s0] sm:$0xff]
          %v1203 = vld [vmem:[%s0 + $0x8] sm:$0xff]
          %v1204 = vld [vmem:[%s0 + $0x10] sm:$0xff]
          %v1205 = vld [vmem:[%s0 + $0x18] sm:$0xff]
          %v1206 = vld [vmem:[%s0 + $0x20] sm:$0xff]
          %v1207 = vld [vmem:[%s0 + $0x28] sm:$0xff]
          %1208 = vst [vmem:[#allocation2] sm:$0xff] %v1202
          %1209 = vst [vmem:[#allocation2 + $0x8] sm:$0xff] %v1203
          %1210 = vst [vmem:[#allocation2 + $0x10] sm:$0xff] %v1204
          %1211 = vst [vmem:[#allocation2 + $0x18] sm:$0xff] %v1205
          %1212 = vst [vmem:[#allocation2 + $0x20] sm:$0xff] %v1206
          %1213 = vst [vmem:[#allocation2 + $0x28] sm:$0xff] %v1207
        $region196: #{transformer_linear_attn.1} parent=111 // pred_fallthru
          _
        %v1214 = vld [vmem:[#allocation2] sm:$0xff]
        %v1215 = vld [vmem:[#allocation2 + $0x8] sm:$0xff]
        %v1216 = vld [vmem:[#allocation2 + $0x10] sm:$0xff]
        %v1217 = vld [vmem:[#allocation2 + $0x18] sm:$0xff]
        %v1218 = vld [vmem:[#allocation2 + $0x20] sm:$0xff]
        %v1219 = vld [vmem:[#allocation2 + $0x28] sm:$0xff]
        %v1220 = vpack.c.bf16 %v1217, %v1214
        %v1221 = vpack.c.bf16 %v1218, %v1215
        %v1222 = vpack.c.bf16 %v1219, %v1216
        %v1223 = vld [vmem:[#allocation4] sm:$0x1]
        %v1224 = vld [vmem:[#allocation4 + $0x1] sm:$0x1]
        %v1225 = vld [vmem:[%s966] sm:$0xff]
        %v1226 = vld [vmem:[%s966 + $0x8] sm:$0xff]
        %v1227 = vld [vmem:[%s966 + $0x10] sm:$0xff]
        %v1228 = vld [vmem:[%s966 + $0x18] sm:$0xff]
        %v1229 = vld [vmem:[%s966 + $0x20] sm:$0xff]
        %v1230 = vld [vmem:[%s966 + $0x28] sm:$0xff]
        %v1231 = vld [vmem:[%s966 + $0x30] sm:$0xff]
        %v1232 = vld [vmem:[%s966 + $0x38] sm:$0xff]
        %v1233 = vld [vmem:[%s966 + $0x40] sm:$0xff]
        %v1234 = vld [vmem:[%s966 + $0x48] sm:$0xff]
        %v1235 = vld [vmem:[%s966 + $0x50] sm:$0xff]
        %v1236 = vld [vmem:[%s966 + $0x58] sm:$0xff]
        %v1237 = vld [vmem:[%s966 + $0x60] sm:$0xff]
        %v1238 = vld [vmem:[%s966 + $0x68] sm:$0xff]
        %v1239 = vld [vmem:[%s966 + $0x70] sm:$0xff]
        %v1240 = vld [vmem:[%s966 + $0x78] sm:$0xff]
        %v1241 = vld [vmem:[%s966 + $0x80] sm:$0xff]
        %v1242 = vld [vmem:[%s966 + $0x88] sm:$0xff]
        %v1243 = vld [vmem:[%s966 + $0x90] sm:$0xff]
        %v1244 = vld [vmem:[%s966 + $0x98] sm:$0xff]
        %v1245 = vld [vmem:[%s966 + $0xa0] sm:$0xff]
        %v1246 = vld [vmem:[%s966 + $0xa8] sm:$0xff]
        %v1247 = vld [vmem:[%s966 + $0xb0] sm:$0xff]
        %v1248 = vld [vmem:[%s966 + $0xb8] sm:$0xff]
        %v1249 = vld [vmem:[%s966 + $0xc0] sm:$0xff]
        %v1250 = vld [vmem:[%s966 + $0xc8] sm:$0xff]
        %v1251 = vld [vmem:[%s966 + $0xd0] sm:$0xff]
        %v1252 = vld [vmem:[%s966 + $0xd8] sm:$0xff]
        %v1253 = vld [vmem:[%s966 + $0xe0] sm:$0xff]
        %v1254 = vld [vmem:[%s966 + $0xe8] sm:$0xff]
        %v1255 = vld [vmem:[%s966 + $0xf0] sm:$0xff]
        %v1256 = vld [vmem:[%s966 + $0xf8] sm:$0xff]
        %v1257 = vld [vmem:[%s966 + $0x100] sm:$0xff]
        %v1258 = vld [vmem:[%s966 + $0x108] sm:$0xff]
        %v1259 = vld [vmem:[%s966 + $0x110] sm:$0xff]
        %v1260 = vld [vmem:[%s966 + $0x118] sm:$0xff]
        %v1261 = vld [vmem:[%s966 + $0x120] sm:$0xff]
        %v1262 = vld [vmem:[%s966 + $0x128] sm:$0xff]
        %v1263 = vld [vmem:[%s966 + $0x130] sm:$0xff]
        %v1264 = vld [vmem:[%s966 + $0x138] sm:$0xff]
        %v1265 = vld [vmem:[%s966 + $0x140] sm:$0xff]
        %v1266 = vld [vmem:[%s966 + $0x148] sm:$0xff]
        %v1267 = vld [vmem:[%s966 + $0x150] sm:$0xff]
        %v1268 = vld [vmem:[%s966 + $0x158] sm:$0xff]
        %v1269 = vld [vmem:[%s966 + $0x160] sm:$0xff]
        %v1270 = vld [vmem:[%s966 + $0x168] sm:$0xff]
        %v1271 = vld [vmem:[%s966 + $0x170] sm:$0xff]
        %v1272 = vld [vmem:[%s966 + $0x178] sm:$0xff]
        %v1273 = vld [vmem:[%s966 + $0x180] sm:$0xff]
        %v1274 = vld [vmem:[%s966 + $0x188] sm:$0xff]
        %v1275 = vld [vmem:[%s966 + $0x190] sm:$0xff]
        %v1276 = vld [vmem:[%s966 + $0x198] sm:$0xff]
        %v1277 = vld [vmem:[%s966 + $0x1a0] sm:$0xff]
        %v1278 = vld [vmem:[%s966 + $0x1a8] sm:$0xff]
        %v1279 = vld [vmem:[%s966 + $0x1b0] sm:$0xff]
        %v1280 = vld [vmem:[%s966 + $0x1b8] sm:$0xff]
        %v1281 = vld [vmem:[%s966 + $0x1c0] sm:$0xff]
        %v1282 = vld [vmem:[%s966 + $0x1c8] sm:$0xff]
        %v1283 = vld [vmem:[%s966 + $0x1d0] sm:$0xff]
        %v1284 = vld [vmem:[%s966 + $0x1d8] sm:$0xff]
        %v1285 = vld [vmem:[%s966 + $0x1e0] sm:$0xff]
        %v1286 = vld [vmem:[%s966 + $0x1e8] sm:$0xff]
        %v1287 = vld [vmem:[%s966 + $0x1f0] sm:$0xff]
        %v1288 = vld [vmem:[%s966 + $0x1f8] sm:$0xff]
        %v1289 = vld [vmem:[%s966 + $0x200] sm:$0xff]
        %v1290 = vld [vmem:[%s966 + $0x208] sm:$0xff]
        %v1291 = vld [vmem:[%s966 + $0x210] sm:$0xff]
        %v1292 = vld [vmem:[%s966 + $0x218] sm:$0xff]
        %v1293 = vld [vmem:[%s966 + $0x220] sm:$0xff]
        %v1294 = vld [vmem:[%s966 + $0x228] sm:$0xff]
        %v1295 = vld [vmem:[%s966 + $0x230] sm:$0xff]
        %v1296 = vld [vmem:[%s966 + $0x238] sm:$0xff]
        %v1297 = vld [vmem:[%s966 + $0x240] sm:$0xff]
        %v1298 = vld [vmem:[%s966 + $0x248] sm:$0xff]
        %v1299 = vld [vmem:[%s966 + $0x250] sm:$0xff]
        %v1300 = vld [vmem:[%s966 + $0x258] sm:$0xff]
        %v1301 = vld [vmem:[%s966 + $0x260] sm:$0xff]
        %v1302 = vld [vmem:[%s966 + $0x268] sm:$0xff]
        %v1303 = vld [vmem:[%s966 + $0x270] sm:$0xff]
        %v1304 = vld [vmem:[%s966 + $0x278] sm:$0xff]
        %v1305 = vld [vmem:[%s966 + $0x280] sm:$0xff]
        %v1306 = vld [vmem:[%s966 + $0x288] sm:$0xff]
        %v1307 = vld [vmem:[%s966 + $0x290] sm:$0xff]
        %v1308 = vld [vmem:[%s966 + $0x298] sm:$0xff]
        %v1309 = vld [vmem:[%s966 + $0x2a0] sm:$0xff]
        %v1310 = vld [vmem:[%s966 + $0x2a8] sm:$0xff]
        %v1311 = vld [vmem:[%s966 + $0x2b0] sm:$0xff]
        %v1312 = vld [vmem:[%s966 + $0x2b8] sm:$0xff]
        %v1313 = vld [vmem:[%s966 + $0x2c0] sm:$0xff]
        %v1314 = vld [vmem:[%s966 + $0x2c8] sm:$0xff]
        %v1315 = vld [vmem:[%s966 + $0x2d0] sm:$0xff]
        %v1316 = vld [vmem:[%s966 + $0x2d8] sm:$0xff]
        %v1317 = vld [vmem:[%s966 + $0x2e0] sm:$0xff]
        %v1318 = vld [vmem:[%s966 + $0x2e8] sm:$0xff]
        %v1319 = vld [vmem:[%s966 + $0x2f0] sm:$0xff]
        %v1320 = vld [vmem:[%s966 + $0x2f8] sm:$0xff]
        %v1321 = vld [vmem:[%s966 + $0x300] sm:$0xff]
        %v1322 = vld [vmem:[%s966 + $0x308] sm:$0xff]
        %v1323 = vld [vmem:[%s966 + $0x310] sm:$0xff]
        %v1324 = vld [vmem:[%s966 + $0x318] sm:$0xff]
        %v1325 = vld [vmem:[%s966 + $0x320] sm:$0xff]
        %v1326 = vld [vmem:[%s966 + $0x328] sm:$0xff]
        %v1327 = vld [vmem:[%s966 + $0x330] sm:$0xff]
        %v1328 = vld [vmem:[%s966 + $0x338] sm:$0xff]
        %v1329 = vld [vmem:[%s966 + $0x340] sm:$0xff]
        %v1330 = vld [vmem:[%s966 + $0x348] sm:$0xff]
        %v1331 = vld [vmem:[%s966 + $0x350] sm:$0xff]
        %v1332 = vld [vmem:[%s966 + $0x358] sm:$0xff]
        %v1333 = vld [vmem:[%s966 + $0x360] sm:$0xff]
        %v1334 = vld [vmem:[%s966 + $0x368] sm:$0xff]
        %v1335 = vld [vmem:[%s966 + $0x370] sm:$0xff]
        %v1336 = vld [vmem:[%s966 + $0x378] sm:$0xff]
        %v1337 = vld [vmem:[%s966 + $0x380] sm:$0xff]
        %v1338 = vld [vmem:[%s966 + $0x388] sm:$0xff]
        %v1339 = vld [vmem:[%s966 + $0x390] sm:$0xff]
        %v1340 = vld [vmem:[%s966 + $0x398] sm:$0xff]
        %v1341 = vld [vmem:[%s966 + $0x3a0] sm:$0xff]
        %v1342 = vld [vmem:[%s966 + $0x3a8] sm:$0xff]
        %v1343 = vld [vmem:[%s966 + $0x3b0] sm:$0xff]
        %v1344 = vld [vmem:[%s966 + $0x3b8] sm:$0xff]
        %v1345 = vld [vmem:[%s966 + $0x3c0] sm:$0xff]
        %v1346 = vld [vmem:[%s966 + $0x3c8] sm:$0xff]
        %v1347 = vld [vmem:[%s966 + $0x3d0] sm:$0xff]
        %v1348 = vld [vmem:[%s966 + $0x3d8] sm:$0xff]
        %v1349 = vld [vmem:[%s966 + $0x3e0] sm:$0xff]
        %v1350 = vld [vmem:[%s966 + $0x3e8] sm:$0xff]
        %v1351 = vld [vmem:[%s966 + $0x3f0] sm:$0xff]
        %v1352 = vld [vmem:[%s966 + $0x3f8] sm:$0xff]
        %v1353 = vld [vmem:[%s966 + $0x400] sm:$0xff]
        %v1354 = vld [vmem:[%s966 + $0x408] sm:$0xff]
        %v1355 = vld [vmem:[%s966 + $0x410] sm:$0xff]
        %v1356 = vld [vmem:[%s966 + $0x418] sm:$0xff]
        %v1357 = vld [vmem:[%s966 + $0x420] sm:$0xff]
        %v1358 = vld [vmem:[%s966 + $0x428] sm:$0xff]
        %v1359 = vld [vmem:[%s966 + $0x430] sm:$0xff]
        %v1360 = vld [vmem:[%s966 + $0x438] sm:$0xff]
        %v1361 = vld [vmem:[%s966 + $0x440] sm:$0xff]
        %v1362 = vld [vmem:[%s966 + $0x448] sm:$0xff]
        %v1363 = vld [vmem:[%s966 + $0x450] sm:$0xff]
        %v1364 = vld [vmem:[%s966 + $0x458] sm:$0xff]
        %v1365 = vld [vmem:[%s966 + $0x460] sm:$0xff]
        %v1366 = vld [vmem:[%s966 + $0x468] sm:$0xff]
        %v1367 = vld [vmem:[%s966 + $0x470] sm:$0xff]
        %v1368 = vld [vmem:[%s966 + $0x478] sm:$0xff]
        %v1369 = vld [vmem:[%s966 + $0x480] sm:$0xff]
        %v1370 = vld [vmem:[%s966 + $0x488] sm:$0xff]
        %v1371 = vld [vmem:[%s966 + $0x490] sm:$0xff]
        %v1372 = vld [vmem:[%s966 + $0x498] sm:$0xff]
        %v1373 = vld [vmem:[%s966 + $0x4a0] sm:$0xff]
        %v1374 = vld [vmem:[%s966 + $0x4a8] sm:$0xff]
        %v1375 = vld [vmem:[%s966 + $0x4b0] sm:$0xff]
        %v1376 = vld [vmem:[%s966 + $0x4b8] sm:$0xff]
        %v1377 = vld [vmem:[%s966 + $0x4c0] sm:$0xff]
        %v1378 = vld [vmem:[%s966 + $0x4c8] sm:$0xff]
        %v1379 = vld [vmem:[%s966 + $0x4d0] sm:$0xff]
        %v1380 = vld [vmem:[%s966 + $0x4d8] sm:$0xff]
        %v1381 = vld [vmem:[%s966 + $0x4e0] sm:$0xff]
        %v1382 = vld [vmem:[%s966 + $0x4e8] sm:$0xff]
        %v1383 = vld [vmem:[%s966 + $0x4f0] sm:$0xff]
        %v1384 = vld [vmem:[%s966 + $0x4f8] sm:$0xff]
        %v1385 = vld [vmem:[%s966 + $0x500] sm:$0xff]
        %v1386 = vld [vmem:[%s966 + $0x508] sm:$0xff]
        %v1387 = vld [vmem:[%s966 + $0x510] sm:$0xff]
        %v1388 = vld [vmem:[%s966 + $0x518] sm:$0xff]
        %v1389 = vld [vmem:[%s966 + $0x520] sm:$0xff]
        %v1390 = vld [vmem:[%s966 + $0x528] sm:$0xff]
        %v1391 = vld [vmem:[%s966 + $0x530] sm:$0xff]
        %v1392 = vld [vmem:[%s966 + $0x538] sm:$0xff]
        %v1393 = vld [vmem:[%s966 + $0x540] sm:$0xff]
        %v1394 = vld [vmem:[%s966 + $0x548] sm:$0xff]
        %v1395 = vld [vmem:[%s966 + $0x550] sm:$0xff]
        %v1396 = vld [vmem:[%s966 + $0x558] sm:$0xff]
        %v1397 = vld [vmem:[%s966 + $0x560] sm:$0xff]
        %v1398 = vld [vmem:[%s966 + $0x568] sm:$0xff]
        %v1399 = vld [vmem:[%s966 + $0x570] sm:$0xff]
        %v1400 = vld [vmem:[%s966 + $0x578] sm:$0xff]
        %v1401 = vld [vmem:[%s966 + $0x580] sm:$0xff]
        %v1402 = vld [vmem:[%s966 + $0x588] sm:$0xff]
        %v1403 = vld [vmem:[%s966 + $0x590] sm:$0xff]
        %v1404 = vld [vmem:[%s966 + $0x598] sm:$0xff]
        %v1405 = vld [vmem:[%s966 + $0x5a0] sm:$0xff]
        %v1406 = vld [vmem:[%s966 + $0x5a8] sm:$0xff]
        %v1407 = vld [vmem:[%s966 + $0x5b0] sm:$0xff]
        %v1408 = vld [vmem:[%s966 + $0x5b8] sm:$0xff]
        %v1409 = vld [vmem:[%s966 + $0x5c0] sm:$0xff]
        %v1410 = vld [vmem:[%s966 + $0x5c8] sm:$0xff]
        %v1411 = vld [vmem:[%s966 + $0x5d0] sm:$0xff]
        %v1412 = vld [vmem:[%s966 + $0x5d8] sm:$0xff]
        %v1413 = vld [vmem:[%s966 + $0x5e0] sm:$0xff]
        %v1414 = vld [vmem:[%s966 + $0x5e8] sm:$0xff]
        %v1415 = vld [vmem:[%s966 + $0x5f0] sm:$0xff]
        %v1416 = vld [vmem:[%s966 + $0x5f8] sm:$0xff]
        %v1417 = vld [vmem:[%s966 + $0x600] sm:$0xff]
        %v1418 = vld [vmem:[%s966 + $0x608] sm:$0xff]
        %v1419 = vld [vmem:[%s966 + $0x610] sm:$0xff]
        %v1420 = vld [vmem:[%s966 + $0x618] sm:$0xff]
        %v1421 = vld [vmem:[%s966 + $0x620] sm:$0xff]
        %v1422 = vld [vmem:[%s966 + $0x628] sm:$0xff]
        %v1423 = vld [vmem:[%s966 + $0x630] sm:$0xff]
        %v1424 = vld [vmem:[%s966 + $0x638] sm:$0xff]
        %v1425 = vld [vmem:[%s966 + $0x640] sm:$0xff]
        %v1426 = vld [vmem:[%s966 + $0x648] sm:$0xff]
        %v1427 = vld [vmem:[%s966 + $0x650] sm:$0xff]
        %v1428 = vld [vmem:[%s966 + $0x658] sm:$0xff]
        %v1429 = vld [vmem:[%s966 + $0x660] sm:$0xff]
        %v1430 = vld [vmem:[%s966 + $0x668] sm:$0xff]
        %v1431 = vld [vmem:[%s966 + $0x670] sm:$0xff]
        %v1432 = vld [vmem:[%s966 + $0x678] sm:$0xff]
        %v1433 = vld [vmem:[%s966 + $0x680] sm:$0xff]
        %v1434 = vld [vmem:[%s966 + $0x688] sm:$0xff]
        %v1435 = vld [vmem:[%s966 + $0x690] sm:$0xff]
        %v1436 = vld [vmem:[%s966 + $0x698] sm:$0xff]
        %v1437 = vld [vmem:[%s966 + $0x6a0] sm:$0xff]
        %v1438 = vld [vmem:[%s966 + $0x6a8] sm:$0xff]
        %v1439 = vld [vmem:[%s966 + $0x6b0] sm:$0xff]
        %v1440 = vld [vmem:[%s966 + $0x6b8] sm:$0xff]
        %v1441 = vld [vmem:[%s966 + $0x6c0] sm:$0xff]
        %v1442 = vld [vmem:[%s966 + $0x6c8] sm:$0xff]
        %v1443 = vld [vmem:[%s966 + $0x6d0] sm:$0xff]
        %v1444 = vld [vmem:[%s966 + $0x6d8] sm:$0xff]
        %v1445 = vld [vmem:[%s966 + $0x6e0] sm:$0xff]
        %v1446 = vld [vmem:[%s966 + $0x6e8] sm:$0xff]
        %v1447 = vld [vmem:[%s966 + $0x6f0] sm:$0xff]
        %v1448 = vld [vmem:[%s966 + $0x6f8] sm:$0xff]
        %v1449 = vld [vmem:[%s966 + $0x700] sm:$0xff]
        %v1450 = vld [vmem:[%s966 + $0x708] sm:$0xff]
        %v1451 = vld [vmem:[%s966 + $0x710] sm:$0xff]
        %v1452 = vld [vmem:[%s966 + $0x718] sm:$0xff]
        %v1453 = vld [vmem:[%s966 + $0x720] sm:$0xff]
        %v1454 = vld [vmem:[%s966 + $0x728] sm:$0xff]
        %v1455 = vld [vmem:[%s966 + $0x730] sm:$0xff]
        %v1456 = vld [vmem:[%s966 + $0x738] sm:$0xff]
        %v1457 = vld [vmem:[%s966 + $0x740] sm:$0xff]
        %v1458 = vld [vmem:[%s966 + $0x748] sm:$0xff]
        %v1459 = vld [vmem:[%s966 + $0x750] sm:$0xff]
        %v1460 = vld [vmem:[%s966 + $0x758] sm:$0xff]
        %v1461 = vld [vmem:[%s966 + $0x760] sm:$0xff]
        %v1462 = vld [vmem:[%s966 + $0x768] sm:$0xff]
        %v1463 = vld [vmem:[%s966 + $0x770] sm:$0xff]
        %v1464 = vld [vmem:[%s966 + $0x778] sm:$0xff]
        %v1465 = vld [vmem:[%s966 + $0x780] sm:$0xff]
        %v1466 = vld [vmem:[%s966 + $0x788] sm:$0xff]
        %v1467 = vld [vmem:[%s966 + $0x790] sm:$0xff]
        %v1468 = vld [vmem:[%s966 + $0x798] sm:$0xff]
        %v1469 = vld [vmem:[%s966 + $0x7a0] sm:$0xff]
        %v1470 = vld [vmem:[%s966 + $0x7a8] sm:$0xff]
        %v1471 = vld [vmem:[%s966 + $0x7b0] sm:$0xff]
        %v1472 = vld [vmem:[%s966 + $0x7b8] sm:$0xff]
        %v1473 = vld [vmem:[%s966 + $0x7c0] sm:$0xff]
        %v1474 = vld [vmem:[%s966 + $0x7c8] sm:$0xff]
        %v1475 = vld [vmem:[%s966 + $0x7d0] sm:$0xff]
        %v1476 = vld [vmem:[%s966 + $0x7d8] sm:$0xff]
        %v1477 = vld [vmem:[%s966 + $0x7e0] sm:$0xff]
        %v1478 = vld [vmem:[%s966 + $0x7e8] sm:$0xff]
        %v1479 = vld [vmem:[%s966 + $0x7f0] sm:$0xff]
        %v1480 = vld [vmem:[%s966 + $0x7f8] sm:$0xff]
        %v1481 = vld [vmem:[%s966 + $0x800] sm:$0xff]
        %v1482 = vld [vmem:[%s966 + $0x808] sm:$0xff]
        %v1483 = vld [vmem:[%s966 + $0x810] sm:$0xff]
        %v1484 = vld [vmem:[%s966 + $0x818] sm:$0xff]
        %v1485 = vld [vmem:[%s966 + $0x820] sm:$0xff]
        %v1486 = vld [vmem:[%s966 + $0x828] sm:$0xff]
        %v1487 = vld [vmem:[%s966 + $0x830] sm:$0xff]
        %v1488 = vld [vmem:[%s966 + $0x838] sm:$0xff]
        %v1489 = vld [vmem:[%s966 + $0x840] sm:$0xff]
        %v1490 = vld [vmem:[%s966 + $0x848] sm:$0xff]
        %v1491 = vld [vmem:[%s966 + $0x850] sm:$0xff]
        %v1492 = vld [vmem:[%s966 + $0x858] sm:$0xff]
        %v1493 = vld [vmem:[%s966 + $0x860] sm:$0xff]
        %v1494 = vld [vmem:[%s966 + $0x868] sm:$0xff]
        %v1495 = vld [vmem:[%s966 + $0x870] sm:$0xff]
        %v1496 = vld [vmem:[%s966 + $0x878] sm:$0xff]
        %v1497 = vld [vmem:[%s966 + $0x880] sm:$0xff]
        %v1498 = vld [vmem:[%s966 + $0x888] sm:$0xff]
        %v1499 = vld [vmem:[%s966 + $0x890] sm:$0xff]
        %v1500 = vld [vmem:[%s966 + $0x898] sm:$0xff]
        %v1501 = vld [vmem:[%s966 + $0x8a0] sm:$0xff]
        %v1502 = vld [vmem:[%s966 + $0x8a8] sm:$0xff]
        %v1503 = vld [vmem:[%s966 + $0x8b0] sm:$0xff]
        %v1504 = vld [vmem:[%s966 + $0x8b8] sm:$0xff]
        %v1505 = vld [vmem:[%s966 + $0x8c0] sm:$0xff]
        %v1506 = vld [vmem:[%s966 + $0x8c8] sm:$0xff]
        %v1507 = vld [vmem:[%s966 + $0x8d0] sm:$0xff]
        %v1508 = vld [vmem:[%s966 + $0x8d8] sm:$0xff]
        %v1509 = vld [vmem:[%s966 + $0x8e0] sm:$0xff]
        %v1510 = vld [vmem:[%s966 + $0x8e8] sm:$0xff]
        %v1511 = vld [vmem:[%s966 + $0x8f0] sm:$0xff]
        %v1512 = vld [vmem:[%s966 + $0x8f8] sm:$0xff]
        %v1801 = vunpack.c.l.b16 %v1225
        %v1802 = vunpack.c.h.b16 %v1225
        %v1803 = vunpack.c.l.b16 %v1226
        %v1804 = vunpack.c.h.b16 %v1226
        %v1805 = vunpack.c.l.b16 %v1227
        %v1806 = vunpack.c.h.b16 %v1227
        %v1807 = vunpack.c.l.b16 %v1228
        %v1808 = vunpack.c.h.b16 %v1228
        %v1809 = vunpack.c.l.b16 %v1229
        %v1810 = vunpack.c.h.b16 %v1229
        %v1811 = vunpack.c.l.b16 %v1230
        %v1812 = vunpack.c.h.b16 %v1230
        %v1813 = vunpack.c.l.b16 %v1231
        %v1814 = vunpack.c.h.b16 %v1231
        %v1815 = vunpack.c.l.b16 %v1232
        %v1816 = vunpack.c.h.b16 %v1232
        %v1817 = vunpack.c.l.b16 %v1233
        %v1818 = vunpack.c.h.b16 %v1233
        %v1819 = vunpack.c.l.b16 %v1234
        %v1820 = vunpack.c.h.b16 %v1234
        %v1821 = vunpack.c.l.b16 %v1235
        %v1822 = vunpack.c.h.b16 %v1235
        %v1823 = vunpack.c.l.b16 %v1236
        %v1824 = vunpack.c.h.b16 %v1236
        %v1825 = vunpack.c.l.b16 %v1237
        %v1826 = vunpack.c.h.b16 %v1237
        %v1827 = vunpack.c.l.b16 %v1238
        %v1828 = vunpack.c.h.b16 %v1238
        %v1829 = vunpack.c.l.b16 %v1239
        %v1830 = vunpack.c.h.b16 %v1239
        %v1831 = vunpack.c.l.b16 %v1240
        %v1832 = vunpack.c.h.b16 %v1240
        %v1833 = vunpack.c.l.b16 %v1241
        %v1834 = vunpack.c.h.b16 %v1241
        %v1835 = vunpack.c.l.b16 %v1242
        %v1836 = vunpack.c.h.b16 %v1242
        %v1837 = vunpack.c.l.b16 %v1243
        %v1838 = vunpack.c.h.b16 %v1243
        %v1839 = vunpack.c.l.b16 %v1244
        %v1840 = vunpack.c.h.b16 %v1244
        %v1841 = vunpack.c.l.b16 %v1245
        %v1842 = vunpack.c.h.b16 %v1245
        %v1843 = vunpack.c.l.b16 %v1246
        %v1844 = vunpack.c.h.b16 %v1246
        %v1845 = vunpack.c.l.b16 %v1247
        %v1846 = vunpack.c.h.b16 %v1247
        %v1847 = vunpack.c.l.b16 %v1248
        %v1848 = vunpack.c.h.b16 %v1248
        %v1849 = vunpack.c.l.b16 %v1249
        %v1850 = vunpack.c.h.b16 %v1249
        %v1851 = vunpack.c.l.b16 %v1250
        %v1852 = vunpack.c.h.b16 %v1250
        %v1853 = vunpack.c.l.b16 %v1251
        %v1854 = vunpack.c.h.b16 %v1251
        %v1855 = vunpack.c.l.b16 %v1252
        %v1856 = vunpack.c.h.b16 %v1252
        %v1857 = vunpack.c.l.b16 %v1253
        %v1858 = vunpack.c.h.b16 %v1253
        %v1859 = vunpack.c.l.b16 %v1254
        %v1860 = vunpack.c.h.b16 %v1254
        %v1861 = vunpack.c.l.b16 %v1255
        %v1862 = vunpack.c.h.b16 %v1255
        %v1863 = vunpack.c.l.b16 %v1256
        %v1864 = vunpack.c.h.b16 %v1256
        %v1865 = vunpack.c.l.b16 %v1257
        %v1866 = vunpack.c.h.b16 %v1257
        %v1867 = vunpack.c.l.b16 %v1258
        %v1868 = vunpack.c.h.b16 %v1258
        %v1869 = vunpack.c.l.b16 %v1259
        %v1870 = vunpack.c.h.b16 %v1259
        %v1871 = vunpack.c.l.b16 %v1260
        %v1872 = vunpack.c.h.b16 %v1260
        %v1873 = vunpack.c.l.b16 %v1261
        %v1874 = vunpack.c.h.b16 %v1261
        %v1875 = vunpack.c.l.b16 %v1262
        %v1876 = vunpack.c.h.b16 %v1262
        %v1877 = vunpack.c.l.b16 %v1263
        %v1878 = vunpack.c.h.b16 %v1263
        %v1879 = vunpack.c.l.b16 %v1264
        %v1880 = vunpack.c.h.b16 %v1264
        %v1881 = vunpack.c.l.b16 %v1265
        %v1882 = vunpack.c.h.b16 %v1265
        %v1883 = vunpack.c.l.b16 %v1266
        %v1884 = vunpack.c.h.b16 %v1266
        %v1885 = vunpack.c.l.b16 %v1267
        %v1886 = vunpack.c.h.b16 %v1267
        %v1887 = vunpack.c.l.b16 %v1268
        %v1888 = vunpack.c.h.b16 %v1268
        %v1889 = vunpack.c.l.b16 %v1269
        %v1890 = vunpack.c.h.b16 %v1269
        %v1891 = vunpack.c.l.b16 %v1270
        %v1892 = vunpack.c.h.b16 %v1270
        %v1893 = vunpack.c.l.b16 %v1271
        %v1894 = vunpack.c.h.b16 %v1271
        %v1895 = vunpack.c.l.b16 %v1272
        %v1896 = vunpack.c.h.b16 %v1272
        %v1897 = vunpack.c.l.b16 %v1273
        %v1898 = vunpack.c.h.b16 %v1273
        %v1899 = vunpack.c.l.b16 %v1274
        %v1900 = vunpack.c.h.b16 %v1274
        %v1901 = vunpack.c.l.b16 %v1275
        %v1902 = vunpack.c.h.b16 %v1275
        %v1903 = vunpack.c.l.b16 %v1276
        %v1904 = vunpack.c.h.b16 %v1276
        %v1905 = vunpack.c.l.b16 %v1277
        %v1906 = vunpack.c.h.b16 %v1277
        %v1907 = vunpack.c.l.b16 %v1278
        %v1908 = vunpack.c.h.b16 %v1278
        %v1909 = vunpack.c.l.b16 %v1279
        %v1910 = vunpack.c.h.b16 %v1279
        %v1911 = vunpack.c.l.b16 %v1280
        %v1912 = vunpack.c.h.b16 %v1280
        %v1913 = vunpack.c.l.b16 %v1281
        %v1914 = vunpack.c.h.b16 %v1281
        %v1915 = vunpack.c.l.b16 %v1282
        %v1916 = vunpack.c.h.b16 %v1282
        %v1917 = vunpack.c.l.b16 %v1283
        %v1918 = vunpack.c.h.b16 %v1283
        %v1919 = vunpack.c.l.b16 %v1284
        %v1920 = vunpack.c.h.b16 %v1284
        %v1921 = vunpack.c.l.b16 %v1285
        %v1922 = vunpack.c.h.b16 %v1285
        %v1923 = vunpack.c.l.b16 %v1286
        %v1924 = vunpack.c.h.b16 %v1286
        %v1925 = vunpack.c.l.b16 %v1287
        %v1926 = vunpack.c.h.b16 %v1287
        %v1927 = vunpack.c.l.b16 %v1288
        %v1928 = vunpack.c.h.b16 %v1288
        %v1929 = vunpack.c.l.b16 %v1289
        %v1930 = vunpack.c.h.b16 %v1289
        %v1931 = vunpack.c.l.b16 %v1290
        %v1932 = vunpack.c.h.b16 %v1290
        %v1933 = vunpack.c.l.b16 %v1291
        %v1934 = vunpack.c.h.b16 %v1291
        %v1935 = vunpack.c.l.b16 %v1292
        %v1936 = vunpack.c.h.b16 %v1292
        %v1937 = vunpack.c.l.b16 %v1293
        %v1938 = vunpack.c.h.b16 %v1293
        %v1939 = vunpack.c.l.b16 %v1294
        %v1940 = vunpack.c.h.b16 %v1294
        %v1941 = vunpack.c.l.b16 %v1295
        %v1942 = vunpack.c.h.b16 %v1295
        %v1943 = vunpack.c.l.b16 %v1296
        %v1944 = vunpack.c.h.b16 %v1296
        %v1945 = vunpack.c.l.b16 %v1297
        %v1946 = vunpack.c.h.b16 %v1297
        %v1947 = vunpack.c.l.b16 %v1298
        %v1948 = vunpack.c.h.b16 %v1298
        %v1949 = vunpack.c.l.b16 %v1299
        %v1950 = vunpack.c.h.b16 %v1299
        %v1951 = vunpack.c.l.b16 %v1300
        %v1952 = vunpack.c.h.b16 %v1300
        %v1953 = vunpack.c.l.b16 %v1301
        %v1954 = vunpack.c.h.b16 %v1301
        %v1955 = vunpack.c.l.b16 %v1302
        %v1956 = vunpack.c.h.b16 %v1302
        %v1957 = vunpack.c.l.b16 %v1303
        %v1958 = vunpack.c.h.b16 %v1303
        %v1959 = vunpack.c.l.b16 %v1304
        %v1960 = vunpack.c.h.b16 %v1304
        %v1961 = vunpack.c.l.b16 %v1305
        %v1962 = vunpack.c.h.b16 %v1305
        %v1963 = vunpack.c.l.b16 %v1306
        %v1964 = vunpack.c.h.b16 %v1306
        %v1965 = vunpack.c.l.b16 %v1307
        %v1966 = vunpack.c.h.b16 %v1307
        %v1967 = vunpack.c.l.b16 %v1308
        %v1968 = vunpack.c.h.b16 %v1308
        %v1969 = vunpack.c.l.b16 %v1309
        %v1970 = vunpack.c.h.b16 %v1309
        %v1971 = vunpack.c.l.b16 %v1310
        %v1972 = vunpack.c.h.b16 %v1310
        %v1973 = vunpack.c.l.b16 %v1311
        %v1974 = vunpack.c.h.b16 %v1311
        %v1975 = vunpack.c.l.b16 %v1312
        %v1976 = vunpack.c.h.b16 %v1312
        %v1977 = vunpack.c.l.b16 %v1313
        %v1978 = vunpack.c.h.b16 %v1313
        %v1979 = vunpack.c.l.b16 %v1314
        %v1980 = vunpack.c.h.b16 %v1314
        %v1981 = vunpack.c.l.b16 %v1315
        %v1982 = vunpack.c.h.b16 %v1315
        %v1983 = vunpack.c.l.b16 %v1316
        %v1984 = vunpack.c.h.b16 %v1316
        %v1985 = vunpack.c.l.b16 %v1317
        %v1986 = vunpack.c.h.b16 %v1317
        %v1987 = vunpack.c.l.b16 %v1318
        %v1988 = vunpack.c.h.b16 %v1318
        %v1989 = vunpack.c.l.b16 %v1319
        %v1990 = vunpack.c.h.b16 %v1319
        %v1991 = vunpack.c.l.b16 %v1320
        %v1992 = vunpack.c.h.b16 %v1320
        %v1993 = vunpack.c.l.b16 %v1321
        %v1994 = vunpack.c.h.b16 %v1321
        %v1995 = vunpack.c.l.b16 %v1322
        %v1996 = vunpack.c.h.b16 %v1322
        %v1997 = vunpack.c.l.b16 %v1323
        %v1998 = vunpack.c.h.b16 %v1323
        %v1999 = vunpack.c.l.b16 %v1324
        %v2000 = vunpack.c.h.b16 %v1324
        %v2001 = vunpack.c.l.b16 %v1325
        %v2002 = vunpack.c.h.b16 %v1325
        %v2003 = vunpack.c.l.b16 %v1326
        %v2004 = vunpack.c.h.b16 %v1326
        %v2005 = vunpack.c.l.b16 %v1327
        %v2006 = vunpack.c.h.b16 %v1327
        %v2007 = vunpack.c.l.b16 %v1328
        %v2008 = vunpack.c.h.b16 %v1328
        %v2009 = vunpack.c.l.b16 %v1329
        %v2010 = vunpack.c.h.b16 %v1329
        %v2011 = vunpack.c.l.b16 %v1330
        %v2012 = vunpack.c.h.b16 %v1330
        %v2013 = vunpack.c.l.b16 %v1331
        %v2014 = vunpack.c.h.b16 %v1331
        %v2015 = vunpack.c.l.b16 %v1332
        %v2016 = vunpack.c.h.b16 %v1332
        %v2017 = vunpack.c.l.b16 %v1333
        %v2018 = vunpack.c.h.b16 %v1333
        %v2019 = vunpack.c.l.b16 %v1334
        %v2020 = vunpack.c.h.b16 %v1334
        %v2021 = vunpack.c.l.b16 %v1335
        %v2022 = vunpack.c.h.b16 %v1335
        %v2023 = vunpack.c.l.b16 %v1336
        %v2024 = vunpack.c.h.b16 %v1336
        %v2025 = vunpack.c.l.b16 %v1337
        %v2026 = vunpack.c.h.b16 %v1337
        %v2027 = vunpack.c.l.b16 %v1338
        %v2028 = vunpack.c.h.b16 %v1338
        %v2029 = vunpack.c.l.b16 %v1339
        %v2030 = vunpack.c.h.b16 %v1339
        %v2031 = vunpack.c.l.b16 %v1340
        %v2032 = vunpack.c.h.b16 %v1340
        %v2033 = vunpack.c.l.b16 %v1341
        %v2034 = vunpack.c.h.b16 %v1341
        %v2035 = vunpack.c.l.b16 %v1342
        %v2036 = vunpack.c.h.b16 %v1342
        %v2037 = vunpack.c.l.b16 %v1343
        %v2038 = vunpack.c.h.b16 %v1343
        %v2039 = vunpack.c.l.b16 %v1344
        %v2040 = vunpack.c.h.b16 %v1344
        %v2041 = vunpack.c.l.b16 %v1345
        %v2042 = vunpack.c.h.b16 %v1345
        %v2043 = vunpack.c.l.b16 %v1346
        %v2044 = vunpack.c.h.b16 %v1346
        %v2045 = vunpack.c.l.b16 %v1347
        %v2046 = vunpack.c.h.b16 %v1347
        %v2047 = vunpack.c.l.b16 %v1348
        %v2048 = vunpack.c.h.b16 %v1348
        %v2049 = vunpack.c.l.b16 %v1349
        %v2050 = vunpack.c.h.b16 %v1349
        %v2051 = vunpack.c.l.b16 %v1350
        %v2052 = vunpack.c.h.b16 %v1350
        %v2053 = vunpack.c.l.b16 %v1351
        %v2054 = vunpack.c.h.b16 %v1351
        %v2055 = vunpack.c.l.b16 %v1352
        %v2056 = vunpack.c.h.b16 %v1352
        %v2057 = vunpack.c.l.b16 %v1353
        %v2058 = vunpack.c.h.b16 %v1353
        %v2059 = vunpack.c.l.b16 %v1354
        %v2060 = vunpack.c.h.b16 %v1354
        %v2061 = vunpack.c.l.b16 %v1355
        %v2062 = vunpack.c.h.b16 %v1355
        %v2063 = vunpack.c.l.b16 %v1356
        %v2064 = vunpack.c.h.b16 %v1356
        %v2065 = vunpack.c.l.b16 %v1357
        %v2066 = vunpack.c.h.b16 %v1357
        %v2067 = vunpack.c.l.b16 %v1358
        %v2068 = vunpack.c.h.b16 %v1358
        %v2069 = vunpack.c.l.b16 %v1359
        %v2070 = vunpack.c.h.b16 %v1359
        %v2071 = vunpack.c.l.b16 %v1360
        %v2072 = vunpack.c.h.b16 %v1360
        %v2073 = vunpack.c.l.b16 %v1361
        %v2074 = vunpack.c.h.b16 %v1361
        %v2075 = vunpack.c.l.b16 %v1362
        %v2076 = vunpack.c.h.b16 %v1362
        %v2077 = vunpack.c.l.b16 %v1363
        %v2078 = vunpack.c.h.b16 %v1363
        %v2079 = vunpack.c.l.b16 %v1364
        %v2080 = vunpack.c.h.b16 %v1364
        %v2081 = vunpack.c.l.b16 %v1365
        %v2082 = vunpack.c.h.b16 %v1365
        %v2083 = vunpack.c.l.b16 %v1366
        %v2084 = vunpack.c.h.b16 %v1366
        %v2085 = vunpack.c.l.b16 %v1367
        %v2086 = vunpack.c.h.b16 %v1367
        %v2087 = vunpack.c.l.b16 %v1368
        %v2088 = vunpack.c.h.b16 %v1368
        %v2089 = vunpack.c.l.b16 %v1369
        %v2090 = vunpack.c.h.b16 %v1369
        %v2091 = vunpack.c.l.b16 %v1370
        %v2092 = vunpack.c.h.b16 %v1370
        %v2093 = vunpack.c.l.b16 %v1371
        %v2094 = vunpack.c.h.b16 %v1371
        %v2095 = vunpack.c.l.b16 %v1372
        %v2096 = vunpack.c.h.b16 %v1372
        %v2097 = vunpack.c.l.b16 %v1373
        %v2098 = vunpack.c.h.b16 %v1373
        %v2099 = vunpack.c.l.b16 %v1374
        %v2100 = vunpack.c.h.b16 %v1374
        %v2101 = vunpack.c.l.b16 %v1375
        %v2102 = vunpack.c.h.b16 %v1375
        %v2103 = vunpack.c.l.b16 %v1376
        %v2104 = vunpack.c.h.b16 %v1376
        %v2105 = vunpack.c.l.b16 %v1377
        %v2106 = vunpack.c.h.b16 %v1377
        %v2107 = vunpack.c.l.b16 %v1378
        %v2108 = vunpack.c.h.b16 %v1378
        %v2109 = vunpack.c.l.b16 %v1379
        %v2110 = vunpack.c.h.b16 %v1379
        %v2111 = vunpack.c.l.b16 %v1380
        %v2112 = vunpack.c.h.b16 %v1380
        %v2113 = vunpack.c.l.b16 %v1381
        %v2114 = vunpack.c.h.b16 %v1381
        %v2115 = vunpack.c.l.b16 %v1382
        %v2116 = vunpack.c.h.b16 %v1382
        %v2117 = vunpack.c.l.b16 %v1383
        %v2118 = vunpack.c.h.b16 %v1383
        %v2119 = vunpack.c.l.b16 %v1384
        %v2120 = vunpack.c.h.b16 %v1384
        %v2121 = vunpack.c.l.b16 %v1385
        %v2122 = vunpack.c.h.b16 %v1385
        %v2123 = vunpack.c.l.b16 %v1386
        %v2124 = vunpack.c.h.b16 %v1386
        %v2125 = vunpack.c.l.b16 %v1387
        %v2126 = vunpack.c.h.b16 %v1387
        %v2127 = vunpack.c.l.b16 %v1388
        %v2128 = vunpack.c.h.b16 %v1388
        %v2129 = vunpack.c.l.b16 %v1389
        %v2130 = vunpack.c.h.b16 %v1389
        %v2131 = vunpack.c.l.b16 %v1390
        %v2132 = vunpack.c.h.b16 %v1390
        %v2133 = vunpack.c.l.b16 %v1391
        %v2134 = vunpack.c.h.b16 %v1391
        %v2135 = vunpack.c.l.b16 %v1392
        %v2136 = vunpack.c.h.b16 %v1392
        %v2137 = vunpack.c.l.b16 %v1393
        %v2138 = vunpack.c.h.b16 %v1393
        %v2139 = vunpack.c.l.b16 %v1394
        %v2140 = vunpack.c.h.b16 %v1394
        %v2141 = vunpack.c.l.b16 %v1395
        %v2142 = vunpack.c.h.b16 %v1395
        %v2143 = vunpack.c.l.b16 %v1396
        %v2144 = vunpack.c.h.b16 %v1396
        %v2145 = vunpack.c.l.b16 %v1397
        %v2146 = vunpack.c.h.b16 %v1397
        %v2147 = vunpack.c.l.b16 %v1398
        %v2148 = vunpack.c.h.b16 %v1398
        %v2149 = vunpack.c.l.b16 %v1399
        %v2150 = vunpack.c.h.b16 %v1399
        %v2151 = vunpack.c.l.b16 %v1400
        %v2152 = vunpack.c.h.b16 %v1400
        %v2153 = vunpack.c.l.b16 %v1401
        %v2154 = vunpack.c.h.b16 %v1401
        %v2155 = vunpack.c.l.b16 %v1402
        %v2156 = vunpack.c.h.b16 %v1402
        %v2157 = vunpack.c.l.b16 %v1403
        %v2158 = vunpack.c.h.b16 %v1403
        %v2159 = vunpack.c.l.b16 %v1404
        %v2160 = vunpack.c.h.b16 %v1404
        %v2161 = vunpack.c.l.b16 %v1405
        %v2162 = vunpack.c.h.b16 %v1405
        %v2163 = vunpack.c.l.b16 %v1406
        %v2164 = vunpack.c.h.b16 %v1406
        %v2165 = vunpack.c.l.b16 %v1407
        %v2166 = vunpack.c.h.b16 %v1407
        %v2167 = vunpack.c.l.b16 %v1408
        %v2168 = vunpack.c.h.b16 %v1408
        %v2169 = vunpack.c.l.b16 %v1409
        %v2170 = vunpack.c.h.b16 %v1409
        %v2171 = vunpack.c.l.b16 %v1410
        %v2172 = vunpack.c.h.b16 %v1410
        %v2173 = vunpack.c.l.b16 %v1411
        %v2174 = vunpack.c.h.b16 %v1411
        %v2175 = vunpack.c.l.b16 %v1412
        %v2176 = vunpack.c.h.b16 %v1412
        %v2177 = vunpack.c.l.b16 %v1413
        %v2178 = vunpack.c.h.b16 %v1413
        %v2179 = vunpack.c.l.b16 %v1414
        %v2180 = vunpack.c.h.b16 %v1414
        %v2181 = vunpack.c.l.b16 %v1415
        %v2182 = vunpack.c.h.b16 %v1415
        %v2183 = vunpack.c.l.b16 %v1416
        %v2184 = vunpack.c.h.b16 %v1416
        %v2185 = vunpack.c.l.b16 %v1417
        %v2186 = vunpack.c.h.b16 %v1417
        %v2187 = vunpack.c.l.b16 %v1418
        %v2188 = vunpack.c.h.b16 %v1418
        %v2189 = vunpack.c.l.b16 %v1419
        %v2190 = vunpack.c.h.b16 %v1419
        %v2191 = vunpack.c.l.b16 %v1420
        %v2192 = vunpack.c.h.b16 %v1420
        %v2193 = vunpack.c.l.b16 %v1421
        %v2194 = vunpack.c.h.b16 %v1421
        %v2195 = vunpack.c.l.b16 %v1422
        %v2196 = vunpack.c.h.b16 %v1422
        %v2197 = vunpack.c.l.b16 %v1423
        %v2198 = vunpack.c.h.b16 %v1423
        %v2199 = vunpack.c.l.b16 %v1424
        %v2200 = vunpack.c.h.b16 %v1424
        %v2201 = vunpack.c.l.b16 %v1425
        %v2202 = vunpack.c.h.b16 %v1425
        %v2203 = vunpack.c.l.b16 %v1426
        %v2204 = vunpack.c.h.b16 %v1426
        %v2205 = vunpack.c.l.b16 %v1427
        %v2206 = vunpack.c.h.b16 %v1427
        %v2207 = vunpack.c.l.b16 %v1428
        %v2208 = vunpack.c.h.b16 %v1428
        %v2209 = vunpack.c.l.b16 %v1429
        %v2210 = vunpack.c.h.b16 %v1429
        %v2211 = vunpack.c.l.b16 %v1430
        %v2212 = vunpack.c.h.b16 %v1430
        %v2213 = vunpack.c.l.b16 %v1431
        %v2214 = vunpack.c.h.b16 %v1431
        %v2215 = vunpack.c.l.b16 %v1432
        %v2216 = vunpack.c.h.b16 %v1432
        %v2217 = vunpack.c.l.b16 %v1433
        %v2218 = vunpack.c.h.b16 %v1433
        %v2219 = vunpack.c.l.b16 %v1434
        %v2220 = vunpack.c.h.b16 %v1434
        %v2221 = vunpack.c.l.b16 %v1435
        %v2222 = vunpack.c.h.b16 %v1435
        %v2223 = vunpack.c.l.b16 %v1436
        %v2224 = vunpack.c.h.b16 %v1436
        %v2225 = vunpack.c.l.b16 %v1437
        %v2226 = vunpack.c.h.b16 %v1437
        %v2227 = vunpack.c.l.b16 %v1438
        %v2228 = vunpack.c.h.b16 %v1438
        %v2229 = vunpack.c.l.b16 %v1439
        %v2230 = vunpack.c.h.b16 %v1439
        %v2231 = vunpack.c.l.b16 %v1440
        %v2232 = vunpack.c.h.b16 %v1440
        %v2233 = vunpack.c.l.b16 %v1441
        %v2234 = vunpack.c.h.b16 %v1441
        %v2235 = vunpack.c.l.b16 %v1442
        %v2236 = vunpack.c.h.b16 %v1442
        %v2237 = vunpack.c.l.b16 %v1443
        %v2238 = vunpack.c.h.b16 %v1443
        %v2239 = vunpack.c.l.b16 %v1444
        %v2240 = vunpack.c.h.b16 %v1444
        %v2241 = vunpack.c.l.b16 %v1445
        %v2242 = vunpack.c.h.b16 %v1445
        %v2243 = vunpack.c.l.b16 %v1446
        %v2244 = vunpack.c.h.b16 %v1446
        %v2245 = vunpack.c.l.b16 %v1447
        %v2246 = vunpack.c.h.b16 %v1447
        %v2247 = vunpack.c.l.b16 %v1448
        %v2248 = vunpack.c.h.b16 %v1448
        %v2249 = vunpack.c.l.b16 %v1449
        %v2250 = vunpack.c.h.b16 %v1449
        %v2251 = vunpack.c.l.b16 %v1450
        %v2252 = vunpack.c.h.b16 %v1450
        %v2253 = vunpack.c.l.b16 %v1451
        %v2254 = vunpack.c.h.b16 %v1451
        %v2255 = vunpack.c.l.b16 %v1452
        %v2256 = vunpack.c.h.b16 %v1452
        %v2257 = vunpack.c.l.b16 %v1453
        %v2258 = vunpack.c.h.b16 %v1453
        %v2259 = vunpack.c.l.b16 %v1454
        %v2260 = vunpack.c.h.b16 %v1454
        %v2261 = vunpack.c.l.b16 %v1455
        %v2262 = vunpack.c.h.b16 %v1455
        %v2263 = vunpack.c.l.b16 %v1456
        %v2264 = vunpack.c.h.b16 %v1456
        %v2265 = vunpack.c.l.b16 %v1457
        %v2266 = vunpack.c.h.b16 %v1457
        %v2267 = vunpack.c.l.b16 %v1458
        %v2268 = vunpack.c.h.b16 %v1458
        %v2269 = vunpack.c.l.b16 %v1459
        %v2270 = vunpack.c.h.b16 %v1459
        %v2271 = vunpack.c.l.b16 %v1460
        %v2272 = vunpack.c.h.b16 %v1460
        %v2273 = vunpack.c.l.b16 %v1461
        %v2274 = vunpack.c.h.b16 %v1461
        %v2275 = vunpack.c.l.b16 %v1462
        %v2276 = vunpack.c.h.b16 %v1462
        %v2277 = vunpack.c.l.b16 %v1463
        %v2278 = vunpack.c.h.b16 %v1463
        %v2279 = vunpack.c.l.b16 %v1464
        %v2280 = vunpack.c.h.b16 %v1464
        %v2281 = vunpack.c.l.b16 %v1465
        %v2282 = vunpack.c.h.b16 %v1465
        %v2283 = vunpack.c.l.b16 %v1466
        %v2284 = vunpack.c.h.b16 %v1466
        %v2285 = vunpack.c.l.b16 %v1467
        %v2286 = vunpack.c.h.b16 %v1467
        %v2287 = vunpack.c.l.b16 %v1468
        %v2288 = vunpack.c.h.b16 %v1468
        %v2289 = vunpack.c.l.b16 %v1469
        %v2290 = vunpack.c.h.b16 %v1469
        %v2291 = vunpack.c.l.b16 %v1470
        %v2292 = vunpack.c.h.b16 %v1470
        %v2293 = vunpack.c.l.b16 %v1471
        %v2294 = vunpack.c.h.b16 %v1471
        %v2295 = vunpack.c.l.b16 %v1472
        %v2296 = vunpack.c.h.b16 %v1472
        %v2297 = vunpack.c.l.b16 %v1473
        %v2298 = vunpack.c.h.b16 %v1473
        %v2299 = vunpack.c.l.b16 %v1474
        %v2300 = vunpack.c.h.b16 %v1474
        %v2301 = vunpack.c.l.b16 %v1475
        %v2302 = vunpack.c.h.b16 %v1475
        %v2303 = vunpack.c.l.b16 %v1476
        %v2304 = vunpack.c.h.b16 %v1476
        %v2305 = vunpack.c.l.b16 %v1477
        %v2306 = vunpack.c.h.b16 %v1477
        %v2307 = vunpack.c.l.b16 %v1478
        %v2308 = vunpack.c.h.b16 %v1478
        %v2309 = vunpack.c.l.b16 %v1479
        %v2310 = vunpack.c.h.b16 %v1479
        %v2311 = vunpack.c.l.b16 %v1480
        %v2312 = vunpack.c.h.b16 %v1480
        %v2313 = vunpack.c.l.b16 %v1481
        %v2314 = vunpack.c.h.b16 %v1481
        %v2315 = vunpack.c.l.b16 %v1482
        %v2316 = vunpack.c.h.b16 %v1482
        %v2317 = vunpack.c.l.b16 %v1483
        %v2318 = vunpack.c.h.b16 %v1483
        %v2319 = vunpack.c.l.b16 %v1484
        %v2320 = vunpack.c.h.b16 %v1484
        %v2321 = vunpack.c.l.b16 %v1485
        %v2322 = vunpack.c.h.b16 %v1485
        %v2323 = vunpack.c.l.b16 %v1486
        %v2324 = vunpack.c.h.b16 %v1486
        %v2325 = vunpack.c.l.b16 %v1487
        %v2326 = vunpack.c.h.b16 %v1487
        %v2327 = vunpack.c.l.b16 %v1488
        %v2328 = vunpack.c.h.b16 %v1488
        %v2329 = vunpack.c.l.b16 %v1489
        %v2330 = vunpack.c.h.b16 %v1489
        %v2331 = vunpack.c.l.b16 %v1490
        %v2332 = vunpack.c.h.b16 %v1490
        %v2333 = vunpack.c.l.b16 %v1491
        %v2334 = vunpack.c.h.b16 %v1491
        %v2335 = vunpack.c.l.b16 %v1492
        %v2336 = vunpack.c.h.b16 %v1492
        %v2337 = vunpack.c.l.b16 %v1493
        %v2338 = vunpack.c.h.b16 %v1493
        %v2339 = vunpack.c.l.b16 %v1494
        %v2340 = vunpack.c.h.b16 %v1494
        %v2341 = vunpack.c.l.b16 %v1495
        %v2342 = vunpack.c.h.b16 %v1495
        %v2343 = vunpack.c.l.b16 %v1496
        %v2344 = vunpack.c.h.b16 %v1496
        %v2345 = vunpack.c.l.b16 %v1497
        %v2346 = vunpack.c.h.b16 %v1497
        %v2347 = vunpack.c.l.b16 %v1498
        %v2348 = vunpack.c.h.b16 %v1498
        %v2349 = vunpack.c.l.b16 %v1499
        %v2350 = vunpack.c.h.b16 %v1499
        %v2351 = vunpack.c.l.b16 %v1500
        %v2352 = vunpack.c.h.b16 %v1500
        %v2353 = vunpack.c.l.b16 %v1501
        %v2354 = vunpack.c.h.b16 %v1501
        %v2355 = vunpack.c.l.b16 %v1502
        %v2356 = vunpack.c.h.b16 %v1502
        %v2357 = vunpack.c.l.b16 %v1503
        %v2358 = vunpack.c.h.b16 %v1503
        %v2359 = vunpack.c.l.b16 %v1504
        %v2360 = vunpack.c.h.b16 %v1504
        %v2361 = vunpack.c.l.b16 %v1505
        %v2362 = vunpack.c.h.b16 %v1505
        %v2363 = vunpack.c.l.b16 %v1506
        %v2364 = vunpack.c.h.b16 %v1506
        %v2365 = vunpack.c.l.b16 %v1507
        %v2366 = vunpack.c.h.b16 %v1507
        %v2367 = vunpack.c.l.b16 %v1508
        %v2368 = vunpack.c.h.b16 %v1508
        %v2369 = vunpack.c.l.b16 %v1509
        %v2370 = vunpack.c.h.b16 %v1509
        %v2371 = vunpack.c.l.b16 %v1510
        %v2372 = vunpack.c.h.b16 %v1510
        %v2373 = vunpack.c.l.b16 %v1511
        %v2374 = vunpack.c.h.b16 %v1511
        %v2375 = vunpack.c.l.b16 %v1512
        %v2376 = vunpack.c.h.b16 %v1512
        %v2377 = vpack.c.b16 %v1813, %v1801
        %v2378 = vpack.c.b16 %v1814, %v1802
        %v2379 = vpack.c.b16 %v1815, %v1803
        %v2380 = vpack.c.b16 %v1816, %v1804
        %v2381 = vpack.c.b16 %v1817, %v1805
        %v2382 = vpack.c.b16 %v1818, %v1806
        %v2383 = vpack.c.b16 %v1819, %v1807
        %v2384 = vpack.c.b16 %v1820, %v1808
        %v2385 = vpack.c.b16 %v1821, %v1809
        %v2386 = vpack.c.b16 %v1822, %v1810
        %v2387 = vpack.c.b16 %v1823, %v1811
        %v2388 = vpack.c.b16 %v1824, %v1812
        %v2389 = vpack.c.b16 %v1837, %v1825
        %v2390 = vpack.c.b16 %v1838, %v1826
        %v2391 = vpack.c.b16 %v1839, %v1827
        %v2392 = vpack.c.b16 %v1840, %v1828
        %v2393 = vpack.c.b16 %v1841, %v1829
        %v2394 = vpack.c.b16 %v1842, %v1830
        %v2395 = vpack.c.b16 %v1843, %v1831
        %v2396 = vpack.c.b16 %v1844, %v1832
        %v2397 = vpack.c.b16 %v1845, %v1833
        %v2398 = vpack.c.b16 %v1846, %v1834
        %v2399 = vpack.c.b16 %v1847, %v1835
        %v2400 = vpack.c.b16 %v1848, %v1836
        %v2401 = vpack.c.b16 %v1861, %v1849
        %v2402 = vpack.c.b16 %v1862, %v1850
        %v2403 = vpack.c.b16 %v1863, %v1851
        %v2404 = vpack.c.b16 %v1864, %v1852
        %v2405 = vpack.c.b16 %v1865, %v1853
        %v2406 = vpack.c.b16 %v1866, %v1854
        %v2407 = vpack.c.b16 %v1867, %v1855
        %v2408 = vpack.c.b16 %v1868, %v1856
        %v2409 = vpack.c.b16 %v1869, %v1857
        %v2410 = vpack.c.b16 %v1870, %v1858
        %v2411 = vpack.c.b16 %v1871, %v1859
        %v2412 = vpack.c.b16 %v1872, %v1860
        %v2413 = vpack.c.b16 %v1885, %v1873
        %v2414 = vpack.c.b16 %v1886, %v1874
        %v2415 = vpack.c.b16 %v1887, %v1875
        %v2416 = vpack.c.b16 %v1888, %v1876
        %v2417 = vpack.c.b16 %v1889, %v1877
        %v2418 = vpack.c.b16 %v1890, %v1878
        %v2419 = vpack.c.b16 %v1891, %v1879
        %v2420 = vpack.c.b16 %v1892, %v1880
        %v2421 = vpack.c.b16 %v1893, %v1881
        %v2422 = vpack.c.b16 %v1894, %v1882
        %v2423 = vpack.c.b16 %v1895, %v1883
        %v2424 = vpack.c.b16 %v1896, %v1884
        %v2425 = vpack.c.b16 %v1909, %v1897
        %v2426 = vpack.c.b16 %v1910, %v1898
        %v2427 = vpack.c.b16 %v1911, %v1899
        %v2428 = vpack.c.b16 %v1912, %v1900
        %v2429 = vpack.c.b16 %v1913, %v1901
        %v2430 = vpack.c.b16 %v1914, %v1902
        %v2431 = vpack.c.b16 %v1915, %v1903
        %v2432 = vpack.c.b16 %v1916, %v1904
        %v2433 = vpack.c.b16 %v1917, %v1905
        %v2434 = vpack.c.b16 %v1918, %v1906
        %v2435 = vpack.c.b16 %v1919, %v1907
        %v2436 = vpack.c.b16 %v1920, %v1908
        %v2437 = vpack.c.b16 %v1933, %v1921
        %v2438 = vpack.c.b16 %v1934, %v1922
        %v2439 = vpack.c.b16 %v1935, %v1923
        %v2440 = vpack.c.b16 %v1936, %v1924
        %v2441 = vpack.c.b16 %v1937, %v1925
        %v2442 = vpack.c.b16 %v1938, %v1926
        %v2443 = vpack.c.b16 %v1939, %v1927
        %v2444 = vpack.c.b16 %v1940, %v1928
        %v2445 = vpack.c.b16 %v1941, %v1929
        %v2446 = vpack.c.b16 %v1942, %v1930
        %v2447 = vpack.c.b16 %v1943, %v1931
        %v2448 = vpack.c.b16 %v1944, %v1932
        %v2449 = vpack.c.b16 %v1957, %v1945
        %v2450 = vpack.c.b16 %v1958, %v1946
        %v2451 = vpack.c.b16 %v1959, %v1947
        %v2452 = vpack.c.b16 %v1960, %v1948
        %v2453 = vpack.c.b16 %v1961, %v1949
        %v2454 = vpack.c.b16 %v1962, %v1950
        %v2455 = vpack.c.b16 %v1963, %v1951
        %v2456 = vpack.c.b16 %v1964, %v1952
        %v2457 = vpack.c.b16 %v1965, %v1953
        %v2458 = vpack.c.b16 %v1966, %v1954
        %v2459 = vpack.c.b16 %v1967, %v1955
        %v2460 = vpack.c.b16 %v1968, %v1956
        %v2461 = vpack.c.b16 %v1981, %v1969
        %v2462 = vpack.c.b16 %v1982, %v1970
        %v2463 = vpack.c.b16 %v1983, %v1971
        %v2464 = vpack.c.b16 %v1984, %v1972
        %v2465 = vpack.c.b16 %v1985, %v1973
        %v2466 = vpack.c.b16 %v1986, %v1974
        %v2467 = vpack.c.b16 %v1987, %v1975
        %v2468 = vpack.c.b16 %v1988, %v1976
        %v2469 = vpack.c.b16 %v1989, %v1977
        %v2470 = vpack.c.b16 %v1990, %v1978
        %v2471 = vpack.c.b16 %v1991, %v1979
        %v2472 = vpack.c.b16 %v1992, %v1980
        %v2473 = vpack.c.b16 %v2005, %v1993
        %v2474 = vpack.c.b16 %v2006, %v1994
        %v2475 = vpack.c.b16 %v2007, %v1995
        %v2476 = vpack.c.b16 %v2008, %v1996
        %v2477 = vpack.c.b16 %v2009, %v1997
        %v2478 = vpack.c.b16 %v2010, %v1998
        %v2479 = vpack.c.b16 %v2011, %v1999
        %v2480 = vpack.c.b16 %v2012, %v2000
        %v2481 = vpack.c.b16 %v2013, %v2001
        %v2482 = vpack.c.b16 %v2014, %v2002
        %v2483 = vpack.c.b16 %v2015, %v2003
        %v2484 = vpack.c.b16 %v2016, %v2004
        %v2485 = vpack.c.b16 %v2029, %v2017
        %v2486 = vpack.c.b16 %v2030, %v2018
        %v2487 = vpack.c.b16 %v2031, %v2019
        %v2488 = vpack.c.b16 %v2032, %v2020
        %v2489 = vpack.c.b16 %v2033, %v2021
        %v2490 = vpack.c.b16 %v2034, %v2022
        %v2491 = vpack.c.b16 %v2035, %v2023
        %v2492 = vpack.c.b16 %v2036, %v2024
        %v2493 = vpack.c.b16 %v2037, %v2025
        %v2494 = vpack.c.b16 %v2038, %v2026
        %v2495 = vpack.c.b16 %v2039, %v2027
        %v2496 = vpack.c.b16 %v2040, %v2028
        %v2497 = vpack.c.b16 %v2053, %v2041
        %v2498 = vpack.c.b16 %v2054, %v2042
        %v2499 = vpack.c.b16 %v2055, %v2043
        %v2500 = vpack.c.b16 %v2056, %v2044
        %v2501 = vpack.c.b16 %v2057, %v2045
        %v2502 = vpack.c.b16 %v2058, %v2046
        %v2503 = vpack.c.b16 %v2059, %v2047
        %v2504 = vpack.c.b16 %v2060, %v2048
        %v2505 = vpack.c.b16 %v2061, %v2049
        %v2506 = vpack.c.b16 %v2062, %v2050
        %v2507 = vpack.c.b16 %v2063, %v2051
        %v2508 = vpack.c.b16 %v2064, %v2052
        %v2509 = vpack.c.b16 %v2077, %v2065
        %v2510 = vpack.c.b16 %v2078, %v2066
        %v2511 = vpack.c.b16 %v2079, %v2067
        %v2512 = vpack.c.b16 %v2080, %v2068
        %v2513 = vpack.c.b16 %v2081, %v2069
        %v2514 = vpack.c.b16 %v2082, %v2070
        %v2515 = vpack.c.b16 %v2083, %v2071
        %v2516 = vpack.c.b16 %v2084, %v2072
        %v2517 = vpack.c.b16 %v2085, %v2073
        %v2518 = vpack.c.b16 %v2086, %v2074
        %v2519 = vpack.c.b16 %v2087, %v2075
        %v2520 = vpack.c.b16 %v2088, %v2076
        %v2521 = vpack.c.b16 %v2101, %v2089
        %v2522 = vpack.c.b16 %v2102, %v2090
        %v2523 = vpack.c.b16 %v2103, %v2091
        %v2524 = vpack.c.b16 %v2104, %v2092
        %v2525 = vpack.c.b16 %v2105, %v2093
        %v2526 = vpack.c.b16 %v2106, %v2094
        %v2527 = vpack.c.b16 %v2107, %v2095
        %v2528 = vpack.c.b16 %v2108, %v2096
        %v2529 = vpack.c.b16 %v2109, %v2097
        %v2530 = vpack.c.b16 %v2110, %v2098
        %v2531 = vpack.c.b16 %v2111, %v2099
        %v2532 = vpack.c.b16 %v2112, %v2100
        %v2533 = vpack.c.b16 %v2125, %v2113
        %v2534 = vpack.c.b16 %v2126, %v2114
        %v2535 = vpack.c.b16 %v2127, %v2115
        %v2536 = vpack.c.b16 %v2128, %v2116
        %v2537 = vpack.c.b16 %v2129, %v2117
        %v2538 = vpack.c.b16 %v2130, %v2118
        %v2539 = vpack.c.b16 %v2131, %v2119
        %v2540 = vpack.c.b16 %v2132, %v2120
        %v2541 = vpack.c.b16 %v2133, %v2121
        %v2542 = vpack.c.b16 %v2134, %v2122
        %v2543 = vpack.c.b16 %v2135, %v2123
        %v2544 = vpack.c.b16 %v2136, %v2124
        %v2545 = vpack.c.b16 %v2149, %v2137
        %v2546 = vpack.c.b16 %v2150, %v2138
        %v2547 = vpack.c.b16 %v2151, %v2139
        %v2548 = vpack.c.b16 %v2152, %v2140
        %v2549 = vpack.c.b16 %v2153, %v2141
        %v2550 = vpack.c.b16 %v2154, %v2142
        %v2551 = vpack.c.b16 %v2155, %v2143
        %v2552 = vpack.c.b16 %v2156, %v2144
        %v2553 = vpack.c.b16 %v2157, %v2145
        %v2554 = vpack.c.b16 %v2158, %v2146
        %v2555 = vpack.c.b16 %v2159, %v2147
        %v2556 = vpack.c.b16 %v2160, %v2148
        %v2557 = vpack.c.b16 %v2173, %v2161
        %v2558 = vpack.c.b16 %v2174, %v2162
        %v2559 = vpack.c.b16 %v2175, %v2163
        %v2560 = vpack.c.b16 %v2176, %v2164
        %v2561 = vpack.c.b16 %v2177, %v2165
        %v2562 = vpack.c.b16 %v2178, %v2166
        %v2563 = vpack.c.b16 %v2179, %v2167
        %v2564 = vpack.c.b16 %v2180, %v2168
        %v2565 = vpack.c.b16 %v2181, %v2169
        %v2566 = vpack.c.b16 %v2182, %v2170
        %v2567 = vpack.c.b16 %v2183, %v2171
        %v2568 = vpack.c.b16 %v2184, %v2172
        %v2569 = vpack.c.b16 %v2197, %v2185
        %v2570 = vpack.c.b16 %v2198, %v2186
        %v2571 = vpack.c.b16 %v2199, %v2187
        %v2572 = vpack.c.b16 %v2200, %v2188
        %v2573 = vpack.c.b16 %v2201, %v2189
        %v2574 = vpack.c.b16 %v2202, %v2190
        %v2575 = vpack.c.b16 %v2203, %v2191
        %v2576 = vpack.c.b16 %v2204, %v2192
        %v2577 = vpack.c.b16 %v2205, %v2193
        %v2578 = vpack.c.b16 %v2206, %v2194
        %v2579 = vpack.c.b16 %v2207, %v2195
        %v2580 = vpack.c.b16 %v2208, %v2196
        %v2581 = vpack.c.b16 %v2221, %v2209
        %v2582 = vpack.c.b16 %v2222, %v2210
        %v2583 = vpack.c.b16 %v2223, %v2211
        %v2584 = vpack.c.b16 %v2224, %v2212
        %v2585 = vpack.c.b16 %v2225, %v2213
        %v2586 = vpack.c.b16 %v2226, %v2214
        %v2587 = vpack.c.b16 %v2227, %v2215
        %v2588 = vpack.c.b16 %v2228, %v2216
        %v2589 = vpack.c.b16 %v2229, %v2217
        %v2590 = vpack.c.b16 %v2230, %v2218
        %v2591 = vpack.c.b16 %v2231, %v2219
        %v2592 = vpack.c.b16 %v2232, %v2220
        %v2593 = vpack.c.b16 %v2245, %v2233
        %v2594 = vpack.c.b16 %v2246, %v2234
        %v2595 = vpack.c.b16 %v2247, %v2235
        %v2596 = vpack.c.b16 %v2248, %v2236
        %v2597 = vpack.c.b16 %v2249, %v2237
        %v2598 = vpack.c.b16 %v2250, %v2238
        %v2599 = vpack.c.b16 %v2251, %v2239
        %v2600 = vpack.c.b16 %v2252, %v2240
        %v2601 = vpack.c.b16 %v2253, %v2241
        %v2602 = vpack.c.b16 %v2254, %v2242
        %v2603 = vpack.c.b16 %v2255, %v2243
        %v2604 = vpack.c.b16 %v2256, %v2244
        %v2605 = vpack.c.b16 %v2269, %v2257
        %v2606 = vpack.c.b16 %v2270, %v2258
        %v2607 = vpack.c.b16 %v2271, %v2259
        %v2608 = vpack.c.b16 %v2272, %v2260
        %v2609 = vpack.c.b16 %v2273, %v2261
        %v2610 = vpack.c.b16 %v2274, %v2262
        %v2611 = vpack.c.b16 %v2275, %v2263
        %v2612 = vpack.c.b16 %v2276, %v2264
        %v2613 = vpack.c.b16 %v2277, %v2265
        %v2614 = vpack.c.b16 %v2278, %v2266
        %v2615 = vpack.c.b16 %v2279, %v2267
        %v2616 = vpack.c.b16 %v2280, %v2268
        %v2617 = vpack.c.b16 %v2293, %v2281
        %v2618 = vpack.c.b16 %v2294, %v2282
        %v2619 = vpack.c.b16 %v2295, %v2283
        %v2620 = vpack.c.b16 %v2296, %v2284
        %v2621 = vpack.c.b16 %v2297, %v2285
        %v2622 = vpack.c.b16 %v2298, %v2286
        %v2623 = vpack.c.b16 %v2299, %v2287
        %v2624 = vpack.c.b16 %v2300, %v2288
        %v2625 = vpack.c.b16 %v2301, %v2289
        %v2626 = vpack.c.b16 %v2302, %v2290
        %v2627 = vpack.c.b16 %v2303, %v2291
        %v2628 = vpack.c.b16 %v2304, %v2292
        %v2629 = vpack.c.b16 %v2317, %v2305
        %v2630 = vpack.c.b16 %v2318, %v2306
        %v2631 = vpack.c.b16 %v2319, %v2307
        %v2632 = vpack.c.b16 %v2320, %v2308
        %v2633 = vpack.c.b16 %v2321, %v2309
        %v2634 = vpack.c.b16 %v2322, %v2310
        %v2635 = vpack.c.b16 %v2323, %v2311
        %v2636 = vpack.c.b16 %v2324, %v2312
        %v2637 = vpack.c.b16 %v2325, %v2313
        %v2638 = vpack.c.b16 %v2326, %v2314
        %v2639 = vpack.c.b16 %v2327, %v2315
        %v2640 = vpack.c.b16 %v2328, %v2316
        %v2641 = vpack.c.b16 %v2341, %v2329
        %v2642 = vpack.c.b16 %v2342, %v2330
        %v2643 = vpack.c.b16 %v2343, %v2331
        %v2644 = vpack.c.b16 %v2344, %v2332
        %v2645 = vpack.c.b16 %v2345, %v2333
        %v2646 = vpack.c.b16 %v2346, %v2334
        %v2647 = vpack.c.b16 %v2347, %v2335
        %v2648 = vpack.c.b16 %v2348, %v2336
        %v2649 = vpack.c.b16 %v2349, %v2337
        %v2650 = vpack.c.b16 %v2350, %v2338
        %v2651 = vpack.c.b16 %v2351, %v2339
        %v2652 = vpack.c.b16 %v2352, %v2340
        %v2653 = vpack.c.b16 %v2365, %v2353
        %v2654 = vpack.c.b16 %v2366, %v2354
        %v2655 = vpack.c.b16 %v2367, %v2355
        %v2656 = vpack.c.b16 %v2368, %v2356
        %v2657 = vpack.c.b16 %v2369, %v2357
        %v2658 = vpack.c.b16 %v2370, %v2358
        %v2659 = vpack.c.b16 %v2371, %v2359
        %v2660 = vpack.c.b16 %v2372, %v2360
        %v2661 = vpack.c.b16 %v2373, %v2361
        %v2662 = vpack.c.b16 %v2374, %v2362
        %v2663 = vpack.c.b16 %v2375, %v2363
        %v2664 = vpack.c.b16 %v2376, %v2364
        %2953 = vmatprep.subr.bf16.mxu0 %v2378
        %2954 = vmatpush1.bf16.msra.mxu0 %v2377
        %2955 = vmatprep.subr.bf16.mxu0 %v2390
        %2956 = vmatpush1.bf16.msra.mxu0 %v2389
        %2957 = vmatprep.subr.bf16.mxu0 %v2402
        %2958 = vmatpush1.bf16.msra.mxu0 %v2401
        %2959 = vmatprep.subr.bf16.mxu0 %v2414
        %2960 = vmatpush1.bf16.msra.mxu0 %v2413
        %2961 = vmatprep.subr.bf16.mxu0 %v2426
        %2962 = vmatpush1.bf16.msra.mxu0 %v2425
        %2963 = vmatprep.subr.bf16.mxu0 %v2438
        %2964 = vmatpush1.bf16.msra.mxu0 %v2437
        %2965 = vmatprep.subr.bf16.mxu0 %v2450
        %2966 = vmatpush1.bf16.msra.mxu0 %v2449
        %2967 = vmatprep.subr.bf16.mxu0 %v2462
        %2968 = vmatpush1.bf16.msra.mxu0 %v2461
        %2969 = vmatprep.subr.bf16.mxu0 %v2474
        %2970 = vmatpush1.bf16.msra.mxu0 %v2473
        %2971 = vmatprep.subr.bf16.mxu0 %v2486
        %2972 = vmatpush1.bf16.msra.mxu0 %v2485
        %2973 = vmatprep.subr.bf16.mxu0 %v2498
        %2974 = vmatpush1.bf16.msra.mxu0 %v2497
        %2975 = vmatprep.subr.bf16.mxu0 %v2510
        %2976 = vmatpush1.bf16.msra.mxu0 %v2509
        %2977 = vmatprep.subr.bf16.mxu0 %v2522
        %2978 = vmatpush1.bf16.msra.mxu0 %v2521
        %2979 = vmatprep.subr.bf16.mxu0 %v2534
        %2980 = vmatpush1.bf16.msra.mxu0 %v2533
        %2981 = vmatprep.subr.bf16.mxu0 %v2546
        %2982 = vmatpush1.bf16.msra.mxu0 %v2545
        %2983 = vmatprep.subr.bf16.mxu0 %v2558
        %2984 = vmatpush1.bf16.msra.mxu0 %v2557
        %2985 = vmatprep.mubr.bf16.mxu0 %v1221
        %2986 = vmatmul.mubr.bf16.gmra.mrb[0].mxu0 %v1220
        %v2987 = vpop.f32.mrb[0].mxu0
        %v2988 = vadd.f32 0.0, %v2987
        %v2989 = vpop.f32.mrb[0].mxu0
        %v2990 = vadd.f32 0.0, %v2989
        %v2991 = vpop.f32.mrb[0].mxu0
        %v2992 = vadd.f32 0.0, %v2991
        %v2993 = vpop.f32.mrb[0].mxu0
        %v2994 = vadd.f32 0.0, %v2993
        %2995 = vdwg.mxu0
        %2996 = vmatprep.subr.bf16.mxu0 %v2570
        %2997 = vmatpush1.bf16.msra.mxu0 %v2569
        %2998 = vmatprep.subr.bf16.mxu0 %v2582
        %2999 = vmatpush1.bf16.msra.mxu0 %v2581
        %3000 = vmatprep.subr.bf16.mxu0 %v2594
        %3001 = vmatpush1.bf16.msra.mxu0 %v2593
        %3002 = vmatprep.subr.bf16.mxu0 %v2606
        %3003 = vmatpush1.bf16.msra.mxu0 %v2605
        %3004 = vmatprep.subr.bf16.mxu0 %v2618
        %3005 = vmatpush1.bf16.msra.mxu0 %v2617
        %3006 = vmatprep.subr.bf16.mxu0 %v2630
        %3007 = vmatpush1.bf16.msra.mxu0 %v2629
        %3008 = vmatprep.subr.bf16.mxu0 %v2642
        %3009 = vmatpush1.bf16.msra.mxu0 %v2641
        %3010 = vmatprep.subr.bf16.mxu0 %v2654
        %3011 = vmatpush1.bf16.msra.mxu0 %v2653
        %3012 = vmatprep.subr.bf16.mxu0 0
        %3013 = vmatpush1.bf16.msra.mxu0 0
        %3014 = vmatprep.subr.bf16.mxu0 0
        %3015 = vmatpush1.bf16.msra.mxu0 0
        %3016 = vmatprep.subr.bf16.mxu0 0
        %3017 = vmatpush1.bf16.msra.mxu0 0
        %3018 = vmatprep.subr.bf16.mxu0 0
        %3019 = vmatpush1.bf16.msra.mxu0 0
        %3020 = vmatprep.subr.bf16.mxu0 0
        %3021 = vmatpush1.bf16.msra.mxu0 0
        %3022 = vmatprep.subr.bf16.mxu0 0
        %3023 = vmatpush1.bf16.msra.mxu0 0
        %3024 = vmatprep.subr.bf16.mxu0 0
        %3025 = vmatpush1.bf16.msra.mxu0 0
        %3026 = vmatprep.subr.bf16.mxu0 0
        %3027 = vmatpush1.bf16.msra.mxu0 0
        %3028 = vmatprep.mubr.bf16.mxu0 0
        %3029 = vmatmul.mubr.bf16.gmra.mrb[0].mxu0 %v1222
        %v3030 = vpop.f32.mrb[0].mxu0
        %v3031 = vadd.f32 %v2988, %v3030
        %v3032 = vpop.f32.mrb[0].mxu0
        %v3033 = vadd.f32 %v2990, %v3032
        %v3034 = vpop.f32.mrb[0].mxu0
        %v3035 = vadd.f32 %v2992, %v3034
        %v3036 = vpop.f32.mrb[0].mxu0
        %v3037 = vadd.f32 %v2994, %v3036
        %3038 = vdwg.mxu0
        %3039 = vmatprep.subr.bf16.mxu0 %v2380
        %3040 = vmatpush1.bf16.msra.mxu0 %v2379
        %3041 = vmatprep.subr.bf16.mxu0 %v2392
        %3042 = vmatpush1.bf16.msra.mxu0 %v2391
        %3043 = vmatprep.subr.bf16.mxu0 %v2404
        %3044 = vmatpush1.bf16.msra.mxu0 %v2403
        %3045 = vmatprep.subr.bf16.mxu0 %v2416
        %3046 = vmatpush1.bf16.msra.mxu0 %v2415
        %3047 = vmatprep.subr.bf16.mxu0 %v2428
        %3048 = vmatpush1.bf16.msra.mxu0 %v2427
        %3049 = vmatprep.subr.bf16.mxu0 %v2440
        %3050 = vmatpush1.bf16.msra.mxu0 %v2439
        %3051 = vmatprep.subr.bf16.mxu0 %v2452
        %3052 = vmatpush1.bf16.msra.mxu0 %v2451
        %3053 = vmatprep.subr.bf16.mxu0 %v2464
        %3054 = vmatpush1.bf16.msra.mxu0 %v2463
        %3055 = vmatprep.subr.bf16.mxu0 %v2476
        %3056 = vmatpush1.bf16.msra.mxu0 %v2475
        %3057 = vmatprep.subr.bf16.mxu0 %v2488
        %3058 = vmatpush1.bf16.msra.mxu0 %v2487
        %3059 = vmatprep.subr.bf16.mxu0 %v2500
        %3060 = vmatpush1.bf16.msra.mxu0 %v2499
        %3061 = vmatprep.subr.bf16.mxu0 %v2512
        %3062 = vmatpush1.bf16.msra.mxu0 %v2511
        %3063 = vmatprep.subr.bf16.mxu0 %v2524
        %3064 = vmatpush1.bf16.msra.mxu0 %v2523
        %3065 = vmatprep.subr.bf16.mxu0 %v2536
        %3066 = vmatpush1.bf16.msra.mxu0 %v2535
        %3067 = vmatprep.subr.bf16.mxu0 %v2548
        %3068 = vmatpush1.bf16.msra.mxu0 %v2547
        %3069 = vmatprep.subr.bf16.mxu0 %v2560
        %3070 = vmatpush1.bf16.msra.mxu0 %v2559
        %3071 = vmatprep.mubr.bf16.mxu0 %v1221
        %3072 = vmatmul.mubr.bf16.gmra.mrb[0].mxu0 %v1220
        %v3073 = vpop.f32.mrb[0].mxu0
        %v3074 = vadd.f32 0.0, %v3073
        %v3075 = vpop.f32.mrb[0].mxu0
        %v3076 = vadd.f32 0.0, %v3075
        %v3077 = vpop.f32.mrb[0].mxu0
        %v3078 = vadd.f32 0.0, %v3077
        %v3079 = vpop.f32.mrb[0].mxu0
        %v3080 = vadd.f32 0.0, %v3079
        %3081 = vdwg.mxu0
        %3082 = vmatprep.subr.bf16.mxu0 %v2572
        %3083 = vmatpush1.bf16.msra.mxu0 %v2571
        %3084 = vmatprep.subr.bf16.mxu0 %v2584
        %3085 = vmatpush1.bf16.msra.mxu0 %v2583
        %3086 = vmatprep.subr.bf16.mxu0 %v2596
        %3087 = vmatpush1.bf16.msra.mxu0 %v2595
        %3088 = vmatprep.subr.bf16.mxu0 %v2608
        %3089 = vmatpush1.bf16.msra.mxu0 %v2607
        %3090 = vmatprep.subr.bf16.mxu0 %v2620
        %3091 = vmatpush1.bf16.msra.mxu0 %v2619
        %3092 = vmatprep.subr.bf16.mxu0 %v2632
        %3093 = vmatpush1.bf16.msra.mxu0 %v2631
        %3094 = vmatprep.subr.bf16.mxu0 %v2644
        %3095 = vmatpush1.bf16.msra.mxu0 %v2643
        %3096 = vmatprep.subr.bf16.mxu0 %v2656
        %3097 = vmatpush1.bf16.msra.mxu0 %v2655
        %3098 = vmatprep.subr.bf16.mxu0 0
        %3099 = vmatpush1.bf16.msra.mxu0 0
        %3100 = vmatprep.subr.bf16.mxu0 0
        %3101 = vmatpush1.bf16.msra.mxu0 0
        %3102 = vmatprep.subr.bf16.mxu0 0
        %3103 = vmatpush1.bf16.msra.mxu0 0
        %3104 = vmatprep.subr.bf16.mxu0 0
        %3105 = vmatpush1.bf16.msra.mxu0 0
        %3106 = vmatprep.subr.bf16.mxu0 0
        %3107 = vmatpush1.bf16.msra.mxu0 0
        %3108 = vmatprep.subr.bf16.mxu0 0
        %3109 = vmatpush1.bf16.msra.mxu0 0
        %3110 = vmatprep.subr.bf16.mxu0 0
        %3111 = vmatpush1.bf16.msra.mxu0 0
        %3112 = vmatprep.subr.bf16.mxu0 0
        %3113 = vmatpush1.bf16.msra.mxu0 0
        %3114 = vmatprep.mubr.bf16.mxu0 0
        %3115 = vmatmul.mubr.bf16.gmra.mrb[0].mxu0 %v1222
        %v3116 = vpop.f32.mrb[0].mxu0
        %v3117 = vadd.f32 %v3074, %v3116
        %v3118 = vpop.f32.mrb[0].mxu0
        %v3119 = vadd.f32 %v3076, %v3118
        %v3120 = vpop.f32.mrb[0].mxu0
        %v3121 = vadd.f32 %v3078, %v3120
        %v3122 = vpop.f32.mrb[0].mxu0
        %v3123 = vadd.f32 %v3080, %v3122
        %3124 = vdwg.mxu0
        %3125 = vmatprep.subr.bf16.mxu0 %v2382
        %3126 = vmatpush1.bf16.msra.mxu0 %v2381
        %3127 = vmatprep.subr.bf16.mxu0 %v2394
        %3128 = vmatpush1.bf16.msra.mxu0 %v2393
        %3129 = vmatprep.subr.bf16.mxu0 %v2406
        %3130 = vmatpush1.bf16.msra.mxu0 %v2405
        %3131 = vmatprep.subr.bf16.mxu0 %v2418
        %3132 = vmatpush1.bf16.msra.mxu0 %v2417
        %3133 = vmatprep.subr.bf16.mxu0 %v2430
        %3134 = vmatpush1.bf16.msra.mxu0 %v2429
        %3135 = vmatprep.subr.bf16.mxu0 %v2442
        %3136 = vmatpush1.bf16.msra.mxu0 %v2441
        %3137 = vmatprep.subr.bf16.mxu0 %v2454
        %3138 = vmatpush1.bf16.msra.mxu0 %v2453
        %3139 = vmatprep.subr.bf16.mxu0 %v2466
        %3140 = vmatpush1.bf16.msra.mxu0 %v2465
        %3141 = vmatprep.subr.bf16.mxu0 %v2478
        %3142 = vmatpush1.bf16.msra.mxu0 %v2477
        %3143 = vmatprep.subr.bf16.mxu0 %v2490
        %3144 = vmatpush1.bf16.msra.mxu0 %v2489
        %3145 = vmatprep.subr.bf16.mxu0 %v2502
        %3146 = vmatpush1.bf16.msra.mxu0 %v2501
        %3147 = vmatprep.subr.bf16.mxu0 %v2514
        %3148 = vmatpush1.bf16.msra.mxu0 %v2513
        %3149 = vmatprep.subr.bf16.mxu0 %v2526
        %3150 = vmatpush1.bf16.msra.mxu0 %v2525
        %3151 = vmatprep.subr.bf16.mxu0 %v2538
        %3152 = vmatpush1.bf16.msra.mxu0 %v2537
        %3153 = vmatprep.subr.bf16.mxu0 %v2550
        %3154 = vmatpush1.bf16.msra.mxu0 %v2549
        %3155 = vmatprep.subr.bf16.mxu0 %v2562
        %3156 = vmatpush1.bf16.msra.mxu0 %v2561
        %3157 = vmatprep.mubr.bf16.mxu0 %v1221
        %3158 = vmatmul.mubr.bf16.gmra.mrb[0].mxu0 %v1220
        %v3159 = vpop.f32.mrb[0].mxu0
        %v3160 = vadd.f32 0.0, %v3159
        %v3161 = vpop.f32.mrb[0].mxu0
        %v3162 = vadd.f32 0.0, %v3161
        %v3163 = vpop.f32.mrb[0].mxu0
        %v3164 = vadd.f32 0.0, %v3163
        %v3165 = vpop.f32.mrb[0].mxu0
        %v3166 = vadd.f32 0.0, %v3165
        %3167 = vdwg.mxu0
        %3168 = vmatprep.subr.bf16.mxu0 %v2574
        %3169 = vmatpush1.bf16.msra.mxu0 %v2573
        %3170 = vmatprep.subr.bf16.mxu0 %v2586
        %3171 = vmatpush1.bf16.msra.mxu0 %v2585
        %3172 = vmatprep.subr.bf16.mxu0 %v2598
        %3173 = vmatpush1.bf16.msra.mxu0 %v2597
        %3174 = vmatprep.subr.bf16.mxu0 %v2610
        %3175 = vmatpush1.bf16.msra.mxu0 %v2609
        %3176 = vmatprep.subr.bf16.mxu0 %v2622
        %3177 = vmatpush1.bf16.msra.mxu0 %v2621
        %3178 = vmatprep.subr.bf16.mxu0 %v2634
        %3179 = vmatpush1.bf16.msra.mxu0 %v2633
        %3180 = vmatprep.subr.bf16.mxu0 %v2646
        %3181 = vmatpush1.bf16.msra.mxu0 %v2645
        %3182 = vmatprep.subr.bf16.mxu0 %v2658
        %3183 = vmatpush1.bf16.msra.mxu0 %v2657
        %3184 = vmatprep.subr.bf16.mxu0 0
        %3185 = vmatpush1.bf16.msra.mxu0 0
        %3186 = vmatprep.subr.bf16.mxu0 0
        %3187 = vmatpush1.bf16.msra.mxu0 0
        %3188 = vmatprep.subr.bf16.mxu0 0
        %3189 = vmatpush1.bf16.msra.mxu0 0
        %3190 = vmatprep.subr.bf16.mxu0 0
        %3191 = vmatpush1.bf16.msra.mxu0 0
        %3192 = vmatprep.subr.bf16.mxu0 0
        %3193 = vmatpush1.bf16.msra.mxu0 0
        %3194 = vmatprep.subr.bf16.mxu0 0
        %3195 = vmatpush1.bf16.msra.mxu0 0
        %3196 = vmatprep.subr.bf16.mxu0 0
        %3197 = vmatpush1.bf16.msra.mxu0 0
        %3198 = vmatprep.subr.bf16.mxu0 0
        %3199 = vmatpush1.bf16.msra.mxu0 0
        %3200 = vmatprep.mubr.bf16.mxu0 0
        %3201 = vmatmul.mubr.bf16.gmra.mrb[0].mxu0 %v1222
        %v3202 = vpop.f32.mrb[0].mxu0
        %v3203 = vadd.f32 %v3160, %v3202
        %v3204 = vpop.f32.mrb[0].mxu0
        %v3205 = vadd.f32 %v3162, %v3204
        %v3206 = vpop.f32.mrb[0].mxu0
        %v3207 = vadd.f32 %v3164, %v3206
        %v3208 = vpop.f32.mrb[0].mxu0
        %v3209 = vadd.f32 %v3166, %v3208
        %3210 = vdwg.mxu0
        %3211 = vmatprep.subr.bf16.mxu0 %v2384
        %3212 = vmatpush1.bf16.msra.mxu0 %v2383
        %3213 = vmatprep.subr.bf16.mxu0 %v2396
        %3214 = vmatpush1.bf16.msra.mxu0 %v2395
        %3215 = vmatprep.subr.bf16.mxu0 %v2408
        %3216 = vmatpush1.bf16.msra.mxu0 %v2407
        %3217 = vmatprep.subr.bf16.mxu0 %v2420
        %3218 = vmatpush1.bf16.msra.mxu0 %v2419
        %3219 = vmatprep.subr.bf16.mxu0 %v2432
        %3220 = vmatpush1.bf16.msra.mxu0 %v2431
        %3221 = vmatprep.subr.bf16.mxu0 %v2444
        %3222 = vmatpush1.bf16.msra.mxu0 %v2443
        %3223 = vmatprep.subr.bf16.mxu0 %v2456
        %3224 = vmatpush1.bf16.msra.mxu0 %v2455
        %3225 = vmatprep.subr.bf16.mxu0 %v2468
        %3226 = vmatpush1.bf16.msra.mxu0 %v2467
        %3227 = vmatprep.subr.bf16.mxu0 %v2480
        %3228 = vmatpush1.bf16.msra.mxu0 %v2479
        %3229 = vmatprep.subr.bf16.mxu0 %v2492
        %3230 = vmatpush1.bf16.msra.mxu0 %v2491
        %3231 = vmatprep.subr.bf16.mxu0 %v2504
        %3232 = vmatpush1.bf16.msra.mxu0 %v2503
        %3233 = vmatprep.subr.bf16.mxu0 %v2516
        %3234 = vmatpush1.bf16.msra.mxu0 %v2515
        %3235 = vmatprep.subr.bf16.mxu0 %v2528
        %3236 = vmatpush1.bf16.msra.mxu0 %v2527
        %3237 = vmatprep.subr.bf16.mxu0 %v2540
        %3238 = vmatpush1.bf16.msra.mxu0 %v2539
        %3239 = vmatprep.subr.bf16.mxu0 %v2552
        %3240 = vmatpush1.bf16.msra.mxu0 %v2551
        %3241 = vmatprep.subr.bf16.mxu0 %v2564
        %3242 = vmatpush1.bf16.msra.mxu0 %v2563
        %3243 = vmatprep.mubr.bf16.mxu0 %v1221
        %3244 = vmatmul.mubr.bf16.gmra.mrb[0].mxu0 %v1220
        %v3245 = vpop.f32.mrb[0].mxu0
        %v3246 = vadd.f32 0.0, %v3245
        %v3247 = vpop.f32.mrb[0].mxu0
        %v3248 = vadd.f32 0.0, %v3247
        %v3249 = vpop.f32.mrb[0].mxu0
        %v3250 = vadd.f32 0.0, %v3249
        %v3251 = vpop.f32.mrb[0].mxu0
        %v3252 = vadd.f32 0.0, %v3251
        %3253 = vdwg.mxu0
        %3254 = vmatprep.subr.bf16.mxu0 %v2576
        %3255 = vmatpush1.bf16.msra.mxu0 %v2575
        %3256 = vmatprep.subr.bf16.mxu0 %v2588
        %3257 = vmatpush1.bf16.msra.mxu0 %v2587
        %3258 = vmatprep.subr.bf16.mxu0 %v2600
        %3259 = vmatpush1.bf16.msra.mxu0 %v2599
        %3260 = vmatprep.subr.bf16.mxu0 %v2612
        %3261 = vmatpush1.bf16.msra.mxu0 %v2611
        %3262 = vmatprep.subr.bf16.mxu0 %v2624
        %3263 = vmatpush1.bf16.msra.mxu0 %v2623
        %3264 = vmatprep.subr.bf16.mxu0 %v2636
        %3265 = vmatpush1.bf16.msra.mxu0 %v2635
        %3266 = vmatprep.subr.bf16.mxu0 %v2648
        %3267 = vmatpush1.bf16.msra.mxu0 %v2647
        %3268 = vmatprep.subr.bf16.mxu0 %v2660
        %3269 = vmatpush1.bf16.msra.mxu0 %v2659
        %3270 = vmatprep.subr.bf16.mxu0 0
        %3271 = vmatpush1.bf16.msra.mxu0 0
        %3272 = vmatprep.subr.bf16.mxu0 0
        %3273 = vmatpush1.bf16.msra.mxu0 0
        %3274 = vmatprep.subr.bf16.mxu0 0
        %3275 = vmatpush1.bf16.msra.mxu0 0
        %3276 = vmatprep.subr.bf16.mxu0 0
        %3277 = vmatpush1.bf16.msra.mxu0 0
        %3278 = vmatprep.subr.bf16.mxu0 0
        %3279 = vmatpush1.bf16.msra.mxu0 0
        %3280 = vmatprep.subr.bf16.mxu0 0
        %3281 = vmatpush1.bf16.msra.mxu0 0
        %3282 = vmatprep.subr.bf16.mxu0 0
        %3283 = vmatpush1.bf16.msra.mxu0 0
        %3284 = vmatprep.subr.bf16.mxu0 0
        %3285 = vmatpush1.bf16.msra.mxu0 0
        %3286 = vmatprep.mubr.bf16.mxu0 0
        %3287 = vmatmul.mubr.bf16.gmra.mrb[0].mxu0 %v1222
        %v3288 = vpop.f32.mrb[0].mxu0
        %v3289 = vadd.f32 %v3246, %v3288
        %v3290 = vpop.f32.mrb[0].mxu0
        %v3291 = vadd.f32 %v3248, %v3290
        %v3292 = vpop.f32.mrb[0].mxu0
        %v3293 = vadd.f32 %v3250, %v3292
        %v3294 = vpop.f32.mrb[0].mxu0
        %v3295 = vadd.f32 %v3252, %v3294
        %3296 = vdwg.mxu0
        %3297 = vmatprep.subr.bf16.mxu0 %v2386
        %3298 = vmatpush1.bf16.msra.mxu0 %v2385
        %3299 = vmatprep.subr.bf16.mxu0 %v2398
        %3300 = vmatpush1.bf16.msra.mxu0 %v2397
        %3301 = vmatprep.subr.bf16.mxu0 %v2410
        %3302 = vmatpush1.bf16.msra.mxu0 %v2409
        %3303 = vmatprep.subr.bf16.mxu0 %v2422
        %3304 = vmatpush1.bf16.msra.mxu0 %v2421
        %3305 = vmatprep.subr.bf16.mxu0 %v2434
        %3306 = vmatpush1.bf16.msra.mxu0 %v2433
        %3307 = vmatprep.subr.bf16.mxu0 %v2446
        %3308 = vmatpush1.bf16.msra.mxu0 %v2445
        %3309 = vmatprep.subr.bf16.mxu0 %v2458
        %3310 = vmatpush1.bf16.msra.mxu0 %v2457
        %3311 = vmatprep.subr.bf16.mxu0 %v2470
        %3312 = vmatpush1.bf16.msra.mxu0 %v2469
        %3313 = vmatprep.subr.bf16.mxu0 %v2482
        %3314 = vmatpush1.bf16.msra.mxu0 %v2481
        %3315 = vmatprep.subr.bf16.mxu0 %v2494
        %3316 = vmatpush1.bf16.msra.mxu0 %v2493
        %3317 = vmatprep.subr.bf16.mxu0 %v2506
        %3318 = vmatpush1.bf16.msra.mxu0 %v2505
        %3319 = vmatprep.subr.bf16.mxu0 %v2518
        %3320 = vmatpush1.bf16.msra.mxu0 %v2517
        %3321 = vmatprep.subr.bf16.mxu0 %v2530
        %3322 = vmatpush1.bf16.msra.mxu0 %v2529
        %3323 = vmatprep.subr.bf16.mxu0 %v2542
        %3324 = vmatpush1.bf16.msra.mxu0 %v2541
        %3325 = vmatprep.subr.bf16.mxu0 %v2554
        %3326 = vmatpush1.bf16.msra.mxu0 %v2553
        %3327 = vmatprep.subr.bf16.mxu0 %v2566
        %3328 = vmatpush1.bf16.msra.mxu0 %v2565
        %3329 = vmatprep.mubr.bf16.mxu0 %v1221
        %3330 = vmatmul.mubr.bf16.gmra.mrb[0].mxu0 %v1220
        %v3331 = vpop.f32.mrb[0].mxu0
        %v3332 = vadd.f32 0.0, %v3331
        %v3333 = vpop.f32.mrb[0].mxu0
        %v3334 = vadd.f32 0.0, %v3333
        %v3335 = vpop.f32.mrb[0].mxu0
        %v3336 = vadd.f32 0.0, %v3335
        %v3337 = vpop.f32.mrb[0].mxu0
        %v3338 = vadd.f32 0.0, %v3337
        %3339 = vdwg.mxu0
        %3340 = vmatprep.subr.bf16.mxu0 %v2578
        %3341 = vmatpush1.bf16.msra.mxu0 %v2577
        %3342 = vmatprep.subr.bf16.mxu0 %v2590
        %3343 = vmatpush1.bf16.msra.mxu0 %v2589
        %3344 = vmatprep.subr.bf16.mxu0 %v2602
        %3345 = vmatpush1.bf16.msra.mxu0 %v2601
        %3346 = vmatprep.subr.bf16.mxu0 %v2614
        %3347 = vmatpush1.bf16.msra.mxu0 %v2613
        %3348 = vmatprep.subr.bf16.mxu0 %v2626
        %3349 = vmatpush1.bf16.msra.mxu0 %v2625
        %3350 = vmatprep.subr.bf16.mxu0 %v2638
        %3351 = vmatpush1.bf16.msra.mxu0 %v2637
        %3352 = vmatprep.subr.bf16.mxu0 %v2650
        %3353 = vmatpush1.bf16.msra.mxu0 %v2649
        %3354 = vmatprep.subr.bf16.mxu0 %v2662
        %3355 = vmatpush1.bf16.msra.mxu0 %v2661
        %3356 = vmatprep.subr.bf16.mxu0 0
        %3357 = vmatpush1.bf16.msra.mxu0 0
        %3358 = vmatprep.subr.bf16.mxu0 0
        %3359 = vmatpush1.bf16.msra.mxu0 0
        %3360 = vmatprep.subr.bf16.mxu0 0
        %3361 = vmatpush1.bf16.msra.mxu0 0
        %3362 = vmatprep.subr.bf16.mxu0 0
        %3363 = vmatpush1.bf16.msra.mxu0 0
        %3364 = vmatprep.subr.bf16.mxu0 0
        %3365 = vmatpush1.bf16.msra.mxu0 0
        %3366 = vmatprep.subr.bf16.mxu0 0
        %3367 = vmatpush1.bf16.msra.mxu0 0
        %3368 = vmatprep.subr.bf16.mxu0 0
        %3369 = vmatpush1.bf16.msra.mxu0 0
        %3370 = vmatprep.subr.bf16.mxu0 0
        %3371 = vmatpush1.bf16.msra.mxu0 0
        %3372 = vmatprep.mubr.bf16.mxu0 0
        %3373 = vmatmul.mubr.bf16.gmra.mrb[0].mxu0 %v1222
        %v3374 = vpop.f32.mrb[0].mxu0
        %v3375 = vadd.f32 %v3332, %v3374
        %v3376 = vpop.f32.mrb[0].mxu0
        %v3377 = vadd.f32 %v3334, %v3376
        %v3378 = vpop.f32.mrb[0].mxu0
        %v3379 = vadd.f32 %v3336, %v3378
        %v3380 = vpop.f32.mrb[0].mxu0
        %v3381 = vadd.f32 %v3338, %v3380
        %3382 = vdwg.mxu0
        %3383 = vmatprep.subr.bf16.mxu0 %v2388
        %3384 = vmatpush1.bf16.msra.mxu0 %v2387
        %3385 = vmatprep.subr.bf16.mxu0 %v2400
        %3386 = vmatpush1.bf16.msra.mxu0 %v2399
        %3387 = vmatprep.subr.bf16.mxu0 %v2412
        %3388 = vmatpush1.bf16.msra.mxu0 %v2411
        %3389 = vmatprep.subr.bf16.mxu0 %v2424
        %3390 = vmatpush1.bf16.msra.mxu0 %v2423
        %3391 = vmatprep.subr.bf16.mxu0 %v2436
        %3392 = vmatpush1.bf16.msra.mxu0 %v2435
        %3393 = vmatprep.subr.bf16.mxu0 %v2448
        %3394 = vmatpush1.bf16.msra.mxu0 %v2447
        %3395 = vmatprep.subr.bf16.mxu0 %v2460
        %3396 = vmatpush1.bf16.msra.mxu0 %v2459
        %3397 = vmatprep.subr.bf16.mxu0 %v2472
        %3398 = vmatpush1.bf16.msra.mxu0 %v2471
        %3399 = vmatprep.subr.bf16.mxu0 %v2484
        %3400 = vmatpush1.bf16.msra.mxu0 %v2483
        %3401 = vmatprep.subr.bf16.mxu0 %v2496
        %3402 = vmatpush1.bf16.msra.mxu0 %v2495
        %3403 = vmatprep.subr.bf16.mxu0 %v2508
        %3404 = vmatpush1.bf16.msra.mxu0 %v2507
        %3405 = vmatprep.subr.bf16.mxu0 %v2520
        %3406 = vmatpush1.bf16.msra.mxu0 %v2519
        %3407 = vmatprep.subr.bf16.mxu0 %v2532
        %3408 = vmatpush1.bf16.msra.mxu0 %v2531
        %3409 = vmatprep.subr.bf16.mxu0 %v2544
        %3410 = vmatpush1.bf16.msra.mxu0 %v2543
        %3411 = vmatprep.subr.bf16.mxu0 %v2556
        %3412 = vmatpush1.bf16.msra.mxu0 %v2555
        %3413 = vmatprep.subr.bf16.mxu0 %v2568
        %3414 = vmatpush1.bf16.msra.mxu0 %v2567
        %3415 = vmatprep.mubr.bf16.mxu0 %v1221
        %3416 = vmatmul.mubr.bf16.gmra.mrb[0].mxu0 %v1220
        %v3417 = vpop.f32.mrb[0].mxu0
        %v3418 = vadd.f32 0.0, %v3417
        %v3419 = vpop.f32.mrb[0].mxu0
        %v3420 = vadd.f32 0.0, %v3419
        %v3421 = vpop.f32.mrb[0].mxu0
        %v3422 = vadd.f32 0.0, %v3421
        %v3423 = vpop.f32.mrb[0].mxu0
        %v3424 = vadd.f32 0.0, %v3423
        %3425 = vdwg.mxu0
        %3426 = vmatprep.subr.bf16.mxu0 %v2580
        %3427 = vmatpush1.bf16.msra.mxu0 %v2579
        %3428 = vmatprep.subr.bf16.mxu0 %v2592
        %3429 = vmatpush1.bf16.msra.mxu0 %v2591
        %3430 = vmatprep.subr.bf16.mxu0 %v2604
        %3431 = vmatpush1.bf16.msra.mxu0 %v2603
        %3432 = vmatprep.subr.bf16.mxu0 %v2616
        %3433 = vmatpush1.bf16.msra.mxu0 %v2615
        %3434 = vmatprep.subr.bf16.mxu0 %v2628
        %3435 = vmatpush1.bf16.msra.mxu0 %v2627
        %3436 = vmatprep.subr.bf16.mxu0 %v2640
        %3437 = vmatpush1.bf16.msra.mxu0 %v2639
        %3438 = vmatprep.subr.bf16.mxu0 %v2652
        %3439 = vmatpush1.bf16.msra.mxu0 %v2651
        %3440 = vmatprep.subr.bf16.mxu0 %v2664
        %3441 = vmatpush1.bf16.msra.mxu0 %v2663
        %3442 = vmatprep.subr.bf16.mxu0 0
        %3443 = vmatpush1.bf16.msra.mxu0 0
        %3444 = vmatprep.subr.bf16.mxu0 0
        %3445 = vmatpush1.bf16.msra.mxu0 0
        %3446 = vmatprep.subr.bf16.mxu0 0
        %3447 = vmatpush1.bf16.msra.mxu0 0
        %3448 = vmatprep.subr.bf16.mxu0 0
        %3449 = vmatpush1.bf16.msra.mxu0 0
        %3450 = vmatprep.subr.bf16.mxu0 0
        %3451 = vmatpush1.bf16.msra.mxu0 0
        %3452 = vmatprep.subr.bf16.mxu0 0
        %3453 = vmatpush1.bf16.msra.mxu0 0
        %3454 = vmatprep.subr.bf16.mxu0 0
        %3455 = vmatpush1.bf16.msra.mxu0 0
        %3456 = vmatprep.subr.bf16.mxu0 0
        %3457 = vmatpush1.bf16.msra.mxu0 0
        %3458 = vmatprep.mubr.bf16.mxu0 0
        %3459 = vmatmul.mubr.bf16.gmra.mrb[0].mxu0 %v1222
        %v3460 = vpop.f32.mrb[0].mxu0
        %v3461 = vadd.f32 %v3418, %v3460
        %v3462 = vpop.f32.mrb[0].mxu0
        %v3463 = vadd.f32 %v3420, %v3462
        %v3464 = vpop.f32.mrb[0].mxu0
        %v3465 = vadd.f32 %v3422, %v3464
        %v3466 = vpop.f32.mrb[0].mxu0
        %v3467 = vadd.f32 %v3424, %v3466
        %3468 = vdwg.mxu0
        %vm3469 = vcmask 523264
        %v3471 = vsel %vm3469, %v3031, 0
        %v3474 = vsel %vm3469, %v3203, 0
        %3476 = vmatprep.subr.mxu0 0.0
        %3477 = vmatpush1.xpose.msra.mxu0 %v3474
        %3478 = vmatprep.subr.mxu0 0.0
        %3479 = vmatpush1.xpose.msra.mxu0 0.0
        %3480 = vmatprep.subr.mxu0 0.0
        %3481 = vmatpush1.xpose.msra.mxu0 0.0
        %3482 = vmatprep.subr.mxu0 0.0
        %3483 = vmatpush1.xpose.msra.mxu0 0.0
        %3484 = vmatprep.subr.mxu0 0.0
        %3485 = vmatpush1.xpose.msra.mxu0 0.0
        %3486 = vmatprep.subr.mxu0 0.0
        %3487 = vmatpush1.xpose.msra.mxu0 0.0
        %3488 = vmatprep.subr.mxu0 0.0
        %3489 = vmatpush1.xpose.msra.mxu0 0.0
        %3490 = vmatprep.subr.mxu0 0.0
        %3491 = vmatpush1.xpose.msra.mxu0 0.0
        %3492 = vmatprep.subr.mxu0 0.0
        %3493 = vmatpush1.xpose.msra.mxu0 0.0
        %3494 = vmatprep.subr.mxu0 0.0
        %3495 = vmatpush1.xpose.msra.mxu0 0.0
        %3496 = vmatprep.subr.mxu0 0.0
        %3497 = vmatpush1.xpose.msra.mxu0 0.0
        %3498 = vmatprep.subr.mxu0 0.0
        %3499 = vmatpush1.xpose.msra.mxu0 0.0
        %3500 = vmatprep.subr.mxu0 0.0
        %3501 = vmatpush1.xpose.msra.mxu0 0.0
        %3502 = vmatprep.subr.mxu0 0.0
        %3503 = vmatpush1.xpose.msra.mxu0 0.0
        %3504 = vmatprep.subr.mxu0 0.0
        %3505 = vmatpush1.xpose.msra.mxu0 0.0
        %3506 = vmatprep.subr.mxu0 0.0
        %3507 = vmatpush1.xpose.msra.mxu0 0.0
        %3508 = vmatprep.subr.mxu0 0.0
        %3509 = vmatpush1.xpose.msra.mxu0 0.0
        %3510 = vmatprep.subr.mxu0 0.0
        %3511 = vmatpush1.xpose.msra.mxu0 0.0
        %3512 = vmatprep.subr.mxu0 0.0
        %3513 = vmatpush1.xpose.msra.mxu0 0.0
        %3514 = vmatprep.subr.mxu0 0.0
        %3515 = vmatpush1.xpose.msra.mxu0 0.0
        %3516 = vmatprep.subr.mxu0 0.0
        %3517 = vmatpush1.xpose.msra.mxu0 0.0
        %3518 = vmatprep.subr.mxu0 0.0
        %3519 = vmatpush1.xpose.msra.mxu0 0.0
        %3520 = vmatprep.subr.mxu0 0.0
        %3521 = vmatpush1.xpose.msra.mxu0 0.0
        %3522 = vmatprep.subr.mxu0 0.0
        %3523 = vmatpush1.xpose.msra.mxu0 0.0
        %3524 = vmatprep.subr.mxu0 0.0
        %3525 = vmatpush1.xpose.msra.mxu0 0.0
        %3526 = vmatprep.subr.mxu0 0.0
        %3527 = vmatpush1.xpose.msra.mxu0 0.0
        %3528 = vmatprep.subr.mxu0 0.0
        %3529 = vmatpush1.xpose.msra.mxu0 0.0
        %3530 = vmatprep.subr.mxu0 0.0
        %3531 = vmatpush1.xpose.msra.mxu0 0.0
        %3532 = vmatprep.subr.mxu0 0.0
        %3533 = vmatpush1.xpose.msra.mxu0 0.0
        %3534 = vmatprep.subr.mxu0 0.0
        %3535 = vmatpush1.xpose.msra.mxu0 0.0
        %3536 = vmatprep.subr.mxu0 0.0
        %3537 = vmatpush1.xpose.msra.mxu0 0.0
        %3538 = vmatprep.subr.mxu0 0.0
        %3539 = vmatpush1.xpose.msra.mxu0 0.0
        %3540 = vmatprep.mubr.f32.mxu0 0.0
        %3541 = vmatmul.mubr.f32.gmra.mrb[0].mxu0 %v3471
        %v3542 = vpop.f32.mrb[0].mxu0
        %v3543 = vadd.f32 0.0, %v3542
        %v3544 = vpop.f32.mrb[0].mxu0
        %3545 = vdwg.mxu0
        %v3547 = vsel %vm3469, %v3035, 0
        %v3550 = vsel %vm3469, %v3207, 0
        %3552 = vmatprep.subr.mxu0 0.0
        %3553 = vmatpush1.xpose.msra.mxu0 %v3550
        %3554 = vmatprep.subr.mxu0 0.0
        %3555 = vmatpush1.xpose.msra.mxu0 0.0
        %3556 = vmatprep.subr.mxu0 0.0
        %3557 = vmatpush1.xpose.msra.mxu0 0.0
        %3558 = vmatprep.subr.mxu0 0.0
        %3559 = vmatpush1.xpose.msra.mxu0 0.0
        %3560 = vmatprep.subr.mxu0 0.0
        %3561 = vmatpush1.xpose.msra.mxu0 0.0
        %3562 = vmatprep.subr.mxu0 0.0
        %3563 = vmatpush1.xpose.msra.mxu0 0.0
        %3564 = vmatprep.subr.mxu0 0.0
        %3565 = vmatpush1.xpose.msra.mxu0 0.0
        %3566 = vmatprep.subr.mxu0 0.0
        %3567 = vmatpush1.xpose.msra.mxu0 0.0
        %3568 = vmatprep.subr.mxu0 0.0
        %3569 = vmatpush1.xpose.msra.mxu0 0.0
        %3570 = vmatprep.subr.mxu0 0.0
        %3571 = vmatpush1.xpose.msra.mxu0 0.0
        %3572 = vmatprep.subr.mxu0 0.0
        %3573 = vmatpush1.xpose.msra.mxu0 0.0
        %3574 = vmatprep.subr.mxu0 0.0
        %3575 = vmatpush1.xpose.msra.mxu0 0.0
        %3576 = vmatprep.subr.mxu0 0.0
        %3577 = vmatpush1.xpose.msra.mxu0 0.0
        %3578 = vmatprep.subr.mxu0 0.0
        %3579 = vmatpush1.xpose.msra.mxu0 0.0
        %3580 = vmatprep.subr.mxu0 0.0
        %3581 = vmatpush1.xpose.msra.mxu0 0.0
        %3582 = vmatprep.subr.mxu0 0.0
        %3583 = vmatpush1.xpose.msra.mxu0 0.0
        %3584 = vmatprep.subr.mxu0 0.0
        %3585 = vmatpush1.xpose.msra.mxu0 0.0
        %3586 = vmatprep.subr.mxu0 0.0
        %3587 = vmatpush1.xpose.msra.mxu0 0.0
        %3588 = vmatprep.subr.mxu0 0.0
        %3589 = vmatpush1.xpose.msra.mxu0 0.0
        %3590 = vmatprep.subr.mxu0 0.0
        %3591 = vmatpush1.xpose.msra.mxu0 0.0
        %3592 = vmatprep.subr.mxu0 0.0
        %3593 = vmatpush1.xpose.msra.mxu0 0.0
        %3594 = vmatprep.subr.mxu0 0.0
        %3595 = vmatpush1.xpose.msra.mxu0 0.0
        %3596 = vmatprep.subr.mxu0 0.0
        %3597 = vmatpush1.xpose.msra.mxu0 0.0
        %3598 = vmatprep.subr.mxu0 0.0
        %3599 = vmatpush1.xpose.msra.mxu0 0.0
        %3600 = vmatprep.subr.mxu0 0.0
        %3601 = vmatpush1.xpose.msra.mxu0 0.0
        %3602 = vmatprep.subr.mxu0 0.0
        %3603 = vmatpush1.xpose.msra.mxu0 0.0
        %3604 = vmatprep.subr.mxu0 0.0
        %3605 = vmatpush1.xpose.msra.mxu0 0.0
        %3606 = vmatprep.subr.mxu0 0.0
        %3607 = vmatpush1.xpose.msra.mxu0 0.0
        %3608 = vmatprep.subr.mxu0 0.0
        %3609 = vmatpush1.xpose.msra.mxu0 0.0
        %3610 = vmatprep.subr.mxu0 0.0
        %3611 = vmatpush1.xpose.msra.mxu0 0.0
        %3612 = vmatprep.subr.mxu0 0.0
        %3613 = vmatpush1.xpose.msra.mxu0 0.0
        %3614 = vmatprep.subr.mxu0 0.0
        %3615 = vmatpush1.xpose.msra.mxu0 0.0
        %3616 = vmatprep.mubr.f32.mxu0 0.0
        %3617 = vmatmul.mubr.f32.gmra.mrb[0].mxu0 %v3547
        %v3618 = vpop.f32.mrb[0].mxu0
        %v3619 = vadd.f32 0.0, %v3618
        %v3620 = vpop.f32.mrb[0].mxu0
        %3621 = vdwg.mxu0
        %v3622 = vmul.f32 %v3543, 0.125
        %v3623 = vmul.f32 %v3619, 0.125
        %vm3624 = vcmp.gt.f32.partialorder %v1223, 0.0
        %vm3625 = vcmp.gt.f32.partialorder %v1224, 0.0
        %v3626 = vsel %vm3624, 1, 0
        %v3627 = vsel %vm3625, 1, 0
        %v3628 = vlaneseq
        %v3629 = vshrl.u32 %v3628, 7
        %v3630 = vsub.s32 0, %v3629
        %v3631 = vrot.slane %v3626, %v3630
        %v3632 = vlaneseq
        %v3633 = vshrl.u32 %v3632, 7
        %v3634 = vsub.s32 0, %v3633
        %v3635 = vrot.slane %v3627, %v3634
        %vm3636 = vcmp.eq.s32.totalorder %v3631, 1
        %vm3637 = vcmp.eq.s32.totalorder %v3635, 1
        %v3638 = vsel %vm3636, %v3622, -1e+09
        %v3639 = vsel %vm3637, %v3623, -1e+09
        %vm3640 = vcmask 64512
        %v3641 = vsel %vm3640, %v3638, -inf
        %3642 = vmax.xlane.f32.xlu0 %v3641
        %v3643 = vpop.xlane.xlu0 %3642
        %v3644 = vsel %vm3640, %v3639, -inf
        %3645 = vmax.xlane.f32.xlu0 %v3644
        %v3646 = vpop.xlane.xlu0 %3645
        %v3647 = vsub.f32 %v3638, %v3643
        %v3648 = vsub.f32 %v3639, %v3646
        %v3649 = vmul.f32 %v3647, 1.442695
        %v3650 = vpow.pop %v3649
        %v3651 = vmul.f32 %v3648, 1.442695
        %v3652 = vpow.pop %v3651
        %v3653 = vsel %vm3640, %v3650, 0.0
        %3654 = vadd.xlane.f32.xlu0 %v3653
        %v3655 = vpop.xlane.xlu0 %3654
        %v3656 = vsel %vm3640, %v3652, 0.0
        %3657 = vadd.xlane.f32.xlu0 %v3656
        %v3658 = vpop.xlane.xlu0 %3657
        %v3659 = vrcp.pop %v3655
        %v3660 = vrcp.pop %v3658
        %v3661 = vmul.f32 %v3650, %v3659
        %v3662 = vmul.f32 %v3652, %v3660
        %v3664 = vsel %vm3640, %v3661, 0
        %3666 = vmatprep.subr.mxu0 0.0
        %3667 = vmatpush1.msra.mxu0 %v3375
        %3668 = vmatprep.subr.mxu0 0.0
        %3669 = vmatpush1.msra.mxu0 0.0
        %3670 = vmatprep.subr.mxu0 0.0
        %3671 = vmatpush1.msra.mxu0 0.0
        %3672 = vmatprep.subr.mxu0 0.0
        %3673 = vmatpush1.msra.mxu0 0.0
        %3674 = vmatprep.subr.mxu0 0.0
        %3675 = vmatpush1.msra.mxu0 0.0
        %3676 = vmatprep.subr.mxu0 0.0
        %3677 = vmatpush1.msra.mxu0 0.0
        %3678 = vmatprep.subr.mxu0 0.0
        %3679 = vmatpush1.msra.mxu0 0.0
        %3680 = vmatprep.subr.mxu0 0.0
        %3681 = vmatpush1.msra.mxu0 0.0
        %3682 = vmatprep.subr.mxu0 0.0
        %3683 = vmatpush1.msra.mxu0 0.0
        %3684 = vmatprep.subr.mxu0 0.0
        %3685 = vmatpush1.msra.mxu0 0.0
        %3686 = vmatprep.subr.mxu0 0.0
        %3687 = vmatpush1.msra.mxu0 0.0
        %3688 = vmatprep.subr.mxu0 0.0
        %3689 = vmatpush1.msra.mxu0 0.0
        %3690 = vmatprep.subr.mxu0 0.0
        %3691 = vmatpush1.msra.mxu0 0.0
        %3692 = vmatprep.subr.mxu0 0.0
        %3693 = vmatpush1.msra.mxu0 0.0
        %3694 = vmatprep.subr.mxu0 0.0
        %3695 = vmatpush1.msra.mxu0 0.0
        %3696 = vmatprep.subr.mxu0 0.0
        %3697 = vmatpush1.msra.mxu0 0.0
        %3698 = vmatprep.subr.mxu0 0.0
        %3699 = vmatpush1.msra.mxu0 0.0
        %3700 = vmatprep.subr.mxu0 0.0
        %3701 = vmatpush1.msra.mxu0 0.0
        %3702 = vmatprep.subr.mxu0 0.0
        %3703 = vmatpush1.msra.mxu0 0.0
        %3704 = vmatprep.subr.mxu0 0.0
        %3705 = vmatpush1.msra.mxu0 0.0
        %3706 = vmatprep.subr.mxu0 0.0
        %3707 = vmatpush1.msra.mxu0 0.0
        %3708 = vmatprep.subr.mxu0 0.0
        %3709 = vmatpush1.msra.mxu0 0.0
        %3710 = vmatprep.subr.mxu0 0.0
        %3711 = vmatpush1.msra.mxu0 0.0
        %3712 = vmatprep.subr.mxu0 0.0
        %3713 = vmatpush1.msra.mxu0 0.0
        %3714 = vmatprep.subr.mxu0 0.0
        %3715 = vmatpush1.msra.mxu0 0.0
        %3716 = vmatprep.subr.mxu0 0.0
        %3717 = vmatpush1.msra.mxu0 0.0
        %3718 = vmatprep.subr.mxu0 0.0
        %3719 = vmatpush1.msra.mxu0 0.0
        %3720 = vmatprep.subr.mxu0 0.0
        %3721 = vmatpush1.msra.mxu0 0.0
        %3722 = vmatprep.subr.mxu0 0.0
        %3723 = vmatpush1.msra.mxu0 0.0
        %3724 = vmatprep.subr.mxu0 0.0
        %3725 = vmatpush1.msra.mxu0 0.0
        %3726 = vmatprep.subr.mxu0 0.0
        %3727 = vmatpush1.msra.mxu0 0.0
        %3728 = vmatprep.subr.mxu0 0.0
        %3729 = vmatpush1.msra.mxu0 0.0
        %3730 = vmatprep.mubr.f32.mxu0 0.0
        %3731 = vmatmul.mubr.f32.gmra.mrb[0].mxu0 %v3664
        %v3732 = vpop.f32.mrb[0].mxu0
        %v3733 = vadd.f32 0.0, %v3732
        %v3734 = vpop.f32.mrb[0].mxu0
        %3735 = vdwg.mxu0
        %v3737 = vsel %vm3640, %v3662, 0
        %3739 = vmatprep.subr.mxu0 0.0
        %3740 = vmatpush1.msra.mxu0 %v3379
        %3741 = vmatprep.subr.mxu0 0.0
        %3742 = vmatpush1.msra.mxu0 0.0
        %3743 = vmatprep.subr.mxu0 0.0
        %3744 = vmatpush1.msra.mxu0 0.0
        %3745 = vmatprep.subr.mxu0 0.0
        %3746 = vmatpush1.msra.mxu0 0.0
        %3747 = vmatprep.subr.mxu0 0.0
        %3748 = vmatpush1.msra.mxu0 0.0
        %3749 = vmatprep.subr.mxu0 0.0
        %3750 = vmatpush1.msra.mxu0 0.0
        %3751 = vmatprep.subr.mxu0 0.0
        %3752 = vmatpush1.msra.mxu0 0.0
        %3753 = vmatprep.subr.mxu0 0.0
        %3754 = vmatpush1.msra.mxu0 0.0
        %3755 = vmatprep.subr.mxu0 0.0
        %3756 = vmatpush1.msra.mxu0 0.0
        %3757 = vmatprep.subr.mxu0 0.0
        %3758 = vmatpush1.msra.mxu0 0.0
        %3759 = vmatprep.subr.mxu0 0.0
        %3760 = vmatpush1.msra.mxu0 0.0
        %3761 = vmatprep.subr.mxu0 0.0
        %3762 = vmatpush1.msra.mxu0 0.0
        %3763 = vmatprep.subr.mxu0 0.0
        %3764 = vmatpush1.msra.mxu0 0.0
        %3765 = vmatprep.subr.mxu0 0.0
        %3766 = vmatpush1.msra.mxu0 0.0
        %3767 = vmatprep.subr.mxu0 0.0
        %3768 = vmatpush1.msra.mxu0 0.0
        %3769 = vmatprep.subr.mxu0 0.0
        %3770 = vmatpush1.msra.mxu0 0.0
        %3771 = vmatprep.subr.mxu0 0.0
        %3772 = vmatpush1.msra.mxu0 0.0
        %3773 = vmatprep.subr.mxu0 0.0
        %3774 = vmatpush1.msra.mxu0 0.0
        %3775 = vmatprep.subr.mxu0 0.0
        %3776 = vmatpush1.msra.mxu0 0.0
        %3777 = vmatprep.subr.mxu0 0.0
        %3778 = vmatpush1.msra.mxu0 0.0
        %3779 = vmatprep.subr.mxu0 0.0
        %3780 = vmatpush1.msra.mxu0 0.0
        %3781 = vmatprep.subr.mxu0 0.0
        %3782 = vmatpush1.msra.mxu0 0.0
        %3783 = vmatprep.subr.mxu0 0.0
        %3784 = vmatpush1.msra.mxu0 0.0
        %3785 = vmatprep.subr.mxu0 0.0
        %3786 = vmatpush1.msra.mxu0 0.0
        %3787 = vmatprep.subr.mxu0 0.0
        %3788 = vmatpush1.msra.mxu0 0.0
        %3789 = vmatprep.subr.mxu0 0.0
        %3790 = vmatpush1.msra.mxu0 0.0
        %3791 = vmatprep.subr.mxu0 0.0
        %3792 = vmatpush1.msra.mxu0 0.0
        %3793 = vmatprep.subr.mxu0 0.0
        %3794 = vmatpush1.msra.mxu0 0.0
        %3795 = vmatprep.subr.mxu0 0.0
        %3796 = vmatpush1.msra.mxu0 0.0
        %3797 = vmatprep.subr.mxu0 0.0
        %3798 = vmatpush1.msra.mxu0 0.0
        %3799 = vmatprep.subr.mxu0 0.0
        %3800 = vmatpush1.msra.mxu0 0.0
        %3801 = vmatprep.subr.mxu0 0.0
        %3802 = vmatpush1.msra.mxu0 0.0
        %3803 = vmatprep.mubr.f32.mxu0 0.0
        %3804 = vmatmul.mubr.f32.gmra.mrb[0].mxu0 %v3737
        %v3805 = vpop.f32.mrb[0].mxu0
        %v3806 = vadd.f32 0.0, %v3805
        %v3807 = vpop.f32.mrb[0].mxu0
        %3808 = vdwg.mxu0
        %v3809 = vpack.c.bf16 %v3806, %v3733
        %3810 = vrot.lane.b32.xlu0 %v3031, 64
        %v3811 = vpop.permute.xlu0 %3810
        %3812 = vrot.lane.b32.xlu0 %v3203, 64
        %v3813 = vpop.permute.xlu0 %3812
        %v3814 = vsel %vm3469, %v3811, 0
        %v3816 = vsel %vm3469, %v3813, 0
        %3818 = vmatprep.subr.mxu0 0.0
        %3819 = vmatpush1.xpose.msra.mxu0 %v3816
        %3820 = vmatprep.subr.mxu0 0.0
        %3821 = vmatpush1.xpose.msra.mxu0 0.0
        %3822 = vmatprep.subr.mxu0 0.0
        %3823 = vmatpush1.xpose.msra.mxu0 0.0
        %3824 = vmatprep.subr.mxu0 0.0
        %3825 = vmatpush1.xpose.msra.mxu0 0.0
        %3826 = vmatprep.subr.mxu0 0.0
        %3827 = vmatpush1.xpose.msra.mxu0 0.0
        %3828 = vmatprep.subr.mxu0 0.0
        %3829 = vmatpush1.xpose.msra.mxu0 0.0
        %3830 = vmatprep.subr.mxu0 0.0
        %3831 = vmatpush1.xpose.msra.mxu0 0.0
        %3832 = vmatprep.subr.mxu0 0.0
        %3833 = vmatpush1.xpose.msra.mxu0 0.0
        %3834 = vmatprep.subr.mxu0 0.0
        %3835 = vmatpush1.xpose.msra.mxu0 0.0
        %3836 = vmatprep.subr.mxu0 0.0
        %3837 = vmatpush1.xpose.msra.mxu0 0.0
        %3838 = vmatprep.subr.mxu0 0.0
        %3839 = vmatpush1.xpose.msra.mxu0 0.0
        %3840 = vmatprep.subr.mxu0 0.0
        %3841 = vmatpush1.xpose.msra.mxu0 0.0
        %3842 = vmatprep.subr.mxu0 0.0
        %3843 = vmatpush1.xpose.msra.mxu0 0.0
        %3844 = vmatprep.subr.mxu0 0.0
        %3845 = vmatpush1.xpose.msra.mxu0 0.0
        %3846 = vmatprep.subr.mxu0 0.0
        %3847 = vmatpush1.xpose.msra.mxu0 0.0
        %3848 = vmatprep.subr.mxu0 0.0
        %3849 = vmatpush1.xpose.msra.mxu0 0.0
        %3850 = vmatprep.subr.mxu0 0.0
        %3851 = vmatpush1.xpose.msra.mxu0 0.0
        %3852 = vmatprep.subr.mxu0 0.0
        %3853 = vmatpush1.xpose.msra.mxu0 0.0
        %3854 = vmatprep.subr.mxu0 0.0
        %3855 = vmatpush1.xpose.msra.mxu0 0.0
        %3856 = vmatprep.subr.mxu0 0.0
        %3857 = vmatpush1.xpose.msra.mxu0 0.0
        %3858 = vmatprep.subr.mxu0 0.0
        %3859 = vmatpush1.xpose.msra.mxu0 0.0
        %3860 = vmatprep.subr.mxu0 0.0
        %3861 = vmatpush1.xpose.msra.mxu0 0.0
        %3862 = vmatprep.subr.mxu0 0.0
        %3863 = vmatpush1.xpose.msra.mxu0 0.0
        %3864 = vmatprep.subr.mxu0 0.0
        %3865 = vmatpush1.xpose.msra.mxu0 0.0
        %3866 = vmatprep.subr.mxu0 0.0
        %3867 = vmatpush1.xpose.msra.mxu0 0.0
        %3868 = vmatprep.subr.mxu0 0.0
        %3869 = vmatpush1.xpose.msra.mxu0 0.0
        %3870 = vmatprep.subr.mxu0 0.0
        %3871 = vmatpush1.xpose.msra.mxu0 0.0
        %3872 = vmatprep.subr.mxu0 0.0
        %3873 = vmatpush1.xpose.msra.mxu0 0.0
        %3874 = vmatprep.subr.mxu0 0.0
        %3875 = vmatpush1.xpose.msra.mxu0 0.0
        %3876 = vmatprep.subr.mxu0 0.0
        %3877 = vmatpush1.xpose.msra.mxu0 0.0
        %3878 = vmatprep.subr.mxu0 0.0
        %3879 = vmatpush1.xpose.msra.mxu0 0.0
        %3880 = vmatprep.subr.mxu0 0.0
        %3881 = vmatpush1.xpose.msra.mxu0 0.0
        %3882 = vmatprep.mubr.f32.mxu0 0.0
        %3883 = vmatmul.mubr.f32.gmra.mrb[0].mxu0 %v3814
        %v3884 = vpop.f32.mrb[0].mxu0
        %v3885 = vadd.f32 0.0, %v3884
        %v3886 = vpop.f32.mrb[0].mxu0
        %3887 = vdwg.mxu0
        %3888 = vrot.lane.b32.xlu0 %v3035, 64
        %v3889 = vpop.permute.xlu0 %3888
        %3890 = vrot.lane.b32.xlu0 %v3207, 64
        %v3891 = vpop.permute.xlu0 %3890
        %v3892 = vsel %vm3469, %v3889, 0
        %v3894 = vsel %vm3469, %v3891, 0
        %3896 = vmatprep.subr.mxu0 0.0
        %3897 = vmatpush1.xpose.msra.mxu0 %v3894
        %3898 = vmatprep.subr.mxu0 0.0
        %3899 = vmatpush1.xpose.msra.mxu0 0.0
        %3900 = vmatprep.subr.mxu0 0.0
        %3901 = vmatpush1.xpose.msra.mxu0 0.0
        %3902 = vmatprep.subr.mxu0 0.0
        %3903 = vmatpush1.xpose.msra.mxu0 0.0
        %3904 = vmatprep.subr.mxu0 0.0
        %3905 = vmatpush1.xpose.msra.mxu0 0.0
        %3906 = vmatprep.subr.mxu0 0.0
        %3907 = vmatpush1.xpose.msra.mxu0 0.0
        %3908 = vmatprep.subr.mxu0 0.0
        %3909 = vmatpush1.xpose.msra.mxu0 0.0
        %3910 = vmatprep.subr.mxu0 0.0
        %3911 = vmatpush1.xpose.msra.mxu0 0.0
        %3912 = vmatprep.subr.mxu0 0.0
        %3913 = vmatpush1.xpose.msra.mxu0 0.0
        %3914 = vmatprep.subr.mxu0 0.0
        %3915 = vmatpush1.xpose.msra.mxu0 0.0
        %3916 = vmatprep.subr.mxu0 0.0
        %3917 = vmatpush1.xpose.msra.mxu0 0.0
        %3918 = vmatprep.subr.mxu0 0.0
        %3919 = vmatpush1.xpose.msra.mxu0 0.0
        %3920 = vmatprep.subr.mxu0 0.0
        %3921 = vmatpush1.xpose.msra.mxu0 0.0
        %3922 = vmatprep.subr.mxu0 0.0
        %3923 = vmatpush1.xpose.msra.mxu0 0.0
        %3924 = vmatprep.subr.mxu0 0.0
        %3925 = vmatpush1.xpose.msra.mxu0 0.0
        %3926 = vmatprep.subr.mxu0 0.0
        %3927 = vmatpush1.xpose.msra.mxu0 0.0
        %3928 = vmatprep.subr.mxu0 0.0
        %3929 = vmatpush1.xpose.msra.mxu0 0.0
        %3930 = vmatprep.subr.mxu0 0.0
        %3931 = vmatpush1.xpose.msra.mxu0 0.0
        %3932 = vmatprep.subr.mxu0 0.0
        %3933 = vmatpush1.xpose.msra.mxu0 0.0
        %3934 = vmatprep.subr.mxu0 0.0
        %3935 = vmatpush1.xpose.msra.mxu0 0.0
        %3936 = vmatprep.subr.mxu0 0.0
        %3937 = vmatpush1.xpose.msra.mxu0 0.0
        %3938 = vmatprep.subr.mxu0 0.0
        %3939 = vmatpush1.xpose.msra.mxu0 0.0
        %3940 = vmatprep.subr.mxu0 0.0
        %3941 = vmatpush1.xpose.msra.mxu0 0.0
        %3942 = vmatprep.subr.mxu0 0.0
        %3943 = vmatpush1.xpose.msra.mxu0 0.0
        %3944 = vmatprep.subr.mxu0 0.0
        %3945 = vmatpush1.xpose.msra.mxu0 0.0
        %3946 = vmatprep.subr.mxu0 0.0
        %3947 = vmatpush1.xpose.msra.mxu0 0.0
        %3948 = vmatprep.subr.mxu0 0.0
        %3949 = vmatpush1.xpose.msra.mxu0 0.0
        %3950 = vmatprep.subr.mxu0 0.0
        %3951 = vmatpush1.xpose.msra.mxu0 0.0
        %3952 = vmatprep.subr.mxu0 0.0
        %3953 = vmatpush1.xpose.msra.mxu0 0.0
        %3954 = vmatprep.subr.mxu0 0.0
        %3955 = vmatpush1.xpose.msra.mxu0 0.0
        %3956 = vmatprep.subr.mxu0 0.0
        %3957 = vmatpush1.xpose.msra.mxu0 0.0
        %3958 = vmatprep.subr.mxu0 0.0
        %3959 = vmatpush1.xpose.msra.mxu0 0.0
        %3960 = vmatprep.mubr.f32.mxu0 0.0
        %3961 = vmatmul.mubr.f32.gmra.mrb[0].mxu0 %v3892
        %v3962 = vpop.f32.mrb[0].mxu0
        %v3963 = vadd.f32 0.0, %v3962
        %v3964 = vpop.f32.mrb[0].mxu0
        %3965 = vdwg.mxu0
        %v3966 = vmul.f32 %v3885, 0.125
        %v3967 = vmul.f32 %v3963, 0.125
        %v3968 = vsel %vm3636, %v3966, -1e+09
        %v3969 = vsel %vm3637, %v3967, -1e+09
        %v3970 = vsel %vm3640, %v3968, -inf
        %3971 = vmax.xlane.f32.xlu0 %v3970
        %v3972 = vpop.xlane.xlu0 %3971
        %v3973 = vsel %vm3640, %v3969, -inf
        %3974 = vmax.xlane.f32.xlu0 %v3973
        %v3975 = vpop.xlane.xlu0 %3974
        %v3976 = vsub.f32 %v3968, %v3972
        %v3977 = vsub.f32 %v3969, %v3975
        %v3978 = vmul.f32 %v3976, 1.442695
        %v3979 = vpow.pop %v3978
        %v3980 = vmul.f32 %v3977, 1.442695
        %v3981 = vpow.pop %v3980
        %v3982 = vsel %vm3640, %v3979, 0.0
        %3983 = vadd.xlane.f32.xlu0 %v3982
        %v3984 = vpop.xlane.xlu0 %3983
        %v3985 = vsel %vm3640, %v3981, 0.0
        %3986 = vadd.xlane.f32.xlu0 %v3985
        %v3987 = vpop.xlane.xlu0 %3986
        %v3988 = vrcp.pop %v3984
        %v3989 = vrcp.pop %v3987
        %v3990 = vmul.f32 %v3979, %v3988
        %v3991 = vmul.f32 %v3981, %v3989
        %3993 = vrot.lane.b32.xlu0 %v3375, 64
        %v3994 = vpop.permute.xlu0 %3993
        %v3997 = vsel %vm3640, %v3990, 0
        %3999 = vmatprep.subr.mxu0 0.0
        %4000 = vmatpush1.msra.mxu0 %v3994
        %4001 = vmatprep.subr.mxu0 0.0
        %4002 = vmatpush1.msra.mxu0 0.0
        %4003 = vmatprep.subr.mxu0 0.0
        %4004 = vmatpush1.msra.mxu0 0.0
        %4005 = vmatprep.subr.mxu0 0.0
        %4006 = vmatpush1.msra.mxu0 0.0
        %4007 = vmatprep.subr.mxu0 0.0
        %4008 = vmatpush1.msra.mxu0 0.0
        %4009 = vmatprep.subr.mxu0 0.0
        %4010 = vmatpush1.msra.mxu0 0.0
        %4011 = vmatprep.subr.mxu0 0.0
        %4012 = vmatpush1.msra.mxu0 0.0
        %4013 = vmatprep.subr.mxu0 0.0
        %4014 = vmatpush1.msra.mxu0 0.0
        %4015 = vmatprep.subr.mxu0 0.0
        %4016 = vmatpush1.msra.mxu0 0.0
        %4017 = vmatprep.subr.mxu0 0.0
        %4018 = vmatpush1.msra.mxu0 0.0
        %4019 = vmatprep.subr.mxu0 0.0
        %4020 = vmatpush1.msra.mxu0 0.0
        %4021 = vmatprep.subr.mxu0 0.0
        %4022 = vmatpush1.msra.mxu0 0.0
        %4023 = vmatprep.subr.mxu0 0.0
        %4024 = vmatpush1.msra.mxu0 0.0
        %4025 = vmatprep.subr.mxu0 0.0
        %4026 = vmatpush1.msra.mxu0 0.0
        %4027 = vmatprep.subr.mxu0 0.0
        %4028 = vmatpush1.msra.mxu0 0.0
        %4029 = vmatprep.subr.mxu0 0.0
        %4030 = vmatpush1.msra.mxu0 0.0
        %4031 = vmatprep.subr.mxu0 0.0
        %4032 = vmatpush1.msra.mxu0 0.0
        %4033 = vmatprep.subr.mxu0 0.0
        %4034 = vmatpush1.msra.mxu0 0.0
        %4035 = vmatprep.subr.mxu0 0.0
        %4036 = vmatpush1.msra.mxu0 0.0
        %4037 = vmatprep.subr.mxu0 0.0
        %4038 = vmatpush1.msra.mxu0 0.0
        %4039 = vmatprep.subr.mxu0 0.0
        %4040 = vmatpush1.msra.mxu0 0.0
        %4041 = vmatprep.subr.mxu0 0.0
        %4042 = vmatpush1.msra.mxu0 0.0
        %4043 = vmatprep.subr.mxu0 0.0
        %4044 = vmatpush1.msra.mxu0 0.0
        %4045 = vmatprep.subr.mxu0 0.0
        %4046 = vmatpush1.msra.mxu0 0.0
        %4047 = vmatprep.subr.mxu0 0.0
        %4048 = vmatpush1.msra.mxu0 0.0
        %4049 = vmatprep.subr.mxu0 0.0
        %4050 = vmatpush1.msra.mxu0 0.0
        %4051 = vmatprep.subr.mxu0 0.0
        %4052 = vmatpush1.msra.mxu0 0.0
        %4053 = vmatprep.subr.mxu0 0.0
        %4054 = vmatpush1.msra.mxu0 0.0
        %4055 = vmatprep.subr.mxu0 0.0
        %4056 = vmatpush1.msra.mxu0 0.0
        %4057 = vmatprep.subr.mxu0 0.0
        %4058 = vmatpush1.msra.mxu0 0.0
        %4059 = vmatprep.subr.mxu0 0.0
        %4060 = vmatpush1.msra.mxu0 0.0
        %4061 = vmatprep.subr.mxu0 0.0
        %4062 = vmatpush1.msra.mxu0 0.0
        %4063 = vmatprep.mubr.f32.mxu0 0.0
        %4064 = vmatmul.mubr.f32.gmra.mrb[0].mxu0 %v3997
        %v4065 = vpop.f32.mrb[0].mxu0
        %v4066 = vadd.f32 0.0, %v4065
        %v4067 = vpop.f32.mrb[0].mxu0
        %4068 = vdwg.mxu0
        %4070 = vrot.lane.b32.xlu0 %v3379, 64
        %v4071 = vpop.permute.xlu0 %4070
        %v4074 = vsel %vm3640, %v3991, 0
        %4076 = vmatprep.subr.mxu0 0.0
        %4077 = vmatpush1.msra.mxu0 %v4071
        %4078 = vmatprep.subr.mxu0 0.0
        %4079 = vmatpush1.msra.mxu0 0.0
        %4080 = vmatprep.subr.mxu0 0.0
        %4081 = vmatpush1.msra.mxu0 0.0
        %4082 = vmatprep.subr.mxu0 0.0
        %4083 = vmatpush1.msra.mxu0 0.0
        %4084 = vmatprep.subr.mxu0 0.0
        %4085 = vmatpush1.msra.mxu0 0.0
        %4086 = vmatprep.subr.mxu0 0.0
        %4087 = vmatpush1.msra.mxu0 0.0
        %4088 = vmatprep.subr.mxu0 0.0
        %4089 = vmatpush1.msra.mxu0 0.0
        %4090 = vmatprep.subr.mxu0 0.0
        %4091 = vmatpush1.msra.mxu0 0.0
        %4092 = vmatprep.subr.mxu0 0.0
        %4093 = vmatpush1.msra.mxu0 0.0
        %4094 = vmatprep.subr.mxu0 0.0
        %4095 = vmatpush1.msra.mxu0 0.0
        %4096 = vmatprep.subr.mxu0 0.0
        %4097 = vmatpush1.msra.mxu0 0.0
        %4098 = vmatprep.subr.mxu0 0.0
        %4099 = vmatpush1.msra.mxu0 0.0
        %4100 = vmatprep.subr.mxu0 0.0
        %4101 = vmatpush1.msra.mxu0 0.0
        %4102 = vmatprep.subr.mxu0 0.0
        %4103 = vmatpush1.msra.mxu0 0.0
        %4104 = vmatprep.subr.mxu0 0.0
        %4105 = vmatpush1.msra.mxu0 0.0
        %4106 = vmatprep.subr.mxu0 0.0
        %4107 = vmatpush1.msra.mxu0 0.0
        %4108 = vmatprep.subr.mxu0 0.0
        %4109 = vmatpush1.msra.mxu0 0.0
        %4110 = vmatprep.subr.mxu0 0.0
        %4111 = vmatpush1.msra.mxu0 0.0
        %4112 = vmatprep.subr.mxu0 0.0
        %4113 = vmatpush1.msra.mxu0 0.0
        %4114 = vmatprep.subr.mxu0 0.0
        %4115 = vmatpush1.msra.mxu0 0.0
        %4116 = vmatprep.subr.mxu0 0.0
        %4117 = vmatpush1.msra.mxu0 0.0
        %4118 = vmatprep.subr.mxu0 0.0
        %4119 = vmatpush1.msra.mxu0 0.0
        %4120 = vmatprep.subr.mxu0 0.0
        %4121 = vmatpush1.msra.mxu0 0.0
        %4122 = vmatprep.subr.mxu0 0.0
        %4123 = vmatpush1.msra.mxu0 0.0
        %4124 = vmatprep.subr.mxu0 0.0
        %4125 = vmatpush1.msra.mxu0 0.0
        %4126 = vmatprep.subr.mxu0 0.0
        %4127 = vmatpush1.msra.mxu0 0.0
        %4128 = vmatprep.subr.mxu0 0.0
        %4129 = vmatpush1.msra.mxu0 0.0
        %4130 = vmatprep.subr.mxu0 0.0
        %4131 = vmatpush1.msra.mxu0 0.0
        %4132 = vmatprep.subr.mxu0 0.0
        %4133 = vmatpush1.msra.mxu0 0.0
        %4134 = vmatprep.subr.mxu0 0.0
        %4135 = vmatpush1.msra.mxu0 0.0
        %4136 = vmatprep.subr.mxu0 0.0
        %4137 = vmatpush1.msra.mxu0 0.0
        %4138 = vmatprep.subr.mxu0 0.0
        %4139 = vmatpush1.msra.mxu0 0.0
        %4140 = vmatprep.mubr.f32.mxu0 0.0
        %4141 = vmatmul.mubr.f32.gmra.mrb[0].mxu0 %v4074
        %v4142 = vpop.f32.mrb[0].mxu0
        %v4143 = vadd.f32 0.0, %v4142
        %v4144 = vpop.f32.mrb[0].mxu0
        %4145 = vdwg.mxu0
        %v4146 = vpack.c.bf16 %v4143, %v4066
        %v4148 = vsel %vm3469, %v3033, 0
        %v4151 = vsel %vm3469, %v3205, 0
        %4153 = vmatprep.subr.mxu0 0.0
        %4154 = vmatpush1.xpose.msra.mxu0 %v4151
        %4155 = vmatprep.subr.mxu0 0.0
        %4156 = vmatpush1.xpose.msra.mxu0 0.0
        %4157 = vmatprep.subr.mxu0 0.0
        %4158 = vmatpush1.xpose.msra.mxu0 0.0
        %4159 = vmatprep.subr.mxu0 0.0
        %4160 = vmatpush1.xpose.msra.mxu0 0.0
        %4161 = vmatprep.subr.mxu0 0.0
        %4162 = vmatpush1.xpose.msra.mxu0 0.0
        %4163 = vmatprep.subr.mxu0 0.0
        %4164 = vmatpush1.xpose.msra.mxu0 0.0
        %4165 = vmatprep.subr.mxu0 0.0
        %4166 = vmatpush1.xpose.msra.mxu0 0.0
        %4167 = vmatprep.subr.mxu0 0.0
        %4168 = vmatpush1.xpose.msra.mxu0 0.0
        %4169 = vmatprep.subr.mxu0 0.0
        %4170 = vmatpush1.xpose.msra.mxu0 0.0
        %4171 = vmatprep.subr.mxu0 0.0
        %4172 = vmatpush1.xpose.msra.mxu0 0.0
        %4173 = vmatprep.subr.mxu0 0.0
        %4174 = vmatpush1.xpose.msra.mxu0 0.0
        %4175 = vmatprep.subr.mxu0 0.0
        %4176 = vmatpush1.xpose.msra.mxu0 0.0
        %4177 = vmatprep.subr.mxu0 0.0
        %4178 = vmatpush1.xpose.msra.mxu0 0.0
        %4179 = vmatprep.subr.mxu0 0.0
        %4180 = vmatpush1.xpose.msra.mxu0 0.0
        %4181 = vmatprep.subr.mxu0 0.0
        %4182 = vmatpush1.xpose.msra.mxu0 0.0
        %4183 = vmatprep.subr.mxu0 0.0
        %4184 = vmatpush1.xpose.msra.mxu0 0.0
        %4185 = vmatprep.subr.mxu0 0.0
        %4186 = vmatpush1.xpose.msra.mxu0 0.0
        %4187 = vmatprep.subr.mxu0 0.0
        %4188 = vmatpush1.xpose.msra.mxu0 0.0
        %4189 = vmatprep.subr.mxu0 0.0
        %4190 = vmatpush1.xpose.msra.mxu0 0.0
        %4191 = vmatprep.subr.mxu0 0.0
        %4192 = vmatpush1.xpose.msra.mxu0 0.0
        %4193 = vmatprep.subr.mxu0 0.0
        %4194 = vmatpush1.xpose.msra.mxu0 0.0
        %4195 = vmatprep.subr.mxu0 0.0
        %4196 = vmatpush1.xpose.msra.mxu0 0.0
        %4197 = vmatprep.subr.mxu0 0.0
        %4198 = vmatpush1.xpose.msra.mxu0 0.0
        %4199 = vmatprep.subr.mxu0 0.0
        %4200 = vmatpush1.xpose.msra.mxu0 0.0
        %4201 = vmatprep.subr.mxu0 0.0
        %4202 = vmatpush1.xpose.msra.mxu0 0.0
        %4203 = vmatprep.subr.mxu0 0.0
        %4204 = vmatpush1.xpose.msra.mxu0 0.0
        %4205 = vmatprep.subr.mxu0 0.0
        %4206 = vmatpush1.xpose.msra.mxu0 0.0
        %4207 = vmatprep.subr.mxu0 0.0
        %4208 = vmatpush1.xpose.msra.mxu0 0.0
        %4209 = vmatprep.subr.mxu0 0.0
        %4210 = vmatpush1.xpose.msra.mxu0 0.0
        %4211 = vmatprep.subr.mxu0 0.0
        %4212 = vmatpush1.xpose.msra.mxu0 0.0
        %4213 = vmatprep.subr.mxu0 0.0
        %4214 = vmatpush1.xpose.msra.mxu0 0.0
        %4215 = vmatprep.subr.mxu0 0.0
        %4216 = vmatpush1.xpose.msra.mxu0 0.0
        %4217 = vmatprep.mubr.f32.mxu0 0.0
        %4218 = vmatmul.mubr.f32.gmra.mrb[0].mxu0 %v4148
        %v4219 = vpop.f32.mrb[0].mxu0
        %v4220 = vadd.f32 0.0, %v4219
        %v4221 = vpop.f32.mrb[0].mxu0
        %4222 = vdwg.mxu0
        %v4224 = vsel %vm3469, %v3037, 0
        %v4227 = vsel %vm3469, %v3209, 0
        %4229 = vmatprep.subr.mxu0 0.0
        %4230 = vmatpush1.xpose.msra.mxu0 %v4227
        %4231 = vmatprep.subr.mxu0 0.0
        %4232 = vmatpush1.xpose.msra.mxu0 0.0
        %4233 = vmatprep.subr.mxu0 0.0
        %4234 = vmatpush1.xpose.msra.mxu0 0.0
        %4235 = vmatprep.subr.mxu0 0.0
        %4236 = vmatpush1.xpose.msra.mxu0 0.0
        %4237 = vmatprep.subr.mxu0 0.0
        %4238 = vmatpush1.xpose.msra.mxu0 0.0
        %4239 = vmatprep.subr.mxu0 0.0
        %4240 = vmatpush1.xpose.msra.mxu0 0.0
        %4241 = vmatprep.subr.mxu0 0.0
        %4242 = vmatpush1.xpose.msra.mxu0 0.0
        %4243 = vmatprep.subr.mxu0 0.0
        %4244 = vmatpush1.xpose.msra.mxu0 0.0
        %4245 = vmatprep.subr.mxu0 0.0
        %4246 = vmatpush1.xpose.msra.mxu0 0.0
        %4247 = vmatprep.subr.mxu0 0.0
        %4248 = vmatpush1.xpose.msra.mxu0 0.0
        %4249 = vmatprep.subr.mxu0 0.0
        %4250 = vmatpush1.xpose.msra.mxu0 0.0
        %4251 = vmatprep.subr.mxu0 0.0
        %4252 = vmatpush1.xpose.msra.mxu0 0.0
        %4253 = vmatprep.subr.mxu0 0.0
        %4254 = vmatpush1.xpose.msra.mxu0 0.0
        %4255 = vmatprep.subr.mxu0 0.0
        %4256 = vmatpush1.xpose.msra.mxu0 0.0
        %4257 = vmatprep.subr.mxu0 0.0
        %4258 = vmatpush1.xpose.msra.mxu0 0.0
        %4259 = vmatprep.subr.mxu0 0.0
        %4260 = vmatpush1.xpose.msra.mxu0 0.0
        %4261 = vmatprep.subr.mxu0 0.0
        %4262 = vmatpush1.xpose.msra.mxu0 0.0
        %4263 = vmatprep.subr.mxu0 0.0
        %4264 = vmatpush1.xpose.msra.mxu0 0.0
        %4265 = vmatprep.subr.mxu0 0.0
        %4266 = vmatpush1.xpose.msra.mxu0 0.0
        %4267 = vmatprep.subr.mxu0 0.0
        %4268 = vmatpush1.xpose.msra.mxu0 0.0
        %4269 = vmatprep.subr.mxu0 0.0
        %4270 = vmatpush1.xpose.msra.mxu0 0.0
        %4271 = vmatprep.subr.mxu0 0.0
        %4272 = vmatpush1.xpose.msra.mxu0 0.0
        %4273 = vmatprep.subr.mxu0 0.0
        %4274 = vmatpush1.xpose.msra.mxu0 0.0
        %4275 = vmatprep.subr.mxu0 0.0
        %4276 = vmatpush1.xpose.msra.mxu0 0.0
        %4277 = vmatprep.subr.mxu0 0.0
        %4278 = vmatpush1.xpose.msra.mxu0 0.0
        %4279 = vmatprep.subr.mxu0 0.0
        %4280 = vmatpush1.xpose.msra.mxu0 0.0
        %4281 = vmatprep.subr.mxu0 0.0
        %4282 = vmatpush1.xpose.msra.mxu0 0.0
        %4283 = vmatprep.subr.mxu0 0.0
        %4284 = vmatpush1.xpose.msra.mxu0 0.0
        %4285 = vmatprep.subr.mxu0 0.0
        %4286 = vmatpush1.xpose.msra.mxu0 0.0
        %4287 = vmatprep.subr.mxu0 0.0
        %4288 = vmatpush1.xpose.msra.mxu0 0.0
        %4289 = vmatprep.subr.mxu0 0.0
        %4290 = vmatpush1.xpose.msra.mxu0 0.0
        %4291 = vmatprep.subr.mxu0 0.0
        %4292 = vmatpush1.xpose.msra.mxu0 0.0
        %4293 = vmatprep.mubr.f32.mxu0 0.0
        %4294 = vmatmul.mubr.f32.gmra.mrb[0].mxu0 %v4224
        %v4295 = vpop.f32.mrb[0].mxu0
        %v4296 = vadd.f32 0.0, %v4295
        %v4297 = vpop.f32.mrb[0].mxu0
        %4298 = vdwg.mxu0
        %v4299 = vmul.f32 %v4220, 0.125
        %v4300 = vmul.f32 %v4296, 0.125
        %v4301 = vsel %vm3636, %v4299, -1e+09
        %v4302 = vsel %vm3637, %v4300, -1e+09
        %v4303 = vsel %vm3640, %v4301, -inf
        %4304 = vmax.xlane.f32.xlu0 %v4303
        %v4305 = vpop.xlane.xlu0 %4304
        %v4306 = vsel %vm3640, %v4302, -inf
        %4307 = vmax.xlane.f32.xlu0 %v4306
        %v4308 = vpop.xlane.xlu0 %4307
        %v4309 = vsub.f32 %v4301, %v4305
        %v4310 = vsub.f32 %v4302, %v4308
        %v4311 = vmul.f32 %v4309, 1.442695
        %v4312 = vpow.pop %v4311
        %v4313 = vmul.f32 %v4310, 1.442695
        %v4314 = vpow.pop %v4313
        %v4315 = vsel %vm3640, %v4312, 0.0
        %4316 = vadd.xlane.f32.xlu0 %v4315
        %v4317 = vpop.xlane.xlu0 %4316
        %v4318 = vsel %vm3640, %v4314, 0.0
        %4319 = vadd.xlane.f32.xlu0 %v4318
        %v4320 = vpop.xlane.xlu0 %4319
        %v4321 = vrcp.pop %v4317
        %v4322 = vrcp.pop %v4320
        %v4323 = vmul.f32 %v4312, %v4321
        %v4324 = vmul.f32 %v4314, %v4322
        %v4326 = vsel %vm3640, %v4323, 0
        %4328 = vmatprep.subr.mxu0 0.0
        %4329 = vmatpush1.msra.mxu0 %v3377
        %4330 = vmatprep.subr.mxu0 0.0
        %4331 = vmatpush1.msra.mxu0 0.0
        %4332 = vmatprep.subr.mxu0 0.0
        %4333 = vmatpush1.msra.mxu0 0.0
        %4334 = vmatprep.subr.mxu0 0.0
        %4335 = vmatpush1.msra.mxu0 0.0
        %4336 = vmatprep.subr.mxu0 0.0
        %4337 = vmatpush1.msra.mxu0 0.0
        %4338 = vmatprep.subr.mxu0 0.0
        %4339 = vmatpush1.msra.mxu0 0.0
        %4340 = vmatprep.subr.mxu0 0.0
        %4341 = vmatpush1.msra.mxu0 0.0
        %4342 = vmatprep.subr.mxu0 0.0
        %4343 = vmatpush1.msra.mxu0 0.0
        %4344 = vmatprep.subr.mxu0 0.0
        %4345 = vmatpush1.msra.mxu0 0.0
        %4346 = vmatprep.subr.mxu0 0.0
        %4347 = vmatpush1.msra.mxu0 0.0
        %4348 = vmatprep.subr.mxu0 0.0
        %4349 = vmatpush1.msra.mxu0 0.0
        %4350 = vmatprep.subr.mxu0 0.0
        %4351 = vmatpush1.msra.mxu0 0.0
        %4352 = vmatprep.subr.mxu0 0.0
        %4353 = vmatpush1.msra.mxu0 0.0
        %4354 = vmatprep.subr.mxu0 0.0
        %4355 = vmatpush1.msra.mxu0 0.0
        %4356 = vmatprep.subr.mxu0 0.0
        %4357 = vmatpush1.msra.mxu0 0.0
        %4358 = vmatprep.subr.mxu0 0.0
        %4359 = vmatpush1.msra.mxu0 0.0
        %4360 = vmatprep.subr.mxu0 0.0
        %4361 = vmatpush1.msra.mxu0 0.0
        %4362 = vmatprep.subr.mxu0 0.0
        %4363 = vmatpush1.msra.mxu0 0.0
        %4364 = vmatprep.subr.mxu0 0.0
        %4365 = vmatpush1.msra.mxu0 0.0
        %4366 = vmatprep.subr.mxu0 0.0
        %4367 = vmatpush1.msra.mxu0 0.0
        %4368 = vmatprep.subr.mxu0 0.0
        %4369 = vmatpush1.msra.mxu0 0.0
        %4370 = vmatprep.subr.mxu0 0.0
        %4371 = vmatpush1.msra.mxu0 0.0
        %4372 = vmatprep.subr.mxu0 0.0
        %4373 = vmatpush1.msra.mxu0 0.0
        %4374 = vmatprep.subr.mxu0 0.0
        %4375 = vmatpush1.msra.mxu0 0.0
        %4376 = vmatprep.subr.mxu0 0.0
        %4377 = vmatpush1.msra.mxu0 0.0
        %4378 = vmatprep.subr.mxu0 0.0
        %4379 = vmatpush1.msra.mxu0 0.0
        %4380 = vmatprep.subr.mxu0 0.0
        %4381 = vmatpush1.msra.mxu0 0.0
        %4382 = vmatprep.subr.mxu0 0.0
        %4383 = vmatpush1.msra.mxu0 0.0
        %4384 = vmatprep.subr.mxu0 0.0
        %4385 = vmatpush1.msra.mxu0 0.0
        %4386 = vmatprep.subr.mxu0 0.0
        %4387 = vmatpush1.msra.mxu0 0.0
        %4388 = vmatprep.subr.mxu0 0.0
        %4389 = vmatpush1.msra.mxu0 0.0
        %4390 = vmatprep.subr.mxu0 0.0
        %4391 = vmatpush1.msra.mxu0 0.0
        %4392 = vmatprep.mubr.f32.mxu0 0.0
        %4393 = vmatmul.mubr.f32.gmra.mrb[0].mxu0 %v4326
        %v4394 = vpop.f32.mrb[0].mxu0
        %v4395 = vadd.f32 0.0, %v4394
        %v4396 = vpop.f32.mrb[0].mxu0
        %4397 = vdwg.mxu0
        %v4399 = vsel %vm3640, %v4324, 0
        %4401 = vmatprep.subr.mxu0 0.0
        %4402 = vmatpush1.msra.mxu0 %v3381
        %4403 = vmatprep.subr.mxu0 0.0
        %4404 = vmatpush1.msra.mxu0 0.0
        %4405 = vmatprep.subr.mxu0 0.0
        %4406 = vmatpush1.msra.mxu0 0.0
        %4407 = vmatprep.subr.mxu0 0.0
        %4408 = vmatpush1.msra.mxu0 0.0
        %4409 = vmatprep.subr.mxu0 0.0
        %4410 = vmatpush1.msra.mxu0 0.0
        %4411 = vmatprep.subr.mxu0 0.0
        %4412 = vmatpush1.msra.mxu0 0.0
        %4413 = vmatprep.subr.mxu0 0.0
        %4414 = vmatpush1.msra.mxu0 0.0
        %4415 = vmatprep.subr.mxu0 0.0
        %4416 = vmatpush1.msra.mxu0 0.0
        %4417 = vmatprep.subr.mxu0 0.0
        %4418 = vmatpush1.msra.mxu0 0.0
        %4419 = vmatprep.subr.mxu0 0.0
        %4420 = vmatpush1.msra.mxu0 0.0
        %4421 = vmatprep.subr.mxu0 0.0
        %4422 = vmatpush1.msra.mxu0 0.0
        %4423 = vmatprep.subr.mxu0 0.0
        %4424 = vmatpush1.msra.mxu0 0.0
        %4425 = vmatprep.subr.mxu0 0.0
        %4426 = vmatpush1.msra.mxu0 0.0
        %4427 = vmatprep.subr.mxu0 0.0
        %4428 = vmatpush1.msra.mxu0 0.0
        %4429 = vmatprep.subr.mxu0 0.0
        %4430 = vmatpush1.msra.mxu0 0.0
        %4431 = vmatprep.subr.mxu0 0.0
        %4432 = vmatpush1.msra.mxu0 0.0
        %4433 = vmatprep.subr.mxu0 0.0
        %4434 = vmatpush1.msra.mxu0 0.0
        %4435 = vmatprep.subr.mxu0 0.0
        %4436 = vmatpush1.msra.mxu0 0.0
        %4437 = vmatprep.subr.mxu0 0.0
        %4438 = vmatpush1.msra.mxu0 0.0
        %4439 = vmatprep.subr.mxu0 0.0
        %4440 = vmatpush1.msra.mxu0 0.0
        %4441 = vmatprep.subr.mxu0 0.0
        %4442 = vmatpush1.msra.mxu0 0.0
        %4443 = vmatprep.subr.mxu0 0.0
        %4444 = vmatpush1.msra.mxu0 0.0
        %4445 = vmatprep.subr.mxu0 0.0
        %4446 = vmatpush1.msra.mxu0 0.0
        %4447 = vmatprep.subr.mxu0 0.0
        %4448 = vmatpush1.msra.mxu0 0.0
        %4449 = vmatprep.subr.mxu0 0.0
        %4450 = vmatpush1.msra.mxu0 0.0
        %4451 = vmatprep.subr.mxu0 0.0
        %4452 = vmatpush1.msra.mxu0 0.0
        %4453 = vmatprep.subr.mxu0 0.0
        %4454 = vmatpush1.msra.mxu0 0.0
        %4455 = vmatprep.subr.mxu0 0.0
        %4456 = vmatpush1.msra.mxu0 0.0
        %4457 = vmatprep.subr.mxu0 0.0
        %4458 = vmatpush1.msra.mxu0 0.0
        %4459 = vmatprep.subr.mxu0 0.0
        %4460 = vmatpush1.msra.mxu0 0.0
        %4461 = vmatprep.subr.mxu0 0.0
        %4462 = vmatpush1.msra.mxu0 0.0
        %4463 = vmatprep.subr.mxu0 0.0
        %4464 = vmatpush1.msra.mxu0 0.0
        %4465 = vmatprep.mubr.f32.mxu0 0.0
        %4466 = vmatmul.mubr.f32.gmra.mrb[0].mxu0 %v4399
        %v4467 = vpop.f32.mrb[0].mxu0
        %v4468 = vadd.f32 0.0, %v4467
        %v4469 = vpop.f32.mrb[0].mxu0
        %4470 = vdwg.mxu0
        %v4471 = vpack.c.bf16 %v4468, %v4395
        %4472 = vrot.lane.b32.xlu0 %v3033, 64
        %v4473 = vpop.permute.xlu0 %4472
        %4474 = vrot.lane.b32.xlu0 %v3205, 64
        %v4475 = vpop.permute.xlu0 %4474
        %v4476 = vsel %vm3469, %v4473, 0
        %v4478 = vsel %vm3469, %v4475, 0
        %4480 = vmatprep.subr.mxu0 0.0
        %4481 = vmatpush1.xpose.msra.mxu0 %v4478
        %4482 = vmatprep.subr.mxu0 0.0
        %4483 = vmatpush1.xpose.msra.mxu0 0.0
        %4484 = vmatprep.subr.mxu0 0.0
        %4485 = vmatpush1.xpose.msra.mxu0 0.0
        %4486 = vmatprep.subr.mxu0 0.0
        %4487 = vmatpush1.xpose.msra.mxu0 0.0
        %4488 = vmatprep.subr.mxu0 0.0
        %4489 = vmatpush1.xpose.msra.mxu0 0.0
        %4490 = vmatprep.subr.mxu0 0.0
        %4491 = vmatpush1.xpose.msra.mxu0 0.0
        %4492 = vmatprep.subr.mxu0 0.0
        %4493 = vmatpush1.xpose.msra.mxu0 0.0
        %4494 = vmatprep.subr.mxu0 0.0
        %4495 = vmatpush1.xpose.msra.mxu0 0.0
        %4496 = vmatprep.subr.mxu0 0.0
        %4497 = vmatpush1.xpose.msra.mxu0 0.0
        %4498 = vmatprep.subr.mxu0 0.0
        %4499 = vmatpush1.xpose.msra.mxu0 0.0
        %4500 = vmatprep.subr.mxu0 0.0
        %4501 = vmatpush1.xpose.msra.mxu0 0.0
        %4502 = vmatprep.subr.mxu0 0.0
        %4503 = vmatpush1.xpose.msra.mxu0 0.0
        %4504 = vmatprep.subr.mxu0 0.0
        %4505 = vmatpush1.xpose.msra.mxu0 0.0
        %4506 = vmatprep.subr.mxu0 0.0
        %4507 = vmatpush1.xpose.msra.mxu0 0.0
        %4508 = vmatprep.subr.mxu0 0.0
        %4509 = vmatpush1.xpose.msra.mxu0 0.0
        %4510 = vmatprep.subr.mxu0 0.0
        %4511 = vmatpush1.xpose.msra.mxu0 0.0
        %4512 = vmatprep.subr.mxu0 0.0
        %4513 = vmatpush1.xpose.msra.mxu0 0.0
        %4514 = vmatprep.subr.mxu0 0.0
        %4515 = vmatpush1.xpose.msra.mxu0 0.0
        %4516 = vmatprep.subr.mxu0 0.0
        %4517 = vmatpush1.xpose.msra.mxu0 0.0
        %4518 = vmatprep.subr.mxu0 0.0
        %4519 = vmatpush1.xpose.msra.mxu0 0.0
        %4520 = vmatprep.subr.mxu0 0.0
        %4521 = vmatpush1.xpose.msra.mxu0 0.0
        %4522 = vmatprep.subr.mxu0 0.0
        %4523 = vmatpush1.xpose.msra.mxu0 0.0
        %4524 = vmatprep.subr.mxu0 0.0
        %4525 = vmatpush1.xpose.msra.mxu0 0.0
        %4526 = vmatprep.subr.mxu0 0.0
        %4527 = vmatpush1.xpose.msra.mxu0 0.0
        %4528 = vmatprep.subr.mxu0 0.0
        %4529 = vmatpush1.xpose.msra.mxu0 0.0
        %4530 = vmatprep.subr.mxu0 0.0
        %4531 = vmatpush1.xpose.msra.mxu0 0.0
        %4532 = vmatprep.subr.mxu0 0.0
        %4533 = vmatpush1.xpose.msra.mxu0 0.0
        %4534 = vmatprep.subr.mxu0 0.0
        %4535 = vmatpush1.xpose.msra.mxu0 0.0
        %4536 = vmatprep.subr.mxu0 0.0
        %4537 = vmatpush1.xpose.msra.mxu0 0.0
        %4538 = vmatprep.subr.mxu0 0.0
        %4539 = vmatpush1.xpose.msra.mxu0 0.0
        %4540 = vmatprep.subr.mxu0 0.0
        %4541 = vmatpush1.xpose.msra.mxu0 0.0
        %4542 = vmatprep.subr.mxu0 0.0
        %4543 = vmatpush1.xpose.msra.mxu0 0.0
        %4544 = vmatprep.mubr.f32.mxu0 0.0
        %4545 = vmatmul.mubr.f32.gmra.mrb[0].mxu0 %v4476
        %v4546 = vpop.f32.mrb[0].mxu0
        %v4547 = vadd.f32 0.0, %v4546
        %v4548 = vpop.f32.mrb[0].mxu0
        %4549 = vdwg.mxu0
        %4550 = vrot.lane.b32.xlu0 %v3037, 64
        %v4551 = vpop.permute.xlu0 %4550
        %4552 = vrot.lane.b32.xlu0 %v3209, 64
        %v4553 = vpop.permute.xlu0 %4552
        %v4554 = vsel %vm3469, %v4551, 0
        %v4556 = vsel %vm3469, %v4553, 0
        %4558 = vmatprep.subr.mxu0 0.0
        %4559 = vmatpush1.xpose.msra.mxu0 %v4556
        %4560 = vmatprep.subr.mxu0 0.0
        %4561 = vmatpush1.xpose.msra.mxu0 0.0
        %4562 = vmatprep.subr.mxu0 0.0
        %4563 = vmatpush1.xpose.msra.mxu0 0.0
        %4564 = vmatprep.subr.mxu0 0.0
        %4565 = vmatpush1.xpose.msra.mxu0 0.0
        %4566 = vmatprep.subr.mxu0 0.0
        %4567 = vmatpush1.xpose.msra.mxu0 0.0
        %4568 = vmatprep.subr.mxu0 0.0
        %4569 = vmatpush1.xpose.msra.mxu0 0.0
        %4570 = vmatprep.subr.mxu0 0.0
        %4571 = vmatpush1.xpose.msra.mxu0 0.0
        %4572 = vmatprep.subr.mxu0 0.0
        %4573 = vmatpush1.xpose.msra.mxu0 0.0
        %4574 = vmatprep.subr.mxu0 0.0
        %4575 = vmatpush1.xpose.msra.mxu0 0.0
        %4576 = vmatprep.subr.mxu0 0.0
        %4577 = vmatpush1.xpose.msra.mxu0 0.0
        %4578 = vmatprep.subr.mxu0 0.0
        %4579 = vmatpush1.xpose.msra.mxu0 0.0
        %4580 = vmatprep.subr.mxu0 0.0
        %4581 = vmatpush1.xpose.msra.mxu0 0.0
        %4582 = vmatprep.subr.mxu0 0.0
        %4583 = vmatpush1.xpose.msra.mxu0 0.0
        %4584 = vmatprep.subr.mxu0 0.0
        %4585 = vmatpush1.xpose.msra.mxu0 0.0
        %4586 = vmatprep.subr.mxu0 0.0
        %4587 = vmatpush1.xpose.msra.mxu0 0.0
        %4588 = vmatprep.subr.mxu0 0.0
        %4589 = vmatpush1.xpose.msra.mxu0 0.0
        %4590 = vmatprep.subr.mxu0 0.0
        %4591 = vmatpush1.xpose.msra.mxu0 0.0
        %4592 = vmatprep.subr.mxu0 0.0
        %4593 = vmatpush1.xpose.msra.mxu0 0.0
        %4594 = vmatprep.subr.mxu0 0.0
        %4595 = vmatpush1.xpose.msra.mxu0 0.0
        %4596 = vmatprep.subr.mxu0 0.0
        %4597 = vmatpush1.xpose.msra.mxu0 0.0
        %4598 = vmatprep.subr.mxu0 0.0
        %4599 = vmatpush1.xpose.msra.mxu0 0.0
        %4600 = vmatprep.subr.mxu0 0.0
        %4601 = vmatpush1.xpose.msra.mxu0 0.0
        %4602 = vmatprep.subr.mxu0 0.0
        %4603 = vmatpush1.xpose.msra.mxu0 0.0
        %4604 = vmatprep.subr.mxu0 0.0
        %4605 = vmatpush1.xpose.msra.mxu0 0.0
        %4606 = vmatprep.subr.mxu0 0.0
        %4607 = vmatpush1.xpose.msra.mxu0 0.0
        %4608 = vmatprep.subr.mxu0 0.0
        %4609 = vmatpush1.xpose.msra.mxu0 0.0
        %4610 = vmatprep.subr.mxu0 0.0
        %4611 = vmatpush1.xpose.msra.mxu0 0.0
        %4612 = vmatprep.subr.mxu0 0.0
        %4613 = vmatpush1.xpose.msra.mxu0 0.0
        %4614 = vmatprep.subr.mxu0 0.0
        %4615 = vmatpush1.xpose.msra.mxu0 0.0
        %4616 = vmatprep.subr.mxu0 0.0
        %4617 = vmatpush1.xpose.msra.mxu0 0.0
        %4618 = vmatprep.subr.mxu0 0.0
        %4619 = vmatpush1.xpose.msra.mxu0 0.0
        %4620 = vmatprep.subr.mxu0 0.0
        %4621 = vmatpush1.xpose.msra.mxu0 0.0
        %4622 = vmatprep.mubr.f32.mxu0 0.0
        %4623 = vmatmul.mubr.f32.gmra.mrb[0].mxu0 %v4554
        %v4624 = vpop.f32.mrb[0].mxu0
        %v4625 = vadd.f32 0.0, %v4624
        %v4626 = vpop.f32.mrb[0].mxu0
        %4627 = vdwg.mxu0
        %v4628 = vmul.f32 %v4547, 0.125
        %v4629 = vmul.f32 %v4625, 0.125
        %v4630 = vsel %vm3636, %v4628, -1e+09
        %v4631 = vsel %vm3637, %v4629, -1e+09
        %v4632 = vsel %vm3640, %v4630, -inf
        %4633 = vmax.xlane.f32.xlu0 %v4632
        %v4634 = vpop.xlane.xlu0 %4633
        %v4635 = vsel %vm3640, %v4631, -inf
        %4636 = vmax.xlane.f32.xlu0 %v4635
        %v4637 = vpop.xlane.xlu0 %4636
        %v4638 = vsub.f32 %v4630, %v4634
        %v4639 = vsub.f32 %v4631, %v4637
        %v4640 = vmul.f32 %v4638, 1.442695
        %v4641 = vpow.pop %v4640
        %v4642 = vmul.f32 %v4639, 1.442695
        %v4643 = vpow.pop %v4642
        %v4644 = vsel %vm3640, %v4641, 0.0
        %4645 = vadd.xlane.f32.xlu0 %v4644
        %v4646 = vpop.xlane.xlu0 %4645
        %v4647 = vsel %vm3640, %v4643, 0.0
        %4648 = vadd.xlane.f32.xlu0 %v4647
        %v4649 = vpop.xlane.xlu0 %4648
        %v4650 = vrcp.pop %v4646
        %v4651 = vrcp.pop %v4649
        %v4652 = vmul.f32 %v4641, %v4650
        %v4653 = vmul.f32 %v4643, %v4651
        %4655 = vrot.lane.b32.xlu0 %v3377, 64
        %v4656 = vpop.permute.xlu0 %4655
        %v4659 = vsel %vm3640, %v4652, 0
        %4661 = vmatprep.subr.mxu0 0.0
        %4662 = vmatpush1.msra.mxu0 %v4656
        %4663 = vmatprep.subr.mxu0 0.0
        %4664 = vmatpush1.msra.mxu0 0.0
        %4665 = vmatprep.subr.mxu0 0.0
        %4666 = vmatpush1.msra.mxu0 0.0
        %4667 = vmatprep.subr.mxu0 0.0
        %4668 = vmatpush1.msra.mxu0 0.0
        %4669 = vmatprep.subr.mxu0 0.0
        %4670 = vmatpush1.msra.mxu0 0.0
        %4671 = vmatprep.subr.mxu0 0.0
        %4672 = vmatpush1.msra.mxu0 0.0
        %4673 = vmatprep.subr.mxu0 0.0
        %4674 = vmatpush1.msra.mxu0 0.0
        %4675 = vmatprep.subr.mxu0 0.0
        %4676 = vmatpush1.msra.mxu0 0.0
        %4677 = vmatprep.subr.mxu0 0.0
        %4678 = vmatpush1.msra.mxu0 0.0
        %4679 = vmatprep.subr.mxu0 0.0
        %4680 = vmatpush1.msra.mxu0 0.0
        %4681 = vmatprep.subr.mxu0 0.0
        %4682 = vmatpush1.msra.mxu0 0.0
        %4683 = vmatprep.subr.mxu0 0.0
        %4684 = vmatpush1.msra.mxu0 0.0
        %4685 = vmatprep.subr.mxu0 0.0
        %4686 = vmatpush1.msra.mxu0 0.0
        %4687 = vmatprep.subr.mxu0 0.0
        %4688 = vmatpush1.msra.mxu0 0.0
        %4689 = vmatprep.subr.mxu0 0.0
        %4690 = vmatpush1.msra.mxu0 0.0
        %4691 = vmatprep.subr.mxu0 0.0
        %4692 = vmatpush1.msra.mxu0 0.0
        %4693 = vmatprep.subr.mxu0 0.0
        %4694 = vmatpush1.msra.mxu0 0.0
        %4695 = vmatprep.subr.mxu0 0.0
        %4696 = vmatpush1.msra.mxu0 0.0
        %4697 = vmatprep.subr.mxu0 0.0
        %4698 = vmatpush1.msra.mxu0 0.0
        %4699 = vmatprep.subr.mxu0 0.0
        %4700 = vmatpush1.msra.mxu0 0.0
        %4701 = vmatprep.subr.mxu0 0.0
        %4702 = vmatpush1.msra.mxu0 0.0
        %4703 = vmatprep.subr.mxu0 0.0
        %4704 = vmatpush1.msra.mxu0 0.0
        %4705 = vmatprep.subr.mxu0 0.0
        %4706 = vmatpush1.msra.mxu0 0.0
        %4707 = vmatprep.subr.mxu0 0.0
        %4708 = vmatpush1.msra.mxu0 0.0
        %4709 = vmatprep.subr.mxu0 0.0
        %4710 = vmatpush1.msra.mxu0 0.0
        %4711 = vmatprep.subr.mxu0 0.0
        %4712 = vmatpush1.msra.mxu0 0.0
        %4713 = vmatprep.subr.mxu0 0.0
        %4714 = vmatpush1.msra.mxu0 0.0
        %4715 = vmatprep.subr.mxu0 0.0
        %4716 = vmatpush1.msra.mxu0 0.0
        %4717 = vmatprep.subr.mxu0 0.0
        %4718 = vmatpush1.msra.mxu0 0.0
        %4719 = vmatprep.subr.mxu0 0.0
        %4720 = vmatpush1.msra.mxu0 0.0
        %4721 = vmatprep.subr.mxu0 0.0
        %4722 = vmatpush1.msra.mxu0 0.0
        %4723 = vmatprep.subr.mxu0 0.0
        %4724 = vmatpush1.msra.mxu0 0.0
        %4725 = vmatprep.mubr.f32.mxu0 0.0
        %4726 = vmatmul.mubr.f32.gmra.mrb[0].mxu0 %v4659
        %v4727 = vpop.f32.mrb[0].mxu0
        %v4728 = vadd.f32 0.0, %v4727
        %v4729 = vpop.f32.mrb[0].mxu0
        %4730 = vdwg.mxu0
        %4732 = vrot.lane.b32.xlu0 %v3381, 64
        %v4733 = vpop.permute.xlu0 %4732
        %v4736 = vsel %vm3640, %v4653, 0
        %4738 = vmatprep.subr.mxu0 0.0
        %4739 = vmatpush1.msra.mxu0 %v4733
        %4740 = vmatprep.subr.mxu0 0.0
        %4741 = vmatpush1.msra.mxu0 0.0
        %4742 = vmatprep.subr.mxu0 0.0
        %4743 = vmatpush1.msra.mxu0 0.0
        %4744 = vmatprep.subr.mxu0 0.0
        %4745 = vmatpush1.msra.mxu0 0.0
        %4746 = vmatprep.subr.mxu0 0.0
        %4747 = vmatpush1.msra.mxu0 0.0
        %4748 = vmatprep.subr.mxu0 0.0
        %4749 = vmatpush1.msra.mxu0 0.0
        %4750 = vmatprep.subr.mxu0 0.0
        %4751 = vmatpush1.msra.mxu0 0.0
        %4752 = vmatprep.subr.mxu0 0.0
        %4753 = vmatpush1.msra.mxu0 0.0
        %4754 = vmatprep.subr.mxu0 0.0
        %4755 = vmatpush1.msra.mxu0 0.0
        %4756 = vmatprep.subr.mxu0 0.0
        %4757 = vmatpush1.msra.mxu0 0.0
        %4758 = vmatprep.subr.mxu0 0.0
        %4759 = vmatpush1.msra.mxu0 0.0
        %4760 = vmatprep.subr.mxu0 0.0
        %4761 = vmatpush1.msra.mxu0 0.0
        %4762 = vmatprep.subr.mxu0 0.0
        %4763 = vmatpush1.msra.mxu0 0.0
        %4764 = vmatprep.subr.mxu0 0.0
        %4765 = vmatpush1.msra.mxu0 0.0
        %4766 = vmatprep.subr.mxu0 0.0
        %4767 = vmatpush1.msra.mxu0 0.0
        %4768 = vmatprep.subr.mxu0 0.0
        %4769 = vmatpush1.msra.mxu0 0.0
        %4770 = vmatprep.subr.mxu0 0.0
        %4771 = vmatpush1.msra.mxu0 0.0
        %4772 = vmatprep.subr.mxu0 0.0
        %4773 = vmatpush1.msra.mxu0 0.0
        %4774 = vmatprep.subr.mxu0 0.0
        %4775 = vmatpush1.msra.mxu0 0.0
        %4776 = vmatprep.subr.mxu0 0.0
        %4777 = vmatpush1.msra.mxu0 0.0
        %4778 = vmatprep.subr.mxu0 0.0
        %4779 = vmatpush1.msra.mxu0 0.0
        %4780 = vmatprep.subr.mxu0 0.0
        %4781 = vmatpush1.msra.mxu0 0.0
        %4782 = vmatprep.subr.mxu0 0.0
        %4783 = vmatpush1.msra.mxu0 0.0
        %4784 = vmatprep.subr.mxu0 0.0
        %4785 = vmatpush1.msra.mxu0 0.0
        %4786 = vmatprep.subr.mxu0 0.0
        %4787 = vmatpush1.msra.mxu0 0.0
        %4788 = vmatprep.subr.mxu0 0.0
        %4789 = vmatpush1.msra.mxu0 0.0
        %4790 = vmatprep.subr.mxu0 0.0
        %4791 = vmatpush1.msra.mxu0 0.0
        %4792 = vmatprep.subr.mxu0 0.0
        %4793 = vmatpush1.msra.mxu0 0.0
        %4794 = vmatprep.subr.mxu0 0.0
        %4795 = vmatpush1.msra.mxu0 0.0
        %4796 = vmatprep.subr.mxu0 0.0
        %4797 = vmatpush1.msra.mxu0 0.0
        %4798 = vmatprep.subr.mxu0 0.0
        %4799 = vmatpush1.msra.mxu0 0.0
        %4800 = vmatprep.subr.mxu0 0.0
        %4801 = vmatpush1.msra.mxu0 0.0
        %4802 = vmatprep.mubr.f32.mxu0 0.0
        %4803 = vmatmul.mubr.f32.gmra.mrb[0].mxu0 %v4736
        %v4804 = vpop.f32.mrb[0].mxu0
        %v4805 = vadd.f32 0.0, %v4804
        %v4806 = vpop.f32.mrb[0].mxu0
        %4807 = vdwg.mxu0
        %v4808 = vpack.c.bf16 %v4805, %v4728
        %v4810 = vsel %vm3469, %v3117, 0
        %v4813 = vsel %vm3469, %v3289, 0
        %4815 = vmatprep.subr.mxu0 0.0
        %4816 = vmatpush1.xpose.msra.mxu0 %v4813
        %4817 = vmatprep.subr.mxu0 0.0
        %4818 = vmatpush1.xpose.msra.mxu0 0.0
        %4819 = vmatprep.subr.mxu0 0.0
        %4820 = vmatpush1.xpose.msra.mxu0 0.0
        %4821 = vmatprep.subr.mxu0 0.0
        %4822 = vmatpush1.xpose.msra.mxu0 0.0
        %4823 = vmatprep.subr.mxu0 0.0
        %4824 = vmatpush1.xpose.msra.mxu0 0.0
        %4825 = vmatprep.subr.mxu0 0.0
        %4826 = vmatpush1.xpose.msra.mxu0 0.0
        %4827 = vmatprep.subr.mxu0 0.0
        %4828 = vmatpush1.xpose.msra.mxu0 0.0
        %4829 = vmatprep.subr.mxu0 0.0
        %4830 = vmatpush1.xpose.msra.mxu0 0.0
        %4831 = vmatprep.subr.mxu0 0.0
        %4832 = vmatpush1.xpose.msra.mxu0 0.0
        %4833 = vmatprep.subr.mxu0 0.0
        %4834 = vmatpush1.xpose.msra.mxu0 0.0
        %4835 = vmatprep.subr.mxu0 0.0
        %4836 = vmatpush1.xpose.msra.mxu0 0.0
        %4837 = vmatprep.subr.mxu0 0.0
        %4838 = vmatpush1.xpose.msra.mxu0 0.0
        %4839 = vmatprep.subr.mxu0 0.0
        %4840 = vmatpush1.xpose.msra.mxu0 0.0
        %4841 = vmatprep.subr.mxu0 0.0
        %4842 = vmatpush1.xpose.msra.mxu0 0.0
        %4843 = vmatprep.subr.mxu0 0.0
        %4844 = vmatpush1.xpose.msra.mxu0 0.0
        %4845 = vmatprep.subr.mxu0 0.0
        %4846 = vmatpush1.xpose.msra.mxu0 0.0
        %4847 = vmatprep.subr.mxu0 0.0
        %4848 = vmatpush1.xpose.msra.mxu0 0.0
        %4849 = vmatprep.subr.mxu0 0.0
        %4850 = vmatpush1.xpose.msra.mxu0 0.0
        %4851 = vmatprep.subr.mxu0 0.0
        %4852 = vmatpush1.xpose.msra.mxu0 0.0
        %4853 = vmatprep.subr.mxu0 0.0
        %4854 = vmatpush1.xpose.msra.mxu0 0.0
        %4855 = vmatprep.subr.mxu0 0.0
        %4856 = vmatpush1.xpose.msra.mxu0 0.0
        %4857 = vmatprep.subr.mxu0 0.0
        %4858 = vmatpush1.xpose.msra.mxu0 0.0
        %4859 = vmatprep.subr.mxu0 0.0
        %4860 = vmatpush1.xpose.msra.mxu0 0.0
        %4861 = vmatprep.subr.mxu0 0.0
        %4862 = vmatpush1.xpose.msra.mxu0 0.0
        %4863 = vmatprep.subr.mxu0 0.0
        %4864 = vmatpush1.xpose.msra.mxu0 0.0
        %4865 = vmatprep.subr.mxu0 0.0
        %4866 = vmatpush1.xpose.msra.mxu0 0.0
        %4867 = vmatprep.subr.mxu0 0.0
        %4868 = vmatpush1.xpose.msra.mxu0 0.0
        %4869 = vmatprep.subr.mxu0 0.0
        %4870 = vmatpush1.xpose.msra.mxu0 0.0
        %4871 = vmatprep.subr.mxu0 0.0
        %4872 = vmatpush1.xpose.msra.mxu0 0.0
        %4873 = vmatprep.subr.mxu0 0.0
        %4874 = vmatpush1.xpose.msra.mxu0 0.0
        %4875 = vmatprep.subr.mxu0 0.0
        %4876 = vmatpush1.xpose.msra.mxu0 0.0
        %4877 = vmatprep.subr.mxu0 0.0
        %4878 = vmatpush1.xpose.msra.mxu0 0.0
        %4879 = vmatprep.mubr.f32.mxu0 0.0
        %4880 = vmatmul.mubr.f32.gmra.mrb[0].mxu0 %v4810
        %v4881 = vpop.f32.mrb[0].mxu0
        %v4882 = vadd.f32 0.0, %v4881
        %v4883 = vpop.f32.mrb[0].mxu0
        %4884 = vdwg.mxu0
        %v4886 = vsel %vm3469, %v3121, 0
        %v4889 = vsel %vm3469, %v3293, 0
        %4891 = vmatprep.subr.mxu0 0.0
        %4892 = vmatpush1.xpose.msra.mxu0 %v4889
        %4893 = vmatprep.subr.mxu0 0.0
        %4894 = vmatpush1.xpose.msra.mxu0 0.0
        %4895 = vmatprep.subr.mxu0 0.0
        %4896 = vmatpush1.xpose.msra.mxu0 0.0
        %4897 = vmatprep.subr.mxu0 0.0
        %4898 = vmatpush1.xpose.msra.mxu0 0.0
        %4899 = vmatprep.subr.mxu0 0.0
        %4900 = vmatpush1.xpose.msra.mxu0 0.0
        %4901 = vmatprep.subr.mxu0 0.0
        %4902 = vmatpush1.xpose.msra.mxu0 0.0
        %4903 = vmatprep.subr.mxu0 0.0
        %4904 = vmatpush1.xpose.msra.mxu0 0.0
        %4905 = vmatprep.subr.mxu0 0.0
        %4906 = vmatpush1.xpose.msra.mxu0 0.0
        %4907 = vmatprep.subr.mxu0 0.0
        %4908 = vmatpush1.xpose.msra.mxu0 0.0
        %4909 = vmatprep.subr.mxu0 0.0
        %4910 = vmatpush1.xpose.msra.mxu0 0.0
        %4911 = vmatprep.subr.mxu0 0.0
        %4912 = vmatpush1.xpose.msra.mxu0 0.0
        %4913 = vmatprep.subr.mxu0 0.0
        %4914 = vmatpush1.xpose.msra.mxu0 0.0
        %4915 = vmatprep.subr.mxu0 0.0
        %4916 = vmatpush1.xpose.msra.mxu0 0.0
        %4917 = vmatprep.subr.mxu0 0.0
        %4918 = vmatpush1.xpose.msra.mxu0 0.0
        %4919 = vmatprep.subr.mxu0 0.0
        %4920 = vmatpush1.xpose.msra.mxu0 0.0
        %4921 = vmatprep.subr.mxu0 0.0
        %4922 = vmatpush1.xpose.msra.mxu0 0.0
        %4923 = vmatprep.subr.mxu0 0.0
        %4924 = vmatpush1.xpose.msra.mxu0 0.0
        %4925 = vmatprep.subr.mxu0 0.0
        %4926 = vmatpush1.xpose.msra.mxu0 0.0
        %4927 = vmatprep.subr.mxu0 0.0
        %4928 = vmatpush1.xpose.msra.mxu0 0.0
        %4929 = vmatprep.subr.mxu0 0.0
        %4930 = vmatpush1.xpose.msra.mxu0 0.0
        %4931 = vmatprep.subr.mxu0 0.0
        %4932 = vmatpush1.xpose.msra.mxu0 0.0
        %4933 = vmatprep.subr.mxu0 0.0
        %4934 = vmatpush1.xpose.msra.mxu0 0.0
        %4935 = vmatprep.subr.mxu0 0.0
        %4936 = vmatpush1.xpose.msra.mxu0 0.0
        %4937 = vmatprep.subr.mxu0 0.0
        %4938 = vmatpush1.xpose.msra.mxu0 0.0
        %4939 = vmatprep.subr.mxu0 0.0
        %4940 = vmatpush1.xpose.msra.mxu0 0.0
        %4941 = vmatprep.subr.mxu0 0.0
        %4942 = vmatpush1.xpose.msra.mxu0 0.0
        %4943 = vmatprep.subr.mxu0 0.0
        %4944 = vmatpush1.xpose.msra.mxu0 0.0
        %4945 = vmatprep.subr.mxu0 0.0
        %4946 = vmatpush1.xpose.msra.mxu0 0.0
        %4947 = vmatprep.subr.mxu0 0.0
        %4948 = vmatpush1.xpose.msra.mxu0 0.0
        %4949 = vmatprep.subr.mxu0 0.0
        %4950 = vmatpush1.xpose.msra.mxu0 0.0
        %4951 = vmatprep.subr.mxu0 0.0
        %4952 = vmatpush1.xpose.msra.mxu0 0.0
        %4953 = vmatprep.subr.mxu0 0.0
        %4954 = vmatpush1.xpose.msra.mxu0 0.0
        %4955 = vmatprep.mubr.f32.mxu0 0.0
        %4956 = vmatmul.mubr.f32.gmra.mrb[0].mxu0 %v4886
        %v4957 = vpop.f32.mrb[0].mxu0
        %v4958 = vadd.f32 0.0, %v4957
        %v4959 = vpop.f32.mrb[0].mxu0
        %4960 = vdwg.mxu0
        %v4961 = vmul.f32 %v4882, 0.125
        %v4962 = vmul.f32 %v4958, 0.125
        %v4963 = vsel %vm3636, %v4961, -1e+09
        %v4964 = vsel %vm3637, %v4962, -1e+09
        %v4965 = vsel %vm3640, %v4963, -inf
        %4966 = vmax.xlane.f32.xlu0 %v4965
        %v4967 = vpop.xlane.xlu0 %4966
        %v4968 = vsel %vm3640, %v4964, -inf
        %4969 = vmax.xlane.f32.xlu0 %v4968
        %v4970 = vpop.xlane.xlu0 %4969
        %v4971 = vsub.f32 %v4963, %v4967
        %v4972 = vsub.f32 %v4964, %v4970
        %v4973 = vmul.f32 %v4971, 1.442695
        %v4974 = vpow.pop %v4973
        %v4975 = vmul.f32 %v4972, 1.442695
        %v4976 = vpow.pop %v4975
        %v4977 = vsel %vm3640, %v4974, 0.0
        %4978 = vadd.xlane.f32.xlu0 %v4977
        %v4979 = vpop.xlane.xlu0 %4978
        %v4980 = vsel %vm3640, %v4976, 0.0
        %4981 = vadd.xlane.f32.xlu0 %v4980
        %v4982 = vpop.xlane.xlu0 %4981
        %v4983 = vrcp.pop %v4979
        %v4984 = vrcp.pop %v4982
        %v4985 = vmul.f32 %v4974, %v4983
        %v4986 = vmul.f32 %v4976, %v4984
        %v4988 = vsel %vm3640, %v4985, 0
        %4990 = vmatprep.subr.mxu0 0.0
        %4991 = vmatpush1.msra.mxu0 %v3461
        %4992 = vmatprep.subr.mxu0 0.0
        %4993 = vmatpush1.msra.mxu0 0.0
        %4994 = vmatprep.subr.mxu0 0.0
        %4995 = vmatpush1.msra.mxu0 0.0
        %4996 = vmatprep.subr.mxu0 0.0
        %4997 = vmatpush1.msra.mxu0 0.0
        %4998 = vmatprep.subr.mxu0 0.0
        %4999 = vmatpush1.msra.mxu0 0.0
        %5000 = vmatprep.subr.mxu0 0.0
        %5001 = vmatpush1.msra.mxu0 0.0
        %5002 = vmatprep.subr.mxu0 0.0
        %5003 = vmatpush1.msra.mxu0 0.0
        %5004 = vmatprep.subr.mxu0 0.0
        %5005 = vmatpush1.msra.mxu0 0.0
        %5006 = vmatprep.subr.mxu0 0.0
        %5007 = vmatpush1.msra.mxu0 0.0
        %5008 = vmatprep.subr.mxu0 0.0
        %5009 = vmatpush1.msra.mxu0 0.0
        %5010 = vmatprep.subr.mxu0 0.0
        %5011 = vmatpush1.msra.mxu0 0.0
        %5012 = vmatprep.subr.mxu0 0.0
        %5013 = vmatpush1.msra.mxu0 0.0
        %5014 = vmatprep.subr.mxu0 0.0
        %5015 = vmatpush1.msra.mxu0 0.0
        %5016 = vmatprep.subr.mxu0 0.0
        %5017 = vmatpush1.msra.mxu0 0.0
        %5018 = vmatprep.subr.mxu0 0.0
        %5019 = vmatpush1.msra.mxu0 0.0
        %5020 = vmatprep.subr.mxu0 0.0
        %5021 = vmatpush1.msra.mxu0 0.0
        %5022 = vmatprep.subr.mxu0 0.0
        %5023 = vmatpush1.msra.mxu0 0.0
        %5024 = vmatprep.subr.mxu0 0.0
        %5025 = vmatpush1.msra.mxu0 0.0
        %5026 = vmatprep.subr.mxu0 0.0
        %5027 = vmatpush1.msra.mxu0 0.0
        %5028 = vmatprep.subr.mxu0 0.0
        %5029 = vmatpush1.msra.mxu0 0.0
        %5030 = vmatprep.subr.mxu0 0.0
        %5031 = vmatpush1.msra.mxu0 0.0
        %5032 = vmatprep.subr.mxu0 0.0
        %5033 = vmatpush1.msra.mxu0 0.0
        %5034 = vmatprep.subr.mxu0 0.0
        %5035 = vmatpush1.msra.mxu0 0.0
        %5036 = vmatprep.subr.mxu0 0.0
        %5037 = vmatpush1.msra.mxu0 0.0
        %5038 = vmatprep.subr.mxu0 0.0
        %5039 = vmatpush1.msra.mxu0 0.0
        %5040 = vmatprep.subr.mxu0 0.0
        %5041 = vmatpush1.msra.mxu0 0.0
        %5042 = vmatprep.subr.mxu0 0.0
        %5043 = vmatpush1.msra.mxu0 0.0
        %5044 = vmatprep.subr.mxu0 0.0
        %5045 = vmatpush1.msra.mxu0 0.0
        %5046 = vmatprep.subr.mxu0 0.0
        %5047 = vmatpush1.msra.mxu0 0.0
        %5048 = vmatprep.subr.mxu0 0.0
        %5049 = vmatpush1.msra.mxu0 0.0
        %5050 = vmatprep.subr.mxu0 0.0
        %5051 = vmatpush1.msra.mxu0 0.0
        %5052 = vmatprep.subr.mxu0 0.0
        %5053 = vmatpush1.msra.mxu0 0.0
        %5054 = vmatprep.mubr.f32.mxu0 0.0
        %5055 = vmatmul.mubr.f32.gmra.mrb[0].mxu0 %v4988
        %v5056 = vpop.f32.mrb[0].mxu0
        %v5057 = vadd.f32 0.0, %v5056
        %v5058 = vpop.f32.mrb[0].mxu0
        %5059 = vdwg.mxu0
        %v5061 = vsel %vm3640, %v4986, 0
        %5063 = vmatprep.subr.mxu0 0.0
        %5064 = vmatpush1.msra.mxu0 %v3465
        %5065 = vmatprep.subr.mxu0 0.0
        %5066 = vmatpush1.msra.mxu0 0.0
        %5067 = vmatprep.subr.mxu0 0.0
        %5068 = vmatpush1.msra.mxu0 0.0
        %5069 = vmatprep.subr.mxu0 0.0
        %5070 = vmatpush1.msra.mxu0 0.0
        %5071 = vmatprep.subr.mxu0 0.0
        %5072 = vmatpush1.msra.mxu0 0.0
        %5073 = vmatprep.subr.mxu0 0.0
        %5074 = vmatpush1.msra.mxu0 0.0
        %5075 = vmatprep.subr.mxu0 0.0
        %5076 = vmatpush1.msra.mxu0 0.0
        %5077 = vmatprep.subr.mxu0 0.0
        %5078 = vmatpush1.msra.mxu0 0.0
        %5079 = vmatprep.subr.mxu0 0.0
        %5080 = vmatpush1.msra.mxu0 0.0
        %5081 = vmatprep.subr.mxu0 0.0
        %5082 = vmatpush1.msra.mxu0 0.0
        %5083 = vmatprep.subr.mxu0 0.0
        %5084 = vmatpush1.msra.mxu0 0.0
        %5085 = vmatprep.subr.mxu0 0.0
        %5086 = vmatpush1.msra.mxu0 0.0
        %5087 = vmatprep.subr.mxu0 0.0
        %5088 = vmatpush1.msra.mxu0 0.0
        %5089 = vmatprep.subr.mxu0 0.0
        %5090 = vmatpush1.msra.mxu0 0.0
        %5091 = vmatprep.subr.mxu0 0.0
        %5092 = vmatpush1.msra.mxu0 0.0
        %5093 = vmatprep.subr.mxu0 0.0
        %5094 = vmatpush1.msra.mxu0 0.0
        %5095 = vmatprep.subr.mxu0 0.0
        %5096 = vmatpush1.msra.mxu0 0.0
        %5097 = vmatprep.subr.mxu0 0.0
        %5098 = vmatpush1.msra.mxu0 0.0
        %5099 = vmatprep.subr.mxu0 0.0
        %5100 = vmatpush1.msra.mxu0 0.0
        %5101 = vmatprep.subr.mxu0 0.0
        %5102 = vmatpush1.msra.mxu0 0.0
        %5103 = vmatprep.subr.mxu0 0.0
        %5104 = vmatpush1.msra.mxu0 0.0
        %5105 = vmatprep.subr.mxu0 0.0
        %5106 = vmatpush1.msra.mxu0 0.0
        %5107 = vmatprep.subr.mxu0 0.0
        %5108 = vmatpush1.msra.mxu0 0.0
        %5109 = vmatprep.subr.mxu0 0.0
        %5110 = vmatpush1.msra.mxu0 0.0
        %5111 = vmatprep.subr.mxu0 0.0
        %5112 = vmatpush1.msra.mxu0 0.0
        %5113 = vmatprep.subr.mxu0 0.0
        %5114 = vmatpush1.msra.mxu0 0.0
        %5115 = vmatprep.subr.mxu0 0.0
        %5116 = vmatpush1.msra.mxu0 0.0
        %5117 = vmatprep.subr.mxu0 0.0
        %5118 = vmatpush1.msra.mxu0 0.0
        %5119 = vmatprep.subr.mxu0 0.0
        %5120 = vmatpush1.msra.mxu0 0.0
        %5121 = vmatprep.subr.mxu0 0.0
        %5122 = vmatpush1.msra.mxu0 0.0
        %5123 = vmatprep.subr.mxu0 0.0
        %5124 = vmatpush1.msra.mxu0 0.0
        %5125 = vmatprep.subr.mxu0 0.0
        %5126 = vmatpush1.msra.mxu0 0.0
        %5127 = vmatprep.mubr.f32.mxu0 0.0
        %5128 = vmatmul.mubr.f32.gmra.mrb[0].mxu0 %v5061
        %v5129 = vpop.f32.mrb[0].mxu0
        %v5130 = vadd.f32 0.0, %v5129
        %v5131 = vpop.f32.mrb[0].mxu0
        %5132 = vdwg.mxu0
        %v5133 = vpack.c.bf16 %v5130, %v5057
        %5134 = vrot.lane.b32.xlu0 %v3117, 64
        %v5135 = vpop.permute.xlu0 %5134
        %5136 = vrot.lane.b32.xlu0 %v3289, 64
        %v5137 = vpop.permute.xlu0 %5136
        %v5138 = vsel %vm3469, %v5135, 0
        %v5140 = vsel %vm3469, %v5137, 0
        %5142 = vmatprep.subr.mxu0 0.0
        %5143 = vmatpush1.xpose.msra.mxu0 %v5140
        %5144 = vmatprep.subr.mxu0 0.0
        %5145 = vmatpush1.xpose.msra.mxu0 0.0
        %5146 = vmatprep.subr.mxu0 0.0
        %5147 = vmatpush1.xpose.msra.mxu0 0.0
        %5148 = vmatprep.subr.mxu0 0.0
        %5149 = vmatpush1.xpose.msra.mxu0 0.0
        %5150 = vmatprep.subr.mxu0 0.0
        %5151 = vmatpush1.xpose.msra.mxu0 0.0
        %5152 = vmatprep.subr.mxu0 0.0
        %5153 = vmatpush1.xpose.msra.mxu0 0.0
        %5154 = vmatprep.subr.mxu0 0.0
        %5155 = vmatpush1.xpose.msra.mxu0 0.0
        %5156 = vmatprep.subr.mxu0 0.0
        %5157 = vmatpush1.xpose.msra.mxu0 0.0
        %5158 = vmatprep.subr.mxu0 0.0
        %5159 = vmatpush1.xpose.msra.mxu0 0.0
        %5160 = vmatprep.subr.mxu0 0.0
        %5161 = vmatpush1.xpose.msra.mxu0 0.0
        %5162 = vmatprep.subr.mxu0 0.0
        %5163 = vmatpush1.xpose.msra.mxu0 0.0
        %5164 = vmatprep.subr.mxu0 0.0
        %5165 = vmatpush1.xpose.msra.mxu0 0.0
        %5166 = vmatprep.subr.mxu0 0.0
        %5167 = vmatpush1.xpose.msra.mxu0 0.0
        %5168 = vmatprep.subr.mxu0 0.0
        %5169 = vmatpush1.xpose.msra.mxu0 0.0
        %5170 = vmatprep.subr.mxu0 0.0
        %5171 = vmatpush1.xpose.msra.mxu0 0.0
        %5172 = vmatprep.subr.mxu0 0.0
        %5173 = vmatpush1.xpose.msra.mxu0 0.0
        %5174 = vmatprep.subr.mxu0 0.0
        %5175 = vmatpush1.xpose.msra.mxu0 0.0
        %5176 = vmatprep.subr.mxu0 0.0
        %5177 = vmatpush1.xpose.msra.mxu0 0.0
        %5178 = vmatprep.subr.mxu0 0.0
        %5179 = vmatpush1.xpose.msra.mxu0 0.0
        %5180 = vmatprep.subr.mxu0 0.0
        %5181 = vmatpush1.xpose.msra.mxu0 0.0
        %5182 = vmatprep.subr.mxu0 0.0
        %5183 = vmatpush1.xpose.msra.mxu0 0.0
        %5184 = vmatprep.subr.mxu0 0.0
        %5185 = vmatpush1.xpose.msra.mxu0 0.0
        %5186 = vmatprep.subr.mxu0 0.0
        %5187 = vmatpush1.xpose.msra.mxu0 0.0
        %5188 = vmatprep.subr.mxu0 0.0
        %5189 = vmatpush1.xpose.msra.mxu0 0.0
        %5190 = vmatprep.subr.mxu0 0.0
        %5191 = vmatpush1.xpose.msra.mxu0 0.0
        %5192 = vmatprep.subr.mxu0 0.0
        %5193 = vmatpush1.xpose.msra.mxu0 0.0
        %5194 = vmatprep.subr.mxu0 0.0
        %5195 = vmatpush1.xpose.msra.mxu0 0.0
        %5196 = vmatprep.subr.mxu0 0.0
        %5197 = vmatpush1.xpose.msra.mxu0 0.0
        %5198 = vmatprep.subr.mxu0 0.0
        %5199 = vmatpush1.xpose.msra.mxu0 0.0
        %5200 = vmatprep.subr.mxu0 0.0
        %5201 = vmatpush1.xpose.msra.mxu0 0.0
        %5202 = vmatprep.subr.mxu0 0.0
        %5203 = vmatpush1.xpose.msra.mxu0 0.0
        %5204 = vmatprep.subr.mxu0 0.0
        %5205 = vmatpush1.xpose.msra.mxu0 0.0
        %5206 = vmatprep.mubr.f32.mxu0 0.0
        %5207 = vmatmul.mubr.f32.gmra.mrb[0].mxu0 %v5138
        %v5208 = vpop.f32.mrb[0].mxu0
        %v5209 = vadd.f32 0.0, %v5208
        %v5210 = vpop.f32.mrb[0].mxu0
        %5211 = vdwg.mxu0
        %5212 = vrot.lane.b32.xlu0 %v3121, 64
        %v5213 = vpop.permute.xlu0 %5212
        %5214 = vrot.lane.b32.xlu0 %v3293, 64
        %v5215 = vpop.permute.xlu0 %5214
        %v5216 = vsel %vm3469, %v5213, 0
        %v5218 = vsel %vm3469, %v5215, 0
        %5220 = vmatprep.subr.mxu0 0.0
        %5221 = vmatpush1.xpose.msra.mxu0 %v5218
        %5222 = vmatprep.subr.mxu0 0.0
        %5223 = vmatpush1.xpose.msra.mxu0 0.0
        %5224 = vmatprep.subr.mxu0 0.0
        %5225 = vmatpush1.xpose.msra.mxu0 0.0
        %5226 = vmatprep.subr.mxu0 0.0
        %5227 = vmatpush1.xpose.msra.mxu0 0.0
        %5228 = vmatprep.subr.mxu0 0.0
        %5229 = vmatpush1.xpose.msra.mxu0 0.0
        %5230 = vmatprep.subr.mxu0 0.0
        %5231 = vmatpush1.xpose.msra.mxu0 0.0
        %5232 = vmatprep.subr.mxu0 0.0
        %5233 = vmatpush1.xpose.msra.mxu0 0.0
        %5234 = vmatprep.subr.mxu0 0.0
        %5235 = vmatpush1.xpose.msra.mxu0 0.0
        %5236 = vmatprep.subr.mxu0 0.0
        %5237 = vmatpush1.xpose.msra.mxu0 0.0
        %5238 = vmatprep.subr.mxu0 0.0
        %5239 = vmatpush1.xpose.msra.mxu0 0.0
        %5240 = vmatprep.subr.mxu0 0.0
        %5241 = vmatpush1.xpose.msra.mxu0 0.0
        %5242 = vmatprep.subr.mxu0 0.0
        %5243 = vmatpush1.xpose.msra.mxu0 0.0
        %5244 = vmatprep.subr.mxu0 0.0
        %5245 = vmatpush1.xpose.msra.mxu0 0.0
        %5246 = vmatprep.subr.mxu0 0.0
        %5247 = vmatpush1.xpose.msra.mxu0 0.0
        %5248 = vmatprep.subr.mxu0 0.0
        %5249 = vmatpush1.xpose.msra.mxu0 0.0
        %5250 = vmatprep.subr.mxu0 0.0
        %5251 = vmatpush1.xpose.msra.mxu0 0.0
        %5252 = vmatprep.subr.mxu0 0.0
        %5253 = vmatpush1.xpose.msra.mxu0 0.0
        %5254 = vmatprep.subr.mxu0 0.0
        %5255 = vmatpush1.xpose.msra.mxu0 0.0
        %5256 = vmatprep.subr.mxu0 0.0
        %5257 = vmatpush1.xpose.msra.mxu0 0.0
        %5258 = vmatprep.subr.mxu0 0.0
        %5259 = vmatpush1.xpose.msra.mxu0 0.0
        %5260 = vmatprep.subr.mxu0 0.0
        %5261 = vmatpush1.xpose.msra.mxu0 0.0
        %5262 = vmatprep.subr.mxu0 0.0
        %5263 = vmatpush1.xpose.msra.mxu0 0.0
        %5264 = vmatprep.subr.mxu0 0.0
        %5265 = vmatpush1.xpose.msra.mxu0 0.0
        %5266 = vmatprep.subr.mxu0 0.0
        %5267 = vmatpush1.xpose.msra.mxu0 0.0
        %5268 = vmatprep.subr.mxu0 0.0
        %5269 = vmatpush1.xpose.msra.mxu0 0.0
        %5270 = vmatprep.subr.mxu0 0.0
        %5271 = vmatpush1.xpose.msra.mxu0 0.0
        %5272 = vmatprep.subr.mxu0 0.0
        %5273 = vmatpush1.xpose.msra.mxu0 0.0
        %5274 = vmatprep.subr.mxu0 0.0
        %5275 = vmatpush1.xpose.msra.mxu0 0.0
        %5276 = vmatprep.subr.mxu0 0.0
        %5277 = vmatpush1.xpose.msra.mxu0 0.0
        %5278 = vmatprep.subr.mxu0 0.0
        %5279 = vmatpush1.xpose.msra.mxu0 0.0
        %5280 = vmatprep.subr.mxu0 0.0
        %5281 = vmatpush1.xpose.msra.mxu0 0.0
        %5282 = vmatprep.subr.mxu0 0.0
        %5283 = vmatpush1.xpose.msra.mxu0 0.0
        %5284 = vmatprep.mubr.f32.mxu0 0.0
        %5285 = vmatmul.mubr.f32.gmra.mrb[0].mxu0 %v5216
        %v5286 = vpop.f32.mrb[0].mxu0
        %v5287 = vadd.f32 0.0, %v5286
        %v5288 = vpop.f32.mrb[0].mxu0
        %5289 = vdwg.mxu0
        %v5290 = vmul.f32 %v5209, 0.125
        %v5291 = vmul.f32 %v5287, 0.125
        %v5292 = vsel %vm3636, %v5290, -1e+09
        %v5293 = vsel %vm3637, %v5291, -1e+09
        %v5294 = vsel %vm3640, %v5292, -inf
        %5295 = vmax.xlane.f32.xlu0 %v5294
        %v5296 = vpop.xlane.xlu0 %5295
        %v5297 = vsel %vm3640, %v5293, -inf
        %5298 = vmax.xlane.f32.xlu0 %v5297
        %v5299 = vpop.xlane.xlu0 %5298
        %v5300 = vsub.f32 %v5292, %v5296
        %v5301 = vsub.f32 %v5293, %v5299
        %v5302 = vmul.f32 %v5300, 1.442695
        %v5303 = vpow.pop %v5302
        %v5304 = vmul.f32 %v5301, 1.442695
        %v5305 = vpow.pop %v5304
        %v5306 = vsel %vm3640, %v5303, 0.0
        %5307 = vadd.xlane.f32.xlu0 %v5306
        %v5308 = vpop.xlane.xlu0 %5307
        %v5309 = vsel %vm3640, %v5305, 0.0
        %5310 = vadd.xlane.f32.xlu0 %v5309
        %v5311 = vpop.xlane.xlu0 %5310
        %v5312 = vrcp.pop %v5308
        %v5313 = vrcp.pop %v5311
        %v5314 = vmul.f32 %v5303, %v5312
        %v5315 = vmul.f32 %v5305, %v5313
        %5317 = vrot.lane.b32.xlu0 %v3461, 64
        %v5318 = vpop.permute.xlu0 %5317
        %v5321 = vsel %vm3640, %v5314, 0
        %5323 = vmatprep.subr.mxu0 0.0
        %5324 = vmatpush1.msra.mxu0 %v5318
        %5325 = vmatprep.subr.mxu0 0.0
        %5326 = vmatpush1.msra.mxu0 0.0
        %5327 = vmatprep.subr.mxu0 0.0
        %5328 = vmatpush1.msra.mxu0 0.0
        %5329 = vmatprep.subr.mxu0 0.0
        %5330 = vmatpush1.msra.mxu0 0.0
        %5331 = vmatprep.subr.mxu0 0.0
        %5332 = vmatpush1.msra.mxu0 0.0
        %5333 = vmatprep.subr.mxu0 0.0
        %5334 = vmatpush1.msra.mxu0 0.0
        %5335 = vmatprep.subr.mxu0 0.0
        %5336 = vmatpush1.msra.mxu0 0.0
        %5337 = vmatprep.subr.mxu0 0.0
        %5338 = vmatpush1.msra.mxu0 0.0
        %5339 = vmatprep.subr.mxu0 0.0
        %5340 = vmatpush1.msra.mxu0 0.0
        %5341 = vmatprep.subr.mxu0 0.0
        %5342 = vmatpush1.msra.mxu0 0.0
        %5343 = vmatprep.subr.mxu0 0.0
        %5344 = vmatpush1.msra.mxu0 0.0
        %5345 = vmatprep.subr.mxu0 0.0
        %5346 = vmatpush1.msra.mxu0 0.0
        %5347 = vmatprep.subr.mxu0 0.0
        %5348 = vmatpush1.msra.mxu0 0.0
        %5349 = vmatprep.subr.mxu0 0.0
        %5350 = vmatpush1.msra.mxu0 0.0
        %5351 = vmatprep.subr.mxu0 0.0
        %5352 = vmatpush1.msra.mxu0 0.0
        %5353 = vmatprep.subr.mxu0 0.0
        %5354 = vmatpush1.msra.mxu0 0.0
        %5355 = vmatprep.subr.mxu0 0.0
        %5356 = vmatpush1.msra.mxu0 0.0
        %5357 = vmatprep.subr.mxu0 0.0
        %5358 = vmatpush1.msra.mxu0 0.0
        %5359 = vmatprep.subr.mxu0 0.0
        %5360 = vmatpush1.msra.mxu0 0.0
        %5361 = vmatprep.subr.mxu0 0.0
        %5362 = vmatpush1.msra.mxu0 0.0
        %5363 = vmatprep.subr.mxu0 0.0
        %5364 = vmatpush1.msra.mxu0 0.0
        %5365 = vmatprep.subr.mxu0 0.0
        %5366 = vmatpush1.msra.mxu0 0.0
        %5367 = vmatprep.subr.mxu0 0.0
        %5368 = vmatpush1.msra.mxu0 0.0
        %5369 = vmatprep.subr.mxu0 0.0
        %5370 = vmatpush1.msra.mxu0 0.0
        %5371 = vmatprep.subr.mxu0 0.0
        %5372 = vmatpush1.msra.mxu0 0.0
        %5373 = vmatprep.subr.mxu0 0.0
        %5374 = vmatpush1.msra.mxu0 0.0
        %5375 = vmatprep.subr.mxu0 0.0
        %5376 = vmatpush1.msra.mxu0 0.0
        %5377 = vmatprep.subr.mxu0 0.0
        %5378 = vmatpush1.msra.mxu0 0.0
        %5379 = vmatprep.subr.mxu0 0.0
        %5380 = vmatpush1.msra.mxu0 0.0
        %5381 = vmatprep.subr.mxu0 0.0
        %5382 = vmatpush1.msra.mxu0 0.0
        %5383 = vmatprep.subr.mxu0 0.0
        %5384 = vmatpush1.msra.mxu0 0.0
        %5385 = vmatprep.subr.mxu0 0.0
        %5386 = vmatpush1.msra.mxu0 0.0
        %5387 = vmatprep.mubr.f32.mxu0 0.0
        %5388 = vmatmul.mubr.f32.gmra.mrb[0].mxu0 %v5321
        %v5389 = vpop.f32.mrb[0].mxu0
        %v5390 = vadd.f32 0.0, %v5389
        %v5391 = vpop.f32.mrb[0].mxu0
        %5392 = vdwg.mxu0
        %5394 = vrot.lane.b32.xlu0 %v3465, 64
        %v5395 = vpop.permute.xlu0 %5394
        %v5398 = vsel %vm3640, %v5315, 0
        %5400 = vmatprep.subr.mxu0 0.0
        %5401 = vmatpush1.msra.mxu0 %v5395
        %5402 = vmatprep.subr.mxu0 0.0
        %5403 = vmatpush1.msra.mxu0 0.0
        %5404 = vmatprep.subr.mxu0 0.0
        %5405 = vmatpush1.msra.mxu0 0.0
        %5406 = vmatprep.subr.mxu0 0.0
        %5407 = vmatpush1.msra.mxu0 0.0
        %5408 = vmatprep.subr.mxu0 0.0
        %5409 = vmatpush1.msra.mxu0 0.0
        %5410 = vmatprep.subr.mxu0 0.0
        %5411 = vmatpush1.msra.mxu0 0.0
        %5412 = vmatprep.subr.mxu0 0.0
        %5413 = vmatpush1.msra.mxu0 0.0
        %5414 = vmatprep.subr.mxu0 0.0
        %5415 = vmatpush1.msra.mxu0 0.0
        %5416 = vmatprep.subr.mxu0 0.0
        %5417 = vmatpush1.msra.mxu0 0.0
        %5418 = vmatprep.subr.mxu0 0.0
        %5419 = vmatpush1.msra.mxu0 0.0
        %5420 = vmatprep.subr.mxu0 0.0
        %5421 = vmatpush1.msra.mxu0 0.0
        %5422 = vmatprep.subr.mxu0 0.0
        %5423 = vmatpush1.msra.mxu0 0.0
        %5424 = vmatprep.subr.mxu0 0.0
        %5425 = vmatpush1.msra.mxu0 0.0
        %5426 = vmatprep.subr.mxu0 0.0
        %5427 = vmatpush1.msra.mxu0 0.0
        %5428 = vmatprep.subr.mxu0 0.0
        %5429 = vmatpush1.msra.mxu0 0.0
        %5430 = vmatprep.subr.mxu0 0.0
        %5431 = vmatpush1.msra.mxu0 0.0
        %5432 = vmatprep.subr.mxu0 0.0
        %5433 = vmatpush1.msra.mxu0 0.0
        %5434 = vmatprep.subr.mxu0 0.0
        %5435 = vmatpush1.msra.mxu0 0.0
        %5436 = vmatprep.subr.mxu0 0.0
        %5437 = vmatpush1.msra.mxu0 0.0
        %5438 = vmatprep.subr.mxu0 0.0
        %5439 = vmatpush1.msra.mxu0 0.0
        %5440 = vmatprep.subr.mxu0 0.0
        %5441 = vmatpush1.msra.mxu0 0.0
        %5442 = vmatprep.subr.mxu0 0.0
        %5443 = vmatpush1.msra.mxu0 0.0
        %5444 = vmatprep.subr.mxu0 0.0
        %5445 = vmatpush1.msra.mxu0 0.0
        %5446 = vmatprep.subr.mxu0 0.0
        %5447 = vmatpush1.msra.mxu0 0.0
        %5448 = vmatprep.subr.mxu0 0.0
        %5449 = vmatpush1.msra.mxu0 0.0
        %5450 = vmatprep.subr.mxu0 0.0
        %5451 = vmatpush1.msra.mxu0 0.0
        %5452 = vmatprep.subr.mxu0 0.0
        %5453 = vmatpush1.msra.mxu0 0.0
        %5454 = vmatprep.subr.mxu0 0.0
        %5455 = vmatpush1.msra.mxu0 0.0
        %5456 = vmatprep.subr.mxu0 0.0
        %5457 = vmatpush1.msra.mxu0 0.0
        %5458 = vmatprep.subr.mxu0 0.0
        %5459 = vmatpush1.msra.mxu0 0.0
        %5460 = vmatprep.subr.mxu0 0.0
        %5461 = vmatpush1.msra.mxu0 0.0
        %5462 = vmatprep.subr.mxu0 0.0
        %5463 = vmatpush1.msra.mxu0 0.0
        %5464 = vmatprep.mubr.f32.mxu0 0.0
        %5465 = vmatmul.mubr.f32.gmra.mrb[0].mxu0 %v5398
        %v5466 = vpop.f32.mrb[0].mxu0
        %v5467 = vadd.f32 0.0, %v5466
        %v5468 = vpop.f32.mrb[0].mxu0
        %5469 = vdwg.mxu0
        %v5470 = vpack.c.bf16 %v5467, %v5390
        %v5472 = vsel %vm3469, %v3119, 0
        %v5475 = vsel %vm3469, %v3291, 0
        %5477 = vmatprep.subr.mxu0 0.0
        %5478 = vmatpush1.xpose.msra.mxu0 %v5475
        %5479 = vmatprep.subr.mxu0 0.0
        %5480 = vmatpush1.xpose.msra.mxu0 0.0
        %5481 = vmatprep.subr.mxu0 0.0
        %5482 = vmatpush1.xpose.msra.mxu0 0.0
        %5483 = vmatprep.subr.mxu0 0.0
        %5484 = vmatpush1.xpose.msra.mxu0 0.0
        %5485 = vmatprep.subr.mxu0 0.0
        %5486 = vmatpush1.xpose.msra.mxu0 0.0
        %5487 = vmatprep.subr.mxu0 0.0
        %5488 = vmatpush1.xpose.msra.mxu0 0.0
        %5489 = vmatprep.subr.mxu0 0.0
        %5490 = vmatpush1.xpose.msra.mxu0 0.0
        %5491 = vmatprep.subr.mxu0 0.0
        %5492 = vmatpush1.xpose.msra.mxu0 0.0
        %5493 = vmatprep.subr.mxu0 0.0
        %5494 = vmatpush1.xpose.msra.mxu0 0.0
        %5495 = vmatprep.subr.mxu0 0.0
        %5496 = vmatpush1.xpose.msra.mxu0 0.0
        %5497 = vmatprep.subr.mxu0 0.0
        %5498 = vmatpush1.xpose.msra.mxu0 0.0
        %5499 = vmatprep.subr.mxu0 0.0
        %5500 = vmatpush1.xpose.msra.mxu0 0.0
        %5501 = vmatprep.subr.mxu0 0.0
        %5502 = vmatpush1.xpose.msra.mxu0 0.0
        %5503 = vmatprep.subr.mxu0 0.0
        %5504 = vmatpush1.xpose.msra.mxu0 0.0
        %5505 = vmatprep.subr.mxu0 0.0
        %5506 = vmatpush1.xpose.msra.mxu0 0.0
        %5507 = vmatprep.subr.mxu0 0.0
        %5508 = vmatpush1.xpose.msra.mxu0 0.0
        %5509 = vmatprep.subr.mxu0 0.0
        %5510 = vmatpush1.xpose.msra.mxu0 0.0
        %5511 = vmatprep.subr.mxu0 0.0
        %5512 = vmatpush1.xpose.msra.mxu0 0.0
        %5513 = vmatprep.subr.mxu0 0.0
        %5514 = vmatpush1.xpose.msra.mxu0 0.0
        %5515 = vmatprep.subr.mxu0 0.0
        %5516 = vmatpush1.xpose.msra.mxu0 0.0
        %5517 = vmatprep.subr.mxu0 0.0
        %5518 = vmatpush1.xpose.msra.mxu0 0.0
        %5519 = vmatprep.subr.mxu0 0.0
        %5520 = vmatpush1.xpose.msra.mxu0 0.0
        %5521 = vmatprep.subr.mxu0 0.0
        %5522 = vmatpush1.xpose.msra.mxu0 0.0
        %5523 = vmatprep.subr.mxu0 0.0
        %5524 = vmatpush1.xpose.msra.mxu0 0.0
        %5525 = vmatprep.subr.mxu0 0.0
        %5526 = vmatpush1.xpose.msra.mxu0 0.0
        %5527 = vmatprep.subr.mxu0 0.0
        %5528 = vmatpush1.xpose.msra.mxu0 0.0
        %5529 = vmatprep.subr.mxu0 0.0
        %5530 = vmatpush1.xpose.msra.mxu0 0.0
        %5531 = vmatprep.subr.mxu0 0.0
        %5532 = vmatpush1.xpose.msra.mxu0 0.0
        %5533 = vmatprep.subr.mxu0 0.0
        %5534 = vmatpush1.xpose.msra.mxu0 0.0
        %5535 = vmatprep.subr.mxu0 0.0
        %5536 = vmatpush1.xpose.msra.mxu0 0.0
        %5537 = vmatprep.subr.mxu0 0.0
        %5538 = vmatpush1.xpose.msra.mxu0 0.0
        %5539 = vmatprep.subr.mxu0 0.0
        %5540 = vmatpush1.xpose.msra.mxu0 0.0
        %5541 = vmatprep.mubr.f32.mxu0 0.0
        %5542 = vmatmul.mubr.f32.gmra.mrb[0].mxu0 %v5472
        %v5543 = vpop.f32.mrb[0].mxu0
        %v5544 = vadd.f32 0.0, %v5543
        %v5545 = vpop.f32.mrb[0].mxu0
        %5546 = vdwg.mxu0
        %v5548 = vsel %vm3469, %v3123, 0
        %v5551 = vsel %vm3469, %v3295, 0
        %5553 = vmatprep.subr.mxu0 0.0
        %5554 = vmatpush1.xpose.msra.mxu0 %v5551
        %5555 = vmatprep.subr.mxu0 0.0
        %5556 = vmatpush1.xpose.msra.mxu0 0.0
        %5557 = vmatprep.subr.mxu0 0.0
        %5558 = vmatpush1.xpose.msra.mxu0 0.0
        %5559 = vmatprep.subr.mxu0 0.0
        %5560 = vmatpush1.xpose.msra.mxu0 0.0
        %5561 = vmatprep.subr.mxu0 0.0
        %5562 = vmatpush1.xpose.msra.mxu0 0.0
        %5563 = vmatprep.subr.mxu0 0.0
        %5564 = vmatpush1.xpose.msra.mxu0 0.0
        %5565 = vmatprep.subr.mxu0 0.0
        %5566 = vmatpush1.xpose.msra.mxu0 0.0
        %5567 = vmatprep.subr.mxu0 0.0
        %5568 = vmatpush1.xpose.msra.mxu0 0.0
        %5569 = vmatprep.subr.mxu0 0.0
        %5570 = vmatpush1.xpose.msra.mxu0 0.0
        %5571 = vmatprep.subr.mxu0 0.0
        %5572 = vmatpush1.xpose.msra.mxu0 0.0
        %5573 = vmatprep.subr.mxu0 0.0
        %5574 = vmatpush1.xpose.msra.mxu0 0.0
        %5575 = vmatprep.subr.mxu0 0.0
        %5576 = vmatpush1.xpose.msra.mxu0 0.0
        %5577 = vmatprep.subr.mxu0 0.0
        %5578 = vmatpush1.xpose.msra.mxu0 0.0
        %5579 = vmatprep.subr.mxu0 0.0
        %5580 = vmatpush1.xpose.msra.mxu0 0.0
        %5581 = vmatprep.subr.mxu0 0.0
        %5582 = vmatpush1.xpose.msra.mxu0 0.0
        %5583 = vmatprep.subr.mxu0 0.0
        %5584 = vmatpush1.xpose.msra.mxu0 0.0
        %5585 = vmatprep.subr.mxu0 0.0
        %5586 = vmatpush1.xpose.msra.mxu0 0.0
        %5587 = vmatprep.subr.mxu0 0.0
        %5588 = vmatpush1.xpose.msra.mxu0 0.0
        %5589 = vmatprep.subr.mxu0 0.0
        %5590 = vmatpush1.xpose.msra.mxu0 0.0
        %5591 = vmatprep.subr.mxu0 0.0
        %5592 = vmatpush1.xpose.msra.mxu0 0.0
        %5593 = vmatprep.subr.mxu0 0.0
        %5594 = vmatpush1.xpose.msra.mxu0 0.0
        %5595 = vmatprep.subr.mxu0 0.0
        %5596 = vmatpush1.xpose.msra.mxu0 0.0
        %5597 = vmatprep.subr.mxu0 0.0
        %5598 = vmatpush1.xpose.msra.mxu0 0.0
        %5599 = vmatprep.subr.mxu0 0.0
        %5600 = vmatpush1.xpose.msra.mxu0 0.0
        %5601 = vmatprep.subr.mxu0 0.0
        %5602 = vmatpush1.xpose.msra.mxu0 0.0
        %5603 = vmatprep.subr.mxu0 0.0
        %5604 = vmatpush1.xpose.msra.mxu0 0.0
        %5605 = vmatprep.subr.mxu0 0.0
        %5606 = vmatpush1.xpose.msra.mxu0 0.0
        %5607 = vmatprep.subr.mxu0 0.0
        %5608 = vmatpush1.xpose.msra.mxu0 0.0
        %5609 = vmatprep.subr.mxu0 0.0
        %5610 = vmatpush1.xpose.msra.mxu0 0.0
        %5611 = vmatprep.subr.mxu0 0.0
        %5612 = vmatpush1.xpose.msra.mxu0 0.0
        %5613 = vmatprep.subr.mxu0 0.0
        %5614 = vmatpush1.xpose.msra.mxu0 0.0
        %5615 = vmatprep.subr.mxu0 0.0
        %5616 = vmatpush1.xpose.msra.mxu0 0.0
        %5617 = vmatprep.mubr.f32.mxu0 0.0
        %5618 = vmatmul.mubr.f32.gmra.mrb[0].mxu0 %v5548
        %v5619 = vpop.f32.mrb[0].mxu0
        %v5620 = vadd.f32 0.0, %v5619
        %v5621 = vpop.f32.mrb[0].mxu0
        %5622 = vdwg.mxu0
        %v5623 = vmul.f32 %v5544, 0.125
        %v5624 = vmul.f32 %v5620, 0.125
        %v5625 = vsel %vm3636, %v5623, -1e+09
        %v5626 = vsel %vm3637, %v5624, -1e+09
        %v5627 = vsel %vm3640, %v5625, -inf
        %5628 = vmax.xlane.f32.xlu0 %v5627
        %v5629 = vpop.xlane.xlu0 %5628
        %v5630 = vsel %vm3640, %v5626, -inf
        %5631 = vmax.xlane.f32.xlu0 %v5630
        %v5632 = vpop.xlane.xlu0 %5631
        %v5633 = vsub.f32 %v5625, %v5629
        %v5634 = vsub.f32 %v5626, %v5632
        %v5635 = vmul.f32 %v5633, 1.442695
        %v5636 = vpow.pop %v5635
        %v5637 = vmul.f32 %v5634, 1.442695
        %v5638 = vpow.pop %v5637
        %v5639 = vsel %vm3640, %v5636, 0.0
        %5640 = vadd.xlane.f32.xlu0 %v5639
        %v5641 = vpop.xlane.xlu0 %5640
        %v5642 = vsel %vm3640, %v5638, 0.0
        %5643 = vadd.xlane.f32.xlu0 %v5642
        %v5644 = vpop.xlane.xlu0 %5643
        %v5645 = vrcp.pop %v5641
        %v5646 = vrcp.pop %v5644
        %v5647 = vmul.f32 %v5636, %v5645
        %v5648 = vmul.f32 %v5638, %v5646
        %v5650 = vsel %vm3640, %v5647, 0
        %5652 = vmatprep.subr.mxu0 0.0
        %5653 = vmatpush1.msra.mxu0 %v3463
        %5654 = vmatprep.subr.mxu0 0.0
        %5655 = vmatpush1.msra.mxu0 0.0
        %5656 = vmatprep.subr.mxu0 0.0
        %5657 = vmatpush1.msra.mxu0 0.0
        %5658 = vmatprep.subr.mxu0 0.0
        %5659 = vmatpush1.msra.mxu0 0.0
        %5660 = vmatprep.subr.mxu0 0.0
        %5661 = vmatpush1.msra.mxu0 0.0
        %5662 = vmatprep.subr.mxu0 0.0
        %5663 = vmatpush1.msra.mxu0 0.0
        %5664 = vmatprep.subr.mxu0 0.0
        %5665 = vmatpush1.msra.mxu0 0.0
        %5666 = vmatprep.subr.mxu0 0.0
        %5667 = vmatpush1.msra.mxu0 0.0
        %5668 = vmatprep.subr.mxu0 0.0
        %5669 = vmatpush1.msra.mxu0 0.0
        %5670 = vmatprep.subr.mxu0 0.0
        %5671 = vmatpush1.msra.mxu0 0.0
        %5672 = vmatprep.subr.mxu0 0.0
        %5673 = vmatpush1.msra.mxu0 0.0
        %5674 = vmatprep.subr.mxu0 0.0
        %5675 = vmatpush1.msra.mxu0 0.0
        %5676 = vmatprep.subr.mxu0 0.0
        %5677 = vmatpush1.msra.mxu0 0.0
        %5678 = vmatprep.subr.mxu0 0.0
        %5679 = vmatpush1.msra.mxu0 0.0
        %5680 = vmatprep.subr.mxu0 0.0
        %5681 = vmatpush1.msra.mxu0 0.0
        %5682 = vmatprep.subr.mxu0 0.0
        %5683 = vmatpush1.msra.mxu0 0.0
        %5684 = vmatprep.subr.mxu0 0.0
        %5685 = vmatpush1.msra.mxu0 0.0
        %5686 = vmatprep.subr.mxu0 0.0
        %5687 = vmatpush1.msra.mxu0 0.0
        %5688 = vmatprep.subr.mxu0 0.0
        %5689 = vmatpush1.msra.mxu0 0.0
        %5690 = vmatprep.subr.mxu0 0.0
        %5691 = vmatpush1.msra.mxu0 0.0
        %5692 = vmatprep.subr.mxu0 0.0
        %5693 = vmatpush1.msra.mxu0 0.0
        %5694 = vmatprep.subr.mxu0 0.0
        %5695 = vmatpush1.msra.mxu0 0.0
        %5696 = vmatprep.subr.mxu0 0.0
        %5697 = vmatpush1.msra.mxu0 0.0
        %5698 = vmatprep.subr.mxu0 0.0
        %5699 = vmatpush1.msra.mxu0 0.0
        %5700 = vmatprep.subr.mxu0 0.0
        %5701 = vmatpush1.msra.mxu0 0.0
        %5702 = vmatprep.subr.mxu0 0.0
        %5703 = vmatpush1.msra.mxu0 0.0
        %5704 = vmatprep.subr.mxu0 0.0
        %5705 = vmatpush1.msra.mxu0 0.0
        %5706 = vmatprep.subr.mxu0 0.0
        %5707 = vmatpush1.msra.mxu0 0.0
        %5708 = vmatprep.subr.mxu0 0.0
        %5709 = vmatpush1.msra.mxu0 0.0
        %5710 = vmatprep.subr.mxu0 0.0
        %5711 = vmatpush1.msra.mxu0 0.0
        %5712 = vmatprep.subr.mxu0 0.0
        %5713 = vmatpush1.msra.mxu0 0.0
        %5714 = vmatprep.subr.mxu0 0.0
        %5715 = vmatpush1.msra.mxu0 0.0
        %5716 = vmatprep.mubr.f32.mxu0 0.0
        %5717 = vmatmul.mubr.f32.gmra.mrb[0].mxu0 %v5650
        %v5718 = vpop.f32.mrb[0].mxu0
        %v5719 = vadd.f32 0.0, %v5718
        %v5720 = vpop.f32.mrb[0].mxu0
        %5721 = vdwg.mxu0
        %v5723 = vsel %vm3640, %v5648, 0
        %5725 = vmatprep.subr.mxu0 0.0
        %5726 = vmatpush1.msra.mxu0 %v3467
        %5727 = vmatprep.subr.mxu0 0.0
        %5728 = vmatpush1.msra.mxu0 0.0
        %5729 = vmatprep.subr.mxu0 0.0
        %5730 = vmatpush1.msra.mxu0 0.0
        %5731 = vmatprep.subr.mxu0 0.0
        %5732 = vmatpush1.msra.mxu0 0.0
        %5733 = vmatprep.subr.mxu0 0.0
        %5734 = vmatpush1.msra.mxu0 0.0
        %5735 = vmatprep.subr.mxu0 0.0
        %5736 = vmatpush1.msra.mxu0 0.0
        %5737 = vmatprep.subr.mxu0 0.0
        %5738 = vmatpush1.msra.mxu0 0.0
        %5739 = vmatprep.subr.mxu0 0.0
        %5740 = vmatpush1.msra.mxu0 0.0
        %5741 = vmatprep.subr.mxu0 0.0
        %5742 = vmatpush1.msra.mxu0 0.0
        %5743 = vmatprep.subr.mxu0 0.0
        %5744 = vmatpush1.msra.mxu0 0.0
        %5745 = vmatprep.subr.mxu0 0.0
        %5746 = vmatpush1.msra.mxu0 0.0
        %5747 = vmatprep.subr.mxu0 0.0
        %5748 = vmatpush1.msra.mxu0 0.0
        %5749 = vmatprep.subr.mxu0 0.0
        %5750 = vmatpush1.msra.mxu0 0.0
        %5751 = vmatprep.subr.mxu0 0.0
        %5752 = vmatpush1.msra.mxu0 0.0
        %5753 = vmatprep.subr.mxu0 0.0
        %5754 = vmatpush1.msra.mxu0 0.0
        %5755 = vmatprep.subr.mxu0 0.0
        %5756 = vmatpush1.msra.mxu0 0.0
        %5757 = vmatprep.subr.mxu0 0.0
        %5758 = vmatpush1.msra.mxu0 0.0
        %5759 = vmatprep.subr.mxu0 0.0
        %5760 = vmatpush1.msra.mxu0 0.0
        %5761 = vmatprep.subr.mxu0 0.0
        %5762 = vmatpush1.msra.mxu0 0.0
        %5763 = vmatprep.subr.mxu0 0.0
        %5764 = vmatpush1.msra.mxu0 0.0
        %5765 = vmatprep.subr.mxu0 0.0
        %5766 = vmatpush1.msra.mxu0 0.0
        %5767 = vmatprep.subr.mxu0 0.0
        %5768 = vmatpush1.msra.mxu0 0.0
        %5769 = vmatprep.subr.mxu0 0.0
        %5770 = vmatpush1.msra.mxu0 0.0
        %5771 = vmatprep.subr.mxu0 0.0
        %5772 = vmatpush1.msra.mxu0 0.0
        %5773 = vmatprep.subr.mxu0 0.0
        %5774 = vmatpush1.msra.mxu0 0.0
        %5775 = vmatprep.subr.mxu0 0.0
        %5776 = vmatpush1.msra.mxu0 0.0
        %5777 = vmatprep.subr.mxu0 0.0
        %5778 = vmatpush1.msra.mxu0 0.0
        %5779 = vmatprep.subr.mxu0 0.0
        %5780 = vmatpush1.msra.mxu0 0.0
        %5781 = vmatprep.subr.mxu0 0.0
        %5782 = vmatpush1.msra.mxu0 0.0
        %5783 = vmatprep.subr.mxu0 0.0
        %5784 = vmatpush1.msra.mxu0 0.0
        %5785 = vmatprep.subr.mxu0 0.0
        %5786 = vmatpush1.msra.mxu0 0.0
        %5787 = vmatprep.subr.mxu0 0.0
        %5788 = vmatpush1.msra.mxu0 0.0
        %5789 = vmatprep.mubr.f32.mxu0 0.0
        %5790 = vmatmul.mubr.f32.gmra.mrb[0].mxu0 %v5723
        %v5791 = vpop.f32.mrb[0].mxu0
        %v5792 = vadd.f32 0.0, %v5791
        %v5793 = vpop.f32.mrb[0].mxu0
        %5794 = vdwg.mxu0
        %v5795 = vpack.c.bf16 %v5792, %v5719
        %5796 = vrot.lane.b32.xlu0 %v3119, 64
        %v5797 = vpop.permute.xlu0 %5796
        %5798 = vrot.lane.b32.xlu0 %v3291, 64
        %v5799 = vpop.permute.xlu0 %5798
        %v5800 = vsel %vm3469, %v5797, 0
        %v5802 = vsel %vm3469, %v5799, 0
        %5804 = vmatprep.subr.mxu0 0.0
        %5805 = vmatpush1.xpose.msra.mxu0 %v5802
        %5806 = vmatprep.subr.mxu0 0.0
        %5807 = vmatpush1.xpose.msra.mxu0 0.0
        %5808 = vmatprep.subr.mxu0 0.0
        %5809 = vmatpush1.xpose.msra.mxu0 0.0
        %5810 = vmatprep.subr.mxu0 0.0
        %5811 = vmatpush1.xpose.msra.mxu0 0.0
        %5812 = vmatprep.subr.mxu0 0.0
        %5813 = vmatpush1.xpose.msra.mxu0 0.0
        %5814 = vmatprep.subr.mxu0 0.0
        %5815 = vmatpush1.xpose.msra.mxu0 0.0
        %5816 = vmatprep.subr.mxu0 0.0
        %5817 = vmatpush1.xpose.msra.mxu0 0.0
        %5818 = vmatprep.subr.mxu0 0.0
        %5819 = vmatpush1.xpose.msra.mxu0 0.0
        %5820 = vmatprep.subr.mxu0 0.0
        %5821 = vmatpush1.xpose.msra.mxu0 0.0
        %5822 = vmatprep.subr.mxu0 0.0
        %5823 = vmatpush1.xpose.msra.mxu0 0.0
        %5824 = vmatprep.subr.mxu0 0.0
        %5825 = vmatpush1.xpose.msra.mxu0 0.0
        %5826 = vmatprep.subr.mxu0 0.0
        %5827 = vmatpush1.xpose.msra.mxu0 0.0
        %5828 = vmatprep.subr.mxu0 0.0
        %5829 = vmatpush1.xpose.msra.mxu0 0.0
        %5830 = vmatprep.subr.mxu0 0.0
        %5831 = vmatpush1.xpose.msra.mxu0 0.0
        %5832 = vmatprep.subr.mxu0 0.0
        %5833 = vmatpush1.xpose.msra.mxu0 0.0
        %5834 = vmatprep.subr.mxu0 0.0
        %5835 = vmatpush1.xpose.msra.mxu0 0.0
        %5836 = vmatprep.subr.mxu0 0.0
        %5837 = vmatpush1.xpose.msra.mxu0 0.0
        %5838 = vmatprep.subr.mxu0 0.0
        %5839 = vmatpush1.xpose.msra.mxu0 0.0
        %5840 = vmatprep.subr.mxu0 0.0
        %5841 = vmatpush1.xpose.msra.mxu0 0.0
        %5842 = vmatprep.subr.mxu0 0.0
        %5843 = vmatpush1.xpose.msra.mxu0 0.0
        %5844 = vmatprep.subr.mxu0 0.0
        %5845 = vmatpush1.xpose.msra.mxu0 0.0
        %5846 = vmatprep.subr.mxu0 0.0
        %5847 = vmatpush1.xpose.msra.mxu0 0.0
        %5848 = vmatprep.subr.mxu0 0.0
        %5849 = vmatpush1.xpose.msra.mxu0 0.0
        %5850 = vmatprep.subr.mxu0 0.0
        %5851 = vmatpush1.xpose.msra.mxu0 0.0
        %5852 = vmatprep.subr.mxu0 0.0
        %5853 = vmatpush1.xpose.msra.mxu0 0.0
        %5854 = vmatprep.subr.mxu0 0.0
        %5855 = vmatpush1.xpose.msra.mxu0 0.0
        %5856 = vmatprep.subr.mxu0 0.0
        %5857 = vmatpush1.xpose.msra.mxu0 0.0
        %5858 = vmatprep.subr.mxu0 0.0
        %5859 = vmatpush1.xpose.msra.mxu0 0.0
        %5860 = vmatprep.subr.mxu0 0.0
        %5861 = vmatpush1.xpose.msra.mxu0 0.0
        %5862 = vmatprep.subr.mxu0 0.0
        %5863 = vmatpush1.xpose.msra.mxu0 0.0
        %5864 = vmatprep.subr.mxu0 0.0
        %5865 = vmatpush1.xpose.msra.mxu0 0.0
        %5866 = vmatprep.subr.mxu0 0.0
        %5867 = vmatpush1.xpose.msra.mxu0 0.0
        %5868 = vmatprep.mubr.f32.mxu0 0.0
        %5869 = vmatmul.mubr.f32.gmra.mrb[0].mxu0 %v5800
        %v5870 = vpop.f32.mrb[0].mxu0
        %v5871 = vadd.f32 0.0, %v5870
        %v5872 = vpop.f32.mrb[0].mxu0
        %5873 = vdwg.mxu0
        %5874 = vrot.lane.b32.xlu0 %v3123, 64
        %v5875 = vpop.permute.xlu0 %5874
        %5876 = vrot.lane.b32.xlu0 %v3295, 64
        %v5877 = vpop.permute.xlu0 %5876
        %v5878 = vsel %vm3469, %v5875, 0
        %v5880 = vsel %vm3469, %v5877, 0
        %5882 = vmatprep.subr.mxu0 0.0
        %5883 = vmatpush1.xpose.msra.mxu0 %v5880
        %5884 = vmatprep.subr.mxu0 0.0
        %5885 = vmatpush1.xpose.msra.mxu0 0.0
        %5886 = vmatprep.subr.mxu0 0.0
        %5887 = vmatpush1.xpose.msra.mxu0 0.0
        %5888 = vmatprep.subr.mxu0 0.0
        %5889 = vmatpush1.xpose.msra.mxu0 0.0
        %5890 = vmatprep.subr.mxu0 0.0
        %5891 = vmatpush1.xpose.msra.mxu0 0.0
        %5892 = vmatprep.subr.mxu0 0.0
        %5893 = vmatpush1.xpose.msra.mxu0 0.0
        %5894 = vmatprep.subr.mxu0 0.0
        %5895 = vmatpush1.xpose.msra.mxu0 0.0
        %5896 = vmatprep.subr.mxu0 0.0
        %5897 = vmatpush1.xpose.msra.mxu0 0.0
        %5898 = vmatprep.subr.mxu0 0.0
        %5899 = vmatpush1.xpose.msra.mxu0 0.0
        %5900 = vmatprep.subr.mxu0 0.0
        %5901 = vmatpush1.xpose.msra.mxu0 0.0
        %5902 = vmatprep.subr.mxu0 0.0
        %5903 = vmatpush1.xpose.msra.mxu0 0.0
        %5904 = vmatprep.subr.mxu0 0.0
        %5905 = vmatpush1.xpose.msra.mxu0 0.0
        %5906 = vmatprep.subr.mxu0 0.0
        %5907 = vmatpush1.xpose.msra.mxu0 0.0
        %5908 = vmatprep.subr.mxu0 0.0
        %5909 = vmatpush1.xpose.msra.mxu0 0.0
        %5910 = vmatprep.subr.mxu0 0.0
        %5911 = vmatpush1.xpose.msra.mxu0 0.0
        %5912 = vmatprep.subr.mxu0 0.0
        %5913 = vmatpush1.xpose.msra.mxu0 0.0
        %5914 = vmatprep.subr.mxu0 0.0
        %5915 = vmatpush1.xpose.msra.mxu0 0.0
        %5916 = vmatprep.subr.mxu0 0.0
        %5917 = vmatpush1.xpose.msra.mxu0 0.0
        %5918 = vmatprep.subr.mxu0 0.0
        %5919 = vmatpush1.xpose.msra.mxu0 0.0
        %5920 = vmatprep.subr.mxu0 0.0
        %5921 = vmatpush1.xpose.msra.mxu0 0.0
        %5922 = vmatprep.subr.mxu0 0.0
        %5923 = vmatpush1.xpose.msra.mxu0 0.0
        %5924 = vmatprep.subr.mxu0 0.0
        %5925 = vmatpush1.xpose.msra.mxu0 0.0
        %5926 = vmatprep.subr.mxu0 0.0
        %5927 = vmatpush1.xpose.msra.mxu0 0.0
        %5928 = vmatprep.subr.mxu0 0.0
        %5929 = vmatpush1.xpose.msra.mxu0 0.0
        %5930 = vmatprep.subr.mxu0 0.0
        %5931 = vmatpush1.xpose.msra.mxu0 0.0
        %5932 = vmatprep.subr.mxu0 0.0
        %5933 = vmatpush1.xpose.msra.mxu0 0.0
        %5934 = vmatprep.subr.mxu0 0.0
        %5935 = vmatpush1.xpose.msra.mxu0 0.0
        %5936 = vmatprep.subr.mxu0 0.0
        %5937 = vmatpush1.xpose.msra.mxu0 0.0
        %5938 = vmatprep.subr.mxu0 0.0
        %5939 = vmatpush1.xpose.msra.mxu0 0.0
        %5940 = vmatprep.subr.mxu0 0.0
        %5941 = vmatpush1.xpose.msra.mxu0 0.0
        %5942 = vmatprep.subr.mxu0 0.0
        %5943 = vmatpush1.xpose.msra.mxu0 0.0
        %5944 = vmatprep.subr.mxu0 0.0
        %5945 = vmatpush1.xpose.msra.mxu0 0.0
        %5946 = vmatprep.mubr.f32.mxu0 0.0
        %5947 = vmatmul.mubr.f32.gmra.mrb[0].mxu0 %v5878
        %v5948 = vpop.f32.mrb[0].mxu0
        %v5949 = vadd.f32 0.0, %v5948
        %v5950 = vpop.f32.mrb[0].mxu0
        %5951 = vdwg.mxu0
        %v5952 = vmul.f32 %v5871, 0.125
        %v5953 = vmul.f32 %v5949, 0.125
        %v5954 = vsel %vm3636, %v5952, -1e+09
        %v5955 = vsel %vm3637, %v5953, -1e+09
        %v5956 = vsel %vm3640, %v5954, -inf
        %5957 = vmax.xlane.f32.xlu0 %v5956
        %v5958 = vpop.xlane.xlu0 %5957
        %v5959 = vsel %vm3640, %v5955, -inf
        %5960 = vmax.xlane.f32.xlu0 %v5959
        %v5961 = vpop.xlane.xlu0 %5960
        %v5962 = vsub.f32 %v5954, %v5958
        %v5963 = vsub.f32 %v5955, %v5961
        %v5964 = vmul.f32 %v5962, 1.442695
        %v5965 = vpow.pop %v5964
        %v5966 = vmul.f32 %v5963, 1.442695
        %v5967 = vpow.pop %v5966
        %v5968 = vsel %vm3640, %v5965, 0.0
        %5969 = vadd.xlane.f32.xlu0 %v5968
        %v5970 = vpop.xlane.xlu0 %5969
        %v5971 = vsel %vm3640, %v5967, 0.0
        %5972 = vadd.xlane.f32.xlu0 %v5971
        %v5973 = vpop.xlane.xlu0 %5972
        %v5974 = vrcp.pop %v5970
        %v5975 = vrcp.pop %v5973
        %v5976 = vmul.f32 %v5965, %v5974
        %v5977 = vmul.f32 %v5967, %v5975
        %5979 = vrot.lane.b32.xlu0 %v3463, 64
        %v5980 = vpop.permute.xlu0 %5979
        %v5983 = vsel %vm3640, %v5976, 0
        %5985 = vmatprep.subr.mxu0 0.0
        %5986 = vmatpush1.msra.mxu0 %v5980
        %5987 = vmatprep.subr.mxu0 0.0
        %5988 = vmatpush1.msra.mxu0 0.0
        %5989 = vmatprep.subr.mxu0 0.0
        %5990 = vmatpush1.msra.mxu0 0.0
        %5991 = vmatprep.subr.mxu0 0.0
        %5992 = vmatpush1.msra.mxu0 0.0
        %5993 = vmatprep.subr.mxu0 0.0
        %5994 = vmatpush1.msra.mxu0 0.0
        %5995 = vmatprep.subr.mxu0 0.0
        %5996 = vmatpush1.msra.mxu0 0.0
        %5997 = vmatprep.subr.mxu0 0.0
        %5998 = vmatpush1.msra.mxu0 0.0
        %5999 = vmatprep.subr.mxu0 0.0
        %6000 = vmatpush1.msra.mxu0 0.0
        %6001 = vmatprep.subr.mxu0 0.0
        %6002 = vmatpush1.msra.mxu0 0.0
        %6003 = vmatprep.subr.mxu0 0.0
        %6004 = vmatpush1.msra.mxu0 0.0
        %6005 = vmatprep.subr.mxu0 0.0
        %6006 = vmatpush1.msra.mxu0 0.0
        %6007 = vmatprep.subr.mxu0 0.0
        %6008 = vmatpush1.msra.mxu0 0.0
        %6009 = vmatprep.subr.mxu0 0.0
        %6010 = vmatpush1.msra.mxu0 0.0
        %6011 = vmatprep.subr.mxu0 0.0
        %6012 = vmatpush1.msra.mxu0 0.0
        %6013 = vmatprep.subr.mxu0 0.0
        %6014 = vmatpush1.msra.mxu0 0.0
        %6015 = vmatprep.subr.mxu0 0.0
        %6016 = vmatpush1.msra.mxu0 0.0
        %6017 = vmatprep.subr.mxu0 0.0
        %6018 = vmatpush1.msra.mxu0 0.0
        %6019 = vmatprep.subr.mxu0 0.0
        %6020 = vmatpush1.msra.mxu0 0.0
        %6021 = vmatprep.subr.mxu0 0.0
        %6022 = vmatpush1.msra.mxu0 0.0
        %6023 = vmatprep.subr.mxu0 0.0
        %6024 = vmatpush1.msra.mxu0 0.0
        %6025 = vmatprep.subr.mxu0 0.0
        %6026 = vmatpush1.msra.mxu0 0.0
        %6027 = vmatprep.subr.mxu0 0.0
        %6028 = vmatpush1.msra.mxu0 0.0
        %6029 = vmatprep.subr.mxu0 0.0
        %6030 = vmatpush1.msra.mxu0 0.0
        %6031 = vmatprep.subr.mxu0 0.0
        %6032 = vmatpush1.msra.mxu0 0.0
        %6033 = vmatprep.subr.mxu0 0.0
        %6034 = vmatpush1.msra.mxu0 0.0
        %6035 = vmatprep.subr.mxu0 0.0
        %6036 = vmatpush1.msra.mxu0 0.0
        %6037 = vmatprep.subr.mxu0 0.0
        %6038 = vmatpush1.msra.mxu0 0.0
        %6039 = vmatprep.subr.mxu0 0.0
        %6040 = vmatpush1.msra.mxu0 0.0
        %6041 = vmatprep.subr.mxu0 0.0
        %6042 = vmatpush1.msra.mxu0 0.0
        %6043 = vmatprep.subr.mxu0 0.0
        %6044 = vmatpush1.msra.mxu0 0.0
        %6045 = vmatprep.subr.mxu0 0.0
        %6046 = vmatpush1.msra.mxu0 0.0
        %6047 = vmatprep.subr.mxu0 0.0
        %6048 = vmatpush1.msra.mxu0 0.0
        %6049 = vmatprep.mubr.f32.mxu0 0.0
        %6050 = vmatmul.mubr.f32.gmra.mrb[0].mxu0 %v5983
        %v6051 = vpop.f32.mrb[0].mxu0
        %v6052 = vadd.f32 0.0, %v6051
        %v6053 = vpop.f32.mrb[0].mxu0
        %6054 = vdwg.mxu0
        %6056 = vrot.lane.b32.xlu0 %v3467, 64
        %v6057 = vpop.permute.xlu0 %6056
        %v6060 = vsel %vm3640, %v5977, 0
        %6062 = vmatprep.subr.mxu0 0.0
        %6063 = vmatpush1.msra.mxu0 %v6057
        %6064 = vmatprep.subr.mxu0 0.0
        %6065 = vmatpush1.msra.mxu0 0.0
        %6066 = vmatprep.subr.mxu0 0.0
        %6067 = vmatpush1.msra.mxu0 0.0
        %6068 = vmatprep.subr.mxu0 0.0
        %6069 = vmatpush1.msra.mxu0 0.0
        %6070 = vmatprep.subr.mxu0 0.0
        %6071 = vmatpush1.msra.mxu0 0.0
        %6072 = vmatprep.subr.mxu0 0.0
        %6073 = vmatpush1.msra.mxu0 0.0
        %6074 = vmatprep.subr.mxu0 0.0
        %6075 = vmatpush1.msra.mxu0 0.0
        %6076 = vmatprep.subr.mxu0 0.0
        %6077 = vmatpush1.msra.mxu0 0.0
        %6078 = vmatprep.subr.mxu0 0.0
        %6079 = vmatpush1.msra.mxu0 0.0
        %6080 = vmatprep.subr.mxu0 0.0
        %6081 = vmatpush1.msra.mxu0 0.0
        %6082 = vmatprep.subr.mxu0 0.0
        %6083 = vmatpush1.msra.mxu0 0.0
        %6084 = vmatprep.subr.mxu0 0.0
        %6085 = vmatpush1.msra.mxu0 0.0
        %6086 = vmatprep.subr.mxu0 0.0
        %6087 = vmatpush1.msra.mxu0 0.0
        %6088 = vmatprep.subr.mxu0 0.0
        %6089 = vmatpush1.msra.mxu0 0.0
        %6090 = vmatprep.subr.mxu0 0.0
        %6091 = vmatpush1.msra.mxu0 0.0
        %6092 = vmatprep.subr.mxu0 0.0
        %6093 = vmatpush1.msra.mxu0 0.0
        %6094 = vmatprep.subr.mxu0 0.0
        %6095 = vmatpush1.msra.mxu0 0.0
        %6096 = vmatprep.subr.mxu0 0.0
        %6097 = vmatpush1.msra.mxu0 0.0
        %6098 = vmatprep.subr.mxu0 0.0
        %6099 = vmatpush1.msra.mxu0 0.0
        %6100 = vmatprep.subr.mxu0 0.0
        %6101 = vmatpush1.msra.mxu0 0.0
        %6102 = vmatprep.subr.mxu0 0.0
        %6103 = vmatpush1.msra.mxu0 0.0
        %6104 = vmatprep.subr.mxu0 0.0
        %6105 = vmatpush1.msra.mxu0 0.0
        %6106 = vmatprep.subr.mxu0 0.0
        %6107 = vmatpush1.msra.mxu0 0.0
        %6108 = vmatprep.subr.mxu0 0.0
        %6109 = vmatpush1.msra.mxu0 0.0
        %6110 = vmatprep.subr.mxu0 0.0
        %6111 = vmatpush1.msra.mxu0 0.0
        %6112 = vmatprep.subr.mxu0 0.0
        %6113 = vmatpush1.msra.mxu0 0.0
        %6114 = vmatprep.subr.mxu0 0.0
        %6115 = vmatpush1.msra.mxu0 0.0
        %6116 = vmatprep.subr.mxu0 0.0
        %6117 = vmatpush1.msra.mxu0 0.0
        %6118 = vmatprep.subr.mxu0 0.0
        %6119 = vmatpush1.msra.mxu0 0.0
        %6120 = vmatprep.subr.mxu0 0.0
        %6121 = vmatpush1.msra.mxu0 0.0
        %6122 = vmatprep.subr.mxu0 0.0
        %6123 = vmatpush1.msra.mxu0 0.0
        %6124 = vmatprep.subr.mxu0 0.0
        %6125 = vmatpush1.msra.mxu0 0.0
        %6126 = vmatprep.mubr.f32.mxu0 0.0
        %6127 = vmatmul.mubr.f32.gmra.mrb[0].mxu0 %v6060
        %v6128 = vpop.f32.mrb[0].mxu0
        %v6129 = vadd.f32 0.0, %v6128
        %v6130 = vpop.f32.mrb[0].mxu0
        %6131 = vdwg.mxu0
        %v6132 = vpack.c.bf16 %v6129, %v6052
        %6134 = vrot.lane.b32.xlu0 %v4146, 64
        %v6135 = vpop.permute.xlu0 %6134
        %6137 = vrot.lane.b32.xlu0 %v4808, 64
        %v6138 = vpop.permute.xlu0 %6137
        %6140 = vrot.lane.b32.xlu0 %v5470, 64
        %v6141 = vpop.permute.xlu0 %6140
        %6143 = vrot.lane.b32.xlu0 %v6132, 64
        %v6144 = vpop.permute.xlu0 %6143
        %v6147 = vsel %vm3469, %v3809, %v6135
        %v6151 = vsel %vm3469, %v4471, %v6138
        %v6155 = vsel %vm3469, %v5133, %v6141
        %v6159 = vsel %vm3469, %v5795, %v6144
        %v6161 = vld [vmem:[%s975] sm:$0xff]
        %v6162 = vld [vmem:[%s975 + $0x8] sm:$0xf]
        %v6163 = vld [vmem:[%s975 + $0xc] sm:$0xff]
        %v6164 = vld [vmem:[%s975 + $0x14] sm:$0xf]
        %v6165 = vld [vmem:[%s975 + $0x18] sm:$0xff]
        %v6166 = vld [vmem:[%s975 + $0x20] sm:$0xf]
        %v6167 = vld [vmem:[%s975 + $0x24] sm:$0xff]
        %v6168 = vld [vmem:[%s975 + $0x2c] sm:$0xf]
        %v6169 = vld [vmem:[%s975 + $0x30] sm:$0xff]
        %v6170 = vld [vmem:[%s975 + $0x38] sm:$0xf]
        %v6171 = vld [vmem:[%s975 + $0x3c] sm:$0xff]
        %v6172 = vld [vmem:[%s975 + $0x44] sm:$0xf]
        %v6173 = vld [vmem:[%s975 + $0x48] sm:$0xff]
        %v6174 = vld [vmem:[%s975 + $0x50] sm:$0xf]
        %v6175 = vld [vmem:[%s975 + $0x54] sm:$0xff]
        %v6176 = vld [vmem:[%s975 + $0x5c] sm:$0xf]
        %v6177 = vld [vmem:[%s975 + $0x60] sm:$0xff]
        %v6178 = vld [vmem:[%s975 + $0x68] sm:$0xf]
        %v6179 = vld [vmem:[%s975 + $0x6c] sm:$0xff]
        %v6180 = vld [vmem:[%s975 + $0x74] sm:$0xf]
        %v6181 = vld [vmem:[%s975 + $0x78] sm:$0xff]
        %v6182 = vld [vmem:[%s975 + $0x80] sm:$0xf]
        %v6183 = vld [vmem:[%s975 + $0x84] sm:$0xff]
        %v6184 = vld [vmem:[%s975 + $0x8c] sm:$0xf]
        %v6185 = vld [vmem:[%s975 + $0x90] sm:$0xff]
        %v6186 = vld [vmem:[%s975 + $0x98] sm:$0xf]
        %v6187 = vld [vmem:[%s975 + $0x9c] sm:$0xff]
        %v6188 = vld [vmem:[%s975 + $0xa4] sm:$0xf]
        %v6189 = vld [vmem:[%s975 + $0xa8] sm:$0xff]
        %v6190 = vld [vmem:[%s975 + $0xb0] sm:$0xf]
        %v6191 = vld [vmem:[%s975 + $0xb4] sm:$0xff]
        %v6192 = vld [vmem:[%s975 + $0xbc] sm:$0xf]
        %v6193 = vld [vmem:[%s975 + $0xc0] sm:$0xff]
        %v6194 = vld [vmem:[%s975 + $0xc8] sm:$0xf]
        %v6195 = vld [vmem:[%s975 + $0xcc] sm:$0xff]
        %v6196 = vld [vmem:[%s975 + $0xd4] sm:$0xf]
        %v6197 = vld [vmem:[%s975 + $0xd8] sm:$0xff]
        %v6198 = vld [vmem:[%s975 + $0xe0] sm:$0xf]
        %v6199 = vld [vmem:[%s975 + $0xe4] sm:$0xff]
        %v6200 = vld [vmem:[%s975 + $0xec] sm:$0xf]
        %v6201 = vld [vmem:[%s975 + $0xf0] sm:$0xff]
        %v6202 = vld [vmem:[%s975 + $0xf8] sm:$0xf]
        %v6203 = vld [vmem:[%s975 + $0xfc] sm:$0xff]
        %v6204 = vld [vmem:[%s975 + $0x104] sm:$0xf]
        %v6205 = vld [vmem:[%s975 + $0x108] sm:$0xff]
        %v6206 = vld [vmem:[%s975 + $0x110] sm:$0xf]
        %v6207 = vld [vmem:[%s975 + $0x114] sm:$0xff]
        %v6208 = vld [vmem:[%s975 + $0x11c] sm:$0xf]
        %v6209 = vld [vmem:[%s975 + $0x120] sm:$0xff]
        %v6210 = vld [vmem:[%s975 + $0x128] sm:$0xf]
        %v6211 = vld [vmem:[%s975 + $0x12c] sm:$0xff]
        %v6212 = vld [vmem:[%s975 + $0x134] sm:$0xf]
        %v6213 = vld [vmem:[%s975 + $0x138] sm:$0xff]
        %v6214 = vld [vmem:[%s975 + $0x140] sm:$0xf]
        %v6215 = vld [vmem:[%s975 + $0x144] sm:$0xff]
        %v6216 = vld [vmem:[%s975 + $0x14c] sm:$0xf]
        %v6217 = vld [vmem:[%s975 + $0x150] sm:$0xff]
        %v6218 = vld [vmem:[%s975 + $0x158] sm:$0xf]
        %v6219 = vld [vmem:[%s975 + $0x15c] sm:$0xff]
        %v6220 = vld [vmem:[%s975 + $0x164] sm:$0xf]
        %v6221 = vld [vmem:[%s975 + $0x168] sm:$0xff]
        %v6222 = vld [vmem:[%s975 + $0x170] sm:$0xf]
        %v6223 = vld [vmem:[%s975 + $0x174] sm:$0xff]
        %v6224 = vld [vmem:[%s975 + $0x17c] sm:$0xf]
        %v6225 = vld [vmem:[%s975 + $0x180] sm:$0xff]
        %v6226 = vld [vmem:[%s975 + $0x188] sm:$0xf]
        %v6227 = vld [vmem:[%s975 + $0x18c] sm:$0xff]
        %v6228 = vld [vmem:[%s975 + $0x194] sm:$0xf]
        %v6229 = vld [vmem:[%s975 + $0x198] sm:$0xff]
        %v6230 = vld [vmem:[%s975 + $0x1a0] sm:$0xf]
        %v6231 = vld [vmem:[%s975 + $0x1a4] sm:$0xff]
        %v6232 = vld [vmem:[%s975 + $0x1ac] sm:$0xf]
        %v6233 = vld [vmem:[%s975 + $0x1b0] sm:$0xff]
        %v6234 = vld [vmem:[%s975 + $0x1b8] sm:$0xf]
        %v6235 = vld [vmem:[%s975 + $0x1bc] sm:$0xff]
        %v6236 = vld [vmem:[%s975 + $0x1c4] sm:$0xf]
        %v6237 = vld [vmem:[%s975 + $0x1c8] sm:$0xff]
        %v6238 = vld [vmem:[%s975 + $0x1d0] sm:$0xf]
        %v6239 = vld [vmem:[%s975 + $0x1d4] sm:$0xff]
        %v6240 = vld [vmem:[%s975 + $0x1dc] sm:$0xf]
        %v6241 = vld [vmem:[%s975 + $0x1e0] sm:$0xff]
        %v6242 = vld [vmem:[%s975 + $0x1e8] sm:$0xf]
        %v6243 = vld [vmem:[%s975 + $0x1ec] sm:$0xff]
        %v6244 = vld [vmem:[%s975 + $0x1f4] sm:$0xf]
        %v6245 = vld [vmem:[%s975 + $0x1f8] sm:$0xff]
        %v6246 = vld [vmem:[%s975 + $0x200] sm:$0xf]
        %v6247 = vld [vmem:[%s975 + $0x204] sm:$0xff]
        %v6248 = vld [vmem:[%s975 + $0x20c] sm:$0xf]
        %v6249 = vld [vmem:[%s975 + $0x210] sm:$0xff]
        %v6250 = vld [vmem:[%s975 + $0x218] sm:$0xf]
        %v6251 = vld [vmem:[%s975 + $0x21c] sm:$0xff]
        %v6252 = vld [vmem:[%s975 + $0x224] sm:$0xf]
        %v6253 = vld [vmem:[%s975 + $0x228] sm:$0xff]
        %v6254 = vld [vmem:[%s975 + $0x230] sm:$0xf]
        %v6255 = vld [vmem:[%s975 + $0x234] sm:$0xff]
        %v6256 = vld [vmem:[%s975 + $0x23c] sm:$0xf]
        %v6257 = vld [vmem:[%s975 + $0x240] sm:$0xff]
        %v6258 = vld [vmem:[%s975 + $0x248] sm:$0xf]
        %v6259 = vld [vmem:[%s975 + $0x24c] sm:$0xff]
        %v6260 = vld [vmem:[%s975 + $0x254] sm:$0xf]
        %v6261 = vld [vmem:[%s975 + $0x258] sm:$0xff]
        %v6262 = vld [vmem:[%s975 + $0x260] sm:$0xf]
        %v6263 = vld [vmem:[%s975 + $0x264] sm:$0xff]
        %v6264 = vld [vmem:[%s975 + $0x26c] sm:$0xf]
        %v6265 = vld [vmem:[%s975 + $0x270] sm:$0xff]
        %v6266 = vld [vmem:[%s975 + $0x278] sm:$0xf]
        %v6267 = vld [vmem:[%s975 + $0x27c] sm:$0xff]
        %v6268 = vld [vmem:[%s975 + $0x284] sm:$0xf]
        %v6269 = vld [vmem:[%s975 + $0x288] sm:$0xff]
        %v6270 = vld [vmem:[%s975 + $0x290] sm:$0xf]
        %v6271 = vld [vmem:[%s975 + $0x294] sm:$0xff]
        %v6272 = vld [vmem:[%s975 + $0x29c] sm:$0xf]
        %v6273 = vld [vmem:[%s975 + $0x2a0] sm:$0xff]
        %v6274 = vld [vmem:[%s975 + $0x2a8] sm:$0xf]
        %v6275 = vld [vmem:[%s975 + $0x2ac] sm:$0xff]
        %v6276 = vld [vmem:[%s975 + $0x2b4] sm:$0xf]
        %v6277 = vld [vmem:[%s975 + $0x2b8] sm:$0xff]
        %v6278 = vld [vmem:[%s975 + $0x2c0] sm:$0xf]
        %v6279 = vld [vmem:[%s975 + $0x2c4] sm:$0xff]
        %v6280 = vld [vmem:[%s975 + $0x2cc] sm:$0xf]
        %v6281 = vld [vmem:[%s975 + $0x2d0] sm:$0xff]
        %v6282 = vld [vmem:[%s975 + $0x2d8] sm:$0xf]
        %v6283 = vld [vmem:[%s975 + $0x2dc] sm:$0xff]
        %v6284 = vld [vmem:[%s975 + $0x2e4] sm:$0xf]
        %v6285 = vld [vmem:[%s975 + $0x2e8] sm:$0xff]
        %v6286 = vld [vmem:[%s975 + $0x2f0] sm:$0xf]
        %v6287 = vld [vmem:[%s975 + $0x2f4] sm:$0xff]
        %v6288 = vld [vmem:[%s975 + $0x2fc] sm:$0xf]
        %v6417 = vunpack.c.l.b16 %v6161
        %v6418 = vunpack.c.h.b16 %v6161
        %v6419 = vunpack.c.l.b16 %v6162
        %v6420 = vunpack.c.l.b16 %v6163
        %v6421 = vunpack.c.h.b16 %v6163
        %v6422 = vunpack.c.l.b16 %v6164
        %v6423 = vunpack.c.l.b16 %v6165
        %v6424 = vunpack.c.h.b16 %v6165
        %v6425 = vunpack.c.l.b16 %v6166
        %v6426 = vunpack.c.l.b16 %v6167
        %v6427 = vunpack.c.h.b16 %v6167
        %v6428 = vunpack.c.l.b16 %v6168
        %v6429 = vunpack.c.l.b16 %v6169
        %v6430 = vunpack.c.h.b16 %v6169
        %v6431 = vunpack.c.l.b16 %v6170
        %v6432 = vunpack.c.l.b16 %v6171
        %v6433 = vunpack.c.h.b16 %v6171
        %v6434 = vunpack.c.l.b16 %v6172
        %v6435 = vunpack.c.l.b16 %v6173
        %v6436 = vunpack.c.h.b16 %v6173
        %v6437 = vunpack.c.l.b16 %v6174
        %v6438 = vunpack.c.l.b16 %v6175
        %v6439 = vunpack.c.h.b16 %v6175
        %v6440 = vunpack.c.l.b16 %v6176
        %v6441 = vunpack.c.l.b16 %v6177
        %v6442 = vunpack.c.h.b16 %v6177
        %v6443 = vunpack.c.l.b16 %v6178
        %v6444 = vunpack.c.l.b16 %v6179
        %v6445 = vunpack.c.h.b16 %v6179
        %v6446 = vunpack.c.l.b16 %v6180
        %v6447 = vunpack.c.l.b16 %v6181
        %v6448 = vunpack.c.h.b16 %v6181
        %v6449 = vunpack.c.l.b16 %v6182
        %v6450 = vunpack.c.l.b16 %v6183
        %v6451 = vunpack.c.h.b16 %v6183
        %v6452 = vunpack.c.l.b16 %v6184
        %v6453 = vunpack.c.l.b16 %v6185
        %v6454 = vunpack.c.h.b16 %v6185
        %v6455 = vunpack.c.l.b16 %v6186
        %v6456 = vunpack.c.l.b16 %v6187
        %v6457 = vunpack.c.h.b16 %v6187
        %v6458 = vunpack.c.l.b16 %v6188
        %v6459 = vunpack.c.l.b16 %v6189
        %v6460 = vunpack.c.h.b16 %v6189
        %v6461 = vunpack.c.l.b16 %v6190
        %v6462 = vunpack.c.l.b16 %v6191
        %v6463 = vunpack.c.h.b16 %v6191
        %v6464 = vunpack.c.l.b16 %v6192
        %v6465 = vunpack.c.l.b16 %v6193
        %v6466 = vunpack.c.h.b16 %v6193
        %v6467 = vunpack.c.l.b16 %v6194
        %v6468 = vunpack.c.l.b16 %v6195
        %v6469 = vunpack.c.h.b16 %v6195
        %v6470 = vunpack.c.l.b16 %v6196
        %v6471 = vunpack.c.l.b16 %v6197
        %v6472 = vunpack.c.h.b16 %v6197
        %v6473 = vunpack.c.l.b16 %v6198
        %v6474 = vunpack.c.l.b16 %v6199
        %v6475 = vunpack.c.h.b16 %v6199
        %v6476 = vunpack.c.l.b16 %v6200
        %v6477 = vunpack.c.l.b16 %v6201
        %v6478 = vunpack.c.h.b16 %v6201
        %v6479 = vunpack.c.l.b16 %v6202
        %v6480 = vunpack.c.l.b16 %v6203
        %v6481 = vunpack.c.h.b16 %v6203
        %v6482 = vunpack.c.l.b16 %v6204
        %v6483 = vunpack.c.l.b16 %v6205
        %v6484 = vunpack.c.h.b16 %v6205
        %v6485 = vunpack.c.l.b16 %v6206
        %v6486 = vunpack.c.l.b16 %v6207
        %v6487 = vunpack.c.h.b16 %v6207
        %v6488 = vunpack.c.l.b16 %v6208
        %v6489 = vunpack.c.l.b16 %v6209
        %v6490 = vunpack.c.h.b16 %v6209
        %v6491 = vunpack.c.l.b16 %v6210
        %v6492 = vunpack.c.l.b16 %v6211
        %v6493 = vunpack.c.h.b16 %v6211
        %v6494 = vunpack.c.l.b16 %v6212
        %v6495 = vunpack.c.l.b16 %v6213
        %v6496 = vunpack.c.h.b16 %v6213
        %v6497 = vunpack.c.l.b16 %v6214
        %v6498 = vunpack.c.l.b16 %v6215
        %v6499 = vunpack.c.h.b16 %v6215
        %v6500 = vunpack.c.l.b16 %v6216
        %v6501 = vunpack.c.l.b16 %v6217
        %v6502 = vunpack.c.h.b16 %v6217
        %v6503 = vunpack.c.l.b16 %v6218
        %v6504 = vunpack.c.l.b16 %v6219
        %v6505 = vunpack.c.h.b16 %v6219
        %v6506 = vunpack.c.l.b16 %v6220
        %v6507 = vunpack.c.l.b16 %v6221
        %v6508 = vunpack.c.h.b16 %v6221
        %v6509 = vunpack.c.l.b16 %v6222
        %v6510 = vunpack.c.l.b16 %v6223
        %v6511 = vunpack.c.h.b16 %v6223
        %v6512 = vunpack.c.l.b16 %v6224
        %v6513 = vunpack.c.l.b16 %v6225
        %v6514 = vunpack.c.h.b16 %v6225
        %v6515 = vunpack.c.l.b16 %v6226
        %v6516 = vunpack.c.l.b16 %v6227
        %v6517 = vunpack.c.h.b16 %v6227
        %v6518 = vunpack.c.l.b16 %v6228
        %v6519 = vunpack.c.l.b16 %v6229
        %v6520 = vunpack.c.h.b16 %v6229
        %v6521 = vunpack.c.l.b16 %v6230
        %v6522 = vunpack.c.l.b16 %v6231
        %v6523 = vunpack.c.h.b16 %v6231
        %v6524 = vunpack.c.l.b16 %v6232
        %v6525 = vunpack.c.l.b16 %v6233
        %v6526 = vunpack.c.h.b16 %v6233
        %v6527 = vunpack.c.l.b16 %v6234
        %v6528 = vunpack.c.l.b16 %v6235
        %v6529 = vunpack.c.h.b16 %v6235
        %v6530 = vunpack.c.l.b16 %v6236
        %v6531 = vunpack.c.l.b16 %v6237
        %v6532 = vunpack.c.h.b16 %v6237
        %v6533 = vunpack.c.l.b16 %v6238
        %v6534 = vunpack.c.l.b16 %v6239
        %v6535 = vunpack.c.h.b16 %v6239
        %v6536 = vunpack.c.l.b16 %v6240
        %v6537 = vunpack.c.l.b16 %v6241
        %v6538 = vunpack.c.h.b16 %v6241
        %v6539 = vunpack.c.l.b16 %v6242
        %v6540 = vunpack.c.l.b16 %v6243
        %v6541 = vunpack.c.h.b16 %v6243
        %v6542 = vunpack.c.l.b16 %v6244
        %v6543 = vunpack.c.l.b16 %v6245
        %v6544 = vunpack.c.h.b16 %v6245
        %v6545 = vunpack.c.l.b16 %v6246
        %v6546 = vunpack.c.l.b16 %v6247
        %v6547 = vunpack.c.h.b16 %v6247
        %v6548 = vunpack.c.l.b16 %v6248
        %v6549 = vunpack.c.l.b16 %v6249
        %v6550 = vunpack.c.h.b16 %v6249
        %v6551 = vunpack.c.l.b16 %v6250
        %v6552 = vunpack.c.l.b16 %v6251
        %v6553 = vunpack.c.h.b16 %v6251
        %v6554 = vunpack.c.l.b16 %v6252
        %v6555 = vunpack.c.l.b16 %v6253
        %v6556 = vunpack.c.h.b16 %v6253
        %v6557 = vunpack.c.l.b16 %v6254
        %v6558 = vunpack.c.l.b16 %v6255
        %v6559 = vunpack.c.h.b16 %v6255
        %v6560 = vunpack.c.l.b16 %v6256
        %v6561 = vunpack.c.l.b16 %v6257
        %v6562 = vunpack.c.h.b16 %v6257
        %v6563 = vunpack.c.l.b16 %v6258
        %v6564 = vunpack.c.l.b16 %v6259
        %v6565 = vunpack.c.h.b16 %v6259
        %v6566 = vunpack.c.l.b16 %v6260
        %v6567 = vunpack.c.l.b16 %v6261
        %v6568 = vunpack.c.h.b16 %v6261
        %v6569 = vunpack.c.l.b16 %v6262
        %v6570 = vunpack.c.l.b16 %v6263
        %v6571 = vunpack.c.h.b16 %v6263
        %v6572 = vunpack.c.l.b16 %v6264
        %v6573 = vunpack.c.l.b16 %v6265
        %v6574 = vunpack.c.h.b16 %v6265
        %v6575 = vunpack.c.l.b16 %v6266
        %v6576 = vunpack.c.l.b16 %v6267
        %v6577 = vunpack.c.h.b16 %v6267
        %v6578 = vunpack.c.l.b16 %v6268
        %v6579 = vunpack.c.l.b16 %v6269
        %v6580 = vunpack.c.h.b16 %v6269
        %v6581 = vunpack.c.l.b16 %v6270
        %v6582 = vunpack.c.l.b16 %v6271
        %v6583 = vunpack.c.h.b16 %v6271
        %v6584 = vunpack.c.l.b16 %v6272
        %v6585 = vunpack.c.l.b16 %v6273
        %v6586 = vunpack.c.h.b16 %v6273
        %v6587 = vunpack.c.l.b16 %v6274
        %v6588 = vunpack.c.l.b16 %v6275
        %v6589 = vunpack.c.h.b16 %v6275
        %v6590 = vunpack.c.l.b16 %v6276
        %v6591 = vunpack.c.l.b16 %v6277
        %v6592 = vunpack.c.h.b16 %v6277
        %v6593 = vunpack.c.l.b16 %v6278
        %v6594 = vunpack.c.l.b16 %v6279
        %v6595 = vunpack.c.h.b16 %v6279
        %v6596 = vunpack.c.l.b16 %v6280
        %v6597 = vunpack.c.l.b16 %v6281
        %v6598 = vunpack.c.h.b16 %v6281
        %v6599 = vunpack.c.l.b16 %v6282
        %v6600 = vunpack.c.l.b16 %v6283
        %v6601 = vunpack.c.h.b16 %v6283
        %v6602 = vunpack.c.l.b16 %v6284
        %v6603 = vunpack.c.l.b16 %v6285
        %v6604 = vunpack.c.h.b16 %v6285
        %v6605 = vunpack.c.l.b16 %v6286
        %v6606 = vunpack.c.l.b16 %v6287
        %v6607 = vunpack.c.h.b16 %v6287
        %v6608 = vunpack.c.l.b16 %v6288
        %v6609 = vpack.c.b16 %v6420, %v6417
        %v6610 = vpack.c.b16 %v6421, %v6418
        %v6611 = vpack.c.b16 %v6422, %v6419
        %v6612 = vpack.c.b16 %v6426, %v6423
        %v6613 = vpack.c.b16 %v6427, %v6424
        %v6614 = vpack.c.b16 %v6428, %v6425
        %v6615 = vpack.c.b16 %v6432, %v6429
        %v6616 = vpack.c.b16 %v6433, %v6430
        %v6617 = vpack.c.b16 %v6434, %v6431
        %v6618 = vpack.c.b16 %v6438, %v6435
        %v6619 = vpack.c.b16 %v6439, %v6436
        %v6620 = vpack.c.b16 %v6440, %v6437
        %v6621 = vpack.c.b16 %v6444, %v6441
        %v6622 = vpack.c.b16 %v6445, %v6442
        %v6623 = vpack.c.b16 %v6446, %v6443
        %v6624 = vpack.c.b16 %v6450, %v6447
        %v6625 = vpack.c.b16 %v6451, %v6448
        %v6626 = vpack.c.b16 %v6452, %v6449
        %v6627 = vpack.c.b16 %v6456, %v6453
        %v6628 = vpack.c.b16 %v6457, %v6454
        %v6629 = vpack.c.b16 %v6458, %v6455
        %v6630 = vpack.c.b16 %v6462, %v6459
        %v6631 = vpack.c.b16 %v6463, %v6460
        %v6632 = vpack.c.b16 %v6464, %v6461
        %v6633 = vpack.c.b16 %v6468, %v6465
        %v6634 = vpack.c.b16 %v6469, %v6466
        %v6635 = vpack.c.b16 %v6470, %v6467
        %v6636 = vpack.c.b16 %v6474, %v6471
        %v6637 = vpack.c.b16 %v6475, %v6472
        %v6638 = vpack.c.b16 %v6476, %v6473
        %v6639 = vpack.c.b16 %v6480, %v6477
        %v6640 = vpack.c.b16 %v6481, %v6478
        %v6641 = vpack.c.b16 %v6482, %v6479
        %v6642 = vpack.c.b16 %v6486, %v6483
        %v6643 = vpack.c.b16 %v6487, %v6484
        %v6644 = vpack.c.b16 %v6488, %v6485
        %v6645 = vpack.c.b16 %v6492, %v6489
        %v6646 = vpack.c.b16 %v6493, %v6490
        %v6647 = vpack.c.b16 %v6494, %v6491
        %v6648 = vpack.c.b16 %v6498, %v6495
        %v6649 = vpack.c.b16 %v6499, %v6496
        %v6650 = vpack.c.b16 %v6500, %v6497
        %v6651 = vpack.c.b16 %v6504, %v6501
        %v6652 = vpack.c.b16 %v6505, %v6502
        %v6653 = vpack.c.b16 %v6506, %v6503
        %v6654 = vpack.c.b16 %v6510, %v6507
        %v6655 = vpack.c.b16 %v6511, %v6508
        %v6656 = vpack.c.b16 %v6512, %v6509
        %v6657 = vpack.c.b16 %v6516, %v6513
        %v6658 = vpack.c.b16 %v6517, %v6514
        %v6659 = vpack.c.b16 %v6518, %v6515
        %v6660 = vpack.c.b16 %v6522, %v6519
        %v6661 = vpack.c.b16 %v6523, %v6520
        %v6662 = vpack.c.b16 %v6524, %v6521
        %v6663 = vpack.c.b16 %v6528, %v6525
        %v6664 = vpack.c.b16 %v6529, %v6526
        %v6665 = vpack.c.b16 %v6530, %v6527
        %v6666 = vpack.c.b16 %v6534, %v6531
        %v6667 = vpack.c.b16 %v6535, %v6532
        %v6668 = vpack.c.b16 %v6536, %v6533
        %v6669 = vpack.c.b16 %v6540, %v6537
        %v6670 = vpack.c.b16 %v6541, %v6538
        %v6671 = vpack.c.b16 %v6542, %v6539
        %v6672 = vpack.c.b16 %v6546, %v6543
        %v6673 = vpack.c.b16 %v6547, %v6544
        %v6674 = vpack.c.b16 %v6548, %v6545
        %v6675 = vpack.c.b16 %v6552, %v6549
        %v6676 = vpack.c.b16 %v6553, %v6550
        %v6677 = vpack.c.b16 %v6554, %v6551
        %v6678 = vpack.c.b16 %v6558, %v6555
        %v6679 = vpack.c.b16 %v6559, %v6556
        %v6680 = vpack.c.b16 %v6560, %v6557
        %v6681 = vpack.c.b16 %v6564, %v6561
        %v6682 = vpack.c.b16 %v6565, %v6562
        %v6683 = vpack.c.b16 %v6566, %v6563
        %v6684 = vpack.c.b16 %v6570, %v6567
        %v6685 = vpack.c.b16 %v6571, %v6568
        %v6686 = vpack.c.b16 %v6572, %v6569
        %v6687 = vpack.c.b16 %v6576, %v6573
        %v6688 = vpack.c.b16 %v6577, %v6574
        %v6689 = vpack.c.b16 %v6578, %v6575
        %v6690 = vpack.c.b16 %v6582, %v6579
        %v6691 = vpack.c.b16 %v6583, %v6580
        %v6692 = vpack.c.b16 %v6584, %v6581
        %v6693 = vpack.c.b16 %v6588, %v6585
        %v6694 = vpack.c.b16 %v6589, %v6586
        %v6695 = vpack.c.b16 %v6590, %v6587
        %v6696 = vpack.c.b16 %v6594, %v6591
        %v6697 = vpack.c.b16 %v6595, %v6592
        %v6698 = vpack.c.b16 %v6596, %v6593
        %v6699 = vpack.c.b16 %v6600, %v6597
        %v6700 = vpack.c.b16 %v6601, %v6598
        %v6701 = vpack.c.b16 %v6602, %v6599
        %v6702 = vpack.c.b16 %v6606, %v6603
        %v6703 = vpack.c.b16 %v6607, %v6604
        %v6704 = vpack.c.b16 %v6608, %v6605
        %6801 = vmatprep.subr.bf16.mxu0 %v6610
        %6802 = vmatpush1.bf16.msra.mxu0 %v6609
        %6803 = vmatprep.subr.bf16.mxu0 %v6613
        %6804 = vmatpush1.bf16.msra.mxu0 %v6612
        %6805 = vmatprep.subr.bf16.mxu0 %v6616
        %6806 = vmatpush1.bf16.msra.mxu0 %v6615
        %6807 = vmatprep.subr.bf16.mxu0 %v6619
        %6808 = vmatpush1.bf16.msra.mxu0 %v6618
        %6809 = vmatprep.subr.bf16.mxu0 %v6622
        %6810 = vmatpush1.bf16.msra.mxu0 %v6621
        %6811 = vmatprep.subr.bf16.mxu0 %v6625
        %6812 = vmatpush1.bf16.msra.mxu0 %v6624
        %6813 = vmatprep.subr.bf16.mxu0 %v6628
        %6814 = vmatpush1.bf16.msra.mxu0 %v6627
        %6815 = vmatprep.subr.bf16.mxu0 %v6631
        %6816 = vmatpush1.bf16.msra.mxu0 %v6630
        %6817 = vmatprep.subr.bf16.mxu0 %v6634
        %6818 = vmatpush1.bf16.msra.mxu0 %v6633
        %6819 = vmatprep.subr.bf16.mxu0 %v6637
        %6820 = vmatpush1.bf16.msra.mxu0 %v6636
        %6821 = vmatprep.subr.bf16.mxu0 %v6640
        %6822 = vmatpush1.bf16.msra.mxu0 %v6639
        %6823 = vmatprep.subr.bf16.mxu0 %v6643
        %6824 = vmatpush1.bf16.msra.mxu0 %v6642
        %6825 = vmatprep.subr.bf16.mxu0 %v6646
        %6826 = vmatpush1.bf16.msra.mxu0 %v6645
        %6827 = vmatprep.subr.bf16.mxu0 %v6649
        %6828 = vmatpush1.bf16.msra.mxu0 %v6648
        %6829 = vmatprep.subr.bf16.mxu0 %v6652
        %6830 = vmatpush1.bf16.msra.mxu0 %v6651
        %6831 = vmatprep.subr.bf16.mxu0 %v6655
        %6832 = vmatpush1.bf16.msra.mxu0 %v6654
        %6833 = vmatprep.mubr.bf16.mxu0 %v6151
        %6834 = vmatmul.mubr.bf16.gmra.mrb[0].mxu0 %v6147
        %v6835 = vpop.f32.mrb[0].mxu0
        %v6836 = vadd.f32 0.0, %v6835
        %v6837 = vpop.f32.mrb[0].mxu0
        %v6838 = vadd.f32 0.0, %v6837
        %v6839 = vpop.f32.mrb[0].mxu0
        %v6840 = vadd.f32 0.0, %v6839
        %v6841 = vpop.f32.mrb[0].mxu0
        %v6842 = vadd.f32 0.0, %v6841
        %6843 = vdwg.mxu0
        %6844 = vmatprep.subr.bf16.mxu0 %v6658
        %6845 = vmatpush1.bf16.msra.mxu0 %v6657
        %6846 = vmatprep.subr.bf16.mxu0 %v6661
        %6847 = vmatpush1.bf16.msra.mxu0 %v6660
        %6848 = vmatprep.subr.bf16.mxu0 %v6664
        %6849 = vmatpush1.bf16.msra.mxu0 %v6663
        %6850 = vmatprep.subr.bf16.mxu0 %v6667
        %6851 = vmatpush1.bf16.msra.mxu0 %v6666
        %6852 = vmatprep.subr.bf16.mxu0 %v6670
        %6853 = vmatpush1.bf16.msra.mxu0 %v6669
        %6854 = vmatprep.subr.bf16.mxu0 %v6673
        %6855 = vmatpush1.bf16.msra.mxu0 %v6672
        %6856 = vmatprep.subr.bf16.mxu0 %v6676
        %6857 = vmatpush1.bf16.msra.mxu0 %v6675
        %6858 = vmatprep.subr.bf16.mxu0 %v6679
        %6859 = vmatpush1.bf16.msra.mxu0 %v6678
        %6860 = vmatprep.subr.bf16.mxu0 %v6682
        %6861 = vmatpush1.bf16.msra.mxu0 %v6681
        %6862 = vmatprep.subr.bf16.mxu0 %v6685
        %6863 = vmatpush1.bf16.msra.mxu0 %v6684
        %6864 = vmatprep.subr.bf16.mxu0 %v6688
        %6865 = vmatpush1.bf16.msra.mxu0 %v6687
        %6866 = vmatprep.subr.bf16.mxu0 %v6691
        %6867 = vmatpush1.bf16.msra.mxu0 %v6690
        %6868 = vmatprep.subr.bf16.mxu0 %v6694
        %6869 = vmatpush1.bf16.msra.mxu0 %v6693
        %6870 = vmatprep.subr.bf16.mxu0 %v6697
        %6871 = vmatpush1.bf16.msra.mxu0 %v6696
        %6872 = vmatprep.subr.bf16.mxu0 %v6700
        %6873 = vmatpush1.bf16.msra.mxu0 %v6699
        %6874 = vmatprep.subr.bf16.mxu0 %v6703
        %6875 = vmatpush1.bf16.msra.mxu0 %v6702
        %6876 = vmatprep.mubr.bf16.mxu0 %v6159
        %6877 = vmatmul.mubr.bf16.gmra.mrb[0].mxu0 %v6155
        %v6878 = vpop.f32.mrb[0].mxu0
        %v6879 = vadd.f32 %v6836, %v6878
        %v6880 = vpop.f32.mrb[0].mxu0
        %v6881 = vadd.f32 %v6838, %v6880
        %v6882 = vpop.f32.mrb[0].mxu0
        %v6883 = vadd.f32 %v6840, %v6882
        %v6884 = vpop.f32.mrb[0].mxu0
        %v6885 = vadd.f32 %v6842, %v6884
        %6886 = vdwg.mxu0
        %6887 = vmatprep.subr.bf16.mxu0 0
        %6888 = vmatpush1.bf16.msra.mxu0 %v6611
        %6889 = vmatprep.subr.bf16.mxu0 0
        %6890 = vmatpush1.bf16.msra.mxu0 %v6614
        %6891 = vmatprep.subr.bf16.mxu0 0
        %6892 = vmatpush1.bf16.msra.mxu0 %v6617
        %6893 = vmatprep.subr.bf16.mxu0 0
        %6894 = vmatpush1.bf16.msra.mxu0 %v6620
        %6895 = vmatprep.subr.bf16.mxu0 0
        %6896 = vmatpush1.bf16.msra.mxu0 %v6623
        %6897 = vmatprep.subr.bf16.mxu0 0
        %6898 = vmatpush1.bf16.msra.mxu0 %v6626
        %6899 = vmatprep.subr.bf16.mxu0 0
        %6900 = vmatpush1.bf16.msra.mxu0 %v6629
        %6901 = vmatprep.subr.bf16.mxu0 0
        %6902 = vmatpush1.bf16.msra.mxu0 %v6632
        %6903 = vmatprep.subr.bf16.mxu0 0
        %6904 = vmatpush1.bf16.msra.mxu0 %v6635
        %6905 = vmatprep.subr.bf16.mxu0 0
        %6906 = vmatpush1.bf16.msra.mxu0 %v6638
        %6907 = vmatprep.subr.bf16.mxu0 0
        %6908 = vmatpush1.bf16.msra.mxu0 %v6641
        %6909 = vmatprep.subr.bf16.mxu0 0
        %6910 = vmatpush1.bf16.msra.mxu0 %v6644
        %6911 = vmatprep.subr.bf16.mxu0 0
        %6912 = vmatpush1.bf16.msra.mxu0 %v6647
        %6913 = vmatprep.subr.bf16.mxu0 0
        %6914 = vmatpush1.bf16.msra.mxu0 %v6650
        %6915 = vmatprep.subr.bf16.mxu0 0
        %6916 = vmatpush1.bf16.msra.mxu0 %v6653
        %6917 = vmatprep.subr.bf16.mxu0 0
        %6918 = vmatpush1.bf16.msra.mxu0 %v6656
        %6919 = vmatprep.mubr.bf16.mxu0 %v6151
        %6920 = vmatmul.mubr.bf16.gmra.mrb[0].mxu0 %v6147
        %v6921 = vpop.f32.mrb[0].mxu0
        %v6922 = vadd.f32 0.0, %v6921
        %v6923 = vpop.f32.mrb[0].mxu0
        %v6924 = vpop.f32.mrb[0].mxu0
        %v6925 = vadd.f32 0.0, %v6924
        %v6926 = vpop.f32.mrb[0].mxu0
        %6927 = vdwg.mxu0
        %6928 = vmatprep.subr.bf16.mxu0 0
        %6929 = vmatpush1.bf16.msra.mxu0 %v6659
        %6930 = vmatprep.subr.bf16.mxu0 0
        %6931 = vmatpush1.bf16.msra.mxu0 %v6662
        %6932 = vmatprep.subr.bf16.mxu0 0
        %6933 = vmatpush1.bf16.msra.mxu0 %v6665
        %6934 = vmatprep.subr.bf16.mxu0 0
        %6935 = vmatpush1.bf16.msra.mxu0 %v6668
        %6936 = vmatprep.subr.bf16.mxu0 0
        %6937 = vmatpush1.bf16.msra.mxu0 %v6671
        %6938 = vmatprep.subr.bf16.mxu0 0
        %6939 = vmatpush1.bf16.msra.mxu0 %v6674
        %6940 = vmatprep.subr.bf16.mxu0 0
        %6941 = vmatpush1.bf16.msra.mxu0 %v6677
        %6942 = vmatprep.subr.bf16.mxu0 0
        %6943 = vmatpush1.bf16.msra.mxu0 %v6680
        %6944 = vmatprep.subr.bf16.mxu0 0
        %6945 = vmatpush1.bf16.msra.mxu0 %v6683
        %6946 = vmatprep.subr.bf16.mxu0 0
        %6947 = vmatpush1.bf16.msra.mxu0 %v6686
        %6948 = vmatprep.subr.bf16.mxu0 0
        %6949 = vmatpush1.bf16.msra.mxu0 %v6689
        %6950 = vmatprep.subr.bf16.mxu0 0
        %6951 = vmatpush1.bf16.msra.mxu0 %v6692
        %6952 = vmatprep.subr.bf16.mxu0 0
        %6953 = vmatpush1.bf16.msra.mxu0 %v6695
        %6954 = vmatprep.subr.bf16.mxu0 0
        %6955 = vmatpush1.bf16.msra.mxu0 %v6698
        %6956 = vmatprep.subr.bf16.mxu0 0
        %6957 = vmatpush1.bf16.msra.mxu0 %v6701
        %6958 = vmatprep.subr.bf16.mxu0 0
        %6959 = vmatpush1.bf16.msra.mxu0 %v6704
        %6960 = vmatprep.mubr.bf16.mxu0 %v6159
        %6961 = vmatmul.mubr.bf16.gmra.mrb[0].mxu0 %v6155
        %v6962 = vpop.f32.mrb[0].mxu0
        %v6963 = vadd.f32 %v6922, %v6962
        %v6964 = vpop.f32.mrb[0].mxu0
        %v6965 = vpop.f32.mrb[0].mxu0
        %v6966 = vadd.f32 %v6925, %v6965
        %v6967 = vpop.f32.mrb[0].mxu0
        %6968 = vdwg.mxu0
        %v6969 = vadd.f32 %v1214, %v6879
        %v6970 = vadd.f32 %v1215, %v6881
        %v6971 = vadd.f32 %v1216, %v6963
        %v6972 = vadd.f32 %v1217, %v6883
        %v6973 = vadd.f32 %v1218, %v6885
        %v6974 = vadd.f32 %v1219, %v6966
        %v6975 = vld [vmem:[%s984] sm:$0x7]
        %v6976 = vld [vmem:[%s993] sm:$0x7]
        %v6977 = vadd.f32 %v6969, %v6970
        %v6978 = vadd.f32 %v6977, %v6971
        %6979 = vadd.xlane.f32.xlu0 %v6978
        %v6980 = vpop.xlane.xlu0 %6979
        %v6981 = vadd.f32 %v6972, %v6973
        %v6982 = vadd.f32 %v6981, %v6974
        %6983 = vadd.xlane.f32.xlu0 %v6982
        %v6984 = vpop.xlane.xlu0 %6983
        %v6985 = vmul.f32 %v6980, 0.0033333334
        %v6986 = vmul.f32 %v6984, 0.0033333334
        %v6987 = vsub.f32 %v6969, %v6985
        %v6988 = vsub.f32 %v6970, %v6985
        %v6989 = vsub.f32 %v6971, %v6985
        %v6990 = vsub.f32 %v6972, %v6986
        %v6991 = vsub.f32 %v6973, %v6986
        %v6992 = vsub.f32 %v6974, %v6986
        %v6993 = vmul.f32 %v6987, %v1195
        %v6994 = vmul.f32 %v6988, %v1196
        %v6995 = vmul.f32 %v6989, %v1197
        %v6996 = vmul.f32 %v6990, %v1195
        %v6997 = vmul.f32 %v6991, %v1196
        %v6998 = vmul.f32 %v6992, %v1197
        %v6999 = vmul.f32 %v6993, %v6993
        %v7000 = vmul.f32 %v6994, %v6994
        %v7001 = vmul.f32 %v6995, %v6995
        %v7002 = vmul.f32 %v6996, %v6996
        %v7003 = vmul.f32 %v6997, %v6997
        %v7004 = vmul.f32 %v6998, %v6998
        %v7005 = vadd.f32 %v6999, %v7000
        %v7006 = vadd.f32 %v7005, %v7001
        %7007 = vadd.xlane.f32.xlu0 %v7006
        %v7008 = vpop.xlane.xlu0 %7007
        %v7009 = vadd.f32 %v7002, %v7003
        %v7010 = vadd.f32 %v7009, %v7004
        %7011 = vadd.xlane.f32.xlu0 %v7010
        %v7012 = vpop.xlane.xlu0 %7011
        %v7013 = vmul.f32 %v7008, 0.0033333334
        %v7014 = vmul.f32 %v7012, 0.0033333334
        %v7015 = vadd.f32 %v7013, 1e-06
        %v7016 = vadd.f32 %v7014, 1e-06
        %v7017 = vrsqrt.pop %v7015
        %v7018 = vrsqrt.pop %v7016
        %v7019 = vmul.f32 %v6993, %v7017
        %v7020 = vmul.f32 %v6994, %v7017
        %v7021 = vmul.f32 %v6995, %v7017
        %v7022 = vmul.f32 %v6996, %v7018
        %v7023 = vmul.f32 %v6997, %v7018
        %v7024 = vmul.f32 %v6998, %v7018
        %v7026 = vlaneseq
        %v7027 = vshrl.u32 %v7026, 7
        %v7028 = vsub.s32 0, %v7027
        %v7029 = vrot.slane %v6975, %v7028
        %v7030 = vlaneseq
        %v7031 = vshrl.u32 %v7030, 7
        %v7032 = vsub.s32 1, %v7031
        %v7033 = vrot.slane %v6975, %v7032
        %v7034 = vlaneseq
        %v7035 = vshrl.u32 %v7034, 7
        %v7036 = vsub.s32 2, %v7035
        %v7037 = vrot.slane %v6975, %v7036
        %v7041 = vmul.f32 %v7019, %v7029
        %v7042 = vmul.f32 %v7020, %v7033
        %v7043 = vmul.f32 %v7021, %v7037
        %v7044 = vmul.f32 %v7022, %v7029
        %v7045 = vmul.f32 %v7023, %v7033
        %v7046 = vmul.f32 %v7024, %v7037
        %v7048 = vlaneseq
        %v7049 = vshrl.u32 %v7048, 7
        %v7050 = vsub.s32 0, %v7049
        %v7051 = vrot.slane %v6976, %v7050
        %v7052 = vlaneseq
        %v7053 = vshrl.u32 %v7052, 7
        %v7054 = vsub.s32 1, %v7053
        %v7055 = vrot.slane %v6976, %v7054
        %v7056 = vlaneseq
        %v7057 = vshrl.u32 %v7056, 7
        %v7058 = vsub.s32 2, %v7057
        %v7059 = vrot.slane %v6976, %v7058
        %v7063 = vadd.f32 %v7041, %v7051
        %v7064 = vadd.f32 %v7042, %v7055
        %v7065 = vadd.f32 %v7043, %v7059
        %v7066 = vadd.f32 %v7044, %v7051
        %v7067 = vadd.f32 %v7045, %v7055
        %v7068 = vadd.f32 %v7046, %v7059
        %v7069 = vpack.c.bf16 %v7066, %v7063
        %v7070 = vpack.c.bf16 %v7067, %v7064
        %v7071 = vpack.c.bf16 %v7068, %v7065
        %v7072 = vld [vmem:[%s1002] sm:$0xf]
        %v7073 = vld [vmem:[%s1002 + $0x4] sm:$0xf]
        %v7074 = vld [vmem:[%s1002 + $0x8] sm:$0xf]
        %v7075 = vld [vmem:[%s1002 + $0xc] sm:$0xf]
        %v7076 = vld [vmem:[%s1002 + $0x10] sm:$0xf]
        %v7077 = vld [vmem:[%s1002 + $0x14] sm:$0xf]
        %v7078 = vld [vmem:[%s1002 + $0x18] sm:$0xf]
        %v7079 = vld [vmem:[%s1002 + $0x1c] sm:$0xf]
        %v7080 = vld [vmem:[%s1002 + $0x20] sm:$0xf]
        %v7081 = vld [vmem:[%s1002 + $0x24] sm:$0xf]
        %v7082 = vld [vmem:[%s1002 + $0x28] sm:$0xf]
        %v7083 = vld [vmem:[%s1002 + $0x2c] sm:$0xf]
        %v7084 = vld [vmem:[%s1002 + $0x30] sm:$0xf]
        %v7085 = vld [vmem:[%s1002 + $0x34] sm:$0xf]
        %v7086 = vld [vmem:[%s1002 + $0x38] sm:$0xf]
        %v7087 = vld [vmem:[%s1002 + $0x3c] sm:$0xf]
        %v7088 = vld [vmem:[%s1002 + $0x40] sm:$0xf]
        %v7089 = vld [vmem:[%s1002 + $0x44] sm:$0xf]
        %v7090 = vld [vmem:[%s1002 + $0x48] sm:$0xf]
        %v7091 = vld [vmem:[%s1002 + $0x4c] sm:$0xf]
        %v7092 = vld [vmem:[%s1002 + $0x50] sm:$0xf]
        %v7093 = vld [vmem:[%s1002 + $0x54] sm:$0xf]
        %v7094 = vld [vmem:[%s1002 + $0x58] sm:$0xf]
        %v7095 = vld [vmem:[%s1002 + $0x5c] sm:$0xf]
        %v7096 = vld [vmem:[%s1002 + $0x60] sm:$0xf]
        %v7097 = vld [vmem:[%s1002 + $0x64] sm:$0xf]
        %v7098 = vld [vmem:[%s1002 + $0x68] sm:$0xf]
        %v7099 = vld [vmem:[%s1002 + $0x6c] sm:$0xf]
        %v7100 = vld [vmem:[%s1002 + $0x70] sm:$0xf]
        %v7101 = vld [vmem:[%s1002 + $0x74] sm:$0xf]
        %v7102 = vld [vmem:[%s1002 + $0x78] sm:$0xf]
        %v7103 = vld [vmem:[%s1002 + $0x7c] sm:$0xf]
        %v7104 = vld [vmem:[%s1002 + $0x80] sm:$0xf]
        %v7105 = vld [vmem:[%s1002 + $0x84] sm:$0xf]
        %v7106 = vld [vmem:[%s1002 + $0x88] sm:$0xf]
        %v7107 = vld [vmem:[%s1002 + $0x8c] sm:$0xf]
        %v7108 = vld [vmem:[%s1002 + $0x90] sm:$0xf]
        %v7109 = vld [vmem:[%s1002 + $0x94] sm:$0xf]
        %v7110 = vld [vmem:[%s1002 + $0x98] sm:$0xf]
        %v7111 = vld [vmem:[%s1002 + $0x9c] sm:$0xf]
        %v7112 = vld [vmem:[%s1002 + $0xa0] sm:$0xf]
        %v7113 = vld [vmem:[%s1002 + $0xa4] sm:$0xf]
        %v7114 = vld [vmem:[%s1002 + $0xa8] sm:$0xf]
        %v7115 = vld [vmem:[%s1002 + $0xac] sm:$0xf]
        %v7116 = vld [vmem:[%s1002 + $0xb0] sm:$0xf]
        %v7117 = vld [vmem:[%s1002 + $0xb4] sm:$0xf]
        %v7118 = vld [vmem:[%s1002 + $0xb8] sm:$0xf]
        %v7119 = vld [vmem:[%s1002 + $0xbc] sm:$0xf]
        %v7120 = vld [vmem:[%s1010] sm:$0x1]
        %v7122 = vlaneseq
        %v7123 = vshrl.u32 %v7122, 7
        %v7124 = vsub.s32 0, %v7123
        %v7125 = vrot.slane %v7120, %v7124
        %v7175 = vunpack.c.l.b16 %v7072
        %v7176 = vunpack.c.l.b16 %v7073
        %v7177 = vunpack.c.l.b16 %v7074
        %v7178 = vunpack.c.l.b16 %v7075
        %v7179 = vunpack.c.l.b16 %v7076
        %v7180 = vunpack.c.l.b16 %v7077
        %v7181 = vunpack.c.l.b16 %v7078
        %v7182 = vunpack.c.l.b16 %v7079
        %v7183 = vunpack.c.l.b16 %v7080
        %v7184 = vunpack.c.l.b16 %v7081
        %v7185 = vunpack.c.l.b16 %v7082
        %v7186 = vunpack.c.l.b16 %v7083
        %v7187 = vunpack.c.l.b16 %v7084
        %v7188 = vunpack.c.l.b16 %v7085
        %v7189 = vunpack.c.l.b16 %v7086
        %v7190 = vunpack.c.l.b16 %v7087
        %v7191 = vunpack.c.l.b16 %v7088
        %v7192 = vunpack.c.l.b16 %v7089
        %v7193 = vunpack.c.l.b16 %v7090
        %v7194 = vunpack.c.l.b16 %v7091
        %v7195 = vunpack.c.l.b16 %v7092
        %v7196 = vunpack.c.l.b16 %v7093
        %v7197 = vunpack.c.l.b16 %v7094
        %v7198 = vunpack.c.l.b16 %v7095
        %v7199 = vunpack.c.l.b16 %v7096
        %v7200 = vunpack.c.l.b16 %v7097
        %v7201 = vunpack.c.l.b16 %v7098
        %v7202 = vunpack.c.l.b16 %v7099
        %v7203 = vunpack.c.l.b16 %v7100
        %v7204 = vunpack.c.l.b16 %v7101
        %v7205 = vunpack.c.l.b16 %v7102
        %v7206 = vunpack.c.l.b16 %v7103
        %v7207 = vunpack.c.l.b16 %v7104
        %v7208 = vunpack.c.l.b16 %v7105
        %v7209 = vunpack.c.l.b16 %v7106
        %v7210 = vunpack.c.l.b16 %v7107
        %v7211 = vunpack.c.l.b16 %v7108
        %v7212 = vunpack.c.l.b16 %v7109
        %v7213 = vunpack.c.l.b16 %v7110
        %v7214 = vunpack.c.l.b16 %v7111
        %v7215 = vunpack.c.l.b16 %v7112
        %v7216 = vunpack.c.l.b16 %v7113
        %v7217 = vunpack.c.l.b16 %v7114
        %v7218 = vunpack.c.l.b16 %v7115
        %v7219 = vunpack.c.l.b16 %v7116
        %v7220 = vunpack.c.l.b16 %v7117
        %v7221 = vunpack.c.l.b16 %v7118
        %v7222 = vunpack.c.l.b16 %v7119
        %v7223 = vpack.c.b16 %v7176, %v7175
        %v7224 = vpack.c.b16 %v7178, %v7177
        %v7225 = vpack.c.b16 %v7180, %v7179
        %v7226 = vpack.c.b16 %v7182, %v7181
        %v7227 = vpack.c.b16 %v7184, %v7183
        %v7228 = vpack.c.b16 %v7186, %v7185
        %v7229 = vpack.c.b16 %v7188, %v7187
        %v7230 = vpack.c.b16 %v7190, %v7189
        %v7231 = vpack.c.b16 %v7192, %v7191
        %v7232 = vpack.c.b16 %v7194, %v7193
        %v7233 = vpack.c.b16 %v7196, %v7195
        %v7234 = vpack.c.b16 %v7198, %v7197
        %v7235 = vpack.c.b16 %v7200, %v7199
        %v7236 = vpack.c.b16 %v7202, %v7201
        %v7237 = vpack.c.b16 %v7204, %v7203
        %v7238 = vpack.c.b16 %v7206, %v7205
        %v7239 = vpack.c.b16 %v7208, %v7207
        %v7240 = vpack.c.b16 %v7210, %v7209
        %v7241 = vpack.c.b16 %v7212, %v7211
        %v7242 = vpack.c.b16 %v7214, %v7213
        %v7243 = vpack.c.b16 %v7216, %v7215
        %v7244 = vpack.c.b16 %v7218, %v7217
        %v7245 = vpack.c.b16 %v7220, %v7219
        %v7246 = vpack.c.b16 %v7222, %v7221
        %7271 = vmatprep.subr.bf16.mxu0 0
        %7272 = vmatpush1.bf16.msra.mxu0 %v7223
        %7273 = vmatprep.subr.bf16.mxu0 0
        %7274 = vmatpush1.bf16.msra.mxu0 %v7224
        %7275 = vmatprep.subr.bf16.mxu0 0
        %7276 = vmatpush1.bf16.msra.mxu0 %v7225
        %7277 = vmatprep.subr.bf16.mxu0 0
        %7278 = vmatpush1.bf16.msra.mxu0 %v7226
        %7279 = vmatprep.subr.bf16.mxu0 0
        %7280 = vmatpush1.bf16.msra.mxu0 %v7227
        %7281 = vmatprep.subr.bf16.mxu0 0
        %7282 = vmatpush1.bf16.msra.mxu0 %v7228
        %7283 = vmatprep.subr.bf16.mxu0 0
        %7284 = vmatpush1.bf16.msra.mxu0 %v7229
        %7285 = vmatprep.subr.bf16.mxu0 0
        %7286 = vmatpush1.bf16.msra.mxu0 %v7230
        %7287 = vmatprep.subr.bf16.mxu0 0
        %7288 = vmatpush1.bf16.msra.mxu0 %v7231
        %7289 = vmatprep.subr.bf16.mxu0 0
        %7290 = vmatpush1.bf16.msra.mxu0 %v7232
        %7291 = vmatprep.subr.bf16.mxu0 0
        %7292 = vmatpush1.bf16.msra.mxu0 %v7233
        %7293 = vmatprep.subr.bf16.mxu0 0
        %7294 = vmatpush1.bf16.msra.mxu0 %v7234
        %7295 = vmatprep.subr.bf16.mxu0 0
        %7296 = vmatpush1.bf16.msra.mxu0 %v7235
        %7297 = vmatprep.subr.bf16.mxu0 0
        %7298 = vmatpush1.bf16.msra.mxu0 %v7236
        %7299 = vmatprep.subr.bf16.mxu0 0
        %7300 = vmatpush1.bf16.msra.mxu0 %v7237
        %7301 = vmatprep.subr.bf16.mxu0 0
        %7302 = vmatpush1.bf16.msra.mxu0 %v7238
        %7303 = vmatprep.mubr.bf16.mxu0 %v7070
        %7304 = vmatmul.mubr.bf16.gmra.mrb[0].mxu0 %v7069
        %v7305 = vpop.f32.mrb[0].mxu0
        %v7306 = vadd.f32 %v7125, %v7305
        %v7307 = vpop.f32.mrb[0].mxu0
        %v7308 = vpop.f32.mrb[0].mxu0
        %v7309 = vadd.f32 %v7125, %v7308
        %v7310 = vpop.f32.mrb[0].mxu0
        %7311 = vdwg.mxu0
        %7312 = vmatprep.subr.bf16.mxu0 0
        %7313 = vmatpush1.bf16.msra.mxu0 %v7239
        %7314 = vmatprep.subr.bf16.mxu0 0
        %7315 = vmatpush1.bf16.msra.mxu0 %v7240
        %7316 = vmatprep.subr.bf16.mxu0 0
        %7317 = vmatpush1.bf16.msra.mxu0 %v7241
        %7318 = vmatprep.subr.bf16.mxu0 0
        %7319 = vmatpush1.bf16.msra.mxu0 %v7242
        %7320 = vmatprep.subr.bf16.mxu0 0
        %7321 = vmatpush1.bf16.msra.mxu0 %v7243
        %7322 = vmatprep.subr.bf16.mxu0 0
        %7323 = vmatpush1.bf16.msra.mxu0 %v7244
        %7324 = vmatprep.subr.bf16.mxu0 0
        %7325 = vmatpush1.bf16.msra.mxu0 %v7245
        %7326 = vmatprep.subr.bf16.mxu0 0
        %7327 = vmatpush1.bf16.msra.mxu0 %v7246
        %7328 = vmatprep.subr.bf16.mxu0 0
        %7329 = vmatpush1.bf16.msra.mxu0 0
        %7330 = vmatprep.subr.bf16.mxu0 0
        %7331 = vmatpush1.bf16.msra.mxu0 0
        %7332 = vmatprep.subr.bf16.mxu0 0
        %7333 = vmatpush1.bf16.msra.mxu0 0
        %7334 = vmatprep.subr.bf16.mxu0 0
        %7335 = vmatpush1.bf16.msra.mxu0 0
        %7336 = vmatprep.subr.bf16.mxu0 0
        %7337 = vmatpush1.bf16.msra.mxu0 0
        %7338 = vmatprep.subr.bf16.mxu0 0
        %7339 = vmatpush1.bf16.msra.mxu0 0
        %7340 = vmatprep.subr.bf16.mxu0 0
        %7341 = vmatpush1.bf16.msra.mxu0 0
        %7342 = vmatprep.subr.bf16.mxu0 0
        %7343 = vmatpush1.bf16.msra.mxu0 0
        %7344 = vmatprep.mubr.bf16.mxu0 0
        %7345 = vmatmul.mubr.bf16.gmra.mrb[0].mxu0 %v7071
        %v7346 = vpop.f32.mrb[0].mxu0
        %v7347 = vadd.f32 %v7306, %v7346
        %v7348 = vpop.f32.mrb[0].mxu0
        %v7349 = vpop.f32.mrb[0].mxu0
        %v7350 = vadd.f32 %v7309, %v7349
        %v7351 = vpop.f32.mrb[0].mxu0
        %7352 = vdwg.mxu0
        %v7353 = vmax.f32 %v7347, 0.0
        %v7354 = vmax.f32 %v7350, 0.0
        %v7355 = vpack.c.bf16 %v7354, %v7353
        %v7356 = vld [vmem:[%s1019] sm:$0xff]
        %v7357 = vld [vmem:[%s1019 + $0x8] sm:$0xf]
        %v7358 = vld [vmem:[%s1019 + $0xc] sm:$0xff]
        %v7359 = vld [vmem:[%s1019 + $0x14] sm:$0xf]
        %v7360 = vld [vmem:[%s1019 + $0x18] sm:$0xff]
        %v7361 = vld [vmem:[%s1019 + $0x20] sm:$0xf]
        %v7362 = vld [vmem:[%s1019 + $0x24] sm:$0xff]
        %v7363 = vld [vmem:[%s1019 + $0x2c] sm:$0xf]
        %v7364 = vld [vmem:[%s1019 + $0x30] sm:$0xff]
        %v7365 = vld [vmem:[%s1019 + $0x38] sm:$0xf]
        %v7366 = vld [vmem:[%s1019 + $0x3c] sm:$0xff]
        %v7367 = vld [vmem:[%s1019 + $0x44] sm:$0xf]
        %v7368 = vld [vmem:[%s1019 + $0x48] sm:$0xff]
        %v7369 = vld [vmem:[%s1019 + $0x50] sm:$0xf]
        %v7370 = vld [vmem:[%s1019 + $0x54] sm:$0xff]
        %v7371 = vld [vmem:[%s1019 + $0x5c] sm:$0xf]
        %v7372 = vld [vmem:[%s1019 + $0x60] sm:$0xff]
        %v7373 = vld [vmem:[%s1019 + $0x68] sm:$0xf]
        %v7374 = vld [vmem:[%s1019 + $0x6c] sm:$0xff]
        %v7375 = vld [vmem:[%s1019 + $0x74] sm:$0xf]
        %v7376 = vld [vmem:[%s1019 + $0x78] sm:$0xff]
        %v7377 = vld [vmem:[%s1019 + $0x80] sm:$0xf]
        %v7378 = vld [vmem:[%s1019 + $0x84] sm:$0xff]
        %v7379 = vld [vmem:[%s1019 + $0x8c] sm:$0xf]
        %v7380 = vld [vmem:[%s1019 + $0x90] sm:$0xff]
        %v7381 = vld [vmem:[%s1019 + $0x98] sm:$0xf]
        %v7382 = vld [vmem:[%s1019 + $0x9c] sm:$0xff]
        %v7383 = vld [vmem:[%s1019 + $0xa4] sm:$0xf]
        %v7384 = vld [vmem:[%s1019 + $0xa8] sm:$0xff]
        %v7385 = vld [vmem:[%s1019 + $0xb0] sm:$0xf]
        %v7386 = vld [vmem:[%s1019 + $0xb4] sm:$0xff]
        %v7387 = vld [vmem:[%s1019 + $0xbc] sm:$0xf]
        %v7388 = vld [vmem:[%s1028] sm:$0x7]
        %v7390 = vlaneseq
        %v7391 = vshrl.u32 %v7390, 7
        %v7392 = vsub.s32 0, %v7391
        %v7393 = vrot.slane %v7388, %v7392
        %v7394 = vlaneseq
        %v7395 = vshrl.u32 %v7394, 7
        %v7396 = vsub.s32 1, %v7395
        %v7397 = vrot.slane %v7388, %v7396
        %v7398 = vlaneseq
        %v7399 = vshrl.u32 %v7398, 7
        %v7400 = vsub.s32 2, %v7399
        %v7401 = vrot.slane %v7388, %v7400
        %v7437 = vunpack.c.l.b16 %v7356
        %v7438 = vunpack.c.h.b16 %v7356
        %v7439 = vunpack.c.l.b16 %v7357
        %v7440 = vunpack.c.l.b16 %v7358
        %v7441 = vunpack.c.h.b16 %v7358
        %v7442 = vunpack.c.l.b16 %v7359
        %v7443 = vunpack.c.l.b16 %v7360
        %v7444 = vunpack.c.h.b16 %v7360
        %v7445 = vunpack.c.l.b16 %v7361
        %v7446 = vunpack.c.l.b16 %v7362
        %v7447 = vunpack.c.h.b16 %v7362
        %v7448 = vunpack.c.l.b16 %v7363
        %v7449 = vunpack.c.l.b16 %v7364
        %v7450 = vunpack.c.h.b16 %v7364
        %v7451 = vunpack.c.l.b16 %v7365
        %v7452 = vunpack.c.l.b16 %v7366
        %v7453 = vunpack.c.h.b16 %v7366
        %v7454 = vunpack.c.l.b16 %v7367
        %v7455 = vunpack.c.l.b16 %v7368
        %v7456 = vunpack.c.h.b16 %v7368
        %v7457 = vunpack.c.l.b16 %v7369
        %v7458 = vunpack.c.l.b16 %v7370
        %v7459 = vunpack.c.h.b16 %v7370
        %v7460 = vunpack.c.l.b16 %v7371
        %v7461 = vunpack.c.l.b16 %v7372
        %v7462 = vunpack.c.h.b16 %v7372
        %v7463 = vunpack.c.l.b16 %v7373
        %v7464 = vunpack.c.l.b16 %v7374
        %v7465 = vunpack.c.h.b16 %v7374
        %v7466 = vunpack.c.l.b16 %v7375
        %v7467 = vunpack.c.l.b16 %v7376
        %v7468 = vunpack.c.h.b16 %v7376
        %v7469 = vunpack.c.l.b16 %v7377
        %v7470 = vunpack.c.l.b16 %v7378
        %v7471 = vunpack.c.h.b16 %v7378
        %v7472 = vunpack.c.l.b16 %v7379
        %v7473 = vunpack.c.l.b16 %v7380
        %v7474 = vunpack.c.h.b16 %v7380
        %v7475 = vunpack.c.l.b16 %v7381
        %v7476 = vunpack.c.l.b16 %v7382
        %v7477 = vunpack.c.h.b16 %v7382
        %v7478 = vunpack.c.l.b16 %v7383
        %v7479 = vunpack.c.l.b16 %v7384
        %v7480 = vunpack.c.h.b16 %v7384
        %v7481 = vunpack.c.l.b16 %v7385
        %v7482 = vunpack.c.l.b16 %v7386
        %v7483 = vunpack.c.h.b16 %v7386
        %v7484 = vunpack.c.l.b16 %v7387
        %v7485 = vpack.c.b16 %v7440, %v7437
        %v7486 = vpack.c.b16 %v7441, %v7438
        %v7487 = vpack.c.b16 %v7442, %v7439
        %v7488 = vpack.c.b16 %v7446, %v7443
        %v7489 = vpack.c.b16 %v7447, %v7444
        %v7490 = vpack.c.b16 %v7448, %v7445
        %v7491 = vpack.c.b16 %v7452, %v7449
        %v7492 = vpack.c.b16 %v7453, %v7450
        %v7493 = vpack.c.b16 %v7454, %v7451
        %v7494 = vpack.c.b16 %v7458, %v7455
        %v7495 = vpack.c.b16 %v7459, %v7456
        %v7496 = vpack.c.b16 %v7460, %v7457
        %v7497 = vpack.c.b16 %v7464, %v7461
        %v7498 = vpack.c.b16 %v7465, %v7462
        %v7499 = vpack.c.b16 %v7466, %v7463
        %v7500 = vpack.c.b16 %v7470, %v7467
        %v7501 = vpack.c.b16 %v7471, %v7468
        %v7502 = vpack.c.b16 %v7472, %v7469
        %v7503 = vpack.c.b16 %v7476, %v7473
        %v7504 = vpack.c.b16 %v7477, %v7474
        %v7505 = vpack.c.b16 %v7478, %v7475
        %v7506 = vpack.c.b16 %v7482, %v7479
        %v7507 = vpack.c.b16 %v7483, %v7480
        %v7508 = vpack.c.b16 %v7484, %v7481
        %7533 = vmatprep.subr.bf16.mxu0 %v7486
        %7534 = vmatpush1.bf16.msra.mxu0 %v7485
        %7535 = vmatprep.subr.bf16.mxu0 %v7489
        %7536 = vmatpush1.bf16.msra.mxu0 %v7488
        %7537 = vmatprep.subr.bf16.mxu0 %v7492
        %7538 = vmatpush1.bf16.msra.mxu0 %v7491
        %7539 = vmatprep.subr.bf16.mxu0 %v7495
        %7540 = vmatpush1.bf16.msra.mxu0 %v7494
        %7541 = vmatprep.subr.bf16.mxu0 %v7498
        %7542 = vmatpush1.bf16.msra.mxu0 %v7497
        %7543 = vmatprep.subr.bf16.mxu0 %v7501
        %7544 = vmatpush1.bf16.msra.mxu0 %v7500
        %7545 = vmatprep.subr.bf16.mxu0 %v7504
        %7546 = vmatpush1.bf16.msra.mxu0 %v7503
        %7547 = vmatprep.subr.bf16.mxu0 %v7507
        %7548 = vmatpush1.bf16.msra.mxu0 %v7506
        %7549 = vmatprep.subr.bf16.mxu0 0
        %7550 = vmatpush1.bf16.msra.mxu0 0
        %7551 = vmatprep.subr.bf16.mxu0 0
        %7552 = vmatpush1.bf16.msra.mxu0 0
        %7553 = vmatprep.subr.bf16.mxu0 0
        %7554 = vmatpush1.bf16.msra.mxu0 0
        %7555 = vmatprep.subr.bf16.mxu0 0
        %7556 = vmatpush1.bf16.msra.mxu0 0
        %7557 = vmatprep.subr.bf16.mxu0 0
        %7558 = vmatpush1.bf16.msra.mxu0 0
        %7559 = vmatprep.subr.bf16.mxu0 0
        %7560 = vmatpush1.bf16.msra.mxu0 0
        %7561 = vmatprep.subr.bf16.mxu0 0
        %7562 = vmatpush1.bf16.msra.mxu0 0
        %7563 = vmatprep.subr.bf16.mxu0 0
        %7564 = vmatpush1.bf16.msra.mxu0 0
        %7565 = vmatprep.mubr.bf16.mxu0 0
        %7566 = vmatmul.mubr.bf16.gmra.mrb[0].mxu0 %v7355
        %v7567 = vpop.f32.mrb[0].mxu0
        %v7568 = vadd.f32 %v7393, %v7567
        %v7569 = vpop.f32.mrb[0].mxu0
        %v7570 = vadd.f32 %v7397, %v7569
        %v7571 = vpop.f32.mrb[0].mxu0
        %v7572 = vadd.f32 %v7393, %v7571
        %v7573 = vpop.f32.mrb[0].mxu0
        %v7574 = vadd.f32 %v7397, %v7573
        %7575 = vdwg.mxu0
        %7576 = vmatprep.subr.bf16.mxu0 0
        %7577 = vmatpush1.bf16.msra.mxu0 %v7487
        %7578 = vmatprep.subr.bf16.mxu0 0
        %7579 = vmatpush1.bf16.msra.mxu0 %v7490
        %7580 = vmatprep.subr.bf16.mxu0 0
        %7581 = vmatpush1.bf16.msra.mxu0 %v7493
        %7582 = vmatprep.subr.bf16.mxu0 0
        %7583 = vmatpush1.bf16.msra.mxu0 %v7496
        %7584 = vmatprep.subr.bf16.mxu0 0
        %7585 = vmatpush1.bf16.msra.mxu0 %v7499
        %7586 = vmatprep.subr.bf16.mxu0 0
        %7587 = vmatpush1.bf16.msra.mxu0 %v7502
        %7588 = vmatprep.subr.bf16.mxu0 0
        %7589 = vmatpush1.bf16.msra.mxu0 %v7505
        %7590 = vmatprep.subr.bf16.mxu0 0
        %7591 = vmatpush1.bf16.msra.mxu0 %v7508
        %7592 = vmatprep.subr.bf16.mxu0 0
        %7593 = vmatpush1.bf16.msra.mxu0 0
        %7594 = vmatprep.subr.bf16.mxu0 0
        %7595 = vmatpush1.bf16.msra.mxu0 0
        %7596 = vmatprep.subr.bf16.mxu0 0
        %7597 = vmatpush1.bf16.msra.mxu0 0
        %7598 = vmatprep.subr.bf16.mxu0 0
        %7599 = vmatpush1.bf16.msra.mxu0 0
        %7600 = vmatprep.subr.bf16.mxu0 0
        %7601 = vmatpush1.bf16.msra.mxu0 0
        %7602 = vmatprep.subr.bf16.mxu0 0
        %7603 = vmatpush1.bf16.msra.mxu0 0
        %7604 = vmatprep.subr.bf16.mxu0 0
        %7605 = vmatpush1.bf16.msra.mxu0 0
        %7606 = vmatprep.subr.bf16.mxu0 0
        %7607 = vmatpush1.bf16.msra.mxu0 0
        %7608 = vmatprep.mubr.bf16.mxu0 0
        %7609 = vmatmul.mubr.bf16.gmra.mrb[0].mxu0 %v7355
        %v7610 = vpop.f32.mrb[0].mxu0
        %v7611 = vadd.f32 %v7401, %v7610
        %v7612 = vpop.f32.mrb[0].mxu0
        %v7613 = vpop.f32.mrb[0].mxu0
        %v7614 = vadd.f32 %v7401, %v7613
        %v7615 = vpop.f32.mrb[0].mxu0
        %7616 = vdwg.mxu0
        %v7617 = vadd.f32 %v7063, %v7568
        %v7618 = vadd.f32 %v7064, %v7570
        %v7619 = vadd.f32 %v7065, %v7611
        %v7620 = vadd.f32 %v7066, %v7572
        %v7621 = vadd.f32 %v7067, %v7574
        %v7622 = vadd.f32 %v7068, %v7614
        %v7623 = vld [vmem:[%s1037] sm:$0x7]
        %v7624 = vld [vmem:[%s1046] sm:$0x7]
        %v7625 = vadd.f32 %v7617, %v7618
        %v7626 = vadd.f32 %v7625, %v7619
        %7627 = vadd.xlane.f32.xlu0 %v7626
        %v7628 = vpop.xlane.xlu0 %7627
        %v7629 = vadd.f32 %v7620, %v7621
        %v7630 = vadd.f32 %v7629, %v7622
        %7631 = vadd.xlane.f32.xlu0 %v7630
        %v7632 = vpop.xlane.xlu0 %7631
        %v7633 = vmul.f32 %v7628, 0.0033333334
        %v7634 = vmul.f32 %v7632, 0.0033333334
        %v7635 = vsub.f32 %v7617, %v7633
        %v7636 = vsub.f32 %v7618, %v7633
        %v7637 = vsub.f32 %v7619, %v7633
        %v7638 = vsub.f32 %v7620, %v7634
        %v7639 = vsub.f32 %v7621, %v7634
        %v7640 = vsub.f32 %v7622, %v7634
        %v7641 = vmul.f32 %v7635, %v1195
        %v7642 = vmul.f32 %v7636, %v1196
        %v7643 = vmul.f32 %v7637, %v1197
        %v7644 = vmul.f32 %v7638, %v1195
        %v7645 = vmul.f32 %v7639, %v1196
        %v7646 = vmul.f32 %v7640, %v1197
        %v7647 = vmul.f32 %v7641, %v7641
        %v7648 = vmul.f32 %v7642, %v7642
        %v7649 = vmul.f32 %v7643, %v7643
        %v7650 = vmul.f32 %v7644, %v7644
        %v7651 = vmul.f32 %v7645, %v7645
        %v7652 = vmul.f32 %v7646, %v7646
        %v7653 = vadd.f32 %v7647, %v7648
        %v7654 = vadd.f32 %v7653, %v7649
        %7655 = vadd.xlane.f32.xlu0 %v7654
        %v7656 = vpop.xlane.xlu0 %7655
        %v7657 = vadd.f32 %v7650, %v7651
        %v7658 = vadd.f32 %v7657, %v7652
        %7659 = vadd.xlane.f32.xlu0 %v7658
        %v7660 = vpop.xlane.xlu0 %7659
        %v7661 = vmul.f32 %v7656, 0.0033333334
        %v7662 = vmul.f32 %v7660, 0.0033333334
        %v7663 = vadd.f32 %v7661, 1e-06
        %v7664 = vadd.f32 %v7662, 1e-06
        %v7665 = vrsqrt.pop %v7663
        %v7666 = vrsqrt.pop %v7664
        %v7667 = vmul.f32 %v7641, %v7665
        %v7668 = vmul.f32 %v7642, %v7665
        %v7669 = vmul.f32 %v7643, %v7665
        %v7670 = vmul.f32 %v7644, %v7666
        %v7671 = vmul.f32 %v7645, %v7666
        %v7672 = vmul.f32 %v7646, %v7666
        %v7674 = vlaneseq
        %v7675 = vshrl.u32 %v7674, 7
        %v7676 = vsub.s32 0, %v7675
        %v7677 = vrot.slane %v7623, %v7676
        %v7678 = vlaneseq
        %v7679 = vshrl.u32 %v7678, 7
        %v7680 = vsub.s32 1, %v7679
        %v7681 = vrot.slane %v7623, %v7680
        %v7682 = vlaneseq
        %v7683 = vshrl.u32 %v7682, 7
        %v7684 = vsub.s32 2, %v7683
        %v7685 = vrot.slane %v7623, %v7684
        %v7689 = vmul.f32 %v7667, %v7677
        %v7690 = vmul.f32 %v7668, %v7681
        %v7691 = vmul.f32 %v7669, %v7685
        %v7692 = vmul.f32 %v7670, %v7677
        %v7693 = vmul.f32 %v7671, %v7681
        %v7694 = vmul.f32 %v7672, %v7685
        %v7696 = vlaneseq
        %v7697 = vshrl.u32 %v7696, 7
        %v7698 = vsub.s32 0, %v7697
        %v7699 = vrot.slane %v7624, %v7698
        %v7700 = vlaneseq
        %v7701 = vshrl.u32 %v7700, 7
        %v7702 = vsub.s32 1, %v7701
        %v7703 = vrot.slane %v7624, %v7702
        %v7704 = vlaneseq
        %v7705 = vshrl.u32 %v7704, 7
        %v7706 = vsub.s32 2, %v7705
        %v7707 = vrot.slane %v7624, %v7706
        %v7711 = vadd.f32 %v7689, %v7699
        %v7712 = vadd.f32 %v7690, %v7703
        %v7713 = vadd.f32 %v7691, %v7707
        %v7714 = vadd.f32 %v7692, %v7699
        %v7715 = vadd.f32 %v7693, %v7703
        %v7716 = vadd.f32 %v7694, %v7707
        %7717 = vst [vmem:[#allocation2] sm:$0xff] %v7711
        %7718 = vst [vmem:[#allocation2 + $0x8] sm:$0xff] %v7712
        %7719 = vst [vmem:[#allocation2 + $0x10] sm:$0xff] %v7713
        %7720 = vst [vmem:[#allocation2 + $0x18] sm:$0xff] %v7714
        %7721 = vst [vmem:[#allocation2 + $0x20] sm:$0xff] %v7715
        %7722 = vst [vmem:[#allocation2 + $0x28] sm:$0xff] %v7716
        %p7723 = scmp.eq.s32.totalorder %s58, 5
        // Predicated region
        $region197: #{transformer_linear_attn.1} parent=111 // pred_check
          %p7724 = pneg %p7723
        $region198: #{transformer_linear_attn.1} parent=111 // pred_check_branch
          %7726 = sbr.rel (%p7724) target = $region200
        $region199: #{transformer_linear_attn.1} parent=111 // pred_region
          %v7727 = vpack.c.bf16 %v7714, %v7711
          %v7728 = vpack.c.bf16 %v7715, %v7712
          %v7729 = vpack.c.bf16 %v7716, %v7713
          %v7730 = vld [vmem:[#allocation22] sm:$0xf]
          %v7731 = vld [vmem:[#allocation22 + $0x4] sm:$0xf]
          %v7732 = vld [vmem:[#allocation22 + $0x8] sm:$0xf]
          %v7733 = vld [vmem:[#allocation22 + $0xc] sm:$0xf]
          %v7734 = vld [vmem:[#allocation22 + $0x10] sm:$0xf]
          %v7735 = vld [vmem:[#allocation22 + $0x14] sm:$0xf]
          %v7736 = vld [vmem:[#allocation22 + $0x18] sm:$0xf]
          %v7737 = vld [vmem:[#allocation22 + $0x1c] sm:$0xf]
          %v7738 = vld [vmem:[#allocation22 + $0x20] sm:$0xf]
          %v7739 = vld [vmem:[#allocation22 + $0x24] sm:$0xf]
          %v7740 = vld [vmem:[#allocation22 + $0x28] sm:$0xf]
          %v7741 = vld [vmem:[#allocation22 + $0x2c] sm:$0xf]
          %v7742 = vld [vmem:[#allocation22 + $0x30] sm:$0xf]
          %v7743 = vld [vmem:[#allocation22 + $0x34] sm:$0xf]
          %v7744 = vld [vmem:[#allocation22 + $0x38] sm:$0xf]
          %v7745 = vld [vmem:[#allocation22 + $0x3c] sm:$0xf]
          %v7746 = vld [vmem:[#allocation22 + $0x40] sm:$0xf]
          %v7747 = vld [vmem:[#allocation22 + $0x44] sm:$0xf]
          %v7748 = vld [vmem:[#allocation22 + $0x48] sm:$0xf]
          %v7749 = vld [vmem:[#allocation22 + $0x4c] sm:$0xf]
          %v7750 = vld [vmem:[#allocation22 + $0x50] sm:$0xf]
          %v7751 = vld [vmem:[#allocation22 + $0x54] sm:$0xf]
          %v7752 = vld [vmem:[#allocation22 + $0x58] sm:$0xf]
          %v7753 = vld [vmem:[#allocation22 + $0x5c] sm:$0xf]
          %v7754 = vld [vmem:[#allocation22 + $0x60] sm:$0xf]
          %v7755 = vld [vmem:[#allocation22 + $0x64] sm:$0xf]
          %v7756 = vld [vmem:[#allocation22 + $0x68] sm:$0xf]
          %v7757 = vld [vmem:[#allocation22 + $0x6c] sm:$0xf]
          %v7758 = vld [vmem:[#allocation22 + $0x70] sm:$0xf]
          %v7759 = vld [vmem:[#allocation22 + $0x74] sm:$0xf]
          %v7760 = vld [vmem:[#allocation22 + $0x78] sm:$0xf]
          %v7761 = vld [vmem:[#allocation22 + $0x7c] sm:$0xf]
          %v7762 = vld [vmem:[#allocation22 + $0x80] sm:$0xf]
          %v7763 = vld [vmem:[#allocation22 + $0x84] sm:$0xf]
          %v7764 = vld [vmem:[#allocation22 + $0x88] sm:$0xf]
          %v7765 = vld [vmem:[#allocation22 + $0x8c] sm:$0xf]
          %v7766 = vld [vmem:[#allocation22 + $0x90] sm:$0xf]
          %v7767 = vld [vmem:[#allocation22 + $0x94] sm:$0xf]
          %v7768 = vld [vmem:[#allocation22 + $0x98] sm:$0xf]
          %v7769 = vld [vmem:[#allocation22 + $0x9c] sm:$0xf]
          %v7770 = vld [vmem:[#allocation22 + $0xa0] sm:$0xf]
          %v7771 = vld [vmem:[#allocation22 + $0xa4] sm:$0xf]
          %v7772 = vld [vmem:[#allocation22 + $0xa8] sm:$0xf]
          %v7773 = vld [vmem:[#allocation22 + $0xac] sm:$0xf]
          %v7774 = vld [vmem:[#allocation22 + $0xb0] sm:$0xf]
          %v7775 = vld [vmem:[#allocation22 + $0xb4] sm:$0xf]
          %v7776 = vld [vmem:[#allocation22 + $0xb8] sm:$0xf]
          %v7777 = vld [vmem:[#allocation22 + $0xbc] sm:$0xf]
          %v7778 = vld [vmem:[#allocation24] sm:$0x1]
          %v7780 = vlaneseq
          %v7781 = vshrl.u32 %v7780, 7
          %v7782 = vsub.s32 0, %v7781
          %v7783 = vrot.slane %v7778, %v7782
          %v7833 = vunpack.c.l.b16 %v7730
          %v7834 = vunpack.c.l.b16 %v7731
          %v7835 = vunpack.c.l.b16 %v7732
          %v7836 = vunpack.c.l.b16 %v7733
          %v7837 = vunpack.c.l.b16 %v7734
          %v7838 = vunpack.c.l.b16 %v7735
          %v7839 = vunpack.c.l.b16 %v7736
          %v7840 = vunpack.c.l.b16 %v7737
          %v7841 = vunpack.c.l.b16 %v7738
          %v7842 = vunpack.c.l.b16 %v7739
          %v7843 = vunpack.c.l.b16 %v7740
          %v7844 = vunpack.c.l.b16 %v7741
          %v7845 = vunpack.c.l.b16 %v7742
          %v7846 = vunpack.c.l.b16 %v7743
          %v7847 = vunpack.c.l.b16 %v7744
          %v7848 = vunpack.c.l.b16 %v7745
          %v7849 = vunpack.c.l.b16 %v7746
          %v7850 = vunpack.c.l.b16 %v7747
          %v7851 = vunpack.c.l.b16 %v7748
          %v7852 = vunpack.c.l.b16 %v7749
          %v7853 = vunpack.c.l.b16 %v7750
          %v7854 = vunpack.c.l.b16 %v7751
          %v7855 = vunpack.c.l.b16 %v7752
          %v7856 = vunpack.c.l.b16 %v7753
          %v7857 = vunpack.c.l.b16 %v7754
          %v7858 = vunpack.c.l.b16 %v7755
          %v7859 = vunpack.c.l.b16 %v7756
          %v7860 = vunpack.c.l.b16 %v7757
          %v7861 = vunpack.c.l.b16 %v7758
          %v7862 = vunpack.c.l.b16 %v7759
          %v7863 = vunpack.c.l.b16 %v7760
          %v7864 = vunpack.c.l.b16 %v7761
          %v7865 = vunpack.c.l.b16 %v7762
          %v7866 = vunpack.c.l.b16 %v7763
          %v7867 = vunpack.c.l.b16 %v7764
          %v7868 = vunpack.c.l.b16 %v7765
          %v7869 = vunpack.c.l.b16 %v7766
          %v7870 = vunpack.c.l.b16 %v7767
          %v7871 = vunpack.c.l.b16 %v7768
          %v7872 = vunpack.c.l.b16 %v7769
          %v7873 = vunpack.c.l.b16 %v7770
          %v7874 = vunpack.c.l.b16 %v7771
          %v7875 = vunpack.c.l.b16 %v7772
          %v7876 = vunpack.c.l.b16 %v7773
          %v7877 = vunpack.c.l.b16 %v7774
          %v7878 = vunpack.c.l.b16 %v7775
          %v7879 = vunpack.c.l.b16 %v7776
          %v7880 = vunpack.c.l.b16 %v7777
          %v7881 = vpack.c.b16 %v7834, %v7833
          %v7882 = vpack.c.b16 %v7836, %v7835
          %v7883 = vpack.c.b16 %v7838, %v7837
          %v7884 = vpack.c.b16 %v7840, %v7839
          %v7885 = vpack.c.b16 %v7842, %v7841
          %v7886 = vpack.c.b16 %v7844, %v7843
          %v7887 = vpack.c.b16 %v7846, %v7845
          %v7888 = vpack.c.b16 %v7848, %v7847
          %v7889 = vpack.c.b16 %v7850, %v7849
          %v7890 = vpack.c.b16 %v7852, %v7851
          %v7891 = vpack.c.b16 %v7854, %v7853
          %v7892 = vpack.c.b16 %v7856, %v7855
          %v7893 = vpack.c.b16 %v7858, %v7857
          %v7894 = vpack.c.b16 %v7860, %v7859
          %v7895 = vpack.c.b16 %v7862, %v7861
          %v7896 = vpack.c.b16 %v7864, %v7863
          %v7897 = vpack.c.b16 %v7866, %v7865
          %v7898 = vpack.c.b16 %v7868, %v7867
          %v7899 = vpack.c.b16 %v7870, %v7869
          %v7900 = vpack.c.b16 %v7872, %v7871
          %v7901 = vpack.c.b16 %v7874, %v7873
          %v7902 = vpack.c.b16 %v7876, %v7875
          %v7903 = vpack.c.b16 %v7878, %v7877
          %v7904 = vpack.c.b16 %v7880, %v7879
          %7929 = vmatprep.subr.bf16.mxu0 0
          %7930 = vmatpush1.bf16.msra.mxu0 %v7881
          %7931 = vmatprep.subr.bf16.mxu0 0
          %7932 = vmatpush1.bf16.msra.mxu0 %v7882
          %7933 = vmatprep.subr.bf16.mxu0 0
          %7934 = vmatpush1.bf16.msra.mxu0 %v7883
          %7935 = vmatprep.subr.bf16.mxu0 0
          %7936 = vmatpush1.bf16.msra.mxu0 %v7884
          %7937 = vmatprep.subr.bf16.mxu0 0
          %7938 = vmatpush1.bf16.msra.mxu0 %v7885
          %7939 = vmatprep.subr.bf16.mxu0 0
          %7940 = vmatpush1.bf16.msra.mxu0 %v7886
          %7941 = vmatprep.subr.bf16.mxu0 0
          %7942 = vmatpush1.bf16.msra.mxu0 %v7887
          %7943 = vmatprep.subr.bf16.mxu0 0
          %7944 = vmatpush1.bf16.msra.mxu0 %v7888
          %7945 = vmatprep.subr.bf16.mxu0 0
          %7946 = vmatpush1.bf16.msra.mxu0 %v7889
          %7947 = vmatprep.subr.bf16.mxu0 0
          %7948 = vmatpush1.bf16.msra.mxu0 %v7890
          %7949 = vmatprep.subr.bf16.mxu0 0
          %7950 = vmatpush1.bf16.msra.mxu0 %v7891
          %7951 = vmatprep.subr.bf16.mxu0 0
          %7952 = vmatpush1.bf16.msra.mxu0 %v7892
          %7953 = vmatprep.subr.bf16.mxu0 0
          %7954 = vmatpush1.bf16.msra.mxu0 %v7893
          %7955 = vmatprep.subr.bf16.mxu0 0
          %7956 = vmatpush1.bf16.msra.mxu0 %v7894
          %7957 = vmatprep.subr.bf16.mxu0 0
          %7958 = vmatpush1.bf16.msra.mxu0 %v7895
          %7959 = vmatprep.subr.bf16.mxu0 0
          %7960 = vmatpush1.bf16.msra.mxu0 %v7896
          %7961 = vmatprep.mubr.bf16.mxu0 %v7728
          %7962 = vmatmul.mubr.bf16.gmra.mrb[0].mxu0 %v7727
          %v7963 = vpop.f32.mrb[0].mxu0
          %v7964 = vadd.f32 %v7783, %v7963
          %v7965 = vpop.f32.mrb[0].mxu0
          %v7966 = vpop.f32.mrb[0].mxu0
          %v7967 = vadd.f32 %v7783, %v7966
          %v7968 = vpop.f32.mrb[0].mxu0
          %7969 = vdwg.mxu0
          %7970 = vmatprep.subr.bf16.mxu0 0
          %7971 = vmatpush1.bf16.msra.mxu0 %v7897
          %7972 = vmatprep.subr.bf16.mxu0 0
          %7973 = vmatpush1.bf16.msra.mxu0 %v7898
          %7974 = vmatprep.subr.bf16.mxu0 0
          %7975 = vmatpush1.bf16.msra.mxu0 %v7899
          %7976 = vmatprep.subr.bf16.mxu0 0
          %7977 = vmatpush1.bf16.msra.mxu0 %v7900
          %7978 = vmatprep.subr.bf16.mxu0 0
          %7979 = vmatpush1.bf16.msra.mxu0 %v7901
          %7980 = vmatprep.subr.bf16.mxu0 0
          %7981 = vmatpush1.bf16.msra.mxu0 %v7902
          %7982 = vmatprep.subr.bf16.mxu0 0
          %7983 = vmatpush1.bf16.msra.mxu0 %v7903
          %7984 = vmatprep.subr.bf16.mxu0 0
          %7985 = vmatpush1.bf16.msra.mxu0 %v7904
          %7986 = vmatprep.subr.bf16.mxu0 0
          %7987 = vmatpush1.bf16.msra.mxu0 0
          %7988 = vmatprep.subr.bf16.mxu0 0
          %7989 = vmatpush1.bf16.msra.mxu0 0
          %7990 = vmatprep.subr.bf16.mxu0 0
          %7991 = vmatpush1.bf16.msra.mxu0 0
          %7992 = vmatprep.subr.bf16.mxu0 0
          %7993 = vmatpush1.bf16.msra.mxu0 0
          %7994 = vmatprep.subr.bf16.mxu0 0
          %7995 = vmatpush1.bf16.msra.mxu0 0
          %7996 = vmatprep.subr.bf16.mxu0 0
          %7997 = vmatpush1.bf16.msra.mxu0 0
          %7998 = vmatprep.subr.bf16.mxu0 0
          %7999 = vmatpush1.bf16.msra.mxu0 0
          %8000 = vmatprep.subr.bf16.mxu0 0
          %8001 = vmatpush1.bf16.msra.mxu0 0
          %8002 = vmatprep.mubr.bf16.mxu0 0
          %8003 = vmatmul.mubr.bf16.gmra.mrb[0].mxu0 %v7729
          %v8004 = vpop.f32.mrb[0].mxu0
          %v8005 = vadd.f32 %v7964, %v8004
          %v8006 = vpop.f32.mrb[0].mxu0
          %v8007 = vpop.f32.mrb[0].mxu0
          %v8008 = vadd.f32 %v7967, %v8007
          %v8009 = vpop.f32.mrb[0].mxu0
          %8010 = vdwg.mxu0
          %v8011 = vmax.f32 %v8005, 0.0
          %v8012 = vmax.f32 %v8008, 0.0
          %v8013 = vpack.c.bf16 %v8012, %v8011
          %v8014 = vld [vmem:[#allocation25] sm:$0xf]
          %v8015 = vld [vmem:[#allocation25 + $0x4] sm:$0xf]
          %v8016 = vld [vmem:[#allocation25 + $0x8] sm:$0xf]
          %v8017 = vld [vmem:[#allocation25 + $0xc] sm:$0xf]
          %v8018 = vld [vmem:[#allocation25 + $0x10] sm:$0xf]
          %v8019 = vld [vmem:[#allocation25 + $0x14] sm:$0xf]
          %v8020 = vld [vmem:[#allocation25 + $0x18] sm:$0xf]
          %v8021 = vld [vmem:[#allocation25 + $0x1c] sm:$0xf]
          %v8022 = vld [vmem:[#allocation25 + $0x20] sm:$0xf]
          %v8023 = vld [vmem:[#allocation25 + $0x24] sm:$0xf]
          %v8024 = vld [vmem:[#allocation25 + $0x28] sm:$0xf]
          %v8025 = vld [vmem:[#allocation25 + $0x2c] sm:$0xf]
          %v8026 = vld [vmem:[#allocation25 + $0x30] sm:$0xf]
          %v8027 = vld [vmem:[#allocation25 + $0x34] sm:$0xf]
          %v8028 = vld [vmem:[#allocation25 + $0x38] sm:$0xf]
          %v8029 = vld [vmem:[#allocation25 + $0x3c] sm:$0xf]
          %v8030 = vld [vmem:[#allocation27] sm:$0x1]
          %v8032 = vlaneseq
          %v8033 = vshrl.u32 %v8032, 7
          %v8034 = vsub.s32 0, %v8033
          %v8035 = vrot.slane %v8030, %v8034
          %v8053 = vunpack.c.l.b16 %v8014
          %v8054 = vunpack.c.l.b16 %v8015
          %v8055 = vunpack.c.l.b16 %v8016
          %v8056 = vunpack.c.l.b16 %v8017
          %v8057 = vunpack.c.l.b16 %v8018
          %v8058 = vunpack.c.l.b16 %v8019
          %v8059 = vunpack.c.l.b16 %v8020
          %v8060 = vunpack.c.l.b16 %v8021
          %v8061 = vunpack.c.l.b16 %v8022
          %v8062 = vunpack.c.l.b16 %v8023
          %v8063 = vunpack.c.l.b16 %v8024
          %v8064 = vunpack.c.l.b16 %v8025
          %v8065 = vunpack.c.l.b16 %v8026
          %v8066 = vunpack.c.l.b16 %v8027
          %v8067 = vunpack.c.l.b16 %v8028
          %v8068 = vunpack.c.l.b16 %v8029
          %v8069 = vpack.c.b16 %v8054, %v8053
          %v8070 = vpack.c.b16 %v8056, %v8055
          %v8071 = vpack.c.b16 %v8058, %v8057
          %v8072 = vpack.c.b16 %v8060, %v8059
          %v8073 = vpack.c.b16 %v8062, %v8061
          %v8074 = vpack.c.b16 %v8064, %v8063
          %v8075 = vpack.c.b16 %v8066, %v8065
          %v8076 = vpack.c.b16 %v8068, %v8067
          %8085 = vmatprep.subr.bf16.mxu0 0
          %8086 = vmatpush1.bf16.msra.mxu0 %v8069
          %8087 = vmatprep.subr.bf16.mxu0 0
          %8088 = vmatpush1.bf16.msra.mxu0 %v8070
          %8089 = vmatprep.subr.bf16.mxu0 0
          %8090 = vmatpush1.bf16.msra.mxu0 %v8071
          %8091 = vmatprep.subr.bf16.mxu0 0
          %8092 = vmatpush1.bf16.msra.mxu0 %v8072
          %8093 = vmatprep.subr.bf16.mxu0 0
          %8094 = vmatpush1.bf16.msra.mxu0 %v8073
          %8095 = vmatprep.subr.bf16.mxu0 0
          %8096 = vmatpush1.bf16.msra.mxu0 %v8074
          %8097 = vmatprep.subr.bf16.mxu0 0
          %8098 = vmatpush1.bf16.msra.mxu0 %v8075
          %8099 = vmatprep.subr.bf16.mxu0 0
          %8100 = vmatpush1.bf16.msra.mxu0 %v8076
          %8101 = vmatprep.subr.bf16.mxu0 0
          %8102 = vmatpush1.bf16.msra.mxu0 0
          %8103 = vmatprep.subr.bf16.mxu0 0
          %8104 = vmatpush1.bf16.msra.mxu0 0
          %8105 = vmatprep.subr.bf16.mxu0 0
          %8106 = vmatpush1.bf16.msra.mxu0 0
          %8107 = vmatprep.subr.bf16.mxu0 0
          %8108 = vmatpush1.bf16.msra.mxu0 0
          %8109 = vmatprep.subr.bf16.mxu0 0
          %8110 = vmatpush1.bf16.msra.mxu0 0
          %8111 = vmatprep.subr.bf16.mxu0 0
          %8112 = vmatpush1.bf16.msra.mxu0 0
          %8113 = vmatprep.subr.bf16.mxu0 0
          %8114 = vmatpush1.bf16.msra.mxu0 0
          %8115 = vmatprep.subr.bf16.mxu0 0
          %8116 = vmatpush1.bf16.msra.mxu0 0
          %8117 = vmatprep.mubr.bf16.mxu0 0
          %8118 = vmatmul.mubr.bf16.gmra.mrb[0].mxu0 %v8013
          %v8119 = vpop.f32.mrb[0].mxu0
          %v8120 = vadd.f32 %v8035, %v8119
          %v8121 = vpop.f32.mrb[0].mxu0
          %v8122 = vpop.f32.mrb[0].mxu0
          %v8123 = vadd.f32 %v8035, %v8122
          %v8124 = vpop.f32.mrb[0].mxu0
          %8125 = vdwg.mxu0
          %v8126 = vmax.f32 %v8120, 0.0
          %v8127 = vmax.f32 %v8123, 0.0
          %v8128 = vld [vmem:[#allocation28] sm:$0x1]
          %v8130 = vlaneseq
          %v8131 = vshrl.u32 %v8130, 7
          %v8132 = vsub.s32 0, %v8131
          %v8133 = vrot.slane %v8128, %v8132
          %v8135 = vmul.f32 %v8126, %v8133
          %v8136 = vmul.f32 %v8127, %v8133
          %8137 = vadd.xlane.f32.xlu0 %v8135
          %v8138 = vpop.xlane.xlu0 %8137
          %8139 = vadd.xlane.f32.xlu0 %v8136
          %v8140 = vpop.xlane.xlu0 %8139
          %v8141 = vld [vmem:[#allocation3] sm:$0x1]
          %v8143 = vlaneseq
          %v8144 = vshrl.u32 %v8143, 7
          %v8145 = vsub.s32 0, %v8144
          %v8146 = vrot.slane %v8141, %v8145
          %v8148 = vadd.f32 %v8138, %v8146
          %v8149 = vadd.f32 %v8140, %v8146
          %v8150 = vld [vmem:[%s2] sm:$0xff]
          %v8151 = vld [vmem:[%s2 + $0x8] sm:$0xff]
          %vm8152 = vcmp.gt.f32.partialorder %v8150, 0.0
          %vm8153 = vcmp.gt.f32.partialorder %v8151, 0.0
          %v8154 = vsel %vm8152, %v8148, -1e+09
          %v8155 = vsel %vm8153, %v8149, -1e+09
          %vm8156 = vcmask 7168
          %v8157 = vsel %vm8156, %v8154, -inf
          %v8158 = vrot.slane %v8157, 4
          %v8159 = vmax.f32 %v8157, %v8158
          %v8160 = vrot.slane %v8159, 2
          %v8161 = vmax.f32 %v8159, %v8160
          %v8162 = vrot.slane %v8161, 1
          %v8163 = vmax.f32 %v8161, %v8162
          %v8164 = vsel %vm8156, %v8155, -inf
          %v8165 = vrot.slane %v8164, 4
          %v8166 = vmax.f32 %v8164, %v8165
          %v8167 = vrot.slane %v8166, 2
          %v8168 = vmax.f32 %v8166, %v8167
          %v8169 = vrot.slane %v8168, 1
          %v8170 = vmax.f32 %v8168, %v8169
          %v8171 = vsub.f32 %v8154, %v8163
          %v8172 = vsub.f32 %v8155, %v8170
          %v8173 = vmul.f32 %v8171, 1.442695
          %v8174 = vpow.pop %v8173
          %v8175 = vmul.f32 %v8172, 1.442695
          %v8176 = vpow.pop %v8175
          %v8177 = vsel %vm8156, %v8174, 0.0
          %v8178 = vrot.slane %v8177, 4
          %v8179 = vadd.f32 %v8177, %v8178
          %v8180 = vrot.slane %v8179, 2
          %v8181 = vadd.f32 %v8179, %v8180
          %v8182 = vrot.slane %v8181, 1
          %v8183 = vadd.f32 %v8181, %v8182
          %v8184 = vsel %vm8156, %v8176, 0.0
          %v8185 = vrot.slane %v8184, 4
          %v8186 = vadd.f32 %v8184, %v8185
          %v8187 = vrot.slane %v8186, 2
          %v8188 = vadd.f32 %v8186, %v8187
          %v8189 = vrot.slane %v8188, 1
          %v8190 = vadd.f32 %v8188, %v8189
          %v8191 = vrcp.pop %v8183
          %v8192 = vrcp.pop %v8190
          %v8193 = vmul.f32 %v8174, %v8191
          %v8194 = vmul.f32 %v8176, %v8192
          %8196 = vset.pattern.permute.xlu0 0
          %8197 = vperm.xlu0 %8196, %v8193
          %v8198 = vpop.permute.xlu0 %8197
          %8201 = vset.pattern.permute.xlu0 0
          %8202 = vperm.xlu0 %8201, %v8194
          %v8203 = vpop.permute.xlu0 %8202
          %v8205 = vmul.f32 %v8198, %v7711
          %v8206 = vmul.f32 %v8198, %v7712
          %v8207 = vmul.f32 %v8198, %v7713
          %v8208 = vmul.f32 %v8203, %v7714
          %v8209 = vmul.f32 %v8203, %v7715
          %v8210 = vmul.f32 %v8203, %v7716
          %v8211 = vrot.slane %v8205, 4
          %v8212 = vadd.f32 %v8205, %v8211
          %v8213 = vrot.slane %v8212, 2
          %v8214 = vadd.f32 %v8212, %v8213
          %v8215 = vrot.slane %v8214, 1
          %v8216 = vadd.f32 %v8214, %v8215
          %v8217 = vrot.slane %v8206, 4
          %v8218 = vadd.f32 %v8206, %v8217
          %v8219 = vrot.slane %v8218, 2
          %v8220 = vadd.f32 %v8218, %v8219
          %v8221 = vrot.slane %v8220, 1
          %v8222 = vadd.f32 %v8220, %v8221
          %v8223 = vrot.slane %v8207, 4
          %v8224 = vadd.f32 %v8207, %v8223
          %v8225 = vrot.slane %v8224, 2
          %v8226 = vadd.f32 %v8224, %v8225
          %v8227 = vrot.slane %v8226, 1
          %v8228 = vadd.f32 %v8226, %v8227
          %v8229 = vrot.slane %v8208, 4
          %v8230 = vadd.f32 %v8208, %v8229
          %v8231 = vrot.slane %v8230, 2
          %v8232 = vadd.f32 %v8230, %v8231
          %v8233 = vrot.slane %v8232, 1
          %v8234 = vadd.f32 %v8232, %v8233
          %v8235 = vrot.slane %v8209, 4
          %v8236 = vadd.f32 %v8209, %v8235
          %v8237 = vrot.slane %v8236, 2
          %v8238 = vadd.f32 %v8236, %v8237
          %v8239 = vrot.slane %v8238, 1
          %v8240 = vadd.f32 %v8238, %v8239
          %v8241 = vrot.slane %v8210, 4
          %v8242 = vadd.f32 %v8210, %v8241
          %v8243 = vrot.slane %v8242, 2
          %v8244 = vadd.f32 %v8242, %v8243
          %v8245 = vrot.slane %v8244, 1
          %v8246 = vadd.f32 %v8244, %v8245
          %v8247 = vpack.c.bf16 %v8216, %v8216
          %v8248 = vpack.c.bf16 %v8222, %v8222
          %v8249 = vpack.c.bf16 %v8228, %v8228
          %v8250 = vpack.c.bf16 %v8234, %v8234
          %v8251 = vpack.c.bf16 %v8240, %v8240
          %v8252 = vpack.c.bf16 %v8246, %v8246
          %v8253 = vld [vmem:[#allocation30] sm:$0xf]
          %v8254 = vld [vmem:[#allocation30 + $0x4] sm:$0xf]
          %v8255 = vld [vmem:[#allocation30 + $0x8] sm:$0xf]
          %v8256 = vld [vmem:[#allocation30 + $0xc] sm:$0xf]
          %v8257 = vld [vmem:[#allocation30 + $0x10] sm:$0xf]
          %v8258 = vld [vmem:[#allocation30 + $0x14] sm:$0xf]
          %v8259 = vld [vmem:[#allocation30 + $0x18] sm:$0xf]
          %v8260 = vld [vmem:[#allocation30 + $0x1c] sm:$0xf]
          %v8261 = vld [vmem:[#allocation30 + $0x20] sm:$0xf]
          %v8262 = vld [vmem:[#allocation30 + $0x24] sm:$0xf]
          %v8263 = vld [vmem:[#allocation30 + $0x28] sm:$0xf]
          %v8264 = vld [vmem:[#allocation30 + $0x2c] sm:$0xf]
          %v8265 = vld [vmem:[#allocation30 + $0x30] sm:$0xf]
          %v8266 = vld [vmem:[#allocation30 + $0x34] sm:$0xf]
          %v8267 = vld [vmem:[#allocation30 + $0x38] sm:$0xf]
          %v8268 = vld [vmem:[#allocation30 + $0x3c] sm:$0xf]
          %v8269 = vld [vmem:[#allocation30 + $0x40] sm:$0xf]
          %v8270 = vld [vmem:[#allocation30 + $0x44] sm:$0xf]
          %v8271 = vld [vmem:[#allocation30 + $0x48] sm:$0xf]
          %v8272 = vld [vmem:[#allocation30 + $0x4c] sm:$0xf]
          %v8273 = vld [vmem:[#allocation30 + $0x50] sm:$0xf]
          %v8274 = vld [vmem:[#allocation30 + $0x54] sm:$0xf]
          %v8275 = vld [vmem:[#allocation30 + $0x58] sm:$0xf]
          %v8276 = vld [vmem:[#allocation30 + $0x5c] sm:$0xf]
          %v8277 = vld [vmem:[#allocation30 + $0x60] sm:$0xf]
          %v8278 = vld [vmem:[#allocation30 + $0x64] sm:$0xf]
          %v8279 = vld [vmem:[#allocation30 + $0x68] sm:$0xf]
          %v8280 = vld [vmem:[#allocation30 + $0x6c] sm:$0xf]
          %v8281 = vld [vmem:[#allocation30 + $0x70] sm:$0xf]
          %v8282 = vld [vmem:[#allocation30 + $0x74] sm:$0xf]
          %v8283 = vld [vmem:[#allocation30 + $0x78] sm:$0xf]
          %v8284 = vld [vmem:[#allocation30 + $0x7c] sm:$0xf]
          %v8285 = vld [vmem:[#allocation30 + $0x80] sm:$0xf]
          %v8286 = vld [vmem:[#allocation30 + $0x84] sm:$0xf]
          %v8287 = vld [vmem:[#allocation30 + $0x88] sm:$0xf]
          %v8288 = vld [vmem:[#allocation30 + $0x8c] sm:$0xf]
          %v8289 = vld [vmem:[#allocation30 + $0x90] sm:$0xf]
          %v8290 = vld [vmem:[#allocation30 + $0x94] sm:$0xf]
          %v8291 = vld [vmem:[#allocation30 + $0x98] sm:$0xf]
          %v8292 = vld [vmem:[#allocation30 + $0x9c] sm:$0xf]
          %v8293 = vld [vmem:[#allocation30 + $0xa0] sm:$0xf]
          %v8294 = vld [vmem:[#allocation30 + $0xa4] sm:$0xf]
          %v8295 = vld [vmem:[#allocation30 + $0xa8] sm:$0xf]
          %v8296 = vld [vmem:[#allocation30 + $0xac] sm:$0xf]
          %v8297 = vld [vmem:[#allocation30 + $0xb0] sm:$0xf]
          %v8298 = vld [vmem:[#allocation30 + $0xb4] sm:$0xf]
          %v8299 = vld [vmem:[#allocation30 + $0xb8] sm:$0xf]
          %v8300 = vld [vmem:[#allocation30 + $0xbc] sm:$0xf]
          %v8301 = vld [vmem:[#allocation31] sm:$0x1]
          %v8303 = vlaneseq
          %v8304 = vshrl.u32 %v8303, 7
          %v8305 = vsub.s32 0, %v8304
          %v8306 = vrot.slane %v8301, %v8305
          %v8314 = vunpack.c.l.b16 %v8247
          %v8315 = vunpack.c.l.b16 %v8248
          %v8316 = vunpack.c.l.b16 %v8249
          %v8317 = vunpack.c.l.b16 %v8250
          %v8318 = vunpack.c.l.b16 %v8251
          %v8319 = vunpack.c.l.b16 %v8252
          %vm8320 = vcmask 1041409
          %v8321 = vsel %vm8320, %v8317, %v8314
          %v8322 = vsel %vm8320, %v8318, %v8315
          %v8323 = vsel %vm8320, %v8319, %v8316
          %v8324 = vpack.c.b16 %v8321, %v8321
          %v8325 = vpack.c.b16 %v8322, %v8322
          %v8326 = vpack.c.b16 %v8323, %v8323
          %v8378 = vunpack.c.l.b16 %v8253
          %v8379 = vunpack.c.l.b16 %v8254
          %v8380 = vunpack.c.l.b16 %v8255
          %v8381 = vunpack.c.l.b16 %v8256
          %v8382 = vunpack.c.l.b16 %v8257
          %v8383 = vunpack.c.l.b16 %v8258
          %v8384 = vunpack.c.l.b16 %v8259
          %v8385 = vunpack.c.l.b16 %v8260
          %v8386 = vunpack.c.l.b16 %v8261
          %v8387 = vunpack.c.l.b16 %v8262
          %v8388 = vunpack.c.l.b16 %v8263
          %v8389 = vunpack.c.l.b16 %v8264
          %v8390 = vunpack.c.l.b16 %v8265
          %v8391 = vunpack.c.l.b16 %v8266
          %v8392 = vunpack.c.l.b16 %v8267
          %v8393 = vunpack.c.l.b16 %v8268
          %v8394 = vunpack.c.l.b16 %v8269
          %v8395 = vunpack.c.l.b16 %v8270
          %v8396 = vunpack.c.l.b16 %v8271
          %v8397 = vunpack.c.l.b16 %v8272
          %v8398 = vunpack.c.l.b16 %v8273
          %v8399 = vunpack.c.l.b16 %v8274
          %v8400 = vunpack.c.l.b16 %v8275
          %v8401 = vunpack.c.l.b16 %v8276
          %v8402 = vunpack.c.l.b16 %v8277
          %v8403 = vunpack.c.l.b16 %v8278
          %v8404 = vunpack.c.l.b16 %v8279
          %v8405 = vunpack.c.l.b16 %v8280
          %v8406 = vunpack.c.l.b16 %v8281
          %v8407 = vunpack.c.l.b16 %v8282
          %v8408 = vunpack.c.l.b16 %v8283
          %v8409 = vunpack.c.l.b16 %v8284
          %v8410 = vunpack.c.l.b16 %v8285
          %v8411 = vunpack.c.l.b16 %v8286
          %v8412 = vunpack.c.l.b16 %v8287
          %v8413 = vunpack.c.l.b16 %v8288
          %v8414 = vunpack.c.l.b16 %v8289
          %v8415 = vunpack.c.l.b16 %v8290
          %v8416 = vunpack.c.l.b16 %v8291
          %v8417 = vunpack.c.l.b16 %v8292
          %v8418 = vunpack.c.l.b16 %v8293
          %v8419 = vunpack.c.l.b16 %v8294
          %v8420 = vunpack.c.l.b16 %v8295
          %v8421 = vunpack.c.l.b16 %v8296
          %v8422 = vunpack.c.l.b16 %v8297
          %v8423 = vunpack.c.l.b16 %v8298
          %v8424 = vunpack.c.l.b16 %v8299
          %v8425 = vunpack.c.l.b16 %v8300
          %v8426 = vpack.c.b16 %v8379, %v8378
          %v8427 = vpack.c.b16 %v8381, %v8380
          %v8428 = vpack.c.b16 %v8383, %v8382
          %v8429 = vpack.c.b16 %v8385, %v8384
          %v8430 = vpack.c.b16 %v8387, %v8386
          %v8431 = vpack.c.b16 %v8389, %v8388
          %v8432 = vpack.c.b16 %v8391, %v8390
          %v8433 = vpack.c.b16 %v8393, %v8392
          %v8434 = vpack.c.b16 %v8395, %v8394
          %v8435 = vpack.c.b16 %v8397, %v8396
          %v8436 = vpack.c.b16 %v8399, %v8398
          %v8437 = vpack.c.b16 %v8401, %v8400
          %v8438 = vpack.c.b16 %v8403, %v8402
          %v8439 = vpack.c.b16 %v8405, %v8404
          %v8440 = vpack.c.b16 %v8407, %v8406
          %v8441 = vpack.c.b16 %v8409, %v8408
          %v8442 = vpack.c.b16 %v8411, %v8410
          %v8443 = vpack.c.b16 %v8413, %v8412
          %v8444 = vpack.c.b16 %v8415, %v8414
          %v8445 = vpack.c.b16 %v8417, %v8416
          %v8446 = vpack.c.b16 %v8419, %v8418
          %v8447 = vpack.c.b16 %v8421, %v8420
          %v8448 = vpack.c.b16 %v8423, %v8422
          %v8449 = vpack.c.b16 %v8425, %v8424
          %8474 = vmatprep.subr.bf16.mxu0 0
          %8475 = vmatpush1.bf16.msra.mxu0 %v8426
          %8476 = vmatprep.subr.bf16.mxu0 0
          %8477 = vmatpush1.bf16.msra.mxu0 %v8427
          %8478 = vmatprep.subr.bf16.mxu0 0
          %8479 = vmatpush1.bf16.msra.mxu0 %v8428
          %8480 = vmatprep.subr.bf16.mxu0 0
          %8481 = vmatpush1.bf16.msra.mxu0 %v8429
          %8482 = vmatprep.subr.bf16.mxu0 0
          %8483 = vmatpush1.bf16.msra.mxu0 %v8430
          %8484 = vmatprep.subr.bf16.mxu0 0
          %8485 = vmatpush1.bf16.msra.mxu0 %v8431
          %8486 = vmatprep.subr.bf16.mxu0 0
          %8487 = vmatpush1.bf16.msra.mxu0 %v8432
          %8488 = vmatprep.subr.bf16.mxu0 0
          %8489 = vmatpush1.bf16.msra.mxu0 %v8433
          %8490 = vmatprep.subr.bf16.mxu0 0
          %8491 = vmatpush1.bf16.msra.mxu0 %v8434
          %8492 = vmatprep.subr.bf16.mxu0 0
          %8493 = vmatpush1.bf16.msra.mxu0 %v8435
          %8494 = vmatprep.subr.bf16.mxu0 0
          %8495 = vmatpush1.bf16.msra.mxu0 %v8436
          %8496 = vmatprep.subr.bf16.mxu0 0
          %8497 = vmatpush1.bf16.msra.mxu0 %v8437
          %8498 = vmatprep.subr.bf16.mxu0 0
          %8499 = vmatpush1.bf16.msra.mxu0 %v8438
          %8500 = vmatprep.subr.bf16.mxu0 0
          %8501 = vmatpush1.bf16.msra.mxu0 %v8439
          %8502 = vmatprep.subr.bf16.mxu0 0
          %8503 = vmatpush1.bf16.msra.mxu0 %v8440
          %8504 = vmatprep.subr.bf16.mxu0 0
          %8505 = vmatpush1.bf16.msra.mxu0 %v8441
          %8506 = vmatprep.mubr.bf16.mxu0 %v8325
          %8507 = vmatmul.mubr.bf16.gmra.mrb[0].mxu0 %v8324
          %v8508 = vpop.f32.mrb[0].mxu0
          %v8509 = vadd.f32 %v8306, %v8508
          %v8510 = vpop.f32.mrb[0].mxu0
          %v8511 = vpop.f32.mrb[0].mxu0
          %v8512 = vpop.f32.mrb[0].mxu0
          %8513 = vdwg.mxu0
          %8514 = vmatprep.subr.bf16.mxu0 0
          %8515 = vmatpush1.bf16.msra.mxu0 %v8442
          %8516 = vmatprep.subr.bf16.mxu0 0
          %8517 = vmatpush1.bf16.msra.mxu0 %v8443
          %8518 = vmatprep.subr.bf16.mxu0 0
          %8519 = vmatpush1.bf16.msra.mxu0 %v8444
          %8520 = vmatprep.subr.bf16.mxu0 0
          %8521 = vmatpush1.bf16.msra.mxu0 %v8445
          %8522 = vmatprep.subr.bf16.mxu0 0
          %8523 = vmatpush1.bf16.msra.mxu0 %v8446
          %8524 = vmatprep.subr.bf16.mxu0 0
          %8525 = vmatpush1.bf16.msra.mxu0 %v8447
          %8526 = vmatprep.subr.bf16.mxu0 0
          %8527 = vmatpush1.bf16.msra.mxu0 %v8448
          %8528 = vmatprep.subr.bf16.mxu0 0
          %8529 = vmatpush1.bf16.msra.mxu0 %v8449
          %8530 = vmatprep.subr.bf16.mxu0 0
          %8531 = vmatpush1.bf16.msra.mxu0 0
          %8532 = vmatprep.subr.bf16.mxu0 0
          %8533 = vmatpush1.bf16.msra.mxu0 0
          %8534 = vmatprep.subr.bf16.mxu0 0
          %8535 = vmatpush1.bf16.msra.mxu0 0
          %8536 = vmatprep.subr.bf16.mxu0 0
          %8537 = vmatpush1.bf16.msra.mxu0 0
          %8538 = vmatprep.subr.bf16.mxu0 0
          %8539 = vmatpush1.bf16.msra.mxu0 0
          %8540 = vmatprep.subr.bf16.mxu0 0
          %8541 = vmatpush1.bf16.msra.mxu0 0
          %8542 = vmatprep.subr.bf16.mxu0 0
          %8543 = vmatpush1.bf16.msra.mxu0 0
          %8544 = vmatprep.subr.bf16.mxu0 0
          %8545 = vmatpush1.bf16.msra.mxu0 0
          %8546 = vmatprep.mubr.bf16.mxu0 0
          %8547 = vmatmul.mubr.bf16.gmra.mrb[0].mxu0 %v8326
          %v8548 = vpop.f32.mrb[0].mxu0
          %v8549 = vadd.f32 %v8509, %v8548
          %v8550 = vpop.f32.mrb[0].mxu0
          %v8551 = vpop.f32.mrb[0].mxu0
          %v8552 = vpop.f32.mrb[0].mxu0
          %8553 = vdwg.mxu0
          %v8554 = vmax.f32 %v8549, 0.0
          %v8555 = vld [vmem:[#allocation33] sm:$0xff]
          %v8556 = vld [vmem:[#allocation33 + $0x8] sm:$0xff]
          %v8557 = vld [vmem:[#allocation33 + $0x10] sm:$0xff]
          %v8558 = vld [vmem:[#allocation33 + $0x18] sm:$0xff]
          %v8559 = vld [vmem:[#allocation33 + $0x20] sm:$0xff]
          %v8560 = vld [vmem:[#allocation33 + $0x28] sm:$0xff]
          %v8561 = vld [vmem:[#allocation33 + $0x30] sm:$0xff]
          %v8562 = vld [vmem:[#allocation33 + $0x38] sm:$0xff]
          %v8563 = vld [vmem:[#allocation33 + $0x40] sm:$0xff]
          %v8564 = vld [vmem:[#allocation33 + $0x48] sm:$0xff]
          %v8565 = vld [vmem:[#allocation33 + $0x50] sm:$0xff]
          %v8566 = vld [vmem:[#allocation33 + $0x58] sm:$0xff]
          %v8567 = vld [vmem:[#allocation33 + $0x60] sm:$0xff]
          %v8568 = vld [vmem:[#allocation33 + $0x68] sm:$0xff]
          %v8569 = vld [vmem:[#allocation33 + $0x70] sm:$0xff]
          %v8570 = vld [vmem:[#allocation33 + $0x78] sm:$0xff]
          %v8571 = vld [vmem:[#allocation34] sm:$0x1]
          %v8573 = vlaneseq
          %v8574 = vshrl.u32 %v8573, 7
          %v8575 = vsub.s32 0, %v8574
          %v8576 = vrot.slane %v8571, %v8575
          %8578 = vmatprep.subr.mxu0 0.0
          %8579 = vmatpush1.msra.mxu0 %v8555
          %8580 = vmatprep.subr.mxu0 0.0
          %8581 = vmatpush1.msra.mxu0 %v8556
          %8582 = vmatprep.subr.mxu0 0.0
          %8583 = vmatpush1.msra.mxu0 %v8557
          %8584 = vmatprep.subr.mxu0 0.0
          %8585 = vmatpush1.msra.mxu0 %v8558
          %8586 = vmatprep.subr.mxu0 0.0
          %8587 = vmatpush1.msra.mxu0 %v8559
          %8588 = vmatprep.subr.mxu0 0.0
          %8589 = vmatpush1.msra.mxu0 %v8560
          %8590 = vmatprep.subr.mxu0 0.0
          %8591 = vmatpush1.msra.mxu0 %v8561
          %8592 = vmatprep.subr.mxu0 0.0
          %8593 = vmatpush1.msra.mxu0 %v8562
          %8594 = vmatprep.subr.mxu0 0.0
          %8595 = vmatpush1.msra.mxu0 %v8563
          %8596 = vmatprep.subr.mxu0 0.0
          %8597 = vmatpush1.msra.mxu0 %v8564
          %8598 = vmatprep.subr.mxu0 0.0
          %8599 = vmatpush1.msra.mxu0 %v8565
          %8600 = vmatprep.subr.mxu0 0.0
          %8601 = vmatpush1.msra.mxu0 %v8566
          %8602 = vmatprep.subr.mxu0 0.0
          %8603 = vmatpush1.msra.mxu0 %v8567
          %8604 = vmatprep.subr.mxu0 0.0
          %8605 = vmatpush1.msra.mxu0 %v8568
          %8606 = vmatprep.subr.mxu0 0.0
          %8607 = vmatpush1.msra.mxu0 %v8569
          %8608 = vmatprep.subr.mxu0 0.0
          %8609 = vmatpush1.msra.mxu0 %v8570
          %8610 = vmatprep.subr.mxu0 0.0
          %8611 = vmatpush1.msra.mxu0 0.0
          %8612 = vmatprep.subr.mxu0 0.0
          %8613 = vmatpush1.msra.mxu0 0.0
          %8614 = vmatprep.subr.mxu0 0.0
          %8615 = vmatpush1.msra.mxu0 0.0
          %8616 = vmatprep.subr.mxu0 0.0
          %8617 = vmatpush1.msra.mxu0 0.0
          %8618 = vmatprep.subr.mxu0 0.0
          %8619 = vmatpush1.msra.mxu0 0.0
          %8620 = vmatprep.subr.mxu0 0.0
          %8621 = vmatpush1.msra.mxu0 0.0
          %8622 = vmatprep.subr.mxu0 0.0
          %8623 = vmatpush1.msra.mxu0 0.0
          %8624 = vmatprep.subr.mxu0 0.0
          %8625 = vmatpush1.msra.mxu0 0.0
          %8626 = vmatprep.subr.mxu0 0.0
          %8627 = vmatpush1.msra.mxu0 0.0
          %8628 = vmatprep.subr.mxu0 0.0
          %8629 = vmatpush1.msra.mxu0 0.0
          %8630 = vmatprep.subr.mxu0 0.0
          %8631 = vmatpush1.msra.mxu0 0.0
          %8632 = vmatprep.subr.mxu0 0.0
          %8633 = vmatpush1.msra.mxu0 0.0
          %8634 = vmatprep.subr.mxu0 0.0
          %8635 = vmatpush1.msra.mxu0 0.0
          %8636 = vmatprep.subr.mxu0 0.0
          %8637 = vmatpush1.msra.mxu0 0.0
          %8638 = vmatprep.subr.mxu0 0.0
          %8639 = vmatpush1.msra.mxu0 0.0
          %8640 = vmatprep.subr.mxu0 0.0
          %8641 = vmatpush1.msra.mxu0 0.0
          %8642 = vmatprep.mubr.f32.mxu0 0.0
          %8643 = vmatmul.mubr.f32.gmra.mrb[0].mxu0 %v8554
          %v8644 = vpop.f32.mrb[0].mxu0
          %v8645 = vadd.f32 %v8576, %v8644
          %v8646 = vpop.f32.mrb[0].mxu0
          %8647 = vdwg.mxu0
          %v8648 = vxor.u32 %v8645, 2147483648
          %v8649 = vmul.f32 %v8648, 1.442695
          %v8650 = vpow.pop %v8649
          %v8651 = vadd.f32 %v8650, 1.0
          %v8652 = vrcp.pop %v8651
          %v8653 = vmul.f32 1.0, %v8652
          %8654 = vst [vmem:[#allocation36] sm:$0x3] %v8653
        $region200: #{transformer_linear_attn.1} parent=111 // pred_fallthru
          _
        // Predicated region
        $region201: #{transformer_linear_attn.1} parent=111 // pred_check
          %p8655 = pneg %p604
        $region202: #{transformer_linear_attn.1} parent=111 // pred_check_branch
          %8657 = sbr.rel (%p8655) target = $region204
        $region203: #{transformer_linear_attn.1} parent=111 // pred_region
          %s8659 = ssub.s32 32, 32
          %8660 = vsyncadd [#allocation6], %s8659
          %s8662 = sshll.u32 [#allocation36], 4
          %s8663 = int_to_ptr.vmem [resolvable:$true] %s8662
          %8665 = dma.vmem_to_hbm [thread:$0]  %s8663, 32, %s23, [#allocation6]
        $region204: #{transformer_linear_attn.1} parent=111 // pred_fallthru
          _
        // Predicated region
        $region205: #{transformer_linear_attn.1} parent=111 // pred_check
          %p8666 = pneg %p604
        $region206: #{transformer_linear_attn.1} parent=111 // pred_check_branch
          %8668 = sbr.rel (%p8666) target = $region208
        $region207: #{transformer_linear_attn.1} parent=111 // pred_region
          %8669 = dma.done [#allocation6], 32
        $region208: #{transformer_linear_attn.1} parent=111 // pred_fallthru
          _
      $region112: #{transformer_linear_attn.1} parent=5 // pred_fallthru
        _
      %p8670 = scmp.le.s32.totalorder 2, %s53
      // Predicated region
      $region209: #{transformer_linear_attn.1} parent=5 // pred_check
        %p8671 = pneg %p8670
      $region210: #{transformer_linear_attn.1} parent=5 // pred_check_branch
        %8673 = sbr.rel (%p8671) target = $region212
      $region211: #{transformer_linear_attn.1} parent=5 // pred_region
        %s8674 = ssub.s32 %s53, 2
      $region212: #{transformer_linear_attn.1} parent=5 // pred_fallthru
        _
    $region6: #{transformer_linear_attn.1} parent=1 // loop_footer
      %s57 = sadd.s32 1, %s53
    $region7: #{transformer_linear_attn.1} parent=1 // loop_footer_branch
      %52 = sbr.rel target = $region3
    $region8: #{transformer_linear_attn.1} parent=1 // loop_exit
      _
    %8675 = vsyncpa [#allocation5], 1
    %s8676 = scalar_lea.sflag [#allocation5], 1
    %8677 = vsyncpa %s8676, 1
    %8678 = vsyncpa [#allocation8], 1
    %s8679 = scalar_lea.sflag [#allocation8], 1
    %8680 = vsyncpa %s8679, 1
    %8681 = vsyncpa [#allocation11], 1
    %s8682 = scalar_lea.sflag [#allocation11], 1
    %8683 = vsyncpa %s8682, 1
    %8684 = vsyncpa [#allocation14], 1
    %s8685 = scalar_lea.sflag [#allocation14], 1
    %8686 = vsyncpa %s8685, 1
    %8687 = vsyncpa [#allocation17], 1
    %s8688 = scalar_lea.sflag [#allocation17], 1
    %8689 = vsyncpa %s8688, 1
    %8690 = vsyncpa [#allocation20], 1
    %s8691 = scalar_lea.sflag [#allocation20], 1
    %8692 = vsyncpa %s8691, 1
    %8693 = vsyncpa [#allocation23], 1
    %8694 = vsyncpa [#allocation26], 1
    %8695 = vsyncpa [#allocation29], 1
    %8696 = vsyncpa [#allocation32], 1
    %8697 = vsyncpa [#allocation35], 1
    %8698 = vsyncpa [#allocation6], 1
    %s8699 = scalar_lea.sflag [#allocation6], 1
    %8700 = vsyncpa %s8699, 1

</llo_original>
